<compile_context>
chip_gen: v7x
topology: tpu7x:2x2x1
jax: 0.10.0
libtpu: 0.0.40
codegen_flags: <defaults>
</compile_context>

<pallas_src>
import functools

import jax
import jax.numpy as jnp
from jax.experimental import pallas as pl
from jax.experimental.pallas import tpu as pltpu


def _round_up(x, m):
    return ((x + m - 1) // m) * m


def _vmem_capacity_bytes():
    try:
        cap = getattr(pltpu.get_tpu_info(), "vmem_capacity_bytes", None)
        if cap:
            return int(cap)
    except Exception:
        pass
    return 64 * 1024 * 1024  # conservative default (v7x per-core VMEM)


_VMEM_LIMIT = int(min(100 * 1024 * 1024, 0.75 * _vmem_capacity_bytes()))
_CHUNK_BUDGET = _VMEM_LIMIT // 2


def _pick_chunk(T, Bp, Din_max, Hp, budget_bytes):
    """Largest time chunk whose working set (double-buffered blocks + scratch)
    fits the per-generation VMEM budget."""
    G = 4 * Hp
    fixed = (2 * 2 * (Din_max + Hp) * G    # W_ih + W_hh blocks (bf16, 2 buffers)
             + 2 * 4 * G                   # bias (f32, 2 buffers)
             + 2 * 4 * Bp * Hp)            # h/c state scratch (f32)
    per_t = Bp * (2 * 2 * Din_max          # x block (bf16, 2 buffers)
                  + 2 * 2 * Hp             # y block (bf16, 2 buffers)
                  + 4 * G)                 # staged xg scratch (f32)
    chunk = max(1, min(64, T))
    while chunk > 1 and fixed + chunk * per_t > budget_bytes:
        chunk = (chunk + 1) // 2
    return chunk


# ----------------------------------------------------------------------------
# Fused bidirectional LSTM layer kernel.
#   grid = (num_directions, num_time_chunks); direction axis is "parallel".
#   Gate order matches PyTorch: [i, f, g, o]; each gate padded to Hp lanes.
# ----------------------------------------------------------------------------
def _lstm_layer_kernel(x_ref, w_ih_ref, w_hh_ref, b_ref, y_ref,
                       xg_scr, h_scr, c_scr, *,
                       chunk, batch, hidden_p, n_chunks, seq_len, padded_len):
    d = pl.program_id(0)      # 0 = forward, 1 = backward
    c = pl.program_id(1)      # chunk step within this direction's traversal

    @pl.when(c == 0)
    def _():
        h_scr[...] = jnp.zeros_like(h_scr)
        c_scr[...] = jnp.zeros_like(c_scr)

    Hp = hidden_p
    Bp = batch

    # Fused input projection for the whole chunk: one wide MXU GEMM whose
    # result stays in VMEM (never written back to HBM).
    xg_scr[...] = (
        jnp.dot(x_ref[...], w_ih_ref[0], preferred_element_type=jnp.float32)
        + b_ref[0]
    )

    reverse = d != 0
    arr_chunk = jnp.where(reverse, n_chunks - 1 - c, c)
    needs_mask = seq_len != padded_len

    def step(j, carry):
        h, cs = carry
        local = jnp.where(reverse, chunk - 1 - j, j)
        row = pl.multiple_of(local * Bp, Bp)
        gates = xg_scr[pl.ds(row, Bp), :] + jnp.dot(
            h.astype(jnp.bfloat16), w_hh_ref[0],
            preferred_element_type=jnp.float32)
        i_g = jax.nn.sigmoid(gates[:, 0 * Hp:1 * Hp])
        f_g = jax.nn.sigmoid(gates[:, 1 * Hp:2 * Hp])
        g_g = jnp.tanh(gates[:, 2 * Hp:3 * Hp])
        o_g = jax.nn.sigmoid(gates[:, 3 * Hp:4 * Hp])
        c_new = f_g * cs + i_g * g_g
        h_new = o_g * jnp.tanh(c_new)
        if needs_mask:  # only traced when T was padded up to a chunk multiple
            valid = (arr_chunk * chunk + local) < seq_len
            c_new = jnp.where(valid, c_new, cs)
            h_new = jnp.where(valid, h_new, h)
        y_ref[pl.ds(row, Bp), :] = h_new.astype(y_ref.dtype)
        return h_new, c_new

    h_fin, c_fin = jax.lax.fori_loop(
        0, chunk, step, (h_scr[...], c_scr[...]), unroll=min(8, chunk))
    h_scr[...] = h_fin
    c_scr[...] = c_fin


def lstm_bidir_layer(x2d, w_ih, w_hh, b, *, bi, hidden_p, batch, seq_len,
                     padded_len, chunk):
    """x2d: (Tpad*Bp, Din) bf16, time-major rows.  -> (Tpad*Bp, bi*Hp) bf16."""
    Hp = hidden_p
    Bp = batch
    Din = x2d.shape[1]
    G = 4 * Hp
    n_chunks = padded_len // chunk

    def t_map(d, c):
        # forward (d=0): chunk c ; backward (d=1): chunk n_chunks-1-c
        return c + d * (n_chunks - 1 - 2 * c)

    kernel = functools.partial(
        _lstm_layer_kernel, chunk=chunk, batch=Bp, hidden_p=Hp,
        n_chunks=n_chunks, seq_len=seq_len, padded_len=padded_len)

    return pl.pallas_call(
        kernel,
        out_shape=jax.ShapeDtypeStruct((padded_len * Bp, bi * Hp), jnp.bfloat16),
        grid_spec=pltpu.PrefetchScalarGridSpec(
            num_scalar_prefetch=0,
            grid=(bi, n_chunks),
            in_specs=[
                pl.BlockSpec((chunk * Bp, Din), lambda d, c: (t_map(d, c), 0)),
                pl.BlockSpec((1, Din, G), lambda d, c: (d, 0, 0)),
                pl.BlockSpec((1, Hp, G), lambda d, c: (d, 0, 0)),
                pl.BlockSpec((1, 1, G), lambda d, c: (d, 0, 0)),
            ],
            out_specs=pl.BlockSpec((chunk * Bp, Hp),
                                   lambda d, c: (t_map(d, c), d)),
            scratch_shapes=[
                pltpu.VMEM((chunk * Bp, G), jnp.float32),  # staged x@W_ih + b
                pltpu.VMEM((Bp, Hp), jnp.float32),         # h state
                pltpu.VMEM((Bp, Hp), jnp.float32),         # c state
            ],
        ),
        compiler_params=pltpu.CompilerParams(
            dimension_semantics=("parallel", "arbitrary"),
            vmem_limit_bytes=_VMEM_LIMIT,
        ),
    )(x2d, w_ih, w_hh, b)


# ----------------------------------------------------------------------------
# Head: Linear + LogSoftmax, row-tiled over flattened (Tpad*Bp) rows.
# Output dim is padded to 128 lanes; padded columns carry bias -1e30 so the
# f32 log-softmax over the real columns is unchanged.
# ----------------------------------------------------------------------------
def _head_kernel(x_ref, w_ref, b_ref, o_ref):
    x = x_ref[...].astype(jnp.bfloat16)
    logits = jnp.dot(x, w_ref[...], preferred_element_type=jnp.float32) + b_ref[...]
    m = jnp.max(logits, axis=-1, keepdims=True)
    z = logits - m
    lse = jnp.log(jnp.sum(jnp.exp(z), axis=-1, keepdims=True))
    o_ref[...] = z - lse


def linear_logsoftmax(x, w_t, b, *, row_tile=512):
    N, F = x.shape
    G = w_t.shape[1]
    tn = row_tile if N >= row_tile else _round_up(N, 8)
    Npad = _round_up(N, tn)
    if Npad != N:
        x = jnp.pad(x, ((0, Npad - N), (0, 0)))
    out = pl.pallas_call(
        _head_kernel,
        out_shape=jax.ShapeDtypeStruct((Npad, G), jnp.float32),
        grid_spec=pl.GridSpec(
            grid=(Npad // tn,),
            in_specs=[
                pl.BlockSpec((tn, F), lambda i: (i, 0)),
                pl.BlockSpec((F, G), lambda i: (0, 0)),
                pl.BlockSpec((1, G), lambda i: (0, 0)),
            ],
            out_specs=pl.BlockSpec((tn, G), lambda i: (i, 0)),
        ),
        compiler_params=pltpu.CompilerParams(
            dimension_semantics=("parallel",),
            vmem_limit_bytes=_VMEM_LIMIT,
        ),
    )(x, w_t, b)
    return out[:N] if Npad != N else out


# ----------------------------------------------------------------------------
# Full Net forward.
# ----------------------------------------------------------------------------
def net_forward(params, x_btd):
    """x_btd: (B, T, input_dim) batch-first -> (log_probs (B,T,O), lengths (B,))."""
    B, T, Din0 = x_btd.shape
    bi = params["bi_num"]
    Hp = params["hidden_pad"]
    O = params["output_dim"]

    Bp = _round_up(B, 16)                         # full bf16 sublane tiles
    Din_max = max(Din0, bi * Hp)
    chunk = _pick_chunk(T, Bp, Din_max, Hp, _CHUNK_BUDGET)
    Tpad = _round_up(T, chunk)

    x = x_btd.astype(jnp.bfloat16)
    if Bp != B:
        x = jnp.pad(x, ((0, Bp - B), (0, 0), (0, 0)))
    x = jnp.transpose(x, (1, 0, 2))               # (T, Bp, D) time-major
    if Tpad != T:
        x = jnp.pad(x, ((0, Tpad - T), (0, 0), (0, 0)))
    layer_in = x.reshape(Tpad * Bp, Din0)         # 2-D activations throughout

    for lp in params["lstm"]:
        layer_in = lstm_bidir_layer(
            layer_in, lp["w_ih"], lp["w_hh"], lp["b"],
            bi=bi, hidden_p=Hp, batch=Bp, seq_len=T, padded_len=Tpad,
            chunk=chunk)
        # TODO(synk): inter-layer dropout (train only) is identity in eval mode.

    logp = linear_logsoftmax(layer_in, params["w_fc_t"], params["b_fc"])
    Opad = logp.shape[1]
    logp = logp.reshape(Tpad, Bp, Opad)[:T, :B, :O]
    logp = jnp.transpose(logp, (1, 0, 2))         # (B, T, O)

    lengths = jnp.full((B,), T, dtype=jnp.int32)  # pad_packed_sequence lengths
    return logp, lengths


# ----------------------------------------------------------------------------
# Parameter init (PyTorch LSTM/Linear-style uniform(-k,k)), stored in
# kernel-friendly form: pre-transposed bf16 weights with each gate's columns
# zero-padded to 128 lanes, hidden rows placed at Hp stride, combined bias,
# lane-padded FC output with -1e30 bias on padded logits.
# Raw f32 weights are kept for the pure-JAX reference check.
# ----------------------------------------------------------------------------
def _pad_gate_cols(w_t, H, Hp):
    """(D, 4H) -> (D, 4Hp): zero-pad each gate's H columns to Hp lanes."""
    if Hp == H:
        return w_t
    D = w_t.shape[0]
    w4 = w_t.reshape(D, 4, H)
    w4 = jnp.pad(w4, ((0, 0), (0, 0), (0, Hp - H)))
    return w4.reshape(D, 4 * Hp)


def _expand_rows(w, H, Hp, n_blocks):
    """(n_blocks*H, G) -> (n_blocks*Hp, G): place each H-row block at stride Hp."""
    if Hp == H:
        return w
    G = w.shape[1]
    out = jnp.zeros((n_blocks * Hp, G), w.dtype)
    for blk in range(n_blocks):
        out = out.at[blk * Hp: blk * Hp + H].set(w[blk * H:(blk + 1) * H])
    return out


def init_params(key, input_dim, hidden_dim, output_dim, num_layers, bi_flag):
    bi = 2 if bi_flag else 1
    H = hidden_dim
    Hp = _round_up(H, 128)
    k = 1.0 / (H ** 0.5)

    lstm_layers, raw_layers = [], []
    for l in range(num_layers):
        d_in_raw = input_dim if l == 0 else H * bi
        w_ih_dirs, w_hh_dirs, b_dirs, raw_dirs = [], [], [], []
        for _ in range(bi):
            key, k1, k2, k3, k4 = jax.random.split(key, 5)
            w_ih = jax.random.uniform(k1, (4 * H, d_in_raw), jnp.float32, -k, k)
            w_hh = jax.random.uniform(k2, (4 * H, H), jnp.float32, -k, k)
            b_ih = jax.random.uniform(k3, (4 * H,), jnp.float32, -k, k)
            b_hh = jax.random.uniform(k4, (4 * H,), jnp.float32, -k, k)
            raw_dirs.append({"w_ih": w_ih, "w_hh": w_hh, "b_ih": b_ih, "b_hh": b_hh})

            w_ih_t = _pad_gate_cols(w_ih.T, H, Hp)            # (d_in_raw, 4Hp)
            if l > 0:
                w_ih_t = _expand_rows(w_ih_t, H, Hp, bi)      # (bi*Hp, 4Hp)
            w_hh_t = _expand_rows(_pad_gate_cols(w_hh.T, H, Hp), H, Hp, 1)
            b_comb = _pad_gate_cols((b_ih + b_hh).reshape(1, 4 * H), H, Hp)
            w_ih_dirs.append(w_ih_t.astype(jnp.bfloat16))
            w_hh_dirs.append(w_hh_t.astype(jnp.bfloat16))
            b_dirs.append(b_comb)
        lstm_layers.append({
            "w_ih": jnp.stack(w_ih_dirs),    # (bi, Din_pad, 4Hp) bf16
            "w_hh": jnp.stack(w_hh_dirs),    # (bi, Hp, 4Hp) bf16
            "b": jnp.stack(b_dirs),          # (bi, 1, 4Hp) f32
        })
        raw_layers.append(raw_dirs)

    key, k5, k6 = jax.random.split(key, 3)
    F_raw = H * bi
    kf = 1.0 / (F_raw ** 0.5)
    w_fc = jax.random.uniform(k5, (output_dim, F_raw), jnp.float32, -kf, kf)
    b_fc = jax.random.uniform(k6, (output_dim,), jnp.float32, -kf, kf)
    Opad = _round_up(max(output_dim, 1), 128)
    w_fc_t = _expand_rows(w_fc.T, H, Hp, bi)                  # (bi*Hp, O)
    w_fc_t = jnp.pad(w_fc_t, ((0, 0), (0, Opad - output_dim)))
    b_fc_p = jnp.full((1, Opad), -1e30, jnp.float32).at[0, :output_dim].set(b_fc)

    return {
        "lstm": lstm_layers,
        "w_fc_t": w_fc_t.astype(jnp.bfloat16),
        "b_fc": b_fc_p,
        "bi_num": bi,
        "hidden_dim": H,
        "hidden_pad": Hp,
        "output_dim": output_dim,
        "raw": {"lstm": raw_layers, "w_fc": w_fc, "b_fc": b_fc},
    }


# ----------------------------------------------------------------------------
# Pure-JAX f32 reference of the PyTorch module (eval-mode forward).
# ----------------------------------------------------------------------------
def net_reference(params, x_btd):
    H = params["hidden_dim"]
    bi = params["bi_num"]
    B = x_btd.shape[0]
    xs = jnp.transpose(x_btd, (1, 0, 2)).astype(jnp.float32)   # (T, B, D)
    for dirs in params["raw"]["lstm"]:
        outs = []
        for di in range(bi):
            p = dirs[di]
            seq = xs[::-1] if di == 1 else xs

            def step(carry, xt, p=p):
                h, c = carry
                g = xt @ p["w_ih"].T + h @ p["w_hh"].T + p["b_ih"] + p["b_hh"]
                i = jax.nn.sigmoid(g[:, :H])
                f = jax.nn.sigmoid(g[:, H:2 * H])
                gg = jnp.tanh(g[:, 2 * H:3 * H])
                o = jax.nn.sigmoid(g[:, 3 * H:])
                c = f * c + i * gg
                h = o * jnp.tanh(c)
                return (h, c), h

            init = (jnp.zeros((B, H), jnp.float32), jnp.zeros((B, H), jnp.float32))
            _, ys = jax.lax.scan(step, init, seq)
            outs.append(ys[::-1] if di == 1 else ys)
        xs = outs[0] if bi == 1 else jnp.concatenate(outs, axis=-1)
    logits = xs @ params["raw"]["w_fc"].T + params["raw"]["b_fc"]
    logp = jax.nn.log_softmax(logits, axis=-1)
    return jnp.transpose(logp, (1, 0, 2))


if __name__ == "__main__":
    # Small shapes consistent with the module's forward.
    B, T = 2, 8
    input_dim, hidden_dim, output_dim = 16, 32, 8
    num_layers, bi_flag = 2, True

    key = jax.random.PRNGKey(0)
    pkey, xkey = jax.random.split(key)
    params = init_params(pkey, input_dim, hidden_dim, output_dim,
                         num_layers, bi_flag)
    x = jax.random.normal(xkey, (B, T, input_dim), dtype=jnp.float32)

    fwd = jax.jit(functools.partial(net_forward, params))
    log_probs, lengths = fwd(x)
    jax.block_until_ready(log_probs)
    jax.block_until_ready(lengths)

    assert log_probs.shape == (B, T, output_dim)
    assert lengths.shape == (B,)
    # log_softmax sanity: each row sums to ~1 in prob space.
    row_sums = jnp.exp(log_probs).sum(axis=-1)
    assert jnp.allclose(row_sums, 1.0, atol=1e-3)
    # Numerical check vs. f32 reference (bf16 weights/activations tolerance).
    ref = net_reference(params, x)
    max_err = float(jnp.max(jnp.abs(log_probs - ref)))
    assert max_err < 0.1, f"kernel vs f32 reference max |diff| = {max_err}"

    print("KERNEL_OK")
</pallas_src>

<mosaic_0001>
module attributes {stable_mosaic.version = 11 : i64} {
  func.func @_head_kernel(%arg0: i32, %arg1: memref<128x256xbf16, #tpu.memory_space<vmem>>, %arg2: memref<256x128xbf16, #tpu.memory_space<vmem>>, %arg3: memref<1x128xf32, #tpu.memory_space<vmem>>, %arg4: memref<128x128xf32, #tpu.memory_space<vmem>>) attributes {dimension_semantics = [#tpu.dimension_semantics<parallel>], iteration_bounds = array<i64: 1>, scalar_prefetch = 0 : i64, scratch_operands = 0 : i64, tpu.core_type = #tpu.core_type<tc>, window_params = [{transform_indices = @transform_0, window_bounds = array<i64: 128, 256>}, {pipeline_mode = #tpu.pipeline_mode<synchronous>, transform_indices = @transform_1, window_bounds = array<i64: 256, 128>}, {pipeline_mode = #tpu.pipeline_mode<synchronous>, transform_indices = @transform_2, window_bounds = array<i64: 1, 128>}, {transform_indices = @transform_3, window_bounds = array<i64: 128, 128>}]} {
    %c0 = arith.constant 0 : index
    %c0_0 = arith.constant 0 : index
    %0 = vector.load %arg1[%c0, %c0_0] : memref<128x256xbf16, #tpu.memory_space<vmem>>, vector<128x256xbf16>
    %c0_1 = arith.constant 0 : index
    %c0_2 = arith.constant 0 : index
    %1 = vector.load %arg2[%c0_1, %c0_2] : memref<256x128xbf16, #tpu.memory_space<vmem>>, vector<256x128xbf16>
    %cst = arith.constant dense<0.000000e+00> : vector<128x128xf32>
    %2 = tpu.matmul %0, %1, %cst {dimension_numbers = #tpu.dot_dimension_numbers<[1], [0], [0], [1], [0, 0, 1, 1], [], []>} : vector<128x256xbf16>, vector<256x128xbf16>, vector<128x128xf32> -> vector<128x128xf32>
    %c0_3 = arith.constant 0 : index
    %c0_4 = arith.constant 0 : index
    %3 = vector.load %arg3[%c0_3, %c0_4] : memref<1x128xf32, #tpu.memory_space<vmem>>, vector<1x128xf32>
    %4 = vector.broadcast %3 : vector<1x128xf32> to vector<128x128xf32>
    %5 = arith.addf %2, %4 : vector<128x128xf32>
    %cst_5 = arith.constant dense<0xFF800000> : vector<128xf32>
    %6 = vector.multi_reduction <maximumf>, %5, %cst_5 [1] : vector<128x128xf32> to vector<128xf32>
    %7 = vector.shape_cast %6 : vector<128xf32> to vector<128x1xf32>
    %8 = vector.broadcast %7 : vector<128x1xf32> to vector<128x128xf32>
    %9 = arith.subf %5, %8 : vector<128x128xf32>
    %10 = math.exp %9 : vector<128x128xf32>
    %cst_6 = arith.constant dense<0.000000e+00> : vector<128xf32>
    %11 = vector.multi_reduction <add>, %10, %cst_6 [1] : vector<128x128xf32> to vector<128xf32>
    %12 = vector.shape_cast %11 : vector<128xf32> to vector<128x1xf32>
    %13 = math.log %12 : vector<128x1xf32>
    %14 = vector.broadcast %13 : vector<128x1xf32> to vector<128x128xf32>
    %15 = arith.subf %9, %14 : vector<128x128xf32>
    %c0_7 = arith.constant 0 : index
    %c0_8 = arith.constant 0 : index
    %16 = vector.load %arg4[%c0_7, %c0_8] : memref<128x128xf32, #tpu.memory_space<vmem>>, vector<128x128xf32>
    tpu.vector_store %arg4[%c0_7, %c0_8], %15 {strides = array<i32>} : memref<128x128xf32, #tpu.memory_space<vmem>>, vector<128x128xf32>,
    return
  }
  func.func @transform_0(%arg0: i32) -> (i32, i32) {
    %c0_i32 = arith.constant 0 : i32
    %c0_i32_0 = arith.constant 0 : i32
    return %arg0, %c0_i32 : i32, i32
  }
  func.func @transform_1(%arg0: i32) -> (i32, i32) {
    %c0_i32 = arith.constant 0 : i32
    %c0_i32_0 = arith.constant 0 : i32
    %c0_i32_1 = arith.constant 0 : i32
    return %c0_i32, %c0_i32_0 : i32, i32
  }
  func.func @transform_2(%arg0: i32) -> (i32, i32) {
    %c0_i32 = arith.constant 0 : i32
    %c0_i32_0 = arith.constant 0 : i32
    %c0_i32_1 = arith.constant 0 : i32
    return %c0_i32, %c0_i32_0 : i32, i32
  }
  func.func @transform_3(%arg0: i32) -> (i32, i32) {
    %c0_i32 = arith.constant 0 : i32
    %c0_i32_0 = arith.constant 0 : i32
    return %arg0, %c0_i32 : i32, i32
  }
}

module attributes {stable_mosaic.version = 11 : i64} {
  func.func @_lstm_layer_kernel(%arg0: i32, %arg1: i32, %arg2: memref<128x16xbf16, #tpu.memory_space<vmem>>, %arg3: memref<1x16x512xbf16, #tpu.memory_space<vmem>>, %arg4: memref<1x128x512xbf16, #tpu.memory_space<vmem>>, %arg5: memref<1x1x512xf32, #tpu.memory_space<vmem>>, %arg6: memref<128x128xbf16, #tpu.memory_space<vmem>>, %arg7: memref<128x512xf32, #tpu.memory_space<vmem>>, %arg8: memref<16x128xf32, #tpu.memory_space<vmem>>, %arg9: memref<16x128xf32, #tpu.memory_space<vmem>>) attributes {dimension_semantics = [#tpu.dimension_semantics<parallel>, #tpu.dimension_semantics<arbitrary>], iteration_bounds = array<i64: 2, 1>, scalar_prefetch = 0 : i64, scratch_operands = 3 : i64, tpu.core_type = #tpu.core_type<tc>, window_params = [{transform_indices = @transform_0, window_bounds = array<i64: 128, 16>}, {transform_indices = @transform_1, window_bounds = array<i64: 1, 16, 512>}, {transform_indices = @transform_2, window_bounds = array<i64: 1, 128, 512>}, {transform_indices = @transform_3, window_bounds = array<i64: 1, 1, 512>}, {transform_indices = @transform_4, window_bounds = array<i64: 128, 128>}]} {
    %c0_i32 = arith.constant 0 : i32
    %0 = arith.cmpi eq, %arg1, %c0_i32 : i32
    %1 = arith.extui %0 : i1 to i32
    %c0_i32_0 = arith.constant 0 : i32
    %2 = arith.cmpi ne, %1, %c0_i32_0 : i32
    scf.if %2 {
      %cst_107 = arith.constant 0.000000e+00 : f32
      %329 = vector.broadcast %cst_107 : f32 to vector<16x128xf32>
      %c0_108 = arith.constant 0 : index
      %c0_109 = arith.constant 0 : index
      %330 = vector.load %arg8[%c0_108, %c0_109] : memref<16x128xf32, #tpu.memory_space<vmem>>, vector<16x128xf32>
      tpu.vector_store %arg8[%c0_108, %c0_109], %329 {strides = array<i32>} : memref<16x128xf32, #tpu.memory_space<vmem>>, vector<16x128xf32>,
      %cst_110 = arith.constant 0.000000e+00 : f32
      %331 = vector.broadcast %cst_110 : f32 to vector<16x128xf32>
      %c0_111 = arith.constant 0 : index
      %c0_112 = arith.constant 0 : index
      %332 = vector.load %arg9[%c0_111, %c0_112] : memref<16x128xf32, #tpu.memory_space<vmem>>, vector<16x128xf32>
      tpu.vector_store %arg9[%c0_111, %c0_112], %331 {strides = array<i32>} : memref<16x128xf32, #tpu.memory_space<vmem>>, vector<16x128xf32>,
    } else {
    }
    %c0 = arith.constant 0 : index
    %c0_1 = arith.constant 0 : index
    %3 = vector.load %arg2[%c0, %c0_1] : memref<128x16xbf16, #tpu.memory_space<vmem>>, vector<128x16xbf16>
    %c0_2 = arith.constant 0 : index
    %c0_3 = arith.constant 0 : index
    %c0_4 = arith.constant 0 : index
    %4 = vector.load %arg3[%c0_2, %c0_3, %c0_4] : memref<1x16x512xbf16, #tpu.memory_space<vmem>>, vector<1x16x512xbf16>
    %5 = vector.shape_cast %4 : vector<1x16x512xbf16> to vector<16x512xbf16>
    %cst = arith.constant dense<0.000000e+00> : vector<128x512xf32>
    %6 = tpu.matmul %3, %5, %cst {dimension_numbers = #tpu.dot_dimension_numbers<[1], [0], [0], [1], [0, 0, 1, 1], [], []>} : vector<128x16xbf16>, vector<16x512xbf16>, vector<128x512xf32> -> vector<128x512xf32>
    %c0_5 = arith.constant 0 : index
    %c0_6 = arith.constant 0 : index
    %c0_7 = arith.constant 0 : index
    %7 = vector.load %arg5[%c0_5, %c0_6, %c0_7] : memref<1x1x512xf32, #tpu.memory_space<vmem>>, vector<1x1x512xf32>
    %8 = vector.shape_cast %7 : vector<1x1x512xf32> to vector<1x512xf32>
    %9 = vector.broadcast %8 : vector<1x512xf32> to vector<128x512xf32>
    %10 = arith.addf %6, %9 : vector<128x512xf32>
    %c0_8 = arith.constant 0 : index
    %c0_9 = arith.constant 0 : index
    %11 = vector.load %arg7[%c0_8, %c0_9] : memref<128x512xf32, #tpu.memory_space<vmem>>, vector<128x512xf32>
    tpu.vector_store %arg7[%c0_8, %c0_9], %10 {strides = array<i32>} : memref<128x512xf32, #tpu.memory_space<vmem>>, vector<128x512xf32>,
    %c0_i32_10 = arith.constant 0 : i32
    %12 = arith.cmpi ne, %arg0, %c0_i32_10 : i32
    %c0_11 = arith.constant 0 : index
    %c0_12 = arith.constant 0 : index
    %13 = vector.load %arg8[%c0_11, %c0_12] : memref<16x128xf32, #tpu.memory_space<vmem>>, vector<16x128xf32>
    %c0_13 = arith.constant 0 : index
    %c0_14 = arith.constant 0 : index
    %14 = vector.load %arg9[%c0_13, %c0_14] : memref<16x128xf32, #tpu.memory_space<vmem>>, vector<16x128xf32>
    %c0_i32_15 = arith.constant 0 : i32
    %c7_i32 = arith.constant 7 : i32
    %15 = arith.subi %c7_i32, %c0_i32_15 : i32
    %16 = arith.select %12, %15, %c0_i32_15 : i32
    %c16_i32 = arith.constant 16 : i32
    %17 = arith.muli %16, %c16_i32 : i32
    %18 = tpu.assume_multiple %17, 16 : i32
    %19 = arith.index_cast %18 : i32 to index
    %c0_16 = arith.constant 0 : index
    %20 = vector.load %arg7[%19, %c0_16] : memref<128x512xf32, #tpu.memory_space<vmem>>, vector<16x512xf32>
    %21 = arith.truncf %13 : vector<16x128xf32> to vector<16x128xbf16>
    %c0_17 = arith.constant 0 : index
    %c0_18 = arith.constant 0 : index
    %c0_19 = arith.constant 0 : index
    %22 = vector.load %arg4[%c0_17, %c0_18, %c0_19] : memref<1x128x512xbf16, #tpu.memory_space<vmem>>, vector<1x128x512xbf16>
    %23 = vector.shape_cast %22 : vector<1x128x512xbf16> to vector<128x512xbf16>
    %cst_20 = arith.constant dense<0.000000e+00> : vector<16x512xf32>
    %24 = tpu.matmul %21, %23, %cst_20 {dimension_numbers = #tpu.dot_dimension_numbers<[1], [0], [0], [1], [0, 0, 1, 1], [], []>} : vector<16x128xbf16>, vector<128x512xbf16>, vector<16x512xf32> -> vector<16x512xf32>
    %25 = arith.addf %20, %24 : vector<16x512xf32>
    %26 = vector.extract_strided_slice %25 {offsets = [0, 0], sizes = [16, 128], strides = [1, 1]} : vector<16x512xf32> to vector<16x128xf32>
    %27 = arith.negf %26 : vector<16x128xf32>
    %28 = math.exp %27 : vector<16x128xf32>
    %cst_21 = arith.constant 1.000000e+00 : f32
    %29 = vector.broadcast %cst_21 : f32 to vector<16x128xf32>
    %30 = arith.addf %29, %28 : vector<16x128xf32>
    %31 = arith.divf %29, %30 : vector<16x128xf32>
    %32 = vector.extract_strided_slice %25 {offsets = [0, 128], sizes = [16, 128], strides = [1, 1]} : vector<16x512xf32> to vector<16x128xf32>
    %33 = arith.negf %32 : vector<16x128xf32>
    %34 = math.exp %33 : vector<16x128xf32>
    %cst_22 = arith.constant 1.000000e+00 : f32
    %35 = vector.broadcast %cst_22 : f32 to vector<16x128xf32>
    %36 = arith.addf %35, %34 : vector<16x128xf32>
    %37 = arith.divf %35, %36 : vector<16x128xf32>
    %38 = vector.extract_strided_slice %25 {offsets = [0, 256], sizes = [16, 128], strides = [1, 1]} : vector<16x512xf32> to vector<16x128xf32>
    %39 = math.tanh %38 : vector<16x128xf32>
    %40 = vector.extract_strided_slice %25 {offsets = [0, 384], sizes = [16, 128], strides = [1, 1]} : vector<16x512xf32> to vector<16x128xf32>
    %41 = arith.negf %40 : vector<16x128xf32>
    %42 = math.exp %41 : vector<16x128xf32>
    %cst_23 = arith.constant 1.000000e+00 : f32
    %43 = vector.broadcast %cst_23 : f32 to vector<16x128xf32>
    %44 = arith.addf %43, %42 : vector<16x128xf32>
    %45 = arith.divf %43, %44 : vector<16x128xf32>
    %46 = arith.mulf %37, %14 : vector<16x128xf32>
    %47 = arith.mulf %31, %39 : vector<16x128xf32>
    %48 = arith.addf %46, %47 : vector<16x128xf32>
    %49 = math.tanh %48 : vector<16x128xf32>
    %50 = arith.mulf %45, %49 : vector<16x128xf32>
    %51 = arith.truncf %50 : vector<16x128xf32> to vector<16x128xbf16>
    %52 = arith.index_cast %18 : i32 to index
    %c0_24 = arith.constant 0 : index
    %53 = vector.load %arg6[%52, %c0_24] : memref<128x128xbf16, #tpu.memory_space<vmem>>, vector<16x128xbf16>
    tpu.vector_store %arg6[%52, %c0_24], %51 {strides = array<i32>} : memref<128x128xbf16, #tpu.memory_space<vmem>>, vector<16x128xbf16>,
    %c1_i32 = arith.constant 1 : i32
    %c7_i32_25 = arith.constant 7 : i32
    %54 = arith.subi %c7_i32_25, %c1_i32 : i32
    %55 = arith.select %12, %54, %c1_i32 : i32
    %c16_i32_26 = arith.constant 16 : i32
    %56 = arith.muli %55, %c16_i32_26 : i32
    %57 = tpu.assume_multiple %56, 16 : i32
    %58 = arith.index_cast %57 : i32 to index
    %c0_27 = arith.constant 0 : index
    %59 = vector.load %arg7[%58, %c0_27] : memref<128x512xf32, #tpu.memory_space<vmem>>, vector<16x512xf32>
    %60 = arith.truncf %50 : vector<16x128xf32> to vector<16x128xbf16>
    %c0_28 = arith.constant 0 : index
    %c0_29 = arith.constant 0 : index
    %c0_30 = arith.constant 0 : index
    %61 = vector.load %arg4[%c0_28, %c0_29, %c0_30] : memref<1x128x512xbf16, #tpu.memory_space<vmem>>, vector<1x128x512xbf16>
    %62 = vector.shape_cast %61 : vector<1x128x512xbf16> to vector<128x512xbf16>
    %cst_31 = arith.constant dense<0.000000e+00> : vector<16x512xf32>
    %63 = tpu.matmul %60, %62, %cst_31 {dimension_numbers = #tpu.dot_dimension_numbers<[1], [0], [0], [1], [0, 0, 1, 1], [], []>} : vector<16x128xbf16>, vector<128x512xbf16>, vector<16x512xf32> -> vector<16x512xf32>
    %64 = arith.addf %59, %63 : vector<16x512xf32>
    %65 = vector.extract_strided_slice %64 {offsets = [0, 0], sizes = [16, 128], strides = [1, 1]} : vector<16x512xf32> to vector<16x128xf32>
    %66 = arith.negf %65 : vector<16x128xf32>
    %67 = math.exp %66 : vector<16x128xf32>
    %cst_32 = arith.constant 1.000000e+00 : f32
    %68 = vector.broadcast %cst_32 : f32 to vector<16x128xf32>
    %69 = arith.addf %68, %67 : vector<16x128xf32>
    %70 = arith.divf %68, %69 : vector<16x128xf32>
    %71 = vector.extract_strided_slice %64 {offsets = [0, 128], sizes = [16, 128], strides = [1, 1]} : vector<16x512xf32> to vector<16x128xf32>
    %72 = arith.negf %71 : vector<16x128xf32>
    %73 = math.exp %72 : vector<16x128xf32>
    %cst_33 = arith.constant 1.000000e+00 : f32
    %74 = vector.broadcast %cst_33 : f32 to vector<16x128xf32>
    %75 = arith.addf %74, %73 : vector<16x128xf32>
    %76 = arith.divf %74, %75 : vector<16x128xf32>
    %77 = vector.extract_strided_slice %64 {offsets = [0, 256], sizes = [16, 128], strides = [1, 1]} : vector<16x512xf32> to vector<16x128xf32>
    %78 = math.tanh %77 : vector<16x128xf32>
    %79 = vector.extract_strided_slice %64 {offsets = [0, 384], sizes = [16, 128], strides = [1, 1]} : vector<16x512xf32> to vector<16x128xf32>
    %80 = arith.negf %79 : vector<16x128xf32>
    %81 = math.exp %80 : vector<16x128xf32>
    %cst_34 = arith.constant 1.000000e+00 : f32
    %82 = vector.broadcast %cst_34 : f32 to vector<16x128xf32>
    %83 = arith.addf %82, %81 : vector<16x128xf32>
    %84 = arith.divf %82, %83 : vector<16x128xf32>
    %85 = arith.mulf %76, %48 : vector<16x128xf32>
    %86 = arith.mulf %70, %78 : vector<16x128xf32>
    %87 = arith.addf %85, %86 : vector<16x128xf32>
    %88 = math.tanh %87 : vector<16x128xf32>
    %89 = arith.mulf %84, %88 : vector<16x128xf32>
    %90 = arith.truncf %89 : vector<16x128xf32> to vector<16x128xbf16>
    %91 = arith.index_cast %57 : i32 to index
    %c0_35 = arith.constant 0 : index
    %92 = vector.load %arg6[%91, %c0_35] : memref<128x128xbf16, #tpu.memory_space<vmem>>, vector<16x128xbf16>
    tpu.vector_store %arg6[%91, %c0_35], %90 {strides = array<i32>} : memref<128x128xbf16, #tpu.memory_space<vmem>>, vector<16x128xbf16>,
    %c2_i32 = arith.constant 2 : i32
    %c7_i32_36 = arith.constant 7 : i32
    %93 = arith.subi %c7_i32_36, %c2_i32 : i32
    %94 = arith.select %12, %93, %c2_i32 : i32
    %c16_i32_37 = arith.constant 16 : i32
    %95 = arith.muli %94, %c16_i32_37 : i32
    %96 = tpu.assume_multiple %95, 16 : i32
    %97 = arith.index_cast %96 : i32 to index
    %c0_38 = arith.constant 0 : index
    %98 = vector.load %arg7[%97, %c0_38] : memref<128x512xf32, #tpu.memory_space<vmem>>, vector<16x512xf32>
    %99 = arith.truncf %89 : vector<16x128xf32> to vector<16x128xbf16>
    %c0_39 = arith.constant 0 : index
    %c0_40 = arith.constant 0 : index
    %c0_41 = arith.constant 0 : index
    %100 = vector.load %arg4[%c0_39, %c0_40, %c0_41] : memref<1x128x512xbf16, #tpu.memory_space<vmem>>, vector<1x128x512xbf16>
    %101 = vector.shape_cast %100 : vector<1x128x512xbf16> to vector<128x512xbf16>
    %cst_42 = arith.constant dense<0.000000e+00> : vector<16x512xf32>
    %102 = tpu.matmul %99, %101, %cst_42 {dimension_numbers = #tpu.dot_dimension_numbers<[1], [0], [0], [1], [0, 0, 1, 1], [], []>} : vector<16x128xbf16>, vector<128x512xbf16>, vector<16x512xf32> -> vector<16x512xf32>
    %103 = arith.addf %98, %102 : vector<16x512xf32>
    %104 = vector.extract_strided_slice %103 {offsets = [0, 0], sizes = [16, 128], strides = [1, 1]} : vector<16x512xf32> to vector<16x128xf32>
    %105 = arith.negf %104 : vector<16x128xf32>
    %106 = math.exp %105 : vector<16x128xf32>
    %cst_43 = arith.constant 1.000000e+00 : f32
    %107 = vector.broadcast %cst_43 : f32 to vector<16x128xf32>
    %108 = arith.addf %107, %106 : vector<16x128xf32>
    %109 = arith.divf %107, %108 : vector<16x128xf32>
    %110 = vector.extract_strided_slice %103 {offsets = [0, 128], sizes = [16, 128], strides = [1, 1]} : vector<16x512xf32> to vector<16x128xf32>
    %111 = arith.negf %110 : vector<16x128xf32>
    %112 = math.exp %111 : vector<16x128xf32>
    %cst_44 = arith.constant 1.000000e+00 : f32
    %113 = vector.broadcast %cst_44 : f32 to vector<16x128xf32>
    %114 = arith.addf %113, %112 : vector<16x128xf32>
    %115 = arith.divf %113, %114 : vector<16x128xf32>
    %116 = vector.extract_strided_slice %103 {offsets = [0, 256], sizes = [16, 128], strides = [1, 1]} : vector<16x512xf32> to vector<16x128xf32>
    %117 = math.tanh %116 : vector<16x128xf32>
    %118 = vector.extract_strided_slice %103 {offsets = [0, 384], sizes = [16, 128], strides = [1, 1]} : vector<16x512xf32> to vector<16x128xf32>
    %119 = arith.negf %118 : vector<16x128xf32>
    %120 = math.exp %119 : vector<16x128xf32>
    %cst_45 = arith.constant 1.000000e+00 : f32
    %121 = vector.broadcast %cst_45 : f32 to vector<16x128xf32>
    %122 = arith.addf %121, %120 : vector<16x128xf32>
    %123 = arith.divf %121, %122 : vector<16x128xf32>
    %124 = arith.mulf %115, %87 : vector<16x128xf32>
    %125 = arith.mulf %109, %117 : vector<16x128xf32>
    %126 = arith.addf %124, %125 : vector<16x128xf32>
    %127 = math.tanh %126 : vector<16x128xf32>
    %128 = arith.mulf %123, %127 : vector<16x128xf32>
    %129 = arith.truncf %128 : vector<16x128xf32> to vector<16x128xbf16>
    %130 = arith.index_cast %96 : i32 to index
    %c0_46 = arith.constant 0 : index
    %131 = vector.load %arg6[%130, %c0_46] : memref<128x128xbf16, #tpu.memory_space<vmem>>, vector<16x128xbf16>
    tpu.vector_store %arg6[%130, %c0_46], %129 {strides = array<i32>} : memref<128x128xbf16, #tpu.memory_space<vmem>>, vector<16x128xbf16>,
    %c3_i32 = arith.constant 3 : i32
    %c7_i32_47 = arith.constant 7 : i32
    %132 = arith.subi %c7_i32_47, %c3_i32 : i32
    %133 = arith.select %12, %132, %c3_i32 : i32
    %c16_i32_48 = arith.constant 16 : i32
    %134 = arith.muli %133, %c16_i32_48 : i32
    %135 = tpu.assume_multiple %134, 16 : i32
    %136 = arith.index_cast %135 : i32 to index
    %c0_49 = arith.constant 0 : index
    %137 = vector.load %arg7[%136, %c0_49] : memref<128x512xf32, #tpu.memory_space<vmem>>, vector<16x512xf32>
    %138 = arith.truncf %128 : vector<16x128xf32> to vector<16x128xbf16>
    %c0_50 = arith.constant 0 : index
    %c0_51 = arith.constant 0 : index
    %c0_52 = arith.constant 0 : index
    %139 = vector.load %arg4[%c0_50, %c0_51, %c0_52] : memref<1x128x512xbf16, #tpu.memory_space<vmem>>, vector<1x128x512xbf16>
    %140 = vector.shape_cast %139 : vector<1x128x512xbf16> to vector<128x512xbf16>
    %cst_53 = arith.constant dense<0.000000e+00> : vector<16x512xf32>
    %141 = tpu.matmul %138, %140, %cst_53 {dimension_numbers = #tpu.dot_dimension_numbers<[1], [0], [0], [1], [0, 0, 1, 1], [], []>} : vector<16x128xbf16>, vector<128x512xbf16>, vector<16x512xf32> -> vector<16x512xf32>
    %142 = arith.addf %137, %141 : vector<16x512xf32>
    %143 = vector.extract_strided_slice %142 {offsets = [0, 0], sizes = [16, 128], strides = [1, 1]} : vector<16x512xf32> to vector<16x128xf32>
    %144 = arith.negf %143 : vector<16x128xf32>
    %145 = math.exp %144 : vector<16x128xf32>
    %cst_54 = arith.constant 1.000000e+00 : f32
    %146 = vector.broadcast %cst_54 : f32 to vector<16x128xf32>
    %147 = arith.addf %146, %145 : vector<16x128xf32>
    %148 = arith.divf %146, %147 : vector<16x128xf32>
    %149 = vector.extract_strided_slice %142 {offsets = [0, 128], sizes = [16, 128], strides = [1, 1]} : vector<16x512xf32> to vector<16x128xf32>
    %150 = arith.negf %149 : vector<16x128xf32>
    %151 = math.exp %150 : vector<16x128xf32>
    %cst_55 = arith.constant 1.000000e+00 : f32
    %152 = vector.broadcast %cst_55 : f32 to vector<16x128xf32>
    %153 = arith.addf %152, %151 : vector<16x128xf32>
    %154 = arith.divf %152, %153 : vector<16x128xf32>
    %155 = vector.extract_strided_slice %142 {offsets = [0, 256], sizes = [16, 128], strides = [1, 1]} : vector<16x512xf32> to vector<16x128xf32>
    %156 = math.tanh %155 : vector<16x128xf32>
    %157 = vector.extract_strided_slice %142 {offsets = [0, 384], sizes = [16, 128], strides = [1, 1]} : vector<16x512xf32> to vector<16x128xf32>
    %158 = arith.negf %157 : vector<16x128xf32>
    %159 = math.exp %158 : vector<16x128xf32>
    %cst_56 = arith.constant 1.000000e+00 : f32
    %160 = vector.broadcast %cst_56 : f32 to vector<16x128xf32>
    %161 = arith.addf %160, %159 : vector<16x128xf32>
    %162 = arith.divf %160, %161 : vector<16x128xf32>
    %163 = arith.mulf %154, %126 : vector<16x128xf32>
    %164 = arith.mulf %148, %156 : vector<16x128xf32>
    %165 = arith.addf %163, %164 : vector<16x128xf32>
    %166 = math.tanh %165 : vector<16x128xf32>
    %167 = arith.mulf %162, %166 : vector<16x128xf32>
    %168 = arith.truncf %167 : vector<16x128xf32> to vector<16x128xbf16>
    %169 = arith.index_cast %135 : i32 to index
    %c0_57 = arith.constant 0 : index
    %170 = vector.load %arg6[%169, %c0_57] : memref<128x128xbf16, #tpu.memory_space<vmem>>, vector<16x128xbf16>
    tpu.vector_store %arg6[%169, %c0_57], %168 {strides = array<i32>} : memref<128x128xbf16, #tpu.memory_space<vmem>>, vector<16x128xbf16>,
    %c4_i32 = arith.constant 4 : i32
    %c7_i32_58 = arith.constant 7 : i32
    %171 = arith.subi %c7_i32_58, %c4_i32 : i32
    %172 = arith.select %12, %171, %c4_i32 : i32
    %c16_i32_59 = arith.constant 16 : i32
    %173 = arith.muli %172, %c16_i32_59 : i32
    %174 = tpu.assume_multiple %173, 16 : i32
    %175 = arith.index_cast %174 : i32 to index
    %c0_60 = arith.constant 0 : index
    %176 = vector.load %arg7[%175, %c0_60] : memref<128x512xf32, #tpu.memory_space<vmem>>, vector<16x512xf32>
    %177 = arith.truncf %167 : vector<16x128xf32> to vector<16x128xbf16>
    %c0_61 = arith.constant 0 : index
    %c0_62 = arith.constant 0 : index
    %c0_63 = arith.constant 0 : index
    %178 = vector.load %arg4[%c0_61, %c0_62, %c0_63] : memref<1x128x512xbf16, #tpu.memory_space<vmem>>, vector<1x128x512xbf16>
    %179 = vector.shape_cast %178 : vector<1x128x512xbf16> to vector<128x512xbf16>
    %cst_64 = arith.constant dense<0.000000e+00> : vector<16x512xf32>
    %180 = tpu.matmul %177, %179, %cst_64 {dimension_numbers = #tpu.dot_dimension_numbers<[1], [0], [0], [1], [0, 0, 1, 1], [], []>} : vector<16x128xbf16>, vector<128x512xbf16>, vector<16x512xf32> -> vector<16x512xf32>
    %181 = arith.addf %176, %180 : vector<16x512xf32>
    %182 = vector.extract_strided_slice %181 {offsets = [0, 0], sizes = [16, 128], strides = [1, 1]} : vector<16x512xf32> to vector<16x128xf32>
    %183 = arith.negf %182 : vector<16x128xf32>
    %184 = math.exp %183 : vector<16x128xf32>
    %cst_65 = arith.constant 1.000000e+00 : f32
    %185 = vector.broadcast %cst_65 : f32 to vector<16x128xf32>
    %186 = arith.addf %185, %184 : vector<16x128xf32>
    %187 = arith.divf %185, %186 : vector<16x128xf32>
    %188 = vector.extract_strided_slice %181 {offsets = [0, 128], sizes = [16, 128], strides = [1, 1]} : vector<16x512xf32> to vector<16x128xf32>
    %189 = arith.negf %188 : vector<16x128xf32>
    %190 = math.exp %189 : vector<16x128xf32>
    %cst_66 = arith.constant 1.000000e+00 : f32
    %191 = vector.broadcast %cst_66 : f32 to vector<16x128xf32>
    %192 = arith.addf %191, %190 : vector<16x128xf32>
    %193 = arith.divf %191, %192 : vector<16x128xf32>
    %194 = vector.extract_strided_slice %181 {offsets = [0, 256], sizes = [16, 128], strides = [1, 1]} : vector<16x512xf32> to vector<16x128xf32>
    %195 = math.tanh %194 : vector<16x128xf32>
    %196 = vector.extract_strided_slice %181 {offsets = [0, 384], sizes = [16, 128], strides = [1, 1]} : vector<16x512xf32> to vector<16x128xf32>
    %197 = arith.negf %196 : vector<16x128xf32>
    %198 = math.exp %197 : vector<16x128xf32>
    %cst_67 = arith.constant 1.000000e+00 : f32
    %199 = vector.broadcast %cst_67 : f32 to vector<16x128xf32>
    %200 = arith.addf %199, %198 : vector<16x128xf32>
    %201 = arith.divf %199, %200 : vector<16x128xf32>
    %202 = arith.mulf %193, %165 : vector<16x128xf32>
    %203 = arith.mulf %187, %195 : vector<16x128xf32>
    %204 = arith.addf %202, %203 : vector<16x128xf32>
    %205 = math.tanh %204 : vector<16x128xf32>
    %206 = arith.mulf %201, %205 : vector<16x128xf32>
    %207 = arith.truncf %206 : vector<16x128xf32> to vector<16x128xbf16>
    %208 = arith.index_cast %174 : i32 to index
    %c0_68 = arith.constant 0 : index
    %209 = vector.load %arg6[%208, %c0_68] : memref<128x128xbf16, #tpu.memory_space<vmem>>, vector<16x128xbf16>
    tpu.vector_store %arg6[%208, %c0_68], %207 {strides = array<i32>} : memref<128x128xbf16, #tpu.memory_space<vmem>>, vector<16x128xbf16>,
    %c5_i32 = arith.constant 5 : i32
    %c7_i32_69 = arith.constant 7 : i32
    %210 = arith.subi %c7_i32_69, %c5_i32 : i32
    %211 = arith.select %12, %210, %c5_i32 : i32
    %c16_i32_70 = arith.constant 16 : i32
    %212 = arith.muli %211, %c16_i32_70 : i32
    %213 = tpu.assume_multiple %212, 16 : i32
    %214 = arith.index_cast %213 : i32 to index
    %c0_71 = arith.constant 0 : index
    %215 = vector.load %arg7[%214, %c0_71] : memref<128x512xf32, #tpu.memory_space<vmem>>, vector<16x512xf32>
    %216 = arith.truncf %206 : vector<16x128xf32> to vector<16x128xbf16>
    %c0_72 = arith.constant 0 : index
    %c0_73 = arith.constant 0 : index
    %c0_74 = arith.constant 0 : index
    %217 = vector.load %arg4[%c0_72, %c0_73, %c0_74] : memref<1x128x512xbf16, #tpu.memory_space<vmem>>, vector<1x128x512xbf16>
    %218 = vector.shape_cast %217 : vector<1x128x512xbf16> to vector<128x512xbf16>
    %cst_75 = arith.constant dense<0.000000e+00> : vector<16x512xf32>
    %219 = tpu.matmul %216, %218, %cst_75 {dimension_numbers = #tpu.dot_dimension_numbers<[1], [0], [0], [1], [0, 0, 1, 1], [], []>} : vector<16x128xbf16>, vector<128x512xbf16>, vector<16x512xf32> -> vector<16x512xf32>
    %220 = arith.addf %215, %219 : vector<16x512xf32>
    %221 = vector.extract_strided_slice %220 {offsets = [0, 0], sizes = [16, 128], strides = [1, 1]} : vector<16x512xf32> to vector<16x128xf32>
    %222 = arith.negf %221 : vector<16x128xf32>
    %223 = math.exp %222 : vector<16x128xf32>
    %cst_76 = arith.constant 1.000000e+00 : f32
    %224 = vector.broadcast %cst_76 : f32 to vector<16x128xf32>
    %225 = arith.addf %224, %223 : vector<16x128xf32>
    %226 = arith.divf %224, %225 : vector<16x128xf32>
    %227 = vector.extract_strided_slice %220 {offsets = [0, 128], sizes = [16, 128], strides = [1, 1]} : vector<16x512xf32> to vector<16x128xf32>
    %228 = arith.negf %227 : vector<16x128xf32>
    %229 = math.exp %228 : vector<16x128xf32>
    %cst_77 = arith.constant 1.000000e+00 : f32
    %230 = vector.broadcast %cst_77 : f32 to vector<16x128xf32>
    %231 = arith.addf %230, %229 : vector<16x128xf32>
    %232 = arith.divf %230, %231 : vector<16x128xf32>
    %233 = vector.extract_strided_slice %220 {offsets = [0, 256], sizes = [16, 128], strides = [1, 1]} : vector<16x512xf32> to vector<16x128xf32>
    %234 = math.tanh %233 : vector<16x128xf32>
    %235 = vector.extract_strided_slice %220 {offsets = [0, 384], sizes = [16, 128], strides = [1, 1]} : vector<16x512xf32> to vector<16x128xf32>
    %236 = arith.negf %235 : vector<16x128xf32>
    %237 = math.exp %236 : vector<16x128xf32>
    %cst_78 = arith.constant 1.000000e+00 : f32
    %238 = vector.broadcast %cst_78 : f32 to vector<16x128xf32>
    %239 = arith.addf %238, %237 : vector<16x128xf32>
    %240 = arith.divf %238, %239 : vector<16x128xf32>
    %241 = arith.mulf %232, %204 : vector<16x128xf32>
    %242 = arith.mulf %226, %234 : vector<16x128xf32>
    %243 = arith.addf %241, %242 : vector<16x128xf32>
    %244 = math.tanh %243 : vector<16x128xf32>
    %245 = arith.mulf %240, %244 : vector<16x128xf32>
    %246 = arith.truncf %245 : vector<16x128xf32> to vector<16x128xbf16>
    %247 = arith.index_cast %213 : i32 to index
    %c0_79 = arith.constant 0 : index
    %248 = vector.load %arg6[%247, %c0_79] : memref<128x128xbf16, #tpu.memory_space<vmem>>, vector<16x128xbf16>
    tpu.vector_store %arg6[%247, %c0_79], %246 {strides = array<i32>} : memref<128x128xbf16, #tpu.memory_space<vmem>>, vector<16x128xbf16>,
    %c6_i32 = arith.constant 6 : i32
    %c7_i32_80 = arith.constant 7 : i32
    %249 = arith.subi %c7_i32_80, %c6_i32 : i32
    %250 = arith.select %12, %249, %c6_i32 : i32
    %c16_i32_81 = arith.constant 16 : i32
    %251 = arith.muli %250, %c16_i32_81 : i32
    %252 = tpu.assume_multiple %251, 16 : i32
    %253 = arith.index_cast %252 : i32 to index
    %c0_82 = arith.constant 0 : index
    %254 = vector.load %arg7[%253, %c0_82] : memref<128x512xf32, #tpu.memory_space<vmem>>, vector<16x512xf32>
    %255 = arith.truncf %245 : vector<16x128xf32> to vector<16x128xbf16>
    %c0_83 = arith.constant 0 : index
    %c0_84 = arith.constant 0 : index
    %c0_85 = arith.constant 0 : index
    %256 = vector.load %arg4[%c0_83, %c0_84, %c0_85] : memref<1x128x512xbf16, #tpu.memory_space<vmem>>, vector<1x128x512xbf16>
    %257 = vector.shape_cast %256 : vector<1x128x512xbf16> to vector<128x512xbf16>
    %cst_86 = arith.constant dense<0.000000e+00> : vector<16x512xf32>
    %258 = tpu.matmul %255, %257, %cst_86 {dimension_numbers = #tpu.dot_dimension_numbers<[1], [0], [0], [1], [0, 0, 1, 1], [], []>} : vector<16x128xbf16>, vector<128x512xbf16>, vector<16x512xf32> -> vector<16x512xf32>
    %259 = arith.addf %254, %258 : vector<16x512xf32>
    %260 = vector.extract_strided_slice %259 {offsets = [0, 0], sizes = [16, 128], strides = [1, 1]} : vector<16x512xf32> to vector<16x128xf32>
    %261 = arith.negf %260 : vector<16x128xf32>
    %262 = math.exp %261 : vector<16x128xf32>
    %cst_87 = arith.constant 1.000000e+00 : f32
    %263 = vector.broadcast %cst_87 : f32 to vector<16x128xf32>
    %264 = arith.addf %263, %262 : vector<16x128xf32>
    %265 = arith.divf %263, %264 : vector<16x128xf32>
    %266 = vector.extract_strided_slice %259 {offsets = [0, 128], sizes = [16, 128], strides = [1, 1]} : vector<16x512xf32> to vector<16x128xf32>
    %267 = arith.negf %266 : vector<16x128xf32>
    %268 = math.exp %267 : vector<16x128xf32>
    %cst_88 = arith.constant 1.000000e+00 : f32
    %269 = vector.broadcast %cst_88 : f32 to vector<16x128xf32>
    %270 = arith.addf %269, %268 : vector<16x128xf32>
    %271 = arith.divf %269, %270 : vector<16x128xf32>
    %272 = vector.extract_strided_slice %259 {offsets = [0, 256], sizes = [16, 128], strides = [1, 1]} : vector<16x512xf32> to vector<16x128xf32>
    %273 = math.tanh %272 : vector<16x128xf32>
    %274 = vector.extract_strided_slice %259 {offsets = [0, 384], sizes = [16, 128], strides = [1, 1]} : vector<16x512xf32> to vector<16x128xf32>
    %275 = arith.negf %274 : vector<16x128xf32>
    %276 = math.exp %275 : vector<16x128xf32>
    %cst_89 = arith.constant 1.000000e+00 : f32
    %277 = vector.broadcast %cst_89 : f32 to vector<16x128xf32>
    %278 = arith.addf %277, %276 : vector<16x128xf32>
    %279 = arith.divf %277, %278 : vector<16x128xf32>
    %280 = arith.mulf %271, %243 : vector<16x128xf32>
    %281 = arith.mulf %265, %273 : vector<16x128xf32>
    %282 = arith.addf %280, %281 : vector<16x128xf32>
    %283 = math.tanh %282 : vector<16x128xf32>
    %284 = arith.mulf %279, %283 : vector<16x128xf32>
    %285 = arith.truncf %284 : vector<16x128xf32> to vector<16x128xbf16>
    %286 = arith.index_cast %252 : i32 to index
    %c0_90 = arith.constant 0 : index
    %287 = vector.load %arg6[%286, %c0_90] : memref<128x128xbf16, #tpu.memory_space<vmem>>, vector<16x128xbf16>
    tpu.vector_store %arg6[%286, %c0_90], %285 {strides = array<i32>} : memref<128x128xbf16, #tpu.memory_space<vmem>>, vector<16x128xbf16>,
    %c7_i32_91 = arith.constant 7 : i32
    %c7_i32_92 = arith.constant 7 : i32
    %288 = arith.subi %c7_i32_92, %c7_i32_91 : i32
    %289 = arith.select %12, %288, %c7_i32_91 : i32
    %c16_i32_93 = arith.constant 16 : i32
    %290 = arith.muli %289, %c16_i32_93 : i32
    %291 = tpu.assume_multiple %290, 16 : i32
    %292 = arith.index_cast %291 : i32 to index
    %c0_94 = arith.constant 0 : index
    %293 = vector.load %arg7[%292, %c0_94] : memref<128x512xf32, #tpu.memory_space<vmem>>, vector<16x512xf32>
    %294 = arith.truncf %284 : vector<16x128xf32> to vector<16x128xbf16>
    %c0_95 = arith.constant 0 : index
    %c0_96 = arith.constant 0 : index
    %c0_97 = arith.constant 0 : index
    %295 = vector.load %arg4[%c0_95, %c0_96, %c0_97] : memref<1x128x512xbf16, #tpu.memory_space<vmem>>, vector<1x128x512xbf16>
    %296 = vector.shape_cast %295 : vector<1x128x512xbf16> to vector<128x512xbf16>
    %cst_98 = arith.constant dense<0.000000e+00> : vector<16x512xf32>
    %297 = tpu.matmul %294, %296, %cst_98 {dimension_numbers = #tpu.dot_dimension_numbers<[1], [0], [0], [1], [0, 0, 1, 1], [], []>} : vector<16x128xbf16>, vector<128x512xbf16>, vector<16x512xf32> -> vector<16x512xf32>
    %298 = arith.addf %293, %297 : vector<16x512xf32>
    %299 = vector.extract_strided_slice %298 {offsets = [0, 0], sizes = [16, 128], strides = [1, 1]} : vector<16x512xf32> to vector<16x128xf32>
    %300 = arith.negf %299 : vector<16x128xf32>
    %301 = math.exp %300 : vector<16x128xf32>
    %cst_99 = arith.constant 1.000000e+00 : f32
    %302 = vector.broadcast %cst_99 : f32 to vector<16x128xf32>
    %303 = arith.addf %302, %301 : vector<16x128xf32>
    %304 = arith.divf %302, %303 : vector<16x128xf32>
    %305 = vector.extract_strided_slice %298 {offsets = [0, 128], sizes = [16, 128], strides = [1, 1]} : vector<16x512xf32> to vector<16x128xf32>
    %306 = arith.negf %305 : vector<16x128xf32>
    %307 = math.exp %306 : vector<16x128xf32>
    %cst_100 = arith.constant 1.000000e+00 : f32
    %308 = vector.broadcast %cst_100 : f32 to vector<16x128xf32>
    %309 = arith.addf %308, %307 : vector<16x128xf32>
    %310 = arith.divf %308, %309 : vector<16x128xf32>
    %311 = vector.extract_strided_slice %298 {offsets = [0, 256], sizes = [16, 128], strides = [1, 1]} : vector<16x512xf32> to vector<16x128xf32>
    %312 = math.tanh %311 : vector<16x128xf32>
    %313 = vector.extract_strided_slice %298 {offsets = [0, 384], sizes = [16, 128], strides = [1, 1]} : vector<16x512xf32> to vector<16x128xf32>
    %314 = arith.negf %313 : vector<16x128xf32>
    %315 = math.exp %314 : vector<16x128xf32>
    %cst_101 = arith.constant 1.000000e+00 : f32
    %316 = vector.broadcast %cst_101 : f32 to vector<16x128xf32>
    %317 = arith.addf %316, %315 : vector<16x128xf32>
    %318 = arith.divf %316, %317 : vector<16x128xf32>
    %319 = arith.mulf %310, %282 : vector<16x128xf32>
    %320 = arith.mulf %304, %312 : vector<16x128xf32>
    %321 = arith.addf %319, %320 : vector<16x128xf32>
    %322 = math.tanh %321 : vector<16x128xf32>
    %323 = arith.mulf %318, %322 : vector<16x128xf32>
    %324 = arith.truncf %323 : vector<16x128xf32> to vector<16x128xbf16>
    %325 = arith.index_cast %291 : i32 to index
    %c0_102 = arith.constant 0 : index
    %326 = vector.load %arg6[%325, %c0_102] : memref<128x128xbf16, #tpu.memory_space<vmem>>, vector<16x128xbf16>
    tpu.vector_store %arg6[%325, %c0_102], %324 {strides = array<i32>} : memref<128x128xbf16, #tpu.memory_space<vmem>>, vector<16x128xbf16>,
    %c8_i32 = arith.constant 8 : i32
    %c0_103 = arith.constant 0 : index
    %c0_104 = arith.constant 0 : index
    %327 = vector.load %arg8[%c0_103, %c0_104] : memref<16x128xf32, #tpu.memory_space<vmem>>, vector<16x128xf32>
    tpu.vector_store %arg8[%c0_103, %c0_104], %323 {strides = array<i32>} : memref<16x128xf32, #tpu.memory_space<vmem>>, vector<16x128xf32>,
    %c0_105 = arith.constant 0 : index
    %c0_106 = arith.constant 0 : index
    %328 = vector.load %arg9[%c0_105, %c0_106] : memref<16x128xf32, #tpu.memory_space<vmem>>, vector<16x128xf32>
    tpu.vector_store %arg9[%c0_105, %c0_106], %321 {strides = array<i32>} : memref<16x128xf32, #tpu.memory_space<vmem>>, vector<16x128xf32>,
    return
  }
  func.func @transform_0(%arg0: i32, %arg1: i32) -> (i32, i32) {
    %c2_i32 = arith.constant 2 : i32
    %0 = arith.muli %c2_i32, %arg1 : i32
    %c0_i32 = arith.constant 0 : i32
    %1 = arith.subi %c0_i32, %0 : i32
    %2 = arith.muli %arg0, %1 : i32
    %3 = arith.addi %arg1, %2 : i32
    %c0_i32_0 = arith.constant 0 : i32
    %c0_i32_1 = arith.constant 0 : i32
    return %3, %c0_i32_0 : i32, i32
  }
  func.func @transform_1(%arg0: i32, %arg1: i32) -> (i32, i32, i32) {
    %c0_i32 = arith.constant 0 : i32
    %c0_i32_0 = arith.constant 0 : i32
    %c0_i32_1 = arith.constant 0 : i32
    return %arg0, %c0_i32, %c0_i32_0 : i32, i32, i32
  }
  func.func @transform_2(%arg0: i32, %arg1: i32) -> (i32, i32, i32) {
    %c0_i32 = arith.constant 0 : i32
    %c0_i32_0 = arith.constant 0 : i32
    %c0_i32_1 = arith.constant 0 : i32
    return %arg0, %c0_i32, %c0_i32_0 : i32, i32, i32
  }
  func.func @transform_3(%arg0: i32, %arg1: i32) -> (i32, i32, i32) {
    %c0_i32 = arith.constant 0 : i32
    %c0_i32_0 = arith.constant 0 : i32
    %c0_i32_1 = arith.constant 0 : i32
    return %arg0, %c0_i32, %c0_i32_0 : i32, i32, i32
  }
  func.func @transform_4(%arg0: i32, %arg1: i32) -> (i32, i32) {
    %c2_i32 = arith.constant 2 : i32
    %0 = arith.muli %c2_i32, %arg1 : i32
    %c0_i32 = arith.constant 0 : i32
    %1 = arith.subi %c0_i32, %0 : i32
    %2 = arith.muli %arg0, %1 : i32
    %3 = arith.addi %arg1, %2 : i32
    %c0_i32_0 = arith.constant 0 : i32
    return %3, %arg0 : i32, i32
  }
}

module attributes {stable_mosaic.version = 11 : i64} {
  func.func @_lstm_layer_kernel(%arg0: i32, %arg1: i32, %arg2: memref<128x256xbf16, #tpu.memory_space<vmem>>, %arg3: memref<1x256x512xbf16, #tpu.memory_space<vmem>>, %arg4: memref<1x128x512xbf16, #tpu.memory_space<vmem>>, %arg5: memref<1x1x512xf32, #tpu.memory_space<vmem>>, %arg6: memref<128x128xbf16, #tpu.memory_space<vmem>>, %arg7: memref<128x512xf32, #tpu.memory_space<vmem>>, %arg8: memref<16x128xf32, #tpu.memory_space<vmem>>, %arg9: memref<16x128xf32, #tpu.memory_space<vmem>>) attributes {dimension_semantics = [#tpu.dimension_semantics<parallel>, #tpu.dimension_semantics<arbitrary>], iteration_bounds = array<i64: 2, 1>, scalar_prefetch = 0 : i64, scratch_operands = 3 : i64, tpu.core_type = #tpu.core_type<tc>, window_params = [{transform_indices = @transform_0, window_bounds = array<i64: 128, 256>}, {transform_indices = @transform_1, window_bounds = array<i64: 1, 256, 512>}, {transform_indices = @transform_2, window_bounds = array<i64: 1, 128, 512>}, {transform_indices = @transform_3, window_bounds = array<i64: 1, 1, 512>}, {transform_indices = @transform_4, window_bounds = array<i64: 128, 128>}]} {
    %c0_i32 = arith.constant 0 : i32
    %0 = arith.cmpi eq, %arg1, %c0_i32 : i32
    %1 = arith.extui %0 : i1 to i32
    %c0_i32_0 = arith.constant 0 : i32
    %2 = arith.cmpi ne, %1, %c0_i32_0 : i32
    scf.if %2 {
      %cst_107 = arith.constant 0.000000e+00 : f32
      %329 = vector.broadcast %cst_107 : f32 to vector<16x128xf32>
      %c0_108 = arith.constant 0 : index
      %c0_109 = arith.constant 0 : index
      %330 = vector.load %arg8[%c0_108, %c0_109] : memref<16x128xf32, #tpu.memory_space<vmem>>, vector<16x128xf32>
      tpu.vector_store %arg8[%c0_108, %c0_109], %329 {strides = array<i32>} : memref<16x128xf32, #tpu.memory_space<vmem>>, vector<16x128xf32>,
      %cst_110 = arith.constant 0.000000e+00 : f32
      %331 = vector.broadcast %cst_110 : f32 to vector<16x128xf32>
      %c0_111 = arith.constant 0 : index
      %c0_112 = arith.constant 0 : index
      %332 = vector.load %arg9[%c0_111, %c0_112] : memref<16x128xf32, #tpu.memory_space<vmem>>, vector<16x128xf32>
      tpu.vector_store %arg9[%c0_111, %c0_112], %331 {strides = array<i32>} : memref<16x128xf32, #tpu.memory_space<vmem>>, vector<16x128xf32>,
    } else {
    }
    %c0 = arith.constant 0 : index
    %c0_1 = arith.constant 0 : index
    %3 = vector.load %arg2[%c0, %c0_1] : memref<128x256xbf16, #tpu.memory_space<vmem>>, vector<128x256xbf16>
    %c0_2 = arith.constant 0 : index
    %c0_3 = arith.constant 0 : index
    %c0_4 = arith.constant 0 : index
    %4 = vector.load %arg3[%c0_2, %c0_3, %c0_4] : memref<1x256x512xbf16, #tpu.memory_space<vmem>>, vector<1x256x512xbf16>
    %5 = vector.shape_cast %4 : vector<1x256x512xbf16> to vector<256x512xbf16>
    %cst = arith.constant dense<0.000000e+00> : vector<128x512xf32>
    %6 = tpu.matmul %3, %5, %cst {dimension_numbers = #tpu.dot_dimension_numbers<[1], [0], [0], [1], [0, 0, 1, 1], [], []>} : vector<128x256xbf16>, vector<256x512xbf16>, vector<128x512xf32> -> vector<128x512xf32>
    %c0_5 = arith.constant 0 : index
    %c0_6 = arith.constant 0 : index
    %c0_7 = arith.constant 0 : index
    %7 = vector.load %arg5[%c0_5, %c0_6, %c0_7] : memref<1x1x512xf32, #tpu.memory_space<vmem>>, vector<1x1x512xf32>
    %8 = vector.shape_cast %7 : vector<1x1x512xf32> to vector<1x512xf32>
    %9 = vector.broadcast %8 : vector<1x512xf32> to vector<128x512xf32>
    %10 = arith.addf %6, %9 : vector<128x512xf32>
    %c0_8 = arith.constant 0 : index
    %c0_9 = arith.constant 0 : index
    %11 = vector.load %arg7[%c0_8, %c0_9] : memref<128x512xf32, #tpu.memory_space<vmem>>, vector<128x512xf32>
    tpu.vector_store %arg7[%c0_8, %c0_9], %10 {strides = array<i32>} : memref<128x512xf32, #tpu.memory_space<vmem>>, vector<128x512xf32>,
    %c0_i32_10 = arith.constant 0 : i32
    %12 = arith.cmpi ne, %arg0, %c0_i32_10 : i32
    %c0_11 = arith.constant 0 : index
    %c0_12 = arith.constant 0 : index
    %13 = vector.load %arg8[%c0_11, %c0_12] : memref<16x128xf32, #tpu.memory_space<vmem>>, vector<16x128xf32>
    %c0_13 = arith.constant 0 : index
    %c0_14 = arith.constant 0 : index
    %14 = vector.load %arg9[%c0_13, %c0_14] : memref<16x128xf32, #tpu.memory_space<vmem>>, vector<16x128xf32>
    %c0_i32_15 = arith.constant 0 : i32
    %c7_i32 = arith.constant 7 : i32
    %15 = arith.subi %c7_i32, %c0_i32_15 : i32
    %16 = arith.select %12, %15, %c0_i32_15 : i32
    %c16_i32 = arith.constant 16 : i32
    %17 = arith.muli %16, %c16_i32 : i32
    %18 = tpu.assume_multiple %17, 16 : i32
    %19 = arith.index_cast %18 : i32 to index
    %c0_16 = arith.constant 0 : index
    %20 = vector.load %arg7[%19, %c0_16] : memref<128x512xf32, #tpu.memory_space<vmem>>, vector<16x512xf32>
    %21 = arith.truncf %13 : vector<16x128xf32> to vector<16x128xbf16>
    %c0_17 = arith.constant 0 : index
    %c0_18 = arith.constant 0 : index
    %c0_19 = arith.constant 0 : index
    %22 = vector.load %arg4[%c0_17, %c0_18, %c0_19] : memref<1x128x512xbf16, #tpu.memory_space<vmem>>, vector<1x128x512xbf16>
    %23 = vector.shape_cast %22 : vector<1x128x512xbf16> to vector<128x512xbf16>
    %cst_20 = arith.constant dense<0.000000e+00> : vector<16x512xf32>
    %24 = tpu.matmul %21, %23, %cst_20 {dimension_numbers = #tpu.dot_dimension_numbers<[1], [0], [0], [1], [0, 0, 1, 1], [], []>} : vector<16x128xbf16>, vector<128x512xbf16>, vector<16x512xf32> -> vector<16x512xf32>
    %25 = arith.addf %20, %24 : vector<16x512xf32>
    %26 = vector.extract_strided_slice %25 {offsets = [0, 0], sizes = [16, 128], strides = [1, 1]} : vector<16x512xf32> to vector<16x128xf32>
    %27 = arith.negf %26 : vector<16x128xf32>
    %28 = math.exp %27 : vector<16x128xf32>
    %cst_21 = arith.constant 1.000000e+00 : f32
    %29 = vector.broadcast %cst_21 : f32 to vector<16x128xf32>
    %30 = arith.addf %29, %28 : vector<16x128xf32>
    %31 = arith.divf %29, %30 : vector<16x128xf32>
    %32 = vector.extract_strided_slice %25 {offsets = [0, 128], sizes = [16, 128], strides = [1, 1]} : vector<16x512xf32> to vector<16x128xf32>
    %33 = arith.negf %32 : vector<16x128xf32>
    %34 = math.exp %33 : vector<16x128xf32>
    %cst_22 = arith.constant 1.000000e+00 : f32
    %35 = vector.broadcast %cst_22 : f32 to vector<16x128xf32>
    %36 = arith.addf %35, %34 : vector<16x128xf32>
    %37 = arith.divf %35, %36 : vector<16x128xf32>
    %38 = vector.extract_strided_slice %25 {offsets = [0, 256], sizes = [16, 128], strides = [1, 1]} : vector<16x512xf32> to vector<16x128xf32>
    %39 = math.tanh %38 : vector<16x128xf32>
    %40 = vector.extract_strided_slice %25 {offsets = [0, 384], sizes = [16, 128], strides = [1, 1]} : vector<16x512xf32> to vector<16x128xf32>
    %41 = arith.negf %40 : vector<16x128xf32>
    %42 = math.exp %41 : vector<16x128xf32>
    %cst_23 = arith.constant 1.000000e+00 : f32
    %43 = vector.broadcast %cst_23 : f32 to vector<16x128xf32>
    %44 = arith.addf %43, %42 : vector<16x128xf32>
    %45 = arith.divf %43, %44 : vector<16x128xf32>
    %46 = arith.mulf %37, %14 : vector<16x128xf32>
    %47 = arith.mulf %31, %39 : vector<16x128xf32>
    %48 = arith.addf %46, %47 : vector<16x128xf32>
    %49 = math.tanh %48 : vector<16x128xf32>
    %50 = arith.mulf %45, %49 : vector<16x128xf32>
    %51 = arith.truncf %50 : vector<16x128xf32> to vector<16x128xbf16>
    %52 = arith.index_cast %18 : i32 to index
    %c0_24 = arith.constant 0 : index
    %53 = vector.load %arg6[%52, %c0_24] : memref<128x128xbf16, #tpu.memory_space<vmem>>, vector<16x128xbf16>
    tpu.vector_store %arg6[%52, %c0_24], %51 {strides = array<i32>} : memref<128x128xbf16, #tpu.memory_space<vmem>>, vector<16x128xbf16>,
    %c1_i32 = arith.constant 1 : i32
    %c7_i32_25 = arith.constant 7 : i32
    %54 = arith.subi %c7_i32_25, %c1_i32 : i32
    %55 = arith.select %12, %54, %c1_i32 : i32
    %c16_i32_26 = arith.constant 16 : i32
    %56 = arith.muli %55, %c16_i32_26 : i32
    %57 = tpu.assume_multiple %56, 16 : i32
    %58 = arith.index_cast %57 : i32 to index
    %c0_27 = arith.constant 0 : index
    %59 = vector.load %arg7[%58, %c0_27] : memref<128x512xf32, #tpu.memory_space<vmem>>, vector<16x512xf32>
    %60 = arith.truncf %50 : vector<16x128xf32> to vector<16x128xbf16>
    %c0_28 = arith.constant 0 : index
    %c0_29 = arith.constant 0 : index
    %c0_30 = arith.constant 0 : index
    %61 = vector.load %arg4[%c0_28, %c0_29, %c0_30] : memref<1x128x512xbf16, #tpu.memory_space<vmem>>, vector<1x128x512xbf16>
    %62 = vector.shape_cast %61 : vector<1x128x512xbf16> to vector<128x512xbf16>
    %cst_31 = arith.constant dense<0.000000e+00> : vector<16x512xf32>
    %63 = tpu.matmul %60, %62, %cst_31 {dimension_numbers = #tpu.dot_dimension_numbers<[1], [0], [0], [1], [0, 0, 1, 1], [], []>} : vector<16x128xbf16>, vector<128x512xbf16>, vector<16x512xf32> -> vector<16x512xf32>
    %64 = arith.addf %59, %63 : vector<16x512xf32>
    %65 = vector.extract_strided_slice %64 {offsets = [0, 0], sizes = [16, 128], strides = [1, 1]} : vector<16x512xf32> to vector<16x128xf32>
    %66 = arith.negf %65 : vector<16x128xf32>
    %67 = math.exp %66 : vector<16x128xf32>
    %cst_32 = arith.constant 1.000000e+00 : f32
    %68 = vector.broadcast %cst_32 : f32 to vector<16x128xf32>
    %69 = arith.addf %68, %67 : vector<16x128xf32>
    %70 = arith.divf %68, %69 : vector<16x128xf32>
    %71 = vector.extract_strided_slice %64 {offsets = [0, 128], sizes = [16, 128], strides = [1, 1]} : vector<16x512xf32> to vector<16x128xf32>
    %72 = arith.negf %71 : vector<16x128xf32>
    %73 = math.exp %72 : vector<16x128xf32>
    %cst_33 = arith.constant 1.000000e+00 : f32
    %74 = vector.broadcast %cst_33 : f32 to vector<16x128xf32>
    %75 = arith.addf %74, %73 : vector<16x128xf32>
    %76 = arith.divf %74, %75 : vector<16x128xf32>
    %77 = vector.extract_strided_slice %64 {offsets = [0, 256], sizes = [16, 128], strides = [1, 1]} : vector<16x512xf32> to vector<16x128xf32>
    %78 = math.tanh %77 : vector<16x128xf32>
    %79 = vector.extract_strided_slice %64 {offsets = [0, 384], sizes = [16, 128], strides = [1, 1]} : vector<16x512xf32> to vector<16x128xf32>
    %80 = arith.negf %79 : vector<16x128xf32>
    %81 = math.exp %80 : vector<16x128xf32>
    %cst_34 = arith.constant 1.000000e+00 : f32
    %82 = vector.broadcast %cst_34 : f32 to vector<16x128xf32>
    %83 = arith.addf %82, %81 : vector<16x128xf32>
    %84 = arith.divf %82, %83 : vector<16x128xf32>
    %85 = arith.mulf %76, %48 : vector<16x128xf32>
    %86 = arith.mulf %70, %78 : vector<16x128xf32>
    %87 = arith.addf %85, %86 : vector<16x128xf32>
    %88 = math.tanh %87 : vector<16x128xf32>
    %89 = arith.mulf %84, %88 : vector<16x128xf32>
    %90 = arith.truncf %89 : vector<16x128xf32> to vector<16x128xbf16>
    %91 = arith.index_cast %57 : i32 to index
    %c0_35 = arith.constant 0 : index
    %92 = vector.load %arg6[%91, %c0_35] : memref<128x128xbf16, #tpu.memory_space<vmem>>, vector<16x128xbf16>
    tpu.vector_store %arg6[%91, %c0_35], %90 {strides = array<i32>} : memref<128x128xbf16, #tpu.memory_space<vmem>>, vector<16x128xbf16>,
    %c2_i32 = arith.constant 2 : i32
    %c7_i32_36 = arith.constant 7 : i32
    %93 = arith.subi %c7_i32_36, %c2_i32 : i32
    %94 = arith.select %12, %93, %c2_i32 : i32
    %c16_i32_37 = arith.constant 16 : i32
    %95 = arith.muli %94, %c16_i32_37 : i32
    %96 = tpu.assume_multiple %95, 16 : i32
    %97 = arith.index_cast %96 : i32 to index
    %c0_38 = arith.constant 0 : index
    %98 = vector.load %arg7[%97, %c0_38] : memref<128x512xf32, #tpu.memory_space<vmem>>, vector<16x512xf32>
    %99 = arith.truncf %89 : vector<16x128xf32> to vector<16x128xbf16>
    %c0_39 = arith.constant 0 : index
    %c0_40 = arith.constant 0 : index
    %c0_41 = arith.constant 0 : index
    %100 = vector.load %arg4[%c0_39, %c0_40, %c0_41] : memref<1x128x512xbf16, #tpu.memory_space<vmem>>, vector<1x128x512xbf16>
    %101 = vector.shape_cast %100 : vector<1x128x512xbf16> to vector<128x512xbf16>
    %cst_42 = arith.constant dense<0.000000e+00> : vector<16x512xf32>
    %102 = tpu.matmul %99, %101, %cst_42 {dimension_numbers = #tpu.dot_dimension_numbers<[1], [0], [0], [1], [0, 0, 1, 1], [], []>} : vector<16x128xbf16>, vector<128x512xbf16>, vector<16x512xf32> -> vector<16x512xf32>
    %103 = arith.addf %98, %102 : vector<16x512xf32>
    %104 = vector.extract_strided_slice %103 {offsets = [0, 0], sizes = [16, 128], strides = [1, 1]} : vector<16x512xf32> to vector<16x128xf32>
    %105 = arith.negf %104 : vector<16x128xf32>
    %106 = math.exp %105 : vector<16x128xf32>
    %cst_43 = arith.constant 1.000000e+00 : f32
    %107 = vector.broadcast %cst_43 : f32 to vector<16x128xf32>
    %108 = arith.addf %107, %106 : vector<16x128xf32>
    %109 = arith.divf %107, %108 : vector<16x128xf32>
    %110 = vector.extract_strided_slice %103 {offsets = [0, 128], sizes = [16, 128], strides = [1, 1]} : vector<16x512xf32> to vector<16x128xf32>
    %111 = arith.negf %110 : vector<16x128xf32>
    %112 = math.exp %111 : vector<16x128xf32>
    %cst_44 = arith.constant 1.000000e+00 : f32
    %113 = vector.broadcast %cst_44 : f32 to vector<16x128xf32>
    %114 = arith.addf %113, %112 : vector<16x128xf32>
    %115 = arith.divf %113, %114 : vector<16x128xf32>
    %116 = vector.extract_strided_slice %103 {offsets = [0, 256], sizes = [16, 128], strides = [1, 1]} : vector<16x512xf32> to vector<16x128xf32>
    %117 = math.tanh %116 : vector<16x128xf32>
    %118 = vector.extract_strided_slice %103 {offsets = [0, 384], sizes = [16, 128], strides = [1, 1]} : vector<16x512xf32> to vector<16x128xf32>
    %119 = arith.negf %118 : vector<16x128xf32>
    %120 = math.exp %119 : vector<16x128xf32>
    %cst_45 = arith.constant 1.000000e+00 : f32
    %121 = vector.broadcast %cst_45 : f32 to vector<16x128xf32>
    %122 = arith.addf %121, %120 : vector<16x128xf32>
    %123 = arith.divf %121, %122 : vector<16x128xf32>
    %124 = arith.mulf %115, %87 : vector<16x128xf32>
    %125 = arith.mulf %109, %117 : vector<16x128xf32>
    %126 = arith.addf %124, %125 : vector<16x128xf32>
    %127 = math.tanh %126 : vector<16x128xf32>
    %128 = arith.mulf %123, %127 : vector<16x128xf32>
    %129 = arith.truncf %128 : vector<16x128xf32> to vector<16x128xbf16>
    %130 = arith.index_cast %96 : i32 to index
    %c0_46 = arith.constant 0 : index
    %131 = vector.load %arg6[%130, %c0_46] : memref<128x128xbf16, #tpu.memory_space<vmem>>, vector<16x128xbf16>
    tpu.vector_store %arg6[%130, %c0_46], %129 {strides = array<i32>} : memref<128x128xbf16, #tpu.memory_space<vmem>>, vector<16x128xbf16>,
    %c3_i32 = arith.constant 3 : i32
    %c7_i32_47 = arith.constant 7 : i32
    %132 = arith.subi %c7_i32_47, %c3_i32 : i32
    %133 = arith.select %12, %132, %c3_i32 : i32
    %c16_i32_48 = arith.constant 16 : i32
    %134 = arith.muli %133, %c16_i32_48 : i32
    %135 = tpu.assume_multiple %134, 16 : i32
    %136 = arith.index_cast %135 : i32 to index
    %c0_49 = arith.constant 0 : index
    %137 = vector.load %arg7[%136, %c0_49] : memref<128x512xf32, #tpu.memory_space<vmem>>, vector<16x512xf32>
    %138 = arith.truncf %128 : vector<16x128xf32> to vector<16x128xbf16>
    %c0_50 = arith.constant 0 : index
    %c0_51 = arith.constant 0 : index
    %c0_52 = arith.constant 0 : index
    %139 = vector.load %arg4[%c0_50, %c0_51, %c0_52] : memref<1x128x512xbf16, #tpu.memory_space<vmem>>, vector<1x128x512xbf16>
    %140 = vector.shape_cast %139 : vector<1x128x512xbf16> to vector<128x512xbf16>
    %cst_53 = arith.constant dense<0.000000e+00> : vector<16x512xf32>
    %141 = tpu.matmul %138, %140, %cst_53 {dimension_numbers = #tpu.dot_dimension_numbers<[1], [0], [0], [1], [0, 0, 1, 1], [], []>} : vector<16x128xbf16>, vector<128x512xbf16>, vector<16x512xf32> -> vector<16x512xf32>
    %142 = arith.addf %137, %141 : vector<16x512xf32>
    %143 = vector.extract_strided_slice %142 {offsets = [0, 0], sizes = [16, 128], strides = [1, 1]} : vector<16x512xf32> to vector<16x128xf32>
    %144 = arith.negf %143 : vector<16x128xf32>
    %145 = math.exp %144 : vector<16x128xf32>
    %cst_54 = arith.constant 1.000000e+00 : f32
    %146 = vector.broadcast %cst_54 : f32 to vector<16x128xf32>
    %147 = arith.addf %146, %145 : vector<16x128xf32>
    %148 = arith.divf %146, %147 : vector<16x128xf32>
    %149 = vector.extract_strided_slice %142 {offsets = [0, 128], sizes = [16, 128], strides = [1, 1]} : vector<16x512xf32> to vector<16x128xf32>
    %150 = arith.negf %149 : vector<16x128xf32>
    %151 = math.exp %150 : vector<16x128xf32>
    %cst_55 = arith.constant 1.000000e+00 : f32
    %152 = vector.broadcast %cst_55 : f32 to vector<16x128xf32>
    %153 = arith.addf %152, %151 : vector<16x128xf32>
    %154 = arith.divf %152, %153 : vector<16x128xf32>
    %155 = vector.extract_strided_slice %142 {offsets = [0, 256], sizes = [16, 128], strides = [1, 1]} : vector<16x512xf32> to vector<16x128xf32>
    %156 = math.tanh %155 : vector<16x128xf32>
    %157 = vector.extract_strided_slice %142 {offsets = [0, 384], sizes = [16, 128], strides = [1, 1]} : vector<16x512xf32> to vector<16x128xf32>
    %158 = arith.negf %157 : vector<16x128xf32>
    %159 = math.exp %158 : vector<16x128xf32>
    %cst_56 = arith.constant 1.000000e+00 : f32
    %160 = vector.broadcast %cst_56 : f32 to vector<16x128xf32>
    %161 = arith.addf %160, %159 : vector<16x128xf32>
    %162 = arith.divf %160, %161 : vector<16x128xf32>
    %163 = arith.mulf %154, %126 : vector<16x128xf32>
    %164 = arith.mulf %148, %156 : vector<16x128xf32>
    %165 = arith.addf %163, %164 : vector<16x128xf32>
    %166 = math.tanh %165 : vector<16x128xf32>
    %167 = arith.mulf %162, %166 : vector<16x128xf32>
    %168 = arith.truncf %167 : vector<16x128xf32> to vector<16x128xbf16>
    %169 = arith.index_cast %135 : i32 to index
    %c0_57 = arith.constant 0 : index
    %170 = vector.load %arg6[%169, %c0_57] : memref<128x128xbf16, #tpu.memory_space<vmem>>, vector<16x128xbf16>
    tpu.vector_store %arg6[%169, %c0_57], %168 {strides = array<i32>} : memref<128x128xbf16, #tpu.memory_space<vmem>>, vector<16x128xbf16>,
    %c4_i32 = arith.constant 4 : i32
    %c7_i32_58 = arith.constant 7 : i32
    %171 = arith.subi %c7_i32_58, %c4_i32 : i32
    %172 = arith.select %12, %171, %c4_i32 : i32
    %c16_i32_59 = arith.constant 16 : i32
    %173 = arith.muli %172, %c16_i32_59 : i32
    %174 = tpu.assume_multiple %173, 16 : i32
    %175 = arith.index_cast %174 : i32 to index
    %c0_60 = arith.constant 0 : index
    %176 = vector.load %arg7[%175, %c0_60] : memref<128x512xf32, #tpu.memory_space<vmem>>, vector<16x512xf32>
    %177 = arith.truncf %167 : vector<16x128xf32> to vector<16x128xbf16>
    %c0_61 = arith.constant 0 : index
    %c0_62 = arith.constant 0 : index
    %c0_63 = arith.constant 0 : index
    %178 = vector.load %arg4[%c0_61, %c0_62, %c0_63] : memref<1x128x512xbf16, #tpu.memory_space<vmem>>, vector<1x128x512xbf16>
    %179 = vector.shape_cast %178 : vector<1x128x512xbf16> to vector<128x512xbf16>
    %cst_64 = arith.constant dense<0.000000e+00> : vector<16x512xf32>
    %180 = tpu.matmul %177, %179, %cst_64 {dimension_numbers = #tpu.dot_dimension_numbers<[1], [0], [0], [1], [0, 0, 1, 1], [], []>} : vector<16x128xbf16>, vector<128x512xbf16>, vector<16x512xf32> -> vector<16x512xf32>
    %181 = arith.addf %176, %180 : vector<16x512xf32>
    %182 = vector.extract_strided_slice %181 {offsets = [0, 0], sizes = [16, 128], strides = [1, 1]} : vector<16x512xf32> to vector<16x128xf32>
    %183 = arith.negf %182 : vector<16x128xf32>
    %184 = math.exp %183 : vector<16x128xf32>
    %cst_65 = arith.constant 1.000000e+00 : f32
    %185 = vector.broadcast %cst_65 : f32 to vector<16x128xf32>
    %186 = arith.addf %185, %184 : vector<16x128xf32>
    %187 = arith.divf %185, %186 : vector<16x128xf32>
    %188 = vector.extract_strided_slice %181 {offsets = [0, 128], sizes = [16, 128], strides = [1, 1]} : vector<16x512xf32> to vector<16x128xf32>
    %189 = arith.negf %188 : vector<16x128xf32>
    %190 = math.exp %189 : vector<16x128xf32>
    %cst_66 = arith.constant 1.000000e+00 : f32
    %191 = vector.broadcast %cst_66 : f32 to vector<16x128xf32>
    %192 = arith.addf %191, %190 : vector<16x128xf32>
    %193 = arith.divf %191, %192 : vector<16x128xf32>
    %194 = vector.extract_strided_slice %181 {offsets = [0, 256], sizes = [16, 128], strides = [1, 1]} : vector<16x512xf32> to vector<16x128xf32>
    %195 = math.tanh %194 : vector<16x128xf32>
    %196 = vector.extract_strided_slice %181 {offsets = [0, 384], sizes = [16, 128], strides = [1, 1]} : vector<16x512xf32> to vector<16x128xf32>
    %197 = arith.negf %196 : vector<16x128xf32>
    %198 = math.exp %197 : vector<16x128xf32>
    %cst_67 = arith.constant 1.000000e+00 : f32
    %199 = vector.broadcast %cst_67 : f32 to vector<16x128xf32>
    %200 = arith.addf %199, %198 : vector<16x128xf32>
    %201 = arith.divf %199, %200 : vector<16x128xf32>
    %202 = arith.mulf %193, %165 : vector<16x128xf32>
    %203 = arith.mulf %187, %195 : vector<16x128xf32>
    %204 = arith.addf %202, %203 : vector<16x128xf32>
    %205 = math.tanh %204 : vector<16x128xf32>
    %206 = arith.mulf %201, %205 : vector<16x128xf32>
    %207 = arith.truncf %206 : vector<16x128xf32> to vector<16x128xbf16>
    %208 = arith.index_cast %174 : i32 to index
    %c0_68 = arith.constant 0 : index
    %209 = vector.load %arg6[%208, %c0_68] : memref<128x128xbf16, #tpu.memory_space<vmem>>, vector<16x128xbf16>
    tpu.vector_store %arg6[%208, %c0_68], %207 {strides = array<i32>} : memref<128x128xbf16, #tpu.memory_space<vmem>>, vector<16x128xbf16>,
    %c5_i32 = arith.constant 5 : i32
    %c7_i32_69 = arith.constant 7 : i32
    %210 = arith.subi %c7_i32_69, %c5_i32 : i32
    %211 = arith.select %12, %210, %c5_i32 : i32
    %c16_i32_70 = arith.constant 16 : i32
    %212 = arith.muli %211, %c16_i32_70 : i32
    %213 = tpu.assume_multiple %212, 16 : i32
    %214 = arith.index_cast %213 : i32 to index
    %c0_71 = arith.constant 0 : index
    %215 = vector.load %arg7[%214, %c0_71] : memref<128x512xf32, #tpu.memory_space<vmem>>, vector<16x512xf32>
    %216 = arith.truncf %206 : vector<16x128xf32> to vector<16x128xbf16>
    %c0_72 = arith.constant 0 : index
    %c0_73 = arith.constant 0 : index
    %c0_74 = arith.constant 0 : index
    %217 = vector.load %arg4[%c0_72, %c0_73, %c0_74] : memref<1x128x512xbf16, #tpu.memory_space<vmem>>, vector<1x128x512xbf16>
    %218 = vector.shape_cast %217 : vector<1x128x512xbf16> to vector<128x512xbf16>
    %cst_75 = arith.constant dense<0.000000e+00> : vector<16x512xf32>
    %219 = tpu.matmul %216, %218, %cst_75 {dimension_numbers = #tpu.dot_dimension_numbers<[1], [0], [0], [1], [0, 0, 1, 1], [], []>} : vector<16x128xbf16>, vector<128x512xbf16>, vector<16x512xf32> -> vector<16x512xf32>
    %220 = arith.addf %215, %219 : vector<16x512xf32>
    %221 = vector.extract_strided_slice %220 {offsets = [0, 0], sizes = [16, 128], strides = [1, 1]} : vector<16x512xf32> to vector<16x128xf32>
    %222 = arith.negf %221 : vector<16x128xf32>
    %223 = math.exp %222 : vector<16x128xf32>
    %cst_76 = arith.constant 1.000000e+00 : f32
    %224 = vector.broadcast %cst_76 : f32 to vector<16x128xf32>
    %225 = arith.addf %224, %223 : vector<16x128xf32>
    %226 = arith.divf %224, %225 : vector<16x128xf32>
    %227 = vector.extract_strided_slice %220 {offsets = [0, 128], sizes = [16, 128], strides = [1, 1]} : vector<16x512xf32> to vector<16x128xf32>
    %228 = arith.negf %227 : vector<16x128xf32>
    %229 = math.exp %228 : vector<16x128xf32>
    %cst_77 = arith.constant 1.000000e+00 : f32
    %230 = vector.broadcast %cst_77 : f32 to vector<16x128xf32>
    %231 = arith.addf %230, %229 : vector<16x128xf32>
    %232 = arith.divf %230, %231 : vector<16x128xf32>
    %233 = vector.extract_strided_slice %220 {offsets = [0, 256], sizes = [16, 128], strides = [1, 1]} : vector<16x512xf32> to vector<16x128xf32>
    %234 = math.tanh %233 : vector<16x128xf32>
    %235 = vector.extract_strided_slice %220 {offsets = [0, 384], sizes = [16, 128], strides = [1, 1]} : vector<16x512xf32> to vector<16x128xf32>
    %236 = arith.negf %235 : vector<16x128xf32>
    %237 = math.exp %236 : vector<16x128xf32>
    %cst_78 = arith.constant 1.000000e+00 : f32
    %238 = vector.broadcast %cst_78 : f32 to vector<16x128xf32>
    %239 = arith.addf %238, %237 : vector<16x128xf32>
    %240 = arith.divf %238, %239 : vector<16x128xf32>
    %241 = arith.mulf %232, %204 : vector<16x128xf32>
    %242 = arith.mulf %226, %234 : vector<16x128xf32>
    %243 = arith.addf %241, %242 : vector<16x128xf32>
    %244 = math.tanh %243 : vector<16x128xf32>
    %245 = arith.mulf %240, %244 : vector<16x128xf32>
    %246 = arith.truncf %245 : vector<16x128xf32> to vector<16x128xbf16>
    %247 = arith.index_cast %213 : i32 to index
    %c0_79 = arith.constant 0 : index
    %248 = vector.load %arg6[%247, %c0_79] : memref<128x128xbf16, #tpu.memory_space<vmem>>, vector<16x128xbf16>
    tpu.vector_store %arg6[%247, %c0_79], %246 {strides = array<i32>} : memref<128x128xbf16, #tpu.memory_space<vmem>>, vector<16x128xbf16>,
    %c6_i32 = arith.constant 6 : i32
    %c7_i32_80 = arith.constant 7 : i32
    %249 = arith.subi %c7_i32_80, %c6_i32 : i32
    %250 = arith.select %12, %249, %c6_i32 : i32
    %c16_i32_81 = arith.constant 16 : i32
    %251 = arith.muli %250, %c16_i32_81 : i32
    %252 = tpu.assume_multiple %251, 16 : i32
    %253 = arith.index_cast %252 : i32 to index
    %c0_82 = arith.constant 0 : index
    %254 = vector.load %arg7[%253, %c0_82] : memref<128x512xf32, #tpu.memory_space<vmem>>, vector<16x512xf32>
    %255 = arith.truncf %245 : vector<16x128xf32> to vector<16x128xbf16>
    %c0_83 = arith.constant 0 : index
    %c0_84 = arith.constant 0 : index
    %c0_85 = arith.constant 0 : index
    %256 = vector.load %arg4[%c0_83, %c0_84, %c0_85] : memref<1x128x512xbf16, #tpu.memory_space<vmem>>, vector<1x128x512xbf16>
    %257 = vector.shape_cast %256 : vector<1x128x512xbf16> to vector<128x512xbf16>
    %cst_86 = arith.constant dense<0.000000e+00> : vector<16x512xf32>
    %258 = tpu.matmul %255, %257, %cst_86 {dimension_numbers = #tpu.dot_dimension_numbers<[1], [0], [0], [1], [0, 0, 1, 1], [], []>} : vector<16x128xbf16>, vector<128x512xbf16>, vector<16x512xf32> -> vector<16x512xf32>
    %259 = arith.addf %254, %258 : vector<16x512xf32>
    %260 = vector.extract_strided_slice %259 {offsets = [0, 0], sizes = [16, 128], strides = [1, 1]} : vector<16x512xf32> to vector<16x128xf32>
    %261 = arith.negf %260 : vector<16x128xf32>
    %262 = math.exp %261 : vector<16x128xf32>
    %cst_87 = arith.constant 1.000000e+00 : f32
    %263 = vector.broadcast %cst_87 : f32 to vector<16x128xf32>
    %264 = arith.addf %263, %262 : vector<16x128xf32>
    %265 = arith.divf %263, %264 : vector<16x128xf32>
    %266 = vector.extract_strided_slice %259 {offsets = [0, 128], sizes = [16, 128], strides = [1, 1]} : vector<16x512xf32> to vector<16x128xf32>
    %267 = arith.negf %266 : vector<16x128xf32>
    %268 = math.exp %267 : vector<16x128xf32>
    %cst_88 = arith.constant 1.000000e+00 : f32
    %269 = vector.broadcast %cst_88 : f32 to vector<16x128xf32>
    %270 = arith.addf %269, %268 : vector<16x128xf32>
    %271 = arith.divf %269, %270 : vector<16x128xf32>
    %272 = vector.extract_strided_slice %259 {offsets = [0, 256], sizes = [16, 128], strides = [1, 1]} : vector<16x512xf32> to vector<16x128xf32>
    %273 = math.tanh %272 : vector<16x128xf32>
    %274 = vector.extract_strided_slice %259 {offsets = [0, 384], sizes = [16, 128], strides = [1, 1]} : vector<16x512xf32> to vector<16x128xf32>
    %275 = arith.negf %274 : vector<16x128xf32>
    %276 = math.exp %275 : vector<16x128xf32>
    %cst_89 = arith.constant 1.000000e+00 : f32
    %277 = vector.broadcast %cst_89 : f32 to vector<16x128xf32>
    %278 = arith.addf %277, %276 : vector<16x128xf32>
    %279 = arith.divf %277, %278 : vector<16x128xf32>
    %280 = arith.mulf %271, %243 : vector<16x128xf32>
    %281 = arith.mulf %265, %273 : vector<16x128xf32>
    %282 = arith.addf %280, %281 : vector<16x128xf32>
    %283 = math.tanh %282 : vector<16x128xf32>
    %284 = arith.mulf %279, %283 : vector<16x128xf32>
    %285 = arith.truncf %284 : vector<16x128xf32> to vector<16x128xbf16>
    %286 = arith.index_cast %252 : i32 to index
    %c0_90 = arith.constant 0 : index
    %287 = vector.load %arg6[%286, %c0_90] : memref<128x128xbf16, #tpu.memory_space<vmem>>, vector<16x128xbf16>
    tpu.vector_store %arg6[%286, %c0_90], %285 {strides = array<i32>} : memref<128x128xbf16, #tpu.memory_space<vmem>>, vector<16x128xbf16>,
    %c7_i32_91 = arith.constant 7 : i32
    %c7_i32_92 = arith.constant 7 : i32
    %288 = arith.subi %c7_i32_92, %c7_i32_91 : i32
    %289 = arith.select %12, %288, %c7_i32_91 : i32
    %c16_i32_93 = arith.constant 16 : i32
    %290 = arith.muli %289, %c16_i32_93 : i32
    %291 = tpu.assume_multiple %290, 16 : i32
    %292 = arith.index_cast %291 : i32 to index
    %c0_94 = arith.constant 0 : index
    %293 = vector.load %arg7[%292, %c0_94] : memref<128x512xf32, #tpu.memory_space<vmem>>, vector<16x512xf32>
    %294 = arith.truncf %284 : vector<16x128xf32> to vector<16x128xbf16>
    %c0_95 = arith.constant 0 : index
    %c0_96 = arith.constant 0 : index
    %c0_97 = arith.constant 0 : index
    %295 = vector.load %arg4[%c0_95, %c0_96, %c0_97] : memref<1x128x512xbf16, #tpu.memory_space<vmem>>, vector<1x128x512xbf16>
    %296 = vector.shape_cast %295 : vector<1x128x512xbf16> to vector<128x512xbf16>
    %cst_98 = arith.constant dense<0.000000e+00> : vector<16x512xf32>
    %297 = tpu.matmul %294, %296, %cst_98 {dimension_numbers = #tpu.dot_dimension_numbers<[1], [0], [0], [1], [0, 0, 1, 1], [], []>} : vector<16x128xbf16>, vector<128x512xbf16>, vector<16x512xf32> -> vector<16x512xf32>
    %298 = arith.addf %293, %297 : vector<16x512xf32>
    %299 = vector.extract_strided_slice %298 {offsets = [0, 0], sizes = [16, 128], strides = [1, 1]} : vector<16x512xf32> to vector<16x128xf32>
    %300 = arith.negf %299 : vector<16x128xf32>
    %301 = math.exp %300 : vector<16x128xf32>
    %cst_99 = arith.constant 1.000000e+00 : f32
    %302 = vector.broadcast %cst_99 : f32 to vector<16x128xf32>
    %303 = arith.addf %302, %301 : vector<16x128xf32>
    %304 = arith.divf %302, %303 : vector<16x128xf32>
    %305 = vector.extract_strided_slice %298 {offsets = [0, 128], sizes = [16, 128], strides = [1, 1]} : vector<16x512xf32> to vector<16x128xf32>
    %306 = arith.negf %305 : vector<16x128xf32>
    %307 = math.exp %306 : vector<16x128xf32>
    %cst_100 = arith.constant 1.000000e+00 : f32
    %308 = vector.broadcast %cst_100 : f32 to vector<16x128xf32>
    %309 = arith.addf %308, %307 : vector<16x128xf32>
    %310 = arith.divf %308, %309 : vector<16x128xf32>
    %311 = vector.extract_strided_slice %298 {offsets = [0, 256], sizes = [16, 128], strides = [1, 1]} : vector<16x512xf32> to vector<16x128xf32>
    %312 = math.tanh %311 : vector<16x128xf32>
    %313 = vector.extract_strided_slice %298 {offsets = [0, 384], sizes = [16, 128], strides = [1, 1]} : vector<16x512xf32> to vector<16x128xf32>
    %314 = arith.negf %313 : vector<16x128xf32>
    %315 = math.exp %314 : vector<16x128xf32>
    %cst_101 = arith.constant 1.000000e+00 : f32
    %316 = vector.broadcast %cst_101 : f32 to vector<16x128xf32>
    %317 = arith.addf %316, %315 : vector<16x128xf32>
    %318 = arith.divf %316, %317 : vector<16x128xf32>
    %319 = arith.mulf %310, %282 : vector<16x128xf32>
    %320 = arith.mulf %304, %312 : vector<16x128xf32>
    %321 = arith.addf %319, %320 : vector<16x128xf32>
    %322 = math.tanh %321 : vector<16x128xf32>
    %323 = arith.mulf %318, %322 : vector<16x128xf32>
    %324 = arith.truncf %323 : vector<16x128xf32> to vector<16x128xbf16>
    %325 = arith.index_cast %291 : i32 to index
    %c0_102 = arith.constant 0 : index
    %326 = vector.load %arg6[%325, %c0_102] : memref<128x128xbf16, #tpu.memory_space<vmem>>, vector<16x128xbf16>
    tpu.vector_store %arg6[%325, %c0_102], %324 {strides = array<i32>} : memref<128x128xbf16, #tpu.memory_space<vmem>>, vector<16x128xbf16>,
    %c8_i32 = arith.constant 8 : i32
    %c0_103 = arith.constant 0 : index
    %c0_104 = arith.constant 0 : index
    %327 = vector.load %arg8[%c0_103, %c0_104] : memref<16x128xf32, #tpu.memory_space<vmem>>, vector<16x128xf32>
    tpu.vector_store %arg8[%c0_103, %c0_104], %323 {strides = array<i32>} : memref<16x128xf32, #tpu.memory_space<vmem>>, vector<16x128xf32>,
    %c0_105 = arith.constant 0 : index
    %c0_106 = arith.constant 0 : index
    %328 = vector.load %arg9[%c0_105, %c0_106] : memref<16x128xf32, #tpu.memory_space<vmem>>, vector<16x128xf32>
    tpu.vector_store %arg9[%c0_105, %c0_106], %321 {strides = array<i32>} : memref<16x128xf32, #tpu.memory_space<vmem>>, vector<16x128xf32>,
    return
  }
  func.func @transform_0(%arg0: i32, %arg1: i32) -> (i32, i32) {
    %c2_i32 = arith.constant 2 : i32
    %0 = arith.muli %c2_i32, %arg1 : i32
    %c0_i32 = arith.constant 0 : i32
    %1 = arith.subi %c0_i32, %0 : i32
    %2 = arith.muli %arg0, %1 : i32
    %3 = arith.addi %arg1, %2 : i32
    %c0_i32_0 = arith.constant 0 : i32
    %c0_i32_1 = arith.constant 0 : i32
    return %3, %c0_i32_0 : i32, i32
  }
  func.func @transform_1(%arg0: i32, %arg1: i32) -> (i32, i32, i32) {
    %c0_i32 = arith.constant 0 : i32
    %c0_i32_0 = arith.constant 0 : i32
    %c0_i32_1 = arith.constant 0 : i32
    return %arg0, %c0_i32, %c0_i32_0 : i32, i32, i32
  }
  func.func @transform_2(%arg0: i32, %arg1: i32) -> (i32, i32, i32) {
    %c0_i32 = arith.constant 0 : i32
    %c0_i32_0 = arith.constant 0 : i32
    %c0_i32_1 = arith.constant 0 : i32
    return %arg0, %c0_i32, %c0_i32_0 : i32, i32, i32
  }
  func.func @transform_3(%arg0: i32, %arg1: i32) -> (i32, i32, i32) {
    %c0_i32 = arith.constant 0 : i32
    %c0_i32_0 = arith.constant 0 : i32
    %c0_i32_1 = arith.constant 0 : i32
    return %arg0, %c0_i32, %c0_i32_0 : i32, i32, i32
  }
  func.func @transform_4(%arg0: i32, %arg1: i32) -> (i32, i32) {
    %c2_i32 = arith.constant 2 : i32
    %0 = arith.muli %c2_i32, %arg1 : i32
    %c0_i32 = arith.constant 0 : i32
    %1 = arith.subi %c0_i32, %0 : i32
    %2 = arith.muli %arg0, %1 : i32
    %3 = arith.addi %arg1, %2 : i32
    %c0_i32_0 = arith.constant 0 : i32
    return %3, %arg0 : i32, i32
  }
}

</mosaic_0001>

<llo_original>
// kernel: net_forward.5
$region0: #{net_forward.5}
  #allocation0 [shape = 'u32[]', space=smem, size = 0x4, offset = 0x4, fixed_abs, tag = 'smem constant byte address 0x4 - core index']
  #allocation1 [shape = 'u32[144,128]{1,0:T(1,128)}', space=vmem, size = 0x12000, scoped, tag = 'internal scratch']
  %s0 = inlined_call_operand.vmem [shape: bf16[128,256], index: 0, kind: input, shape index: {}]
  %s1 = inlined_call_operand.vmem [shape: bf16[256,128], index: 1, kind: input, shape index: {}]
  %s2 = inlined_call_operand.vmem [shape: f32[1,128], index: 2, kind: input, shape index: {}]
  %s3 = inlined_call_operand.vmem [shape: f32[128,128], index: 3, kind: output, shape index: {}]
  %s4 = sld [smem:[#allocation0]]
  $region22: #{net_forward.5} parent=0
    _
  %s6 = ssub.s32 1, %s4
  %s7 = scalar_select 0, %s6, %s4
  // Predicated region
  $region2: #{net_forward.5} parent=0 // pred_check
    _
  $region3: #{net_forward.5} parent=0 // pred_check_branch
    %9 = sbr.rel (0) target = $region5
  $region4: #{net_forward.5} parent=0 // pred_region
    _
  $region5: #{net_forward.5} parent=0 // pred_fallthru
    _
  // Predicated region
  $region6: #{net_forward.5} parent=0 // pred_check
    _
  $region7: #{net_forward.5} parent=0 // pred_check_branch
    %11 = sbr.rel (0) target = $region9
  $region8: #{net_forward.5} parent=0 // pred_region
    _
  $region9: #{net_forward.5} parent=0 // pred_fallthru
    _
  // Predicated region
  $region10: #{net_forward.5} parent=0 // pred_check
    _
  $region11: #{net_forward.5} parent=0 // pred_check_branch
    %13 = sbr.rel (0) target = $region13
  $region12: #{net_forward.5} parent=0 // pred_region
    _
  $region13: #{net_forward.5} parent=0 // pred_fallthru
    _
  %v15 = vld [vmem:[%s0] sm:$0xff]
  %v16 = vld [vmem:[%s0 + $0x8] sm:$0xff]
  %v17 = vld [vmem:[%s0 + $0x10] sm:$0xff]
  %v18 = vld [vmem:[%s0 + $0x18] sm:$0xff]
  %v19 = vld [vmem:[%s0 + $0x20] sm:$0xff]
  %v20 = vld [vmem:[%s0 + $0x28] sm:$0xff]
  %v21 = vld [vmem:[%s0 + $0x30] sm:$0xff]
  %v22 = vld [vmem:[%s0 + $0x38] sm:$0xff]
  %v23 = vld [vmem:[%s0 + $0x40] sm:$0xff]
  %v24 = vld [vmem:[%s0 + $0x48] sm:$0xff]
  %v25 = vld [vmem:[%s0 + $0x50] sm:$0xff]
  %v26 = vld [vmem:[%s0 + $0x58] sm:$0xff]
  %v27 = vld [vmem:[%s0 + $0x60] sm:$0xff]
  %v28 = vld [vmem:[%s0 + $0x68] sm:$0xff]
  %v29 = vld [vmem:[%s0 + $0x70] sm:$0xff]
  %v30 = vld [vmem:[%s0 + $0x78] sm:$0xff]
  %v31 = vld [vmem:[%s1] sm:$0xf]
  %v32 = vld [vmem:[%s1 + $0x4] sm:$0xf]
  %v33 = vld [vmem:[%s1 + $0x8] sm:$0xf]
  %v34 = vld [vmem:[%s1 + $0xc] sm:$0xf]
  %v35 = vld [vmem:[%s1 + $0x10] sm:$0xf]
  %v36 = vld [vmem:[%s1 + $0x14] sm:$0xf]
  %v37 = vld [vmem:[%s1 + $0x18] sm:$0xf]
  %v38 = vld [vmem:[%s1 + $0x1c] sm:$0xf]
  %v39 = vld [vmem:[%s1 + $0x20] sm:$0xf]
  %v40 = vld [vmem:[%s1 + $0x24] sm:$0xf]
  %v41 = vld [vmem:[%s1 + $0x28] sm:$0xf]
  %v42 = vld [vmem:[%s1 + $0x2c] sm:$0xf]
  %v43 = vld [vmem:[%s1 + $0x30] sm:$0xf]
  %v44 = vld [vmem:[%s1 + $0x34] sm:$0xf]
  %v45 = vld [vmem:[%s1 + $0x38] sm:$0xf]
  %v46 = vld [vmem:[%s1 + $0x3c] sm:$0xf]
  %v47 = vld [vmem:[%s1 + $0x40] sm:$0xf]
  %v48 = vld [vmem:[%s1 + $0x44] sm:$0xf]
  %v49 = vld [vmem:[%s1 + $0x48] sm:$0xf]
  %v50 = vld [vmem:[%s1 + $0x4c] sm:$0xf]
  %v51 = vld [vmem:[%s1 + $0x50] sm:$0xf]
  %v52 = vld [vmem:[%s1 + $0x54] sm:$0xf]
  %v53 = vld [vmem:[%s1 + $0x58] sm:$0xf]
  %v54 = vld [vmem:[%s1 + $0x5c] sm:$0xf]
  %v55 = vld [vmem:[%s1 + $0x60] sm:$0xf]
  %v56 = vld [vmem:[%s1 + $0x64] sm:$0xf]
  %v57 = vld [vmem:[%s1 + $0x68] sm:$0xf]
  %v58 = vld [vmem:[%s1 + $0x6c] sm:$0xf]
  %v59 = vld [vmem:[%s1 + $0x70] sm:$0xf]
  %v60 = vld [vmem:[%s1 + $0x74] sm:$0xf]
  %v61 = vld [vmem:[%s1 + $0x78] sm:$0xf]
  %v62 = vld [vmem:[%s1 + $0x7c] sm:$0xf]
  %v63 = vld [vmem:[%s2] sm:$0x1]
  %v65 = vlaneseq
  %v66 = vshrl.u32 %v65, 7
  %v67 = vsub.s32 0, %v66
  %v68 = vrot.slane %v63, %v67
  %v86 = vunpack.c.l.b16 %v15
  %v87 = vunpack.c.h.b16 %v15
  %v88 = vunpack.c.l.b16 %v16
  %v89 = vunpack.c.h.b16 %v16
  %v90 = vunpack.c.l.b16 %v17
  %v91 = vunpack.c.h.b16 %v17
  %v92 = vunpack.c.l.b16 %v18
  %v93 = vunpack.c.h.b16 %v18
  %v94 = vunpack.c.l.b16 %v19
  %v95 = vunpack.c.h.b16 %v19
  %v96 = vunpack.c.l.b16 %v20
  %v97 = vunpack.c.h.b16 %v20
  %v98 = vunpack.c.l.b16 %v21
  %v99 = vunpack.c.h.b16 %v21
  %v100 = vunpack.c.l.b16 %v22
  %v101 = vunpack.c.h.b16 %v22
  %v102 = vunpack.c.l.b16 %v23
  %v103 = vunpack.c.h.b16 %v23
  %v104 = vunpack.c.l.b16 %v24
  %v105 = vunpack.c.h.b16 %v24
  %v106 = vunpack.c.l.b16 %v25
  %v107 = vunpack.c.h.b16 %v25
  %v108 = vunpack.c.l.b16 %v26
  %v109 = vunpack.c.h.b16 %v26
  %v110 = vunpack.c.l.b16 %v27
  %v111 = vunpack.c.h.b16 %v27
  %v112 = vunpack.c.l.b16 %v28
  %v113 = vunpack.c.h.b16 %v28
  %v114 = vunpack.c.l.b16 %v29
  %v115 = vunpack.c.h.b16 %v29
  %v116 = vunpack.c.l.b16 %v30
  %v117 = vunpack.c.h.b16 %v30
  %v118 = vpack.c.b16 %v88, %v86
  %v119 = vpack.c.b16 %v89, %v87
  %v120 = vpack.c.b16 %v92, %v90
  %v121 = vpack.c.b16 %v93, %v91
  %v122 = vpack.c.b16 %v96, %v94
  %v123 = vpack.c.b16 %v97, %v95
  %v124 = vpack.c.b16 %v100, %v98
  %v125 = vpack.c.b16 %v101, %v99
  %v126 = vpack.c.b16 %v104, %v102
  %v127 = vpack.c.b16 %v105, %v103
  %v128 = vpack.c.b16 %v108, %v106
  %v129 = vpack.c.b16 %v109, %v107
  %v130 = vpack.c.b16 %v112, %v110
  %v131 = vpack.c.b16 %v113, %v111
  %v132 = vpack.c.b16 %v116, %v114
  %v133 = vpack.c.b16 %v117, %v115
  %v182 = vunpack.c.l.b16 %v31
  %v183 = vunpack.c.l.b16 %v32
  %v184 = vunpack.c.l.b16 %v33
  %v185 = vunpack.c.l.b16 %v34
  %v186 = vunpack.c.l.b16 %v35
  %v187 = vunpack.c.l.b16 %v36
  %v188 = vunpack.c.l.b16 %v37
  %v189 = vunpack.c.l.b16 %v38
  %v190 = vunpack.c.l.b16 %v39
  %v191 = vunpack.c.l.b16 %v40
  %v192 = vunpack.c.l.b16 %v41
  %v193 = vunpack.c.l.b16 %v42
  %v194 = vunpack.c.l.b16 %v43
  %v195 = vunpack.c.l.b16 %v44
  %v196 = vunpack.c.l.b16 %v45
  %v197 = vunpack.c.l.b16 %v46
  %v198 = vunpack.c.l.b16 %v47
  %v199 = vunpack.c.l.b16 %v48
  %v200 = vunpack.c.l.b16 %v49
  %v201 = vunpack.c.l.b16 %v50
  %v202 = vunpack.c.l.b16 %v51
  %v203 = vunpack.c.l.b16 %v52
  %v204 = vunpack.c.l.b16 %v53
  %v205 = vunpack.c.l.b16 %v54
  %v206 = vunpack.c.l.b16 %v55
  %v207 = vunpack.c.l.b16 %v56
  %v208 = vunpack.c.l.b16 %v57
  %v209 = vunpack.c.l.b16 %v58
  %v210 = vunpack.c.l.b16 %v59
  %v211 = vunpack.c.l.b16 %v60
  %v212 = vunpack.c.l.b16 %v61
  %v213 = vunpack.c.l.b16 %v62
  %v214 = vpack.c.b16 %v183, %v182
  %v215 = vpack.c.b16 %v185, %v184
  %v216 = vpack.c.b16 %v187, %v186
  %v217 = vpack.c.b16 %v189, %v188
  %v218 = vpack.c.b16 %v191, %v190
  %v219 = vpack.c.b16 %v193, %v192
  %v220 = vpack.c.b16 %v195, %v194
  %v221 = vpack.c.b16 %v197, %v196
  %v222 = vpack.c.b16 %v199, %v198
  %v223 = vpack.c.b16 %v201, %v200
  %v224 = vpack.c.b16 %v203, %v202
  %v225 = vpack.c.b16 %v205, %v204
  %v226 = vpack.c.b16 %v207, %v206
  %v227 = vpack.c.b16 %v209, %v208
  %v228 = vpack.c.b16 %v211, %v210
  %v229 = vpack.c.b16 %v213, %v212
  %246 = vmatprep.subr.bf16.mxu0 0
  %247 = vmatpush1.bf16.msra.mxu0 %v214
  %248 = vmatprep.subr.bf16.mxu0 0
  %249 = vmatpush1.bf16.msra.mxu0 %v215
  %250 = vmatprep.subr.bf16.mxu0 0
  %251 = vmatpush1.bf16.msra.mxu0 %v216
  %252 = vmatprep.subr.bf16.mxu0 0
  %253 = vmatpush1.bf16.msra.mxu0 %v217
  %254 = vmatprep.subr.bf16.mxu0 0
  %255 = vmatpush1.bf16.msra.mxu0 %v218
  %256 = vmatprep.subr.bf16.mxu0 0
  %257 = vmatpush1.bf16.msra.mxu0 %v219
  %258 = vmatprep.subr.bf16.mxu0 0
  %259 = vmatpush1.bf16.msra.mxu0 %v220
  %260 = vmatprep.subr.bf16.mxu0 0
  %261 = vmatpush1.bf16.msra.mxu0 %v221
  %262 = vmatprep.subr.bf16.mxu0 0
  %263 = vmatpush1.bf16.msra.mxu0 %v222
  %264 = vmatprep.subr.bf16.mxu0 0
  %265 = vmatpush1.bf16.msra.mxu0 %v223
  %266 = vmatprep.subr.bf16.mxu0 0
  %267 = vmatpush1.bf16.msra.mxu0 %v224
  %268 = vmatprep.subr.bf16.mxu0 0
  %269 = vmatpush1.bf16.msra.mxu0 %v225
  %270 = vmatprep.subr.bf16.mxu0 0
  %271 = vmatpush1.bf16.msra.mxu0 %v226
  %272 = vmatprep.subr.bf16.mxu0 0
  %273 = vmatpush1.bf16.msra.mxu0 %v227
  %274 = vmatprep.subr.bf16.mxu0 0
  %275 = vmatpush1.bf16.msra.mxu0 %v228
  %276 = vmatprep.subr.bf16.mxu0 0
  %277 = vmatpush1.bf16.msra.mxu0 %v229
  %278 = vmatprep.mubr.bf16.mxu0 %v119
  %279 = vmatmul.mubr.bf16.gmra.mrb[0].mxu0 %v118
  %v280 = vpop.f32.mrb[0].mxu0
  %v281 = vadd.f32 %v68, %v280
  %v282 = vpop.f32.mrb[0].mxu0
  %v283 = vpop.f32.mrb[0].mxu0
  %v284 = vadd.f32 %v68, %v283
  %v285 = vpop.f32.mrb[0].mxu0
  %286 = vmatprep.mubr.bf16.mxu0 %v121
  %287 = vmatmul.mubr.bf16.gmra.mrb[0].mxu0 %v120
  %v288 = vpop.f32.mrb[0].mxu0
  %v289 = vadd.f32 %v68, %v288
  %v290 = vpop.f32.mrb[0].mxu0
  %v291 = vpop.f32.mrb[0].mxu0
  %v292 = vadd.f32 %v68, %v291
  %v293 = vpop.f32.mrb[0].mxu0
  %294 = vmatprep.mubr.bf16.mxu0 %v123
  %295 = vmatmul.mubr.bf16.gmra.mrb[0].mxu0 %v122
  %v296 = vpop.f32.mrb[0].mxu0
  %v297 = vadd.f32 %v68, %v296
  %v298 = vpop.f32.mrb[0].mxu0
  %v299 = vpop.f32.mrb[0].mxu0
  %v300 = vadd.f32 %v68, %v299
  %v301 = vpop.f32.mrb[0].mxu0
  %302 = vmatprep.mubr.bf16.mxu0 %v125
  %303 = vmatmul.mubr.bf16.gmra.mrb[0].mxu0 %v124
  %v304 = vpop.f32.mrb[0].mxu0
  %v305 = vadd.f32 %v68, %v304
  %v306 = vpop.f32.mrb[0].mxu0
  %v307 = vpop.f32.mrb[0].mxu0
  %v308 = vadd.f32 %v68, %v307
  %v309 = vpop.f32.mrb[0].mxu0
  %310 = vmatprep.mubr.bf16.mxu0 %v127
  %311 = vmatmul.mubr.bf16.gmra.mrb[0].mxu0 %v126
  %v312 = vpop.f32.mrb[0].mxu0
  %v313 = vadd.f32 %v68, %v312
  %v314 = vpop.f32.mrb[0].mxu0
  %v315 = vpop.f32.mrb[0].mxu0
  %v316 = vadd.f32 %v68, %v315
  %v317 = vpop.f32.mrb[0].mxu0
  %318 = vmatprep.mubr.bf16.mxu0 %v129
  %319 = vmatmul.mubr.bf16.gmra.mrb[0].mxu0 %v128
  %v320 = vpop.f32.mrb[0].mxu0
  %v321 = vadd.f32 %v68, %v320
  %v322 = vpop.f32.mrb[0].mxu0
  %v323 = vpop.f32.mrb[0].mxu0
  %v324 = vadd.f32 %v68, %v323
  %v325 = vpop.f32.mrb[0].mxu0
  %326 = vmatprep.mubr.bf16.mxu0 %v131
  %327 = vmatmul.mubr.bf16.gmra.mrb[0].mxu0 %v130
  %v328 = vpop.f32.mrb[0].mxu0
  %v329 = vadd.f32 %v68, %v328
  %v330 = vpop.f32.mrb[0].mxu0
  %v331 = vpop.f32.mrb[0].mxu0
  %v332 = vadd.f32 %v68, %v331
  %v333 = vpop.f32.mrb[0].mxu0
  %334 = vmatprep.mubr.bf16.mxu0 %v133
  %335 = vmatmul.mubr.bf16.gmra.mrb[0].mxu0 %v132
  %v336 = vpop.f32.mrb[0].mxu0
  %v337 = vadd.f32 %v68, %v336
  %v338 = vpop.f32.mrb[0].mxu0
  %v339 = vpop.f32.mrb[0].mxu0
  %v340 = vadd.f32 %v68, %v339
  %v341 = vpop.f32.mrb[0].mxu0
  %342 = vdwg.mxu0
  %343 = vmax.xlane.f32.xlu0 %v281
  %v344 = vpop.xlane.xlu0 %343
  %345 = vmax.xlane.f32.xlu0 %v284
  %v346 = vpop.xlane.xlu0 %345
  %347 = vmax.xlane.f32.xlu0 %v289
  %v348 = vpop.xlane.xlu0 %347
  %349 = vmax.xlane.f32.xlu0 %v292
  %v350 = vpop.xlane.xlu0 %349
  %351 = vmax.xlane.f32.xlu0 %v297
  %v352 = vpop.xlane.xlu0 %351
  %353 = vmax.xlane.f32.xlu0 %v300
  %v354 = vpop.xlane.xlu0 %353
  %355 = vmax.xlane.f32.xlu0 %v305
  %v356 = vpop.xlane.xlu0 %355
  %357 = vmax.xlane.f32.xlu0 %v308
  %v358 = vpop.xlane.xlu0 %357
  %359 = vmax.xlane.f32.xlu0 %v313
  %v360 = vpop.xlane.xlu0 %359
  %361 = vmax.xlane.f32.xlu0 %v316
  %v362 = vpop.xlane.xlu0 %361
  %363 = vmax.xlane.f32.xlu0 %v321
  %v364 = vpop.xlane.xlu0 %363
  %365 = vmax.xlane.f32.xlu0 %v324
  %v366 = vpop.xlane.xlu0 %365
  %367 = vmax.xlane.f32.xlu0 %v329
  %v368 = vpop.xlane.xlu0 %367
  %369 = vmax.xlane.f32.xlu0 %v332
  %v370 = vpop.xlane.xlu0 %369
  %371 = vmax.xlane.f32.xlu0 %v337
  %v372 = vpop.xlane.xlu0 %371
  %373 = vmax.xlane.f32.xlu0 %v340
  %v374 = vpop.xlane.xlu0 %373
  %v375 = vsub.f32 %v281, %v344
  %v376 = vsub.f32 %v284, %v346
  %v377 = vsub.f32 %v289, %v348
  %v378 = vsub.f32 %v292, %v350
  %v379 = vsub.f32 %v297, %v352
  %v380 = vsub.f32 %v300, %v354
  %v381 = vsub.f32 %v305, %v356
  %v382 = vsub.f32 %v308, %v358
  %v383 = vsub.f32 %v313, %v360
  %v384 = vsub.f32 %v316, %v362
  %v385 = vsub.f32 %v321, %v364
  %v386 = vsub.f32 %v324, %v366
  %v387 = vsub.f32 %v329, %v368
  %v388 = vsub.f32 %v332, %v370
  %v389 = vsub.f32 %v337, %v372
  %v390 = vsub.f32 %v340, %v374
  %v391 = vmul.f32 %v375, 1.442695
  %v392 = vpow.pop %v391
  %v393 = vmul.f32 %v376, 1.442695
  %v394 = vpow.pop %v393
  %v395 = vmul.f32 %v377, 1.442695
  %v396 = vpow.pop %v395
  %v397 = vmul.f32 %v378, 1.442695
  %v398 = vpow.pop %v397
  %v399 = vmul.f32 %v379, 1.442695
  %v400 = vpow.pop %v399
  %v401 = vmul.f32 %v380, 1.442695
  %v402 = vpow.pop %v401
  %v403 = vmul.f32 %v381, 1.442695
  %v404 = vpow.pop %v403
  %v405 = vmul.f32 %v382, 1.442695
  %v406 = vpow.pop %v405
  %v407 = vmul.f32 %v383, 1.442695
  %v408 = vpow.pop %v407
  %v409 = vmul.f32 %v384, 1.442695
  %v410 = vpow.pop %v409
  %v411 = vmul.f32 %v385, 1.442695
  %v412 = vpow.pop %v411
  %v413 = vmul.f32 %v386, 1.442695
  %v414 = vpow.pop %v413
  %v415 = vmul.f32 %v387, 1.442695
  %v416 = vpow.pop %v415
  %v417 = vmul.f32 %v388, 1.442695
  %v418 = vpow.pop %v417
  %v419 = vmul.f32 %v389, 1.442695
  %v420 = vpow.pop %v419
  %v421 = vmul.f32 %v390, 1.442695
  %v422 = vpow.pop %v421
  %423 = vadd.xlane.f32.xlu0 %v392
  %v424 = vpop.xlane.xlu0 %423
  %425 = vadd.xlane.f32.xlu0 %v394
  %v426 = vpop.xlane.xlu0 %425
  %427 = vadd.xlane.f32.xlu0 %v396
  %v428 = vpop.xlane.xlu0 %427
  %429 = vadd.xlane.f32.xlu0 %v398
  %v430 = vpop.xlane.xlu0 %429
  %431 = vadd.xlane.f32.xlu0 %v400
  %v432 = vpop.xlane.xlu0 %431
  %433 = vadd.xlane.f32.xlu0 %v402
  %v434 = vpop.xlane.xlu0 %433
  %435 = vadd.xlane.f32.xlu0 %v404
  %v436 = vpop.xlane.xlu0 %435
  %437 = vadd.xlane.f32.xlu0 %v406
  %v438 = vpop.xlane.xlu0 %437
  %439 = vadd.xlane.f32.xlu0 %v408
  %v440 = vpop.xlane.xlu0 %439
  %441 = vadd.xlane.f32.xlu0 %v410
  %v442 = vpop.xlane.xlu0 %441
  %443 = vadd.xlane.f32.xlu0 %v412
  %v444 = vpop.xlane.xlu0 %443
  %445 = vadd.xlane.f32.xlu0 %v414
  %v446 = vpop.xlane.xlu0 %445
  %447 = vadd.xlane.f32.xlu0 %v416
  %v448 = vpop.xlane.xlu0 %447
  %449 = vadd.xlane.f32.xlu0 %v418
  %v450 = vpop.xlane.xlu0 %449
  %451 = vadd.xlane.f32.xlu0 %v420
  %v452 = vpop.xlane.xlu0 %451
  %453 = vadd.xlane.f32.xlu0 %v422
  %v454 = vpop.xlane.xlu0 %453
  %v455 = vlog2.pop %v424
  %v456 = vmul.f32 %v455, 0.6931472
  %v457 = vlog2.pop %v426
  %v458 = vmul.f32 %v457, 0.6931472
  %v459 = vlog2.pop %v428
  %v460 = vmul.f32 %v459, 0.6931472
  %v461 = vlog2.pop %v430
  %v462 = vmul.f32 %v461, 0.6931472
  %v463 = vlog2.pop %v432
  %v464 = vmul.f32 %v463, 0.6931472
  %v465 = vlog2.pop %v434
  %v466 = vmul.f32 %v465, 0.6931472
  %v467 = vlog2.pop %v436
  %v468 = vmul.f32 %v467, 0.6931472
  %v469 = vlog2.pop %v438
  %v470 = vmul.f32 %v469, 0.6931472
  %v471 = vlog2.pop %v440
  %v472 = vmul.f32 %v471, 0.6931472
  %v473 = vlog2.pop %v442
  %v474 = vmul.f32 %v473, 0.6931472
  %v475 = vlog2.pop %v444
  %v476 = vmul.f32 %v475, 0.6931472
  %v477 = vlog2.pop %v446
  %v478 = vmul.f32 %v477, 0.6931472
  %v479 = vlog2.pop %v448
  %v480 = vmul.f32 %v479, 0.6931472
  %v481 = vlog2.pop %v450
  %v482 = vmul.f32 %v481, 0.6931472
  %v483 = vlog2.pop %v452
  %v484 = vmul.f32 %v483, 0.6931472
  %v485 = vlog2.pop %v454
  %v486 = vmul.f32 %v485, 0.6931472
  %v487 = vsub.f32 %v375, %v456
  %v488 = vsub.f32 %v376, %v458
  %v489 = vsub.f32 %v377, %v460
  %v490 = vsub.f32 %v378, %v462
  %v491 = vsub.f32 %v379, %v464
  %v492 = vsub.f32 %v380, %v466
  %v493 = vsub.f32 %v381, %v468
  %v494 = vsub.f32 %v382, %v470
  %v495 = vsub.f32 %v383, %v472
  %v496 = vsub.f32 %v384, %v474
  %v497 = vsub.f32 %v385, %v476
  %v498 = vsub.f32 %v386, %v478
  %v499 = vsub.f32 %v387, %v480
  %v500 = vsub.f32 %v388, %v482
  %v501 = vsub.f32 %v389, %v484
  %v502 = vsub.f32 %v390, %v486
  %503 = vst [vmem:[%s3] sm:$0xff] %v487
  %504 = vst [vmem:[%s3 + $0x8] sm:$0xff] %v488
  %505 = vst [vmem:[%s3 + $0x10] sm:$0xff] %v489
  %506 = vst [vmem:[%s3 + $0x18] sm:$0xff] %v490
  %507 = vst [vmem:[%s3 + $0x20] sm:$0xff] %v491
  %508 = vst [vmem:[%s3 + $0x28] sm:$0xff] %v492
  %509 = vst [vmem:[%s3 + $0x30] sm:$0xff] %v493
  %510 = vst [vmem:[%s3 + $0x38] sm:$0xff] %v494
  %511 = vst [vmem:[%s3 + $0x40] sm:$0xff] %v495
  %512 = vst [vmem:[%s3 + $0x48] sm:$0xff] %v496
  %513 = vst [vmem:[%s3 + $0x50] sm:$0xff] %v497
  %514 = vst [vmem:[%s3 + $0x58] sm:$0xff] %v498
  %515 = vst [vmem:[%s3 + $0x60] sm:$0xff] %v499
  %516 = vst [vmem:[%s3 + $0x68] sm:$0xff] %v500
  %517 = vst [vmem:[%s3 + $0x70] sm:$0xff] %v501
  %518 = vst [vmem:[%s3 + $0x78] sm:$0xff] %v502
  // Predicated region
  $region14: #{net_forward.5} parent=0 // pred_check
    _
  $region15: #{net_forward.5} parent=0 // pred_check_branch
    %520 = sbr.rel (0) target = $region17
  $region16: #{net_forward.5} parent=0 // pred_region
    _
  $region17: #{net_forward.5} parent=0 // pred_fallthru
    _
  // Predicated region
  $region18: #{net_forward.5} parent=0 // pred_check
    _
  $region19: #{net_forward.5} parent=0 // pred_check_branch
    %522 = sbr.rel (0) target = $region21
  $region20: #{net_forward.5} parent=0 // pred_region
    _
  $region21: #{net_forward.5} parent=0 // pred_fallthru
    _

// kernel: net_forward.3
$region0: #{net_forward.3}
  #allocation0 [shape = 'u32[]', space=smem, size = 0x4, offset = 0x4, fixed_abs, tag = 'smem constant byte address 0x4 - core index']
  #allocation1 [shape = 'u32[144,128]{1,0:T(1,128)}', space=vmem, size = 0x12000, scoped, tag = 'internal scratch']
  #allocation2 [shape = 'f32[128,512]{1,0:T(8,128)}', space=vmem, size = 0x40000, scoped, tag = 'scratch operand']
  #allocation3 [shape = 'f32[16,128]{1,0:T(8,128)}', space=vmem, size = 0x2000, scoped, tag = 'scratch operand']
  #allocation4 [shape = 'f32[16,128]{1,0:T(8,128)}', space=vmem, size = 0x2000, scoped, tag = 'scratch operand']
  %s0 = inlined_call_operand.vmem [shape: bf16[128,16], index: 0, kind: input, shape index: {}]
  %s1 = inlined_call_operand.vmem [shape: bf16[2,16,512], index: 1, kind: input, shape index: {}]
  %s2 = inlined_call_operand.vmem [shape: bf16[2,128,512], index: 2, kind: input, shape index: {}]
  %s3 = inlined_call_operand.vmem [shape: f32[2,1,512], index: 3, kind: input, shape index: {}]
  %s4 = inlined_call_operand.vmem [shape: bf16[128,256], index: 4, kind: output, shape index: {}]
  %s5 = sld [smem:[#allocation0]]
  $region90: #{net_forward.3} parent=0
    _
  %s7 = ssub.s32 1, %s5
  %s8 = scalar_select 0, %s7, %s5
  $region1: #{net_forward.3} parent=0
    #allocation5 [shape = 'u8[65536]{0}', space=vmem, size = 0x10000, scoped, tag = 'output window, operand 0']
    loop: start=0, step=1, limit=4
    $region2: #{net_forward.3} parent=1 // loop_pre_header
      _
    $region3: #{net_forward.3} parent=1 // loop_header
      %s10 = sphi 0, %s14
      %p11 = scmp.ge.s32.totalorder %s10, 4
      %s17 = sphi 0, %s29
      %s18 = sphi 0, %s25
      %s19 = sphi 0, %s17
      %s20 = sphi 0, %s18
      %s21 = sphi 0, %s19
      %s22 = sphi 0, %s20
      %s40 = sphi 0, %s42
      %s43 = sphi 0, %s40
      %s44 = sphi 0, %s43
      %s60 = sphi 0, %s44
      %s66 = sphi 0, %s68
      %s69 = sphi 0, %s66
      %s70 = sphi 0, %s69
      %s86 = sphi 0, %s70
      %s92 = sphi 0, %s94
      %s95 = sphi 0, %s92
      %s96 = sphi 0, %s95
      %s112 = sphi 0, %s96
      %s118 = sphi 0, %s120
      %s121 = sphi 0, %s118
      %s122 = sphi 0, %s121
      %s138 = sphi 0, %s122
      %s154 = sphi 0, %s156
      %s157 = sphi 0, %s154
      %s158 = sphi 0, %s157
      %s174 = sphi 0, %s158
    $region4: #{net_forward.3} parent=1 // loop_header_branch
      %13 = sbr.rel (%p11) target = $region8
    $region5: #{net_forward.3} parent=1 // loop_body
      %s15 = ssub.s32 %s10, 1
      %s16 = ssub.s32 %s10, 2
      %s23 = sadd.s32 1, %s18
      %p24 = scmp.ge.s32.totalorder %s23, 1
      %s25 = scalar_select %p24, 0, %s23
      %s26 = sadd.s32 1, %s17
      %s27 = scalar_select %p24, %s26, %s17
      %p28 = scmp.ge.s32.totalorder %s27, 2
      %s29 = scalar_select %p28, 0, %s27
      %s30 = smul.u32 %s18, 2
      %s31 = ssub.s32 0, %s30
      %s32 = smul.u32 %s17, %s31
      %s33 = sadd.s32 %s18, %s32
      %s34 = smul.u32 %s25, 2
      %s35 = ssub.s32 0, %s34
      %s36 = smul.u32 %s29, %s35
      %s37 = sadd.s32 %s25, %s36
      %s38 = ssub.s32 %s33, %s37
      %p39 = scmp.eq.s32.totalorder %s38, 0
      %s41 = sadd.s32 %s40, 1
      %s42 = scalar_select %p39, %s40, %s41
      %p45 = pneg %p39
      %p46 = scmp.eq.s32.totalorder %s10, 1
      %p47 = por %p45, %p46
      %p48 = scmp.ne.s32.totalorder %s40, %s43
      %p49 = scmp.eq.s32.totalorder %s10, 0
      %p50 = por %p48, %p49
      %p51 = scmp.ne.s32.totalorder %s40, %s43
      %p52 = scmp.eq.s32.totalorder %s15, 1
      %p53 = por %p51, %p52
      %p54 = scmp.ne.s32.totalorder %s43, %s44
      %p55 = scmp.eq.s32.totalorder %s15, 0
      %p56 = por %p54, %p55
      %p57 = scmp.ne.s32.totalorder %s43, %s44
      %p58 = scmp.eq.s32.totalorder %s16, 1
      %p59 = por %p57, %p58
      %p61 = scmp.ne.s32.totalorder %s44, %s60
      %p62 = scmp.eq.s32.totalorder %s16, 0
      %p63 = por %p61, %p62
      %s64 = ssub.s32 %s17, %s29
      %p65 = scmp.eq.s32.totalorder %s64, 0
      %s67 = sadd.s32 %s66, 1
      %s68 = scalar_select %p65, %s66, %s67
      %p71 = pneg %p65
      %p72 = scmp.eq.s32.totalorder %s10, 1
      %p73 = por %p71, %p72
      %p74 = scmp.ne.s32.totalorder %s66, %s69
      %p75 = scmp.eq.s32.totalorder %s10, 0
      %p76 = por %p74, %p75
      %p77 = scmp.ne.s32.totalorder %s66, %s69
      %p78 = scmp.eq.s32.totalorder %s15, 1
      %p79 = por %p77, %p78
      %p80 = scmp.ne.s32.totalorder %s69, %s70
      %p81 = scmp.eq.s32.totalorder %s15, 0
      %p82 = por %p80, %p81
      %p83 = scmp.ne.s32.totalorder %s69, %s70
      %p84 = scmp.eq.s32.totalorder %s16, 1
      %p85 = por %p83, %p84
      %p87 = scmp.ne.s32.totalorder %s70, %s86
      %p88 = scmp.eq.s32.totalorder %s16, 0
      %p89 = por %p87, %p88
      %s90 = ssub.s32 %s17, %s29
      %p91 = scmp.eq.s32.totalorder %s90, 0
      %s93 = sadd.s32 %s92, 1
      %s94 = scalar_select %p91, %s92, %s93
      %p97 = pneg %p91
      %p98 = scmp.eq.s32.totalorder %s10, 1
      %p99 = por %p97, %p98
      %p100 = scmp.ne.s32.totalorder %s92, %s95
      %p101 = scmp.eq.s32.totalorder %s10, 0
      %p102 = por %p100, %p101
      %p103 = scmp.ne.s32.totalorder %s92, %s95
      %p104 = scmp.eq.s32.totalorder %s15, 1
      %p105 = por %p103, %p104
      %p106 = scmp.ne.s32.totalorder %s95, %s96
      %p107 = scmp.eq.s32.totalorder %s15, 0
      %p108 = por %p106, %p107
      %p109 = scmp.ne.s32.totalorder %s95, %s96
      %p110 = scmp.eq.s32.totalorder %s16, 1
      %p111 = por %p109, %p110
      %p113 = scmp.ne.s32.totalorder %s96, %s112
      %p114 = scmp.eq.s32.totalorder %s16, 0
      %p115 = por %p113, %p114
      %s116 = ssub.s32 %s17, %s29
      %p117 = scmp.eq.s32.totalorder %s116, 0
      %s119 = sadd.s32 %s118, 1
      %s120 = scalar_select %p117, %s118, %s119
      %p123 = pneg %p117
      %p124 = scmp.eq.s32.totalorder %s10, 1
      %p125 = por %p123, %p124
      %p126 = scmp.ne.s32.totalorder %s118, %s121
      %p127 = scmp.eq.s32.totalorder %s10, 0
      %p128 = por %p126, %p127
      %p129 = scmp.ne.s32.totalorder %s118, %s121
      %p130 = scmp.eq.s32.totalorder %s15, 1
      %p131 = por %p129, %p130
      %p132 = scmp.ne.s32.totalorder %s121, %s122
      %p133 = scmp.eq.s32.totalorder %s15, 0
      %p134 = por %p132, %p133
      %p135 = scmp.ne.s32.totalorder %s121, %s122
      %p136 = scmp.eq.s32.totalorder %s16, 1
      %p137 = por %p135, %p136
      %p139 = scmp.ne.s32.totalorder %s122, %s138
      %p140 = scmp.eq.s32.totalorder %s16, 0
      %p141 = por %p139, %p140
      %s142 = smul.u32 %s18, 2
      %s143 = ssub.s32 0, %s142
      %s144 = smul.u32 %s17, %s143
      %s145 = sadd.s32 %s18, %s144
      %s146 = smul.u32 %s25, 2
      %s147 = ssub.s32 0, %s146
      %s148 = smul.u32 %s29, %s147
      %s149 = sadd.s32 %s25, %s148
      %s150 = ssub.s32 %s145, %s149
      %s151 = ssub.s32 %s17, %s29
      %s152 = sor.u32 %s150, %s151
      %p153 = scmp.eq.s32.totalorder %s152, 0
      %s155 = sadd.s32 %s154, 1
      %s156 = scalar_select %p153, %s154, %s155
      %p159 = pneg %p153
      %p160 = scmp.eq.s32.totalorder %s10, 1
      %p161 = por %p159, %p160
      %p162 = scmp.ne.s32.totalorder %s154, %s157
      %p163 = scmp.eq.s32.totalorder %s10, 0
      %p164 = por %p162, %p163
      %p165 = scmp.ne.s32.totalorder %s154, %s157
      %p166 = scmp.eq.s32.totalorder %s15, 1
      %p167 = por %p165, %p166
      %p168 = scmp.ne.s32.totalorder %s157, %s158
      %p169 = scmp.eq.s32.totalorder %s15, 0
      %p170 = por %p168, %p169
      %p171 = scmp.ne.s32.totalorder %s157, %s158
      %p172 = scmp.eq.s32.totalorder %s16, 1
      %p173 = por %p171, %p172
      %p175 = scmp.ne.s32.totalorder %s158, %s174
      %p176 = scmp.eq.s32.totalorder %s16, 0
      %p177 = por %p175, %p176
      %p178 = scmp.le.s32.totalorder 1, %s10
      %p179 = scmp.lt.s32.totalorder %s10, 3
      %p180 = pnand %p178, %p179
      %p181 = pneg %p180
      // Predicated region
      $region9: #{net_forward.3} parent=5 // pred_check
        _
      $region10: #{net_forward.3} parent=5 // pred_check_branch
        %183 = sbr.rel (%p180) target = $region12
      $region11: #{net_forward.3} parent=5 // pred_region
        %s184 = ssub.s32 %s10, 1
      $region12: #{net_forward.3} parent=5 // pred_fallthru
        _
      %p185 = scmp.lt.s32.totalorder %s10, 2
      // Predicated region
      $region13: #{net_forward.3} parent=5 // pred_check
        %p186 = pneg %p185
      $region14: #{net_forward.3} parent=5 // pred_check_branch
        %188 = sbr.rel (%p186) target = $region16
      $region15: #{net_forward.3} parent=5 // pred_region
        // Predicated region
        $region17: #{net_forward.3} parent=15 // pred_check
          %p189 = pneg %p50
        $region18: #{net_forward.3} parent=15 // pred_check_branch
          %191 = sbr.rel (%p189) target = $region20
        $region19: #{net_forward.3} parent=15 // pred_region
          %s192 = smul.u32 %s18, 2
          %s193 = ssub.s32 0, %s192
          %s194 = smul.u32 %s17, %s193
          %s195 = sadd.s32 %s18, %s194
          %s196 = smul.u32 16, %s195
          %p197 = scmp.lt.s32.totalorder %s196, 15
          %s198 = scalar_select %p197, %s196, 15
          %s199 = smul.addr %s198, 4
          %s200 = scalar_lea.vmem %s0, %s199
          %s201 = smul.u32 %s18, 2
          %s202 = ssub.s32 0, %s201
          %s203 = smul.u32 %s17, %s202
          %s204 = sadd.s32 %s18, %s203
          %s205 = smul.u32 16, %s204
        $region20: #{net_forward.3} parent=15 // pred_fallthru
          _
        // Predicated region
        $region21: #{net_forward.3} parent=15 // pred_check
          %p206 = pneg %p76
        $region22: #{net_forward.3} parent=15 // pred_check_branch
          %208 = sbr.rel (%p206) target = $region24
        $region23: #{net_forward.3} parent=15 // pred_region
          %p209 = scmp.lt.s32.totalorder %s17, 1
          %s210 = scalar_select %p209, %s17, 1
          %s211 = smul.addr %s210, 8
          %s212 = smul.addr %s211, 4
          %s213 = scalar_lea.vmem %s1, %s212
        $region24: #{net_forward.3} parent=15 // pred_fallthru
          _
        // Predicated region
        $region25: #{net_forward.3} parent=15 // pred_check
          %p214 = pneg %p102
        $region26: #{net_forward.3} parent=15 // pred_check_branch
          %216 = sbr.rel (%p214) target = $region28
        $region27: #{net_forward.3} parent=15 // pred_region
          %p217 = scmp.lt.s32.totalorder %s17, 1
          %s218 = scalar_select %p217, %s17, 1
          %s219 = smul.addr %s218, 64
          %s220 = smul.addr %s219, 4
          %s221 = scalar_lea.vmem %s2, %s220
        $region28: #{net_forward.3} parent=15 // pred_fallthru
          _
        // Predicated region
        $region29: #{net_forward.3} parent=15 // pred_check
          %p222 = pneg %p128
        $region30: #{net_forward.3} parent=15 // pred_check_branch
          %224 = sbr.rel (%p222) target = $region32
        $region31: #{net_forward.3} parent=15 // pred_region
          %p225 = scmp.lt.s32.totalorder %s17, 1
          %s226 = scalar_select %p225, %s17, 1
          %s227 = smul.addr %s226, 4
          %s228 = scalar_lea.vmem %s3, %s227
        $region32: #{net_forward.3} parent=15 // pred_fallthru
          _
      $region16: #{net_forward.3} parent=5 // pred_fallthru
        _
      %p229 = scmp.le.s32.totalorder 1, %s10
      %p230 = scmp.lt.s32.totalorder %s10, 3
      %p231 = pnand %p229, %p230
      %p232 = pneg %p231
      // Predicated region
      $region33: #{net_forward.3} parent=5 // pred_check
        _
      $region34: #{net_forward.3} parent=5 // pred_check_branch
        %234 = sbr.rel (%p231) target = $region36
      $region35: #{net_forward.3} parent=5 // pred_region
        %s235 = ssub.s32 %s10, 1
        %s236 = smul.u32 %s20, 2
        %s237 = ssub.s32 0, %s236
        %s238 = smul.u32 %s19, %s237
        %s239 = sadd.s32 %s20, %s238
        %s240 = smul.u32 16, %s239
        %p241 = scmp.lt.s32.totalorder %s240, 15
        %s242 = scalar_select %p241, %s240, 15
        %s243 = smul.addr %s242, 4
        %s244 = scalar_lea.vmem %s0, %s243
        %p245 = pneg %p56
        %p246 = pneg %p53
        %p247 = scmp.lt.s32.totalorder %s19, 1
        %s248 = scalar_select %p247, %s19, 1
        %s249 = smul.addr %s248, 8
        %s250 = smul.addr %s249, 4
        %s251 = scalar_lea.vmem %s1, %s250
        %p252 = pneg %p82
        %p253 = pneg %p79
        %p254 = scmp.lt.s32.totalorder %s19, 1
        %s255 = scalar_select %p254, %s19, 1
        %s256 = smul.addr %s255, 64
        %s257 = smul.addr %s256, 4
        %s258 = scalar_lea.vmem %s2, %s257
        %p259 = pneg %p108
        %p260 = pneg %p105
        %p261 = scmp.lt.s32.totalorder %s19, 1
        %s262 = scalar_select %p261, %s19, 1
        %s263 = smul.addr %s262, 4
        %s264 = scalar_lea.vmem %s3, %s263
        %p265 = pneg %p134
        %p266 = pneg %p131
        %p267 = pneg %p170
        %p268 = pneg %p167
        %s269 = sand.u32 %s157, 1
        %s270 = sand.u32 %s157, 1
        %s271 = smul.addr %s270, 64
        %s272 = scalar_lea.vmem [#allocation5], %s271
        %s273 = smul.u32 %s20, 2
        %s274 = ssub.s32 0, %s273
        %s275 = smul.u32 %s19, %s274
        %s276 = sadd.s32 %s20, %s275
        %s277 = smul.u32 16, %s276
        %p278 = scmp.lt.s32.totalorder %s277, 15
        %s279 = scalar_select %p278, %s277, 15
        %s280 = smul.addr %s279, 4
        %s281 = scalar_lea.vmem %s0, %s280
        %s282 = smul.u32 %s20, 2
        %s283 = ssub.s32 0, %s282
        %s284 = smul.u32 %s19, %s283
        %s285 = sadd.s32 %s20, %s284
        %s286 = smul.u32 16, %s285
        %p287 = scmp.lt.s32.totalorder %s19, 1
        %s288 = scalar_select %p287, %s19, 1
        %s289 = smul.addr %s288, 8
        %s290 = smul.addr %s289, 4
        %s291 = scalar_lea.vmem %s1, %s290
        %p292 = scmp.lt.s32.totalorder %s19, 1
        %s293 = scalar_select %p292, %s19, 1
        %s294 = smul.addr %s293, 64
        %s295 = smul.addr %s294, 4
        %s296 = scalar_lea.vmem %s2, %s295
        %p297 = scmp.lt.s32.totalorder %s19, 1
        %s298 = scalar_select %p297, %s19, 1
        %s299 = smul.addr %s298, 4
        %s300 = scalar_lea.vmem %s3, %s299
        %s301 = smul.u32 %s20, 2
        %s302 = ssub.s32 0, %s301
        %s303 = smul.u32 %s19, %s302
        %s304 = sadd.s32 %s20, %s303
        %s305 = smul.u32 16, %s304
        %p307 = scmp.eq.s32.totalorder %s20, 0
        // Predicated region
        $region37: #{net_forward.3} parent=35 // pred_check
          %p308 = pneg %p307
        $region38: #{net_forward.3} parent=35 // pred_check_branch
          %310 = sbr.rel (%p308) target = $region40
        $region39: #{net_forward.3} parent=35 // pred_region
          %311 = vst [vmem:[#allocation3] sm:$0xff] 0.0
          %312 = vst [vmem:[#allocation3 + $0x8] sm:$0xff] 0.0
          %313 = vst [vmem:[#allocation4] sm:$0xff] 0.0
          %314 = vst [vmem:[#allocation4 + $0x8] sm:$0xff] 0.0
        $region40: #{net_forward.3} parent=35 // pred_fallthru
          _
        %v315 = vld [vmem:[%s281] sm:$0xf]
        %v316 = vld [vmem:[%s281 + $0x4] sm:$0xf]
        %v317 = vld [vmem:[%s281 + $0x8] sm:$0xf]
        %v318 = vld [vmem:[%s281 + $0xc] sm:$0xf]
        %v319 = vld [vmem:[%s281 + $0x10] sm:$0xf]
        %v320 = vld [vmem:[%s281 + $0x14] sm:$0xf]
        %v321 = vld [vmem:[%s281 + $0x18] sm:$0xf]
        %v322 = vld [vmem:[%s281 + $0x1c] sm:$0xf]
        %v323 = vld [vmem:[%s281 + $0x20] sm:$0xf]
        %v324 = vld [vmem:[%s281 + $0x24] sm:$0xf]
        %v325 = vld [vmem:[%s281 + $0x28] sm:$0xf]
        %v326 = vld [vmem:[%s281 + $0x2c] sm:$0xf]
        %v327 = vld [vmem:[%s281 + $0x30] sm:$0xf]
        %v328 = vld [vmem:[%s281 + $0x34] sm:$0xf]
        %v329 = vld [vmem:[%s281 + $0x38] sm:$0xf]
        %v330 = vld [vmem:[%s281 + $0x3c] sm:$0xf]
        %v331 = vld [vmem:[%s291] sm:$0xff]
        %v332 = vld [vmem:[%s291 + $0x8] sm:$0xff]
        %v333 = vld [vmem:[%s291 + $0x10] sm:$0xff]
        %v334 = vld [vmem:[%s291 + $0x18] sm:$0xff]
        %v335 = vld [vmem:[%s300] sm:$0xf]
        %v337 = vlaneseq
        %v338 = vshrl.u32 %v337, 7
        %v339 = vsub.s32 0, %v338
        %v340 = vrot.slane %v335, %v339
        %v341 = vlaneseq
        %v342 = vshrl.u32 %v341, 7
        %v343 = vsub.s32 1, %v342
        %v344 = vrot.slane %v335, %v343
        %v345 = vlaneseq
        %v346 = vshrl.u32 %v345, 7
        %v347 = vsub.s32 2, %v346
        %v348 = vrot.slane %v335, %v347
        %v349 = vlaneseq
        %v350 = vshrl.u32 %v349, 7
        %v351 = vsub.s32 3, %v350
        %v352 = vrot.slane %v335, %v351
        %v373 = vunpack.c.l.b16 %v315
        %v374 = vunpack.c.l.b16 %v316
        %v375 = vunpack.c.l.b16 %v317
        %v376 = vunpack.c.l.b16 %v318
        %v377 = vunpack.c.l.b16 %v319
        %v378 = vunpack.c.l.b16 %v320
        %v379 = vunpack.c.l.b16 %v321
        %v380 = vunpack.c.l.b16 %v322
        %v381 = vunpack.c.l.b16 %v323
        %v382 = vunpack.c.l.b16 %v324
        %v383 = vunpack.c.l.b16 %v325
        %v384 = vunpack.c.l.b16 %v326
        %v385 = vunpack.c.l.b16 %v327
        %v386 = vunpack.c.l.b16 %v328
        %v387 = vunpack.c.l.b16 %v329
        %v388 = vunpack.c.l.b16 %v330
        %v389 = vpack.c.b16 %v374, %v373
        %v390 = vpack.c.b16 %v376, %v375
        %v391 = vpack.c.b16 %v378, %v377
        %v392 = vpack.c.b16 %v380, %v379
        %v393 = vpack.c.b16 %v382, %v381
        %v394 = vpack.c.b16 %v384, %v383
        %v395 = vpack.c.b16 %v386, %v385
        %v396 = vpack.c.b16 %v388, %v387
        %v401 = vunpack.c.l.b16 %v331
        %v402 = vunpack.c.h.b16 %v331
        %v403 = vunpack.c.l.b16 %v332
        %v404 = vunpack.c.h.b16 %v332
        %v405 = vunpack.c.l.b16 %v333
        %v406 = vunpack.c.h.b16 %v333
        %v407 = vunpack.c.l.b16 %v334
        %v408 = vunpack.c.h.b16 %v334
        %v409 = vpack.c.b16 %v405, %v401
        %v410 = vpack.c.b16 %v406, %v402
        %v411 = vpack.c.b16 %v407, %v403
        %v412 = vpack.c.b16 %v408, %v404
        %vm417 = vcmask 130048
        %v419 = vsel %vm417, %v389, 0
        %v422 = vsel %vm417, %v390, 0
        %v425 = vsel %vm417, %v391, 0
        %v428 = vsel %vm417, %v392, 0
        %v431 = vsel %vm417, %v393, 0
        %v434 = vsel %vm417, %v394, 0
        %v437 = vsel %vm417, %v395, 0
        %v440 = vsel %vm417, %v396, 0
        %442 = vmatprep.subr.bf16.mxu0 %v410
        %443 = vmatpush1.bf16.msra.mxu0 %v409
        %444 = vmatprep.subr.bf16.mxu0 0
        %445 = vmatpush1.bf16.msra.mxu0 0
        %446 = vmatprep.subr.bf16.mxu0 0
        %447 = vmatpush1.bf16.msra.mxu0 0
        %448 = vmatprep.subr.bf16.mxu0 0
        %449 = vmatpush1.bf16.msra.mxu0 0
        %450 = vmatprep.subr.bf16.mxu0 0
        %451 = vmatpush1.bf16.msra.mxu0 0
        %452 = vmatprep.subr.bf16.mxu0 0
        %453 = vmatpush1.bf16.msra.mxu0 0
        %454 = vmatprep.subr.bf16.mxu0 0
        %455 = vmatpush1.bf16.msra.mxu0 0
        %456 = vmatprep.subr.bf16.mxu0 0
        %457 = vmatpush1.bf16.msra.mxu0 0
        %458 = vmatprep.subr.bf16.mxu0 0
        %459 = vmatpush1.bf16.msra.mxu0 0
        %460 = vmatprep.subr.bf16.mxu0 0
        %461 = vmatpush1.bf16.msra.mxu0 0
        %462 = vmatprep.subr.bf16.mxu0 0
        %463 = vmatpush1.bf16.msra.mxu0 0
        %464 = vmatprep.subr.bf16.mxu0 0
        %465 = vmatpush1.bf16.msra.mxu0 0
        %466 = vmatprep.subr.bf16.mxu0 0
        %467 = vmatpush1.bf16.msra.mxu0 0
        %468 = vmatprep.subr.bf16.mxu0 0
        %469 = vmatpush1.bf16.msra.mxu0 0
        %470 = vmatprep.subr.bf16.mxu0 0
        %471 = vmatpush1.bf16.msra.mxu0 0
        %472 = vmatprep.subr.bf16.mxu0 0
        %473 = vmatpush1.bf16.msra.mxu0 0
        %474 = vmatprep.mubr.bf16.mxu0 0
        %475 = vmatmul.mubr.bf16.gmra.mrb[0].mxu0 %v419
        %v476 = vpop.f32.mrb[0].mxu0
        %v477 = vadd.f32 %v340, %v476
        %v478 = vpop.f32.mrb[0].mxu0
        %v479 = vadd.f32 %v344, %v478
        %v480 = vpop.f32.mrb[0].mxu0
        %v481 = vadd.f32 %v340, %v480
        %v482 = vpop.f32.mrb[0].mxu0
        %v483 = vadd.f32 %v344, %v482
        %484 = vmatprep.mubr.bf16.mxu0 0
        %485 = vmatmul.mubr.bf16.gmra.mrb[0].mxu0 %v422
        %v486 = vpop.f32.mrb[0].mxu0
        %v487 = vadd.f32 %v340, %v486
        %v488 = vpop.f32.mrb[0].mxu0
        %v489 = vadd.f32 %v344, %v488
        %v490 = vpop.f32.mrb[0].mxu0
        %v491 = vadd.f32 %v340, %v490
        %v492 = vpop.f32.mrb[0].mxu0
        %v493 = vadd.f32 %v344, %v492
        %494 = vmatprep.mubr.bf16.mxu0 0
        %495 = vmatmul.mubr.bf16.gmra.mrb[0].mxu0 %v425
        %v496 = vpop.f32.mrb[0].mxu0
        %v497 = vadd.f32 %v340, %v496
        %v498 = vpop.f32.mrb[0].mxu0
        %v499 = vadd.f32 %v344, %v498
        %v500 = vpop.f32.mrb[0].mxu0
        %v501 = vadd.f32 %v340, %v500
        %v502 = vpop.f32.mrb[0].mxu0
        %v503 = vadd.f32 %v344, %v502
        %504 = vmatprep.mubr.bf16.mxu0 0
        %505 = vmatmul.mubr.bf16.gmra.mrb[0].mxu0 %v428
        %v506 = vpop.f32.mrb[0].mxu0
        %v507 = vadd.f32 %v340, %v506
        %v508 = vpop.f32.mrb[0].mxu0
        %v509 = vadd.f32 %v344, %v508
        %v510 = vpop.f32.mrb[0].mxu0
        %v511 = vadd.f32 %v340, %v510
        %v512 = vpop.f32.mrb[0].mxu0
        %v513 = vadd.f32 %v344, %v512
        %514 = vmatprep.mubr.bf16.mxu0 0
        %515 = vmatmul.mubr.bf16.gmra.mrb[0].mxu0 %v431
        %v516 = vpop.f32.mrb[0].mxu0
        %v517 = vadd.f32 %v340, %v516
        %v518 = vpop.f32.mrb[0].mxu0
        %v519 = vadd.f32 %v344, %v518
        %v520 = vpop.f32.mrb[0].mxu0
        %v521 = vadd.f32 %v340, %v520
        %v522 = vpop.f32.mrb[0].mxu0
        %v523 = vadd.f32 %v344, %v522
        %524 = vmatprep.mubr.bf16.mxu0 0
        %525 = vmatmul.mubr.bf16.gmra.mrb[0].mxu0 %v434
        %v526 = vpop.f32.mrb[0].mxu0
        %v527 = vadd.f32 %v340, %v526
        %v528 = vpop.f32.mrb[0].mxu0
        %v529 = vadd.f32 %v344, %v528
        %v530 = vpop.f32.mrb[0].mxu0
        %v531 = vadd.f32 %v340, %v530
        %v532 = vpop.f32.mrb[0].mxu0
        %v533 = vadd.f32 %v344, %v532
        %534 = vmatprep.mubr.bf16.mxu0 0
        %535 = vmatmul.mubr.bf16.gmra.mrb[0].mxu0 %v437
        %v536 = vpop.f32.mrb[0].mxu0
        %v537 = vadd.f32 %v340, %v536
        %v538 = vpop.f32.mrb[0].mxu0
        %v539 = vadd.f32 %v344, %v538
        %v540 = vpop.f32.mrb[0].mxu0
        %v541 = vadd.f32 %v340, %v540
        %v542 = vpop.f32.mrb[0].mxu0
        %v543 = vadd.f32 %v344, %v542
        %544 = vmatprep.mubr.bf16.mxu0 0
        %545 = vmatmul.mubr.bf16.gmra.mrb[0].mxu0 %v440
        %v546 = vpop.f32.mrb[0].mxu0
        %v547 = vadd.f32 %v340, %v546
        %v548 = vpop.f32.mrb[0].mxu0
        %v549 = vadd.f32 %v344, %v548
        %v550 = vpop.f32.mrb[0].mxu0
        %v551 = vadd.f32 %v340, %v550
        %v552 = vpop.f32.mrb[0].mxu0
        %v553 = vadd.f32 %v344, %v552
        %554 = vdwg.mxu0
        %555 = vmatprep.subr.bf16.mxu0 %v412
        %556 = vmatpush1.bf16.msra.mxu0 %v411
        %557 = vmatprep.subr.bf16.mxu0 0
        %558 = vmatpush1.bf16.msra.mxu0 0
        %559 = vmatprep.subr.bf16.mxu0 0
        %560 = vmatpush1.bf16.msra.mxu0 0
        %561 = vmatprep.subr.bf16.mxu0 0
        %562 = vmatpush1.bf16.msra.mxu0 0
        %563 = vmatprep.subr.bf16.mxu0 0
        %564 = vmatpush1.bf16.msra.mxu0 0
        %565 = vmatprep.subr.bf16.mxu0 0
        %566 = vmatpush1.bf16.msra.mxu0 0
        %567 = vmatprep.subr.bf16.mxu0 0
        %568 = vmatpush1.bf16.msra.mxu0 0
        %569 = vmatprep.subr.bf16.mxu0 0
        %570 = vmatpush1.bf16.msra.mxu0 0
        %571 = vmatprep.subr.bf16.mxu0 0
        %572 = vmatpush1.bf16.msra.mxu0 0
        %573 = vmatprep.subr.bf16.mxu0 0
        %574 = vmatpush1.bf16.msra.mxu0 0
        %575 = vmatprep.subr.bf16.mxu0 0
        %576 = vmatpush1.bf16.msra.mxu0 0
        %577 = vmatprep.subr.bf16.mxu0 0
        %578 = vmatpush1.bf16.msra.mxu0 0
        %579 = vmatprep.subr.bf16.mxu0 0
        %580 = vmatpush1.bf16.msra.mxu0 0
        %581 = vmatprep.subr.bf16.mxu0 0
        %582 = vmatpush1.bf16.msra.mxu0 0
        %583 = vmatprep.subr.bf16.mxu0 0
        %584 = vmatpush1.bf16.msra.mxu0 0
        %585 = vmatprep.subr.bf16.mxu0 0
        %586 = vmatpush1.bf16.msra.mxu0 0
        %587 = vmatprep.mubr.bf16.mxu0 0
        %588 = vmatmul.mubr.bf16.gmra.mrb[0].mxu0 %v419
        %v589 = vpop.f32.mrb[0].mxu0
        %v590 = vadd.f32 %v348, %v589
        %v591 = vpop.f32.mrb[0].mxu0
        %v592 = vadd.f32 %v352, %v591
        %v593 = vpop.f32.mrb[0].mxu0
        %v594 = vadd.f32 %v348, %v593
        %v595 = vpop.f32.mrb[0].mxu0
        %v596 = vadd.f32 %v352, %v595
        %597 = vmatprep.mubr.bf16.mxu0 0
        %598 = vmatmul.mubr.bf16.gmra.mrb[0].mxu0 %v422
        %v599 = vpop.f32.mrb[0].mxu0
        %v600 = vadd.f32 %v348, %v599
        %v601 = vpop.f32.mrb[0].mxu0
        %v602 = vadd.f32 %v352, %v601
        %v603 = vpop.f32.mrb[0].mxu0
        %v604 = vadd.f32 %v348, %v603
        %v605 = vpop.f32.mrb[0].mxu0
        %v606 = vadd.f32 %v352, %v605
        %607 = vmatprep.mubr.bf16.mxu0 0
        %608 = vmatmul.mubr.bf16.gmra.mrb[0].mxu0 %v425
        %v609 = vpop.f32.mrb[0].mxu0
        %v610 = vadd.f32 %v348, %v609
        %v611 = vpop.f32.mrb[0].mxu0
        %v612 = vadd.f32 %v352, %v611
        %v613 = vpop.f32.mrb[0].mxu0
        %v614 = vadd.f32 %v348, %v613
        %v615 = vpop.f32.mrb[0].mxu0
        %v616 = vadd.f32 %v352, %v615
        %617 = vmatprep.mubr.bf16.mxu0 0
        %618 = vmatmul.mubr.bf16.gmra.mrb[0].mxu0 %v428
        %v619 = vpop.f32.mrb[0].mxu0
        %v620 = vadd.f32 %v348, %v619
        %v621 = vpop.f32.mrb[0].mxu0
        %v622 = vadd.f32 %v352, %v621
        %v623 = vpop.f32.mrb[0].mxu0
        %v624 = vadd.f32 %v348, %v623
        %v625 = vpop.f32.mrb[0].mxu0
        %v626 = vadd.f32 %v352, %v625
        %627 = vmatprep.mubr.bf16.mxu0 0
        %628 = vmatmul.mubr.bf16.gmra.mrb[0].mxu0 %v431
        %v629 = vpop.f32.mrb[0].mxu0
        %v630 = vadd.f32 %v348, %v629
        %v631 = vpop.f32.mrb[0].mxu0
        %v632 = vadd.f32 %v352, %v631
        %v633 = vpop.f32.mrb[0].mxu0
        %v634 = vadd.f32 %v348, %v633
        %v635 = vpop.f32.mrb[0].mxu0
        %v636 = vadd.f32 %v352, %v635
        %637 = vmatprep.mubr.bf16.mxu0 0
        %638 = vmatmul.mubr.bf16.gmra.mrb[0].mxu0 %v434
        %v639 = vpop.f32.mrb[0].mxu0
        %v640 = vadd.f32 %v348, %v639
        %v641 = vpop.f32.mrb[0].mxu0
        %v642 = vadd.f32 %v352, %v641
        %v643 = vpop.f32.mrb[0].mxu0
        %v644 = vadd.f32 %v348, %v643
        %v645 = vpop.f32.mrb[0].mxu0
        %v646 = vadd.f32 %v352, %v645
        %647 = vmatprep.mubr.bf16.mxu0 0
        %648 = vmatmul.mubr.bf16.gmra.mrb[0].mxu0 %v437
        %v649 = vpop.f32.mrb[0].mxu0
        %v650 = vadd.f32 %v348, %v649
        %v651 = vpop.f32.mrb[0].mxu0
        %v652 = vadd.f32 %v352, %v651
        %v653 = vpop.f32.mrb[0].mxu0
        %v654 = vadd.f32 %v348, %v653
        %v655 = vpop.f32.mrb[0].mxu0
        %v656 = vadd.f32 %v352, %v655
        %657 = vmatprep.mubr.bf16.mxu0 0
        %658 = vmatmul.mubr.bf16.gmra.mrb[0].mxu0 %v440
        %v659 = vpop.f32.mrb[0].mxu0
        %v660 = vadd.f32 %v348, %v659
        %v661 = vpop.f32.mrb[0].mxu0
        %v662 = vadd.f32 %v352, %v661
        %v663 = vpop.f32.mrb[0].mxu0
        %v664 = vadd.f32 %v348, %v663
        %v665 = vpop.f32.mrb[0].mxu0
        %v666 = vadd.f32 %v352, %v665
        %667 = vdwg.mxu0
        %668 = vst [vmem:[#allocation2] sm:$0xff] %v477
        %669 = vst [vmem:[#allocation2 + $0x8] sm:$0xff] %v479
        %670 = vst [vmem:[#allocation2 + $0x10] sm:$0xff] %v590
        %671 = vst [vmem:[#allocation2 + $0x18] sm:$0xff] %v592
        %672 = vst [vmem:[#allocation2 + $0x20] sm:$0xff] %v481
        %673 = vst [vmem:[#allocation2 + $0x28] sm:$0xff] %v483
        %674 = vst [vmem:[#allocation2 + $0x30] sm:$0xff] %v594
        %675 = vst [vmem:[#allocation2 + $0x38] sm:$0xff] %v596
        %676 = vst [vmem:[#allocation2 + $0x40] sm:$0xff] %v487
        %677 = vst [vmem:[#allocation2 + $0x48] sm:$0xff] %v489
        %678 = vst [vmem:[#allocation2 + $0x50] sm:$0xff] %v600
        %679 = vst [vmem:[#allocation2 + $0x58] sm:$0xff] %v602
        %680 = vst [vmem:[#allocation2 + $0x60] sm:$0xff] %v491
        %681 = vst [vmem:[#allocation2 + $0x68] sm:$0xff] %v493
        %682 = vst [vmem:[#allocation2 + $0x70] sm:$0xff] %v604
        %683 = vst [vmem:[#allocation2 + $0x78] sm:$0xff] %v606
        %684 = vst [vmem:[#allocation2 + $0x80] sm:$0xff] %v497
        %685 = vst [vmem:[#allocation2 + $0x88] sm:$0xff] %v499
        %686 = vst [vmem:[#allocation2 + $0x90] sm:$0xff] %v610
        %687 = vst [vmem:[#allocation2 + $0x98] sm:$0xff] %v612
        %688 = vst [vmem:[#allocation2 + $0xa0] sm:$0xff] %v501
        %689 = vst [vmem:[#allocation2 + $0xa8] sm:$0xff] %v503
        %690 = vst [vmem:[#allocation2 + $0xb0] sm:$0xff] %v614
        %691 = vst [vmem:[#allocation2 + $0xb8] sm:$0xff] %v616
        %692 = vst [vmem:[#allocation2 + $0xc0] sm:$0xff] %v507
        %693 = vst [vmem:[#allocation2 + $0xc8] sm:$0xff] %v509
        %694 = vst [vmem:[#allocation2 + $0xd0] sm:$0xff] %v620
        %695 = vst [vmem:[#allocation2 + $0xd8] sm:$0xff] %v622
        %696 = vst [vmem:[#allocation2 + $0xe0] sm:$0xff] %v511
        %697 = vst [vmem:[#allocation2 + $0xe8] sm:$0xff] %v513
        %698 = vst [vmem:[#allocation2 + $0xf0] sm:$0xff] %v624
        %699 = vst [vmem:[#allocation2 + $0xf8] sm:$0xff] %v626
        %700 = vst [vmem:[#allocation2 + $0x100] sm:$0xff] %v517
        %701 = vst [vmem:[#allocation2 + $0x108] sm:$0xff] %v519
        %702 = vst [vmem:[#allocation2 + $0x110] sm:$0xff] %v630
        %703 = vst [vmem:[#allocation2 + $0x118] sm:$0xff] %v632
        %704 = vst [vmem:[#allocation2 + $0x120] sm:$0xff] %v521
        %705 = vst [vmem:[#allocation2 + $0x128] sm:$0xff] %v523
        %706 = vst [vmem:[#allocation2 + $0x130] sm:$0xff] %v634
        %707 = vst [vmem:[#allocation2 + $0x138] sm:$0xff] %v636
        %708 = vst [vmem:[#allocation2 + $0x140] sm:$0xff] %v527
        %709 = vst [vmem:[#allocation2 + $0x148] sm:$0xff] %v529
        %710 = vst [vmem:[#allocation2 + $0x150] sm:$0xff] %v640
        %711 = vst [vmem:[#allocation2 + $0x158] sm:$0xff] %v642
        %712 = vst [vmem:[#allocation2 + $0x160] sm:$0xff] %v531
        %713 = vst [vmem:[#allocation2 + $0x168] sm:$0xff] %v533
        %714 = vst [vmem:[#allocation2 + $0x170] sm:$0xff] %v644
        %715 = vst [vmem:[#allocation2 + $0x178] sm:$0xff] %v646
        %716 = vst [vmem:[#allocation2 + $0x180] sm:$0xff] %v537
        %717 = vst [vmem:[#allocation2 + $0x188] sm:$0xff] %v539
        %718 = vst [vmem:[#allocation2 + $0x190] sm:$0xff] %v650
        %719 = vst [vmem:[#allocation2 + $0x198] sm:$0xff] %v652
        %720 = vst [vmem:[#allocation2 + $0x1a0] sm:$0xff] %v541
        %721 = vst [vmem:[#allocation2 + $0x1a8] sm:$0xff] %v543
        %722 = vst [vmem:[#allocation2 + $0x1b0] sm:$0xff] %v654
        %723 = vst [vmem:[#allocation2 + $0x1b8] sm:$0xff] %v656
        %724 = vst [vmem:[#allocation2 + $0x1c0] sm:$0xff] %v547
        %725 = vst [vmem:[#allocation2 + $0x1c8] sm:$0xff] %v549
        %726 = vst [vmem:[#allocation2 + $0x1d0] sm:$0xff] %v660
        %727 = vst [vmem:[#allocation2 + $0x1d8] sm:$0xff] %v662
        %728 = vst [vmem:[#allocation2 + $0x1e0] sm:$0xff] %v551
        %729 = vst [vmem:[#allocation2 + $0x1e8] sm:$0xff] %v553
        %730 = vst [vmem:[#allocation2 + $0x1f0] sm:$0xff] %v664
        %731 = vst [vmem:[#allocation2 + $0x1f8] sm:$0xff] %v666
        %p732 = scmp.ne.s32.totalorder %s19, 0
        %v733 = vld [vmem:[#allocation3] sm:$0xff]
        %v734 = vld [vmem:[#allocation3 + $0x8] sm:$0xff]
        %v735 = vld [vmem:[#allocation4] sm:$0xff]
        %v736 = vld [vmem:[#allocation4 + $0x8] sm:$0xff]
        %s737 = scalar_select %p732, 7, 0
        %s738 = smul.u32 %s737, 16
        %s739 = sshra.s32 %s738, 3
        %s740 = sand.u32 %s738, 7
        %s741 = smul.u32 %s739, 4
        %s742 = smul.addr %s741, 8
        %s743 = scalar_lea.vmem [#allocation2], %s742
        %v744 = vld [vmem:[%s743] sm:$0xff]
        %v745 = vld [vmem:[%s743 + $0x8] sm:$0xff]
        %v746 = vld [vmem:[%s743 + $0x10] sm:$0xff]
        %v747 = vld [vmem:[%s743 + $0x18] sm:$0xff]
        %v748 = vld [vmem:[%s743 + $0x20] sm:$0xff]
        %v749 = vld [vmem:[%s743 + $0x28] sm:$0xff]
        %v750 = vld [vmem:[%s743 + $0x30] sm:$0xff]
        %v751 = vld [vmem:[%s743 + $0x38] sm:$0xff]
        %v752 = vpack.c.bf16 %v734, %v733
        %v753 = vld [vmem:[%s296] sm:$0xff]
        %v754 = vld [vmem:[%s296 + $0x8] sm:$0xff]
        %v755 = vld [vmem:[%s296 + $0x10] sm:$0xff]
        %v756 = vld [vmem:[%s296 + $0x18] sm:$0xff]
        %v757 = vld [vmem:[%s296 + $0x20] sm:$0xff]
        %v758 = vld [vmem:[%s296 + $0x28] sm:$0xff]
        %v759 = vld [vmem:[%s296 + $0x30] sm:$0xff]
        %v760 = vld [vmem:[%s296 + $0x38] sm:$0xff]
        %v761 = vld [vmem:[%s296 + $0x40] sm:$0xff]
        %v762 = vld [vmem:[%s296 + $0x48] sm:$0xff]
        %v763 = vld [vmem:[%s296 + $0x50] sm:$0xff]
        %v764 = vld [vmem:[%s296 + $0x58] sm:$0xff]
        %v765 = vld [vmem:[%s296 + $0x60] sm:$0xff]
        %v766 = vld [vmem:[%s296 + $0x68] sm:$0xff]
        %v767 = vld [vmem:[%s296 + $0x70] sm:$0xff]
        %v768 = vld [vmem:[%s296 + $0x78] sm:$0xff]
        %v769 = vld [vmem:[%s296 + $0x80] sm:$0xff]
        %v770 = vld [vmem:[%s296 + $0x88] sm:$0xff]
        %v771 = vld [vmem:[%s296 + $0x90] sm:$0xff]
        %v772 = vld [vmem:[%s296 + $0x98] sm:$0xff]
        %v773 = vld [vmem:[%s296 + $0xa0] sm:$0xff]
        %v774 = vld [vmem:[%s296 + $0xa8] sm:$0xff]
        %v775 = vld [vmem:[%s296 + $0xb0] sm:$0xff]
        %v776 = vld [vmem:[%s296 + $0xb8] sm:$0xff]
        %v777 = vld [vmem:[%s296 + $0xc0] sm:$0xff]
        %v778 = vld [vmem:[%s296 + $0xc8] sm:$0xff]
        %v779 = vld [vmem:[%s296 + $0xd0] sm:$0xff]
        %v780 = vld [vmem:[%s296 + $0xd8] sm:$0xff]
        %v781 = vld [vmem:[%s296 + $0xe0] sm:$0xff]
        %v782 = vld [vmem:[%s296 + $0xe8] sm:$0xff]
        %v783 = vld [vmem:[%s296 + $0xf0] sm:$0xff]
        %v784 = vld [vmem:[%s296 + $0xf8] sm:$0xff]
        %v817 = vunpack.c.l.b16 %v753
        %v818 = vunpack.c.h.b16 %v753
        %v819 = vunpack.c.l.b16 %v754
        %v820 = vunpack.c.h.b16 %v754
        %v821 = vunpack.c.l.b16 %v755
        %v822 = vunpack.c.h.b16 %v755
        %v823 = vunpack.c.l.b16 %v756
        %v824 = vunpack.c.h.b16 %v756
        %v825 = vunpack.c.l.b16 %v757
        %v826 = vunpack.c.h.b16 %v757
        %v827 = vunpack.c.l.b16 %v758
        %v828 = vunpack.c.h.b16 %v758
        %v829 = vunpack.c.l.b16 %v759
        %v830 = vunpack.c.h.b16 %v759
        %v831 = vunpack.c.l.b16 %v760
        %v832 = vunpack.c.h.b16 %v760
        %v833 = vunpack.c.l.b16 %v761
        %v834 = vunpack.c.h.b16 %v761
        %v835 = vunpack.c.l.b16 %v762
        %v836 = vunpack.c.h.b16 %v762
        %v837 = vunpack.c.l.b16 %v763
        %v838 = vunpack.c.h.b16 %v763
        %v839 = vunpack.c.l.b16 %v764
        %v840 = vunpack.c.h.b16 %v764
        %v841 = vunpack.c.l.b16 %v765
        %v842 = vunpack.c.h.b16 %v765
        %v843 = vunpack.c.l.b16 %v766
        %v844 = vunpack.c.h.b16 %v766
        %v845 = vunpack.c.l.b16 %v767
        %v846 = vunpack.c.h.b16 %v767
        %v847 = vunpack.c.l.b16 %v768
        %v848 = vunpack.c.h.b16 %v768
        %v849 = vunpack.c.l.b16 %v769
        %v850 = vunpack.c.h.b16 %v769
        %v851 = vunpack.c.l.b16 %v770
        %v852 = vunpack.c.h.b16 %v770
        %v853 = vunpack.c.l.b16 %v771
        %v854 = vunpack.c.h.b16 %v771
        %v855 = vunpack.c.l.b16 %v772
        %v856 = vunpack.c.h.b16 %v772
        %v857 = vunpack.c.l.b16 %v773
        %v858 = vunpack.c.h.b16 %v773
        %v859 = vunpack.c.l.b16 %v774
        %v860 = vunpack.c.h.b16 %v774
        %v861 = vunpack.c.l.b16 %v775
        %v862 = vunpack.c.h.b16 %v775
        %v863 = vunpack.c.l.b16 %v776
        %v864 = vunpack.c.h.b16 %v776
        %v865 = vunpack.c.l.b16 %v777
        %v866 = vunpack.c.h.b16 %v777
        %v867 = vunpack.c.l.b16 %v778
        %v868 = vunpack.c.h.b16 %v778
        %v869 = vunpack.c.l.b16 %v779
        %v870 = vunpack.c.h.b16 %v779
        %v871 = vunpack.c.l.b16 %v780
        %v872 = vunpack.c.h.b16 %v780
        %v873 = vunpack.c.l.b16 %v781
        %v874 = vunpack.c.h.b16 %v781
        %v875 = vunpack.c.l.b16 %v782
        %v876 = vunpack.c.h.b16 %v782
        %v877 = vunpack.c.l.b16 %v783
        %v878 = vunpack.c.h.b16 %v783
        %v879 = vunpack.c.l.b16 %v784
        %v880 = vunpack.c.h.b16 %v784
        %v881 = vpack.c.b16 %v821, %v817
        %v882 = vpack.c.b16 %v822, %v818
        %v883 = vpack.c.b16 %v823, %v819
        %v884 = vpack.c.b16 %v824, %v820
        %v885 = vpack.c.b16 %v829, %v825
        %v886 = vpack.c.b16 %v830, %v826
        %v887 = vpack.c.b16 %v831, %v827
        %v888 = vpack.c.b16 %v832, %v828
        %v889 = vpack.c.b16 %v837, %v833
        %v890 = vpack.c.b16 %v838, %v834
        %v891 = vpack.c.b16 %v839, %v835
        %v892 = vpack.c.b16 %v840, %v836
        %v893 = vpack.c.b16 %v845, %v841
        %v894 = vpack.c.b16 %v846, %v842
        %v895 = vpack.c.b16 %v847, %v843
        %v896 = vpack.c.b16 %v848, %v844
        %v897 = vpack.c.b16 %v853, %v849
        %v898 = vpack.c.b16 %v854, %v850
        %v899 = vpack.c.b16 %v855, %v851
        %v900 = vpack.c.b16 %v856, %v852
        %v901 = vpack.c.b16 %v861, %v857
        %v902 = vpack.c.b16 %v862, %v858
        %v903 = vpack.c.b16 %v863, %v859
        %v904 = vpack.c.b16 %v864, %v860
        %v905 = vpack.c.b16 %v869, %v865
        %v906 = vpack.c.b16 %v870, %v866
        %v907 = vpack.c.b16 %v871, %v867
        %v908 = vpack.c.b16 %v872, %v868
        %v909 = vpack.c.b16 %v877, %v873
        %v910 = vpack.c.b16 %v878, %v874
        %v911 = vpack.c.b16 %v879, %v875
        %v912 = vpack.c.b16 %v880, %v876
        %945 = vmatprep.subr.bf16.mxu0 %v882
        %946 = vmatpush1.bf16.msra.mxu0 %v881
        %947 = vmatprep.subr.bf16.mxu0 %v886
        %948 = vmatpush1.bf16.msra.mxu0 %v885
        %949 = vmatprep.subr.bf16.mxu0 %v890
        %950 = vmatpush1.bf16.msra.mxu0 %v889
        %951 = vmatprep.subr.bf16.mxu0 %v894
        %952 = vmatpush1.bf16.msra.mxu0 %v893
        %953 = vmatprep.subr.bf16.mxu0 %v898
        %954 = vmatpush1.bf16.msra.mxu0 %v897
        %955 = vmatprep.subr.bf16.mxu0 %v902
        %956 = vmatpush1.bf16.msra.mxu0 %v901
        %957 = vmatprep.subr.bf16.mxu0 %v906
        %958 = vmatpush1.bf16.msra.mxu0 %v905
        %959 = vmatprep.subr.bf16.mxu0 %v910
        %960 = vmatpush1.bf16.msra.mxu0 %v909
        %961 = vmatprep.subr.bf16.mxu0 0
        %962 = vmatpush1.bf16.msra.mxu0 0
        %963 = vmatprep.subr.bf16.mxu0 0
        %964 = vmatpush1.bf16.msra.mxu0 0
        %965 = vmatprep.subr.bf16.mxu0 0
        %966 = vmatpush1.bf16.msra.mxu0 0
        %967 = vmatprep.subr.bf16.mxu0 0
        %968 = vmatpush1.bf16.msra.mxu0 0
        %969 = vmatprep.subr.bf16.mxu0 0
        %970 = vmatpush1.bf16.msra.mxu0 0
        %971 = vmatprep.subr.bf16.mxu0 0
        %972 = vmatpush1.bf16.msra.mxu0 0
        %973 = vmatprep.subr.bf16.mxu0 0
        %974 = vmatpush1.bf16.msra.mxu0 0
        %975 = vmatprep.subr.bf16.mxu0 0
        %976 = vmatpush1.bf16.msra.mxu0 0
        %977 = vmatprep.mubr.bf16.mxu0 0
        %978 = vmatmul.mubr.bf16.gmra.mrb[0].mxu0 %v752
        %v979 = vpop.f32.mrb[0].mxu0
        %v980 = vadd.f32 0.0, %v979
        %v981 = vpop.f32.mrb[0].mxu0
        %v982 = vadd.f32 0.0, %v981
        %v983 = vpop.f32.mrb[0].mxu0
        %v984 = vadd.f32 0.0, %v983
        %v985 = vpop.f32.mrb[0].mxu0
        %v986 = vadd.f32 0.0, %v985
        %987 = vdwg.mxu0
        %988 = vmatprep.subr.bf16.mxu0 %v884
        %989 = vmatpush1.bf16.msra.mxu0 %v883
        %990 = vmatprep.subr.bf16.mxu0 %v888
        %991 = vmatpush1.bf16.msra.mxu0 %v887
        %992 = vmatprep.subr.bf16.mxu0 %v892
        %993 = vmatpush1.bf16.msra.mxu0 %v891
        %994 = vmatprep.subr.bf16.mxu0 %v896
        %995 = vmatpush1.bf16.msra.mxu0 %v895
        %996 = vmatprep.subr.bf16.mxu0 %v900
        %997 = vmatpush1.bf16.msra.mxu0 %v899
        %998 = vmatprep.subr.bf16.mxu0 %v904
        %999 = vmatpush1.bf16.msra.mxu0 %v903
        %1000 = vmatprep.subr.bf16.mxu0 %v908
        %1001 = vmatpush1.bf16.msra.mxu0 %v907
        %1002 = vmatprep.subr.bf16.mxu0 %v912
        %1003 = vmatpush1.bf16.msra.mxu0 %v911
        %1004 = vmatprep.subr.bf16.mxu0 0
        %1005 = vmatpush1.bf16.msra.mxu0 0
        %1006 = vmatprep.subr.bf16.mxu0 0
        %1007 = vmatpush1.bf16.msra.mxu0 0
        %1008 = vmatprep.subr.bf16.mxu0 0
        %1009 = vmatpush1.bf16.msra.mxu0 0
        %1010 = vmatprep.subr.bf16.mxu0 0
        %1011 = vmatpush1.bf16.msra.mxu0 0
        %1012 = vmatprep.subr.bf16.mxu0 0
        %1013 = vmatpush1.bf16.msra.mxu0 0
        %1014 = vmatprep.subr.bf16.mxu0 0
        %1015 = vmatpush1.bf16.msra.mxu0 0
        %1016 = vmatprep.subr.bf16.mxu0 0
        %1017 = vmatpush1.bf16.msra.mxu0 0
        %1018 = vmatprep.subr.bf16.mxu0 0
        %1019 = vmatpush1.bf16.msra.mxu0 0
        %1020 = vmatprep.mubr.bf16.mxu0 0
        %1021 = vmatmul.mubr.bf16.gmra.mrb[0].mxu0 %v752
        %v1022 = vpop.f32.mrb[0].mxu0
        %v1023 = vadd.f32 0.0, %v1022
        %v1024 = vpop.f32.mrb[0].mxu0
        %v1025 = vadd.f32 0.0, %v1024
        %v1026 = vpop.f32.mrb[0].mxu0
        %v1027 = vadd.f32 0.0, %v1026
        %v1028 = vpop.f32.mrb[0].mxu0
        %v1029 = vadd.f32 0.0, %v1028
        %1030 = vdwg.mxu0
        %v1031 = vadd.f32 %v744, %v980
        %v1032 = vadd.f32 %v745, %v982
        %v1033 = vadd.f32 %v746, %v1023
        %v1034 = vadd.f32 %v747, %v1025
        %v1035 = vadd.f32 %v748, %v984
        %v1036 = vadd.f32 %v749, %v986
        %v1037 = vadd.f32 %v750, %v1027
        %v1038 = vadd.f32 %v751, %v1029
        %v1039 = vxor.u32 %v1031, 2147483648
        %v1040 = vxor.u32 %v1035, 2147483648
        %v1041 = vmul.f32 %v1039, 1.442695
        %v1042 = vpow.pop %v1041
        %v1043 = vmul.f32 %v1040, 1.442695
        %v1044 = vpow.pop %v1043
        %v1045 = vadd.f32 %v1042, 1.0
        %v1046 = vadd.f32 %v1044, 1.0
        %v1047 = vrcp.pop %v1045
        %v1048 = vmul.f32 1.0, %v1047
        %v1049 = vrcp.pop %v1046
        %v1050 = vmul.f32 1.0, %v1049
        %v1051 = vxor.u32 %v1032, 2147483648
        %v1052 = vxor.u32 %v1036, 2147483648
        %v1053 = vmul.f32 %v1051, 1.442695
        %v1054 = vpow.pop %v1053
        %v1055 = vmul.f32 %v1052, 1.442695
        %v1056 = vpow.pop %v1055
        %v1057 = vadd.f32 %v1054, 1.0
        %v1058 = vadd.f32 %v1056, 1.0
        %v1059 = vrcp.pop %v1057
        %v1060 = vmul.f32 1.0, %v1059
        %v1061 = vrcp.pop %v1058
        %v1062 = vmul.f32 1.0, %v1061
        %v1063 = vtanh.pop %v1033
        %v1064 = vtanh.pop %v1037
        %v1065 = vxor.u32 %v1034, 2147483648
        %v1066 = vxor.u32 %v1038, 2147483648
        %v1067 = vmul.f32 %v1065, 1.442695
        %v1068 = vpow.pop %v1067
        %v1069 = vmul.f32 %v1066, 1.442695
        %v1070 = vpow.pop %v1069
        %v1071 = vadd.f32 %v1068, 1.0
        %v1072 = vadd.f32 %v1070, 1.0
        %v1073 = vrcp.pop %v1071
        %v1074 = vmul.f32 1.0, %v1073
        %v1075 = vrcp.pop %v1072
        %v1076 = vmul.f32 1.0, %v1075
        %v1077 = vmul.f32 %v1060, %v735
        %v1078 = vmul.f32 %v1062, %v736
        %v1079 = vmul.f32 %v1048, %v1063
        %v1080 = vmul.f32 %v1050, %v1064
        %v1081 = vadd.f32 %v1077, %v1079
        %v1082 = vadd.f32 %v1078, %v1080
        %v1083 = vtanh.pop %v1081
        %v1084 = vtanh.pop %v1082
        %v1085 = vmul.f32 %v1074, %v1083
        %v1086 = vmul.f32 %v1076, %v1084
        %v1087 = vpack.c.bf16 %v1086, %v1085
        %v1089 = vunpack.c.l.b16 %v1087
        %v1090 = vunpack.c.h.b16 %v1087
        %v1091 = vpack.c.b16 %v1089, %v1089
        %v1092 = vpack.c.b16 %v1090, %v1090
        %s1095 = smul.addr %s739, 4
        %s1096 = scalar_lea.vmem %s272, %s1095 [#allocation5]
        %1097 = vst [vmem:[%s1096] sm:$0xf] %v1091
        %1098 = vst [vmem:[%s1096 + $0x4] sm:$0xf] %v1092
        %s1099 = scalar_select %p732, 6, 1
        %s1100 = smul.u32 %s1099, 16
        %s1101 = sshra.s32 %s1100, 3
        %s1102 = sand.u32 %s1100, 7
        %s1103 = smul.u32 %s1101, 4
        %s1104 = smul.addr %s1103, 8
        %s1105 = scalar_lea.vmem [#allocation2], %s1104
        %v1106 = vld [vmem:[%s1105] sm:$0xff]
        %v1107 = vld [vmem:[%s1105 + $0x8] sm:$0xff]
        %v1108 = vld [vmem:[%s1105 + $0x10] sm:$0xff]
        %v1109 = vld [vmem:[%s1105 + $0x18] sm:$0xff]
        %v1110 = vld [vmem:[%s1105 + $0x20] sm:$0xff]
        %v1111 = vld [vmem:[%s1105 + $0x28] sm:$0xff]
        %v1112 = vld [vmem:[%s1105 + $0x30] sm:$0xff]
        %v1113 = vld [vmem:[%s1105 + $0x38] sm:$0xff]
        %v1114 = vld [vmem:[%s296] sm:$0xff]
        %v1115 = vld [vmem:[%s296 + $0x8] sm:$0xff]
        %v1116 = vld [vmem:[%s296 + $0x10] sm:$0xff]
        %v1117 = vld [vmem:[%s296 + $0x18] sm:$0xff]
        %v1118 = vld [vmem:[%s296 + $0x20] sm:$0xff]
        %v1119 = vld [vmem:[%s296 + $0x28] sm:$0xff]
        %v1120 = vld [vmem:[%s296 + $0x30] sm:$0xff]
        %v1121 = vld [vmem:[%s296 + $0x38] sm:$0xff]
        %v1122 = vld [vmem:[%s296 + $0x40] sm:$0xff]
        %v1123 = vld [vmem:[%s296 + $0x48] sm:$0xff]
        %v1124 = vld [vmem:[%s296 + $0x50] sm:$0xff]
        %v1125 = vld [vmem:[%s296 + $0x58] sm:$0xff]
        %v1126 = vld [vmem:[%s296 + $0x60] sm:$0xff]
        %v1127 = vld [vmem:[%s296 + $0x68] sm:$0xff]
        %v1128 = vld [vmem:[%s296 + $0x70] sm:$0xff]
        %v1129 = vld [vmem:[%s296 + $0x78] sm:$0xff]
        %v1130 = vld [vmem:[%s296 + $0x80] sm:$0xff]
        %v1131 = vld [vmem:[%s296 + $0x88] sm:$0xff]
        %v1132 = vld [vmem:[%s296 + $0x90] sm:$0xff]
        %v1133 = vld [vmem:[%s296 + $0x98] sm:$0xff]
        %v1134 = vld [vmem:[%s296 + $0xa0] sm:$0xff]
        %v1135 = vld [vmem:[%s296 + $0xa8] sm:$0xff]
        %v1136 = vld [vmem:[%s296 + $0xb0] sm:$0xff]
        %v1137 = vld [vmem:[%s296 + $0xb8] sm:$0xff]
        %v1138 = vld [vmem:[%s296 + $0xc0] sm:$0xff]
        %v1139 = vld [vmem:[%s296 + $0xc8] sm:$0xff]
        %v1140 = vld [vmem:[%s296 + $0xd0] sm:$0xff]
        %v1141 = vld [vmem:[%s296 + $0xd8] sm:$0xff]
        %v1142 = vld [vmem:[%s296 + $0xe0] sm:$0xff]
        %v1143 = vld [vmem:[%s296 + $0xe8] sm:$0xff]
        %v1144 = vld [vmem:[%s296 + $0xf0] sm:$0xff]
        %v1145 = vld [vmem:[%s296 + $0xf8] sm:$0xff]
        %v1178 = vunpack.c.l.b16 %v1114
        %v1179 = vunpack.c.h.b16 %v1114
        %v1180 = vunpack.c.l.b16 %v1115
        %v1181 = vunpack.c.h.b16 %v1115
        %v1182 = vunpack.c.l.b16 %v1116
        %v1183 = vunpack.c.h.b16 %v1116
        %v1184 = vunpack.c.l.b16 %v1117
        %v1185 = vunpack.c.h.b16 %v1117
        %v1186 = vunpack.c.l.b16 %v1118
        %v1187 = vunpack.c.h.b16 %v1118
        %v1188 = vunpack.c.l.b16 %v1119
        %v1189 = vunpack.c.h.b16 %v1119
        %v1190 = vunpack.c.l.b16 %v1120
        %v1191 = vunpack.c.h.b16 %v1120
        %v1192 = vunpack.c.l.b16 %v1121
        %v1193 = vunpack.c.h.b16 %v1121
        %v1194 = vunpack.c.l.b16 %v1122
        %v1195 = vunpack.c.h.b16 %v1122
        %v1196 = vunpack.c.l.b16 %v1123
        %v1197 = vunpack.c.h.b16 %v1123
        %v1198 = vunpack.c.l.b16 %v1124
        %v1199 = vunpack.c.h.b16 %v1124
        %v1200 = vunpack.c.l.b16 %v1125
        %v1201 = vunpack.c.h.b16 %v1125
        %v1202 = vunpack.c.l.b16 %v1126
        %v1203 = vunpack.c.h.b16 %v1126
        %v1204 = vunpack.c.l.b16 %v1127
        %v1205 = vunpack.c.h.b16 %v1127
        %v1206 = vunpack.c.l.b16 %v1128
        %v1207 = vunpack.c.h.b16 %v1128
        %v1208 = vunpack.c.l.b16 %v1129
        %v1209 = vunpack.c.h.b16 %v1129
        %v1210 = vunpack.c.l.b16 %v1130
        %v1211 = vunpack.c.h.b16 %v1130
        %v1212 = vunpack.c.l.b16 %v1131
        %v1213 = vunpack.c.h.b16 %v1131
        %v1214 = vunpack.c.l.b16 %v1132
        %v1215 = vunpack.c.h.b16 %v1132
        %v1216 = vunpack.c.l.b16 %v1133
        %v1217 = vunpack.c.h.b16 %v1133
        %v1218 = vunpack.c.l.b16 %v1134
        %v1219 = vunpack.c.h.b16 %v1134
        %v1220 = vunpack.c.l.b16 %v1135
        %v1221 = vunpack.c.h.b16 %v1135
        %v1222 = vunpack.c.l.b16 %v1136
        %v1223 = vunpack.c.h.b16 %v1136
        %v1224 = vunpack.c.l.b16 %v1137
        %v1225 = vunpack.c.h.b16 %v1137
        %v1226 = vunpack.c.l.b16 %v1138
        %v1227 = vunpack.c.h.b16 %v1138
        %v1228 = vunpack.c.l.b16 %v1139
        %v1229 = vunpack.c.h.b16 %v1139
        %v1230 = vunpack.c.l.b16 %v1140
        %v1231 = vunpack.c.h.b16 %v1140
        %v1232 = vunpack.c.l.b16 %v1141
        %v1233 = vunpack.c.h.b16 %v1141
        %v1234 = vunpack.c.l.b16 %v1142
        %v1235 = vunpack.c.h.b16 %v1142
        %v1236 = vunpack.c.l.b16 %v1143
        %v1237 = vunpack.c.h.b16 %v1143
        %v1238 = vunpack.c.l.b16 %v1144
        %v1239 = vunpack.c.h.b16 %v1144
        %v1240 = vunpack.c.l.b16 %v1145
        %v1241 = vunpack.c.h.b16 %v1145
        %v1242 = vpack.c.b16 %v1182, %v1178
        %v1243 = vpack.c.b16 %v1183, %v1179
        %v1244 = vpack.c.b16 %v1184, %v1180
        %v1245 = vpack.c.b16 %v1185, %v1181
        %v1246 = vpack.c.b16 %v1190, %v1186
        %v1247 = vpack.c.b16 %v1191, %v1187
        %v1248 = vpack.c.b16 %v1192, %v1188
        %v1249 = vpack.c.b16 %v1193, %v1189
        %v1250 = vpack.c.b16 %v1198, %v1194
        %v1251 = vpack.c.b16 %v1199, %v1195
        %v1252 = vpack.c.b16 %v1200, %v1196
        %v1253 = vpack.c.b16 %v1201, %v1197
        %v1254 = vpack.c.b16 %v1206, %v1202
        %v1255 = vpack.c.b16 %v1207, %v1203
        %v1256 = vpack.c.b16 %v1208, %v1204
        %v1257 = vpack.c.b16 %v1209, %v1205
        %v1258 = vpack.c.b16 %v1214, %v1210
        %v1259 = vpack.c.b16 %v1215, %v1211
        %v1260 = vpack.c.b16 %v1216, %v1212
        %v1261 = vpack.c.b16 %v1217, %v1213
        %v1262 = vpack.c.b16 %v1222, %v1218
        %v1263 = vpack.c.b16 %v1223, %v1219
        %v1264 = vpack.c.b16 %v1224, %v1220
        %v1265 = vpack.c.b16 %v1225, %v1221
        %v1266 = vpack.c.b16 %v1230, %v1226
        %v1267 = vpack.c.b16 %v1231, %v1227
        %v1268 = vpack.c.b16 %v1232, %v1228
        %v1269 = vpack.c.b16 %v1233, %v1229
        %v1270 = vpack.c.b16 %v1238, %v1234
        %v1271 = vpack.c.b16 %v1239, %v1235
        %v1272 = vpack.c.b16 %v1240, %v1236
        %v1273 = vpack.c.b16 %v1241, %v1237
        %1306 = vmatprep.subr.bf16.mxu0 %v1243
        %1307 = vmatpush1.bf16.msra.mxu0 %v1242
        %1308 = vmatprep.subr.bf16.mxu0 %v1247
        %1309 = vmatpush1.bf16.msra.mxu0 %v1246
        %1310 = vmatprep.subr.bf16.mxu0 %v1251
        %1311 = vmatpush1.bf16.msra.mxu0 %v1250
        %1312 = vmatprep.subr.bf16.mxu0 %v1255
        %1313 = vmatpush1.bf16.msra.mxu0 %v1254
        %1314 = vmatprep.subr.bf16.mxu0 %v1259
        %1315 = vmatpush1.bf16.msra.mxu0 %v1258
        %1316 = vmatprep.subr.bf16.mxu0 %v1263
        %1317 = vmatpush1.bf16.msra.mxu0 %v1262
        %1318 = vmatprep.subr.bf16.mxu0 %v1267
        %1319 = vmatpush1.bf16.msra.mxu0 %v1266
        %1320 = vmatprep.subr.bf16.mxu0 %v1271
        %1321 = vmatpush1.bf16.msra.mxu0 %v1270
        %1322 = vmatprep.subr.bf16.mxu0 0
        %1323 = vmatpush1.bf16.msra.mxu0 0
        %1324 = vmatprep.subr.bf16.mxu0 0
        %1325 = vmatpush1.bf16.msra.mxu0 0
        %1326 = vmatprep.subr.bf16.mxu0 0
        %1327 = vmatpush1.bf16.msra.mxu0 0
        %1328 = vmatprep.subr.bf16.mxu0 0
        %1329 = vmatpush1.bf16.msra.mxu0 0
        %1330 = vmatprep.subr.bf16.mxu0 0
        %1331 = vmatpush1.bf16.msra.mxu0 0
        %1332 = vmatprep.subr.bf16.mxu0 0
        %1333 = vmatpush1.bf16.msra.mxu0 0
        %1334 = vmatprep.subr.bf16.mxu0 0
        %1335 = vmatpush1.bf16.msra.mxu0 0
        %1336 = vmatprep.subr.bf16.mxu0 0
        %1337 = vmatpush1.bf16.msra.mxu0 0
        %1338 = vmatprep.mubr.bf16.mxu0 0
        %1339 = vmatmul.mubr.bf16.gmra.mrb[0].mxu0 %v1087
        %v1340 = vpop.f32.mrb[0].mxu0
        %v1341 = vadd.f32 0.0, %v1340
        %v1342 = vpop.f32.mrb[0].mxu0
        %v1343 = vadd.f32 0.0, %v1342
        %v1344 = vpop.f32.mrb[0].mxu0
        %v1345 = vadd.f32 0.0, %v1344
        %v1346 = vpop.f32.mrb[0].mxu0
        %v1347 = vadd.f32 0.0, %v1346
        %1348 = vdwg.mxu0
        %1349 = vmatprep.subr.bf16.mxu0 %v1245
        %1350 = vmatpush1.bf16.msra.mxu0 %v1244
        %1351 = vmatprep.subr.bf16.mxu0 %v1249
        %1352 = vmatpush1.bf16.msra.mxu0 %v1248
        %1353 = vmatprep.subr.bf16.mxu0 %v1253
        %1354 = vmatpush1.bf16.msra.mxu0 %v1252
        %1355 = vmatprep.subr.bf16.mxu0 %v1257
        %1356 = vmatpush1.bf16.msra.mxu0 %v1256
        %1357 = vmatprep.subr.bf16.mxu0 %v1261
        %1358 = vmatpush1.bf16.msra.mxu0 %v1260
        %1359 = vmatprep.subr.bf16.mxu0 %v1265
        %1360 = vmatpush1.bf16.msra.mxu0 %v1264
        %1361 = vmatprep.subr.bf16.mxu0 %v1269
        %1362 = vmatpush1.bf16.msra.mxu0 %v1268
        %1363 = vmatprep.subr.bf16.mxu0 %v1273
        %1364 = vmatpush1.bf16.msra.mxu0 %v1272
        %1365 = vmatprep.subr.bf16.mxu0 0
        %1366 = vmatpush1.bf16.msra.mxu0 0
        %1367 = vmatprep.subr.bf16.mxu0 0
        %1368 = vmatpush1.bf16.msra.mxu0 0
        %1369 = vmatprep.subr.bf16.mxu0 0
        %1370 = vmatpush1.bf16.msra.mxu0 0
        %1371 = vmatprep.subr.bf16.mxu0 0
        %1372 = vmatpush1.bf16.msra.mxu0 0
        %1373 = vmatprep.subr.bf16.mxu0 0
        %1374 = vmatpush1.bf16.msra.mxu0 0
        %1375 = vmatprep.subr.bf16.mxu0 0
        %1376 = vmatpush1.bf16.msra.mxu0 0
        %1377 = vmatprep.subr.bf16.mxu0 0
        %1378 = vmatpush1.bf16.msra.mxu0 0
        %1379 = vmatprep.subr.bf16.mxu0 0
        %1380 = vmatpush1.bf16.msra.mxu0 0
        %1381 = vmatprep.mubr.bf16.mxu0 0
        %1382 = vmatmul.mubr.bf16.gmra.mrb[0].mxu0 %v1087
        %v1383 = vpop.f32.mrb[0].mxu0
        %v1384 = vadd.f32 0.0, %v1383
        %v1385 = vpop.f32.mrb[0].mxu0
        %v1386 = vadd.f32 0.0, %v1385
        %v1387 = vpop.f32.mrb[0].mxu0
        %v1388 = vadd.f32 0.0, %v1387
        %v1389 = vpop.f32.mrb[0].mxu0
        %v1390 = vadd.f32 0.0, %v1389
        %1391 = vdwg.mxu0
        %v1392 = vadd.f32 %v1106, %v1341
        %v1393 = vadd.f32 %v1107, %v1343
        %v1394 = vadd.f32 %v1108, %v1384
        %v1395 = vadd.f32 %v1109, %v1386
        %v1396 = vadd.f32 %v1110, %v1345
        %v1397 = vadd.f32 %v1111, %v1347
        %v1398 = vadd.f32 %v1112, %v1388
        %v1399 = vadd.f32 %v1113, %v1390
        %v1400 = vxor.u32 %v1392, 2147483648
        %v1401 = vxor.u32 %v1396, 2147483648
        %v1402 = vmul.f32 %v1400, 1.442695
        %v1403 = vpow.pop %v1402
        %v1404 = vmul.f32 %v1401, 1.442695
        %v1405 = vpow.pop %v1404
        %v1406 = vadd.f32 %v1403, 1.0
        %v1407 = vadd.f32 %v1405, 1.0
        %v1408 = vrcp.pop %v1406
        %v1409 = vmul.f32 1.0, %v1408
        %v1410 = vrcp.pop %v1407
        %v1411 = vmul.f32 1.0, %v1410
        %v1412 = vxor.u32 %v1393, 2147483648
        %v1413 = vxor.u32 %v1397, 2147483648
        %v1414 = vmul.f32 %v1412, 1.442695
        %v1415 = vpow.pop %v1414
        %v1416 = vmul.f32 %v1413, 1.442695
        %v1417 = vpow.pop %v1416
        %v1418 = vadd.f32 %v1415, 1.0
        %v1419 = vadd.f32 %v1417, 1.0
        %v1420 = vrcp.pop %v1418
        %v1421 = vmul.f32 1.0, %v1420
        %v1422 = vrcp.pop %v1419
        %v1423 = vmul.f32 1.0, %v1422
        %v1424 = vtanh.pop %v1394
        %v1425 = vtanh.pop %v1398
        %v1426 = vxor.u32 %v1395, 2147483648
        %v1427 = vxor.u32 %v1399, 2147483648
        %v1428 = vmul.f32 %v1426, 1.442695
        %v1429 = vpow.pop %v1428
        %v1430 = vmul.f32 %v1427, 1.442695
        %v1431 = vpow.pop %v1430
        %v1432 = vadd.f32 %v1429, 1.0
        %v1433 = vadd.f32 %v1431, 1.0
        %v1434 = vrcp.pop %v1432
        %v1435 = vmul.f32 1.0, %v1434
        %v1436 = vrcp.pop %v1433
        %v1437 = vmul.f32 1.0, %v1436
        %v1438 = vmul.f32 %v1421, %v1081
        %v1439 = vmul.f32 %v1423, %v1082
        %v1440 = vmul.f32 %v1409, %v1424
        %v1441 = vmul.f32 %v1411, %v1425
        %v1442 = vadd.f32 %v1438, %v1440
        %v1443 = vadd.f32 %v1439, %v1441
        %v1444 = vtanh.pop %v1442
        %v1445 = vtanh.pop %v1443
        %v1446 = vmul.f32 %v1435, %v1444
        %v1447 = vmul.f32 %v1437, %v1445
        %v1448 = vpack.c.bf16 %v1447, %v1446
        %v1450 = vunpack.c.l.b16 %v1448
        %v1451 = vunpack.c.h.b16 %v1448
        %v1452 = vpack.c.b16 %v1450, %v1450
        %v1453 = vpack.c.b16 %v1451, %v1451
        %s1456 = smul.addr %s1101, 4
        %s1457 = scalar_lea.vmem %s272, %s1456 [#allocation5]
        %1458 = vst [vmem:[%s1457] sm:$0xf] %v1452
        %1459 = vst [vmem:[%s1457 + $0x4] sm:$0xf] %v1453
        %s1460 = scalar_select %p732, 5, 2
        %s1461 = smul.u32 %s1460, 16
        %s1462 = sshra.s32 %s1461, 3
        %s1463 = sand.u32 %s1461, 7
        %s1464 = smul.u32 %s1462, 4
        %s1465 = smul.addr %s1464, 8
        %s1466 = scalar_lea.vmem [#allocation2], %s1465
        %v1467 = vld [vmem:[%s1466] sm:$0xff]
        %v1468 = vld [vmem:[%s1466 + $0x8] sm:$0xff]
        %v1469 = vld [vmem:[%s1466 + $0x10] sm:$0xff]
        %v1470 = vld [vmem:[%s1466 + $0x18] sm:$0xff]
        %v1471 = vld [vmem:[%s1466 + $0x20] sm:$0xff]
        %v1472 = vld [vmem:[%s1466 + $0x28] sm:$0xff]
        %v1473 = vld [vmem:[%s1466 + $0x30] sm:$0xff]
        %v1474 = vld [vmem:[%s1466 + $0x38] sm:$0xff]
        %v1475 = vld [vmem:[%s296] sm:$0xff]
        %v1476 = vld [vmem:[%s296 + $0x8] sm:$0xff]
        %v1477 = vld [vmem:[%s296 + $0x10] sm:$0xff]
        %v1478 = vld [vmem:[%s296 + $0x18] sm:$0xff]
        %v1479 = vld [vmem:[%s296 + $0x20] sm:$0xff]
        %v1480 = vld [vmem:[%s296 + $0x28] sm:$0xff]
        %v1481 = vld [vmem:[%s296 + $0x30] sm:$0xff]
        %v1482 = vld [vmem:[%s296 + $0x38] sm:$0xff]
        %v1483 = vld [vmem:[%s296 + $0x40] sm:$0xff]
        %v1484 = vld [vmem:[%s296 + $0x48] sm:$0xff]
        %v1485 = vld [vmem:[%s296 + $0x50] sm:$0xff]
        %v1486 = vld [vmem:[%s296 + $0x58] sm:$0xff]
        %v1487 = vld [vmem:[%s296 + $0x60] sm:$0xff]
        %v1488 = vld [vmem:[%s296 + $0x68] sm:$0xff]
        %v1489 = vld [vmem:[%s296 + $0x70] sm:$0xff]
        %v1490 = vld [vmem:[%s296 + $0x78] sm:$0xff]
        %v1491 = vld [vmem:[%s296 + $0x80] sm:$0xff]
        %v1492 = vld [vmem:[%s296 + $0x88] sm:$0xff]
        %v1493 = vld [vmem:[%s296 + $0x90] sm:$0xff]
        %v1494 = vld [vmem:[%s296 + $0x98] sm:$0xff]
        %v1495 = vld [vmem:[%s296 + $0xa0] sm:$0xff]
        %v1496 = vld [vmem:[%s296 + $0xa8] sm:$0xff]
        %v1497 = vld [vmem:[%s296 + $0xb0] sm:$0xff]
        %v1498 = vld [vmem:[%s296 + $0xb8] sm:$0xff]
        %v1499 = vld [vmem:[%s296 + $0xc0] sm:$0xff]
        %v1500 = vld [vmem:[%s296 + $0xc8] sm:$0xff]
        %v1501 = vld [vmem:[%s296 + $0xd0] sm:$0xff]
        %v1502 = vld [vmem:[%s296 + $0xd8] sm:$0xff]
        %v1503 = vld [vmem:[%s296 + $0xe0] sm:$0xff]
        %v1504 = vld [vmem:[%s296 + $0xe8] sm:$0xff]
        %v1505 = vld [vmem:[%s296 + $0xf0] sm:$0xff]
        %v1506 = vld [vmem:[%s296 + $0xf8] sm:$0xff]
        %v1539 = vunpack.c.l.b16 %v1475
        %v1540 = vunpack.c.h.b16 %v1475
        %v1541 = vunpack.c.l.b16 %v1476
        %v1542 = vunpack.c.h.b16 %v1476
        %v1543 = vunpack.c.l.b16 %v1477
        %v1544 = vunpack.c.h.b16 %v1477
        %v1545 = vunpack.c.l.b16 %v1478
        %v1546 = vunpack.c.h.b16 %v1478
        %v1547 = vunpack.c.l.b16 %v1479
        %v1548 = vunpack.c.h.b16 %v1479
        %v1549 = vunpack.c.l.b16 %v1480
        %v1550 = vunpack.c.h.b16 %v1480
        %v1551 = vunpack.c.l.b16 %v1481
        %v1552 = vunpack.c.h.b16 %v1481
        %v1553 = vunpack.c.l.b16 %v1482
        %v1554 = vunpack.c.h.b16 %v1482
        %v1555 = vunpack.c.l.b16 %v1483
        %v1556 = vunpack.c.h.b16 %v1483
        %v1557 = vunpack.c.l.b16 %v1484
        %v1558 = vunpack.c.h.b16 %v1484
        %v1559 = vunpack.c.l.b16 %v1485
        %v1560 = vunpack.c.h.b16 %v1485
        %v1561 = vunpack.c.l.b16 %v1486
        %v1562 = vunpack.c.h.b16 %v1486
        %v1563 = vunpack.c.l.b16 %v1487
        %v1564 = vunpack.c.h.b16 %v1487
        %v1565 = vunpack.c.l.b16 %v1488
        %v1566 = vunpack.c.h.b16 %v1488
        %v1567 = vunpack.c.l.b16 %v1489
        %v1568 = vunpack.c.h.b16 %v1489
        %v1569 = vunpack.c.l.b16 %v1490
        %v1570 = vunpack.c.h.b16 %v1490
        %v1571 = vunpack.c.l.b16 %v1491
        %v1572 = vunpack.c.h.b16 %v1491
        %v1573 = vunpack.c.l.b16 %v1492
        %v1574 = vunpack.c.h.b16 %v1492
        %v1575 = vunpack.c.l.b16 %v1493
        %v1576 = vunpack.c.h.b16 %v1493
        %v1577 = vunpack.c.l.b16 %v1494
        %v1578 = vunpack.c.h.b16 %v1494
        %v1579 = vunpack.c.l.b16 %v1495
        %v1580 = vunpack.c.h.b16 %v1495
        %v1581 = vunpack.c.l.b16 %v1496
        %v1582 = vunpack.c.h.b16 %v1496
        %v1583 = vunpack.c.l.b16 %v1497
        %v1584 = vunpack.c.h.b16 %v1497
        %v1585 = vunpack.c.l.b16 %v1498
        %v1586 = vunpack.c.h.b16 %v1498
        %v1587 = vunpack.c.l.b16 %v1499
        %v1588 = vunpack.c.h.b16 %v1499
        %v1589 = vunpack.c.l.b16 %v1500
        %v1590 = vunpack.c.h.b16 %v1500
        %v1591 = vunpack.c.l.b16 %v1501
        %v1592 = vunpack.c.h.b16 %v1501
        %v1593 = vunpack.c.l.b16 %v1502
        %v1594 = vunpack.c.h.b16 %v1502
        %v1595 = vunpack.c.l.b16 %v1503
        %v1596 = vunpack.c.h.b16 %v1503
        %v1597 = vunpack.c.l.b16 %v1504
        %v1598 = vunpack.c.h.b16 %v1504
        %v1599 = vunpack.c.l.b16 %v1505
        %v1600 = vunpack.c.h.b16 %v1505
        %v1601 = vunpack.c.l.b16 %v1506
        %v1602 = vunpack.c.h.b16 %v1506
        %v1603 = vpack.c.b16 %v1543, %v1539
        %v1604 = vpack.c.b16 %v1544, %v1540
        %v1605 = vpack.c.b16 %v1545, %v1541
        %v1606 = vpack.c.b16 %v1546, %v1542
        %v1607 = vpack.c.b16 %v1551, %v1547
        %v1608 = vpack.c.b16 %v1552, %v1548
        %v1609 = vpack.c.b16 %v1553, %v1549
        %v1610 = vpack.c.b16 %v1554, %v1550
        %v1611 = vpack.c.b16 %v1559, %v1555
        %v1612 = vpack.c.b16 %v1560, %v1556
        %v1613 = vpack.c.b16 %v1561, %v1557
        %v1614 = vpack.c.b16 %v1562, %v1558
        %v1615 = vpack.c.b16 %v1567, %v1563
        %v1616 = vpack.c.b16 %v1568, %v1564
        %v1617 = vpack.c.b16 %v1569, %v1565
        %v1618 = vpack.c.b16 %v1570, %v1566
        %v1619 = vpack.c.b16 %v1575, %v1571
        %v1620 = vpack.c.b16 %v1576, %v1572
        %v1621 = vpack.c.b16 %v1577, %v1573
        %v1622 = vpack.c.b16 %v1578, %v1574
        %v1623 = vpack.c.b16 %v1583, %v1579
        %v1624 = vpack.c.b16 %v1584, %v1580
        %v1625 = vpack.c.b16 %v1585, %v1581
        %v1626 = vpack.c.b16 %v1586, %v1582
        %v1627 = vpack.c.b16 %v1591, %v1587
        %v1628 = vpack.c.b16 %v1592, %v1588
        %v1629 = vpack.c.b16 %v1593, %v1589
        %v1630 = vpack.c.b16 %v1594, %v1590
        %v1631 = vpack.c.b16 %v1599, %v1595
        %v1632 = vpack.c.b16 %v1600, %v1596
        %v1633 = vpack.c.b16 %v1601, %v1597
        %v1634 = vpack.c.b16 %v1602, %v1598
        %1667 = vmatprep.subr.bf16.mxu0 %v1604
        %1668 = vmatpush1.bf16.msra.mxu0 %v1603
        %1669 = vmatprep.subr.bf16.mxu0 %v1608
        %1670 = vmatpush1.bf16.msra.mxu0 %v1607
        %1671 = vmatprep.subr.bf16.mxu0 %v1612
        %1672 = vmatpush1.bf16.msra.mxu0 %v1611
        %1673 = vmatprep.subr.bf16.mxu0 %v1616
        %1674 = vmatpush1.bf16.msra.mxu0 %v1615
        %1675 = vmatprep.subr.bf16.mxu0 %v1620
        %1676 = vmatpush1.bf16.msra.mxu0 %v1619
        %1677 = vmatprep.subr.bf16.mxu0 %v1624
        %1678 = vmatpush1.bf16.msra.mxu0 %v1623
        %1679 = vmatprep.subr.bf16.mxu0 %v1628
        %1680 = vmatpush1.bf16.msra.mxu0 %v1627
        %1681 = vmatprep.subr.bf16.mxu0 %v1632
        %1682 = vmatpush1.bf16.msra.mxu0 %v1631
        %1683 = vmatprep.subr.bf16.mxu0 0
        %1684 = vmatpush1.bf16.msra.mxu0 0
        %1685 = vmatprep.subr.bf16.mxu0 0
        %1686 = vmatpush1.bf16.msra.mxu0 0
        %1687 = vmatprep.subr.bf16.mxu0 0
        %1688 = vmatpush1.bf16.msra.mxu0 0
        %1689 = vmatprep.subr.bf16.mxu0 0
        %1690 = vmatpush1.bf16.msra.mxu0 0
        %1691 = vmatprep.subr.bf16.mxu0 0
        %1692 = vmatpush1.bf16.msra.mxu0 0
        %1693 = vmatprep.subr.bf16.mxu0 0
        %1694 = vmatpush1.bf16.msra.mxu0 0
        %1695 = vmatprep.subr.bf16.mxu0 0
        %1696 = vmatpush1.bf16.msra.mxu0 0
        %1697 = vmatprep.subr.bf16.mxu0 0
        %1698 = vmatpush1.bf16.msra.mxu0 0
        %1699 = vmatprep.mubr.bf16.mxu0 0
        %1700 = vmatmul.mubr.bf16.gmra.mrb[0].mxu0 %v1448
        %v1701 = vpop.f32.mrb[0].mxu0
        %v1702 = vadd.f32 0.0, %v1701
        %v1703 = vpop.f32.mrb[0].mxu0
        %v1704 = vadd.f32 0.0, %v1703
        %v1705 = vpop.f32.mrb[0].mxu0
        %v1706 = vadd.f32 0.0, %v1705
        %v1707 = vpop.f32.mrb[0].mxu0
        %v1708 = vadd.f32 0.0, %v1707
        %1709 = vdwg.mxu0
        %1710 = vmatprep.subr.bf16.mxu0 %v1606
        %1711 = vmatpush1.bf16.msra.mxu0 %v1605
        %1712 = vmatprep.subr.bf16.mxu0 %v1610
        %1713 = vmatpush1.bf16.msra.mxu0 %v1609
        %1714 = vmatprep.subr.bf16.mxu0 %v1614
        %1715 = vmatpush1.bf16.msra.mxu0 %v1613
        %1716 = vmatprep.subr.bf16.mxu0 %v1618
        %1717 = vmatpush1.bf16.msra.mxu0 %v1617
        %1718 = vmatprep.subr.bf16.mxu0 %v1622
        %1719 = vmatpush1.bf16.msra.mxu0 %v1621
        %1720 = vmatprep.subr.bf16.mxu0 %v1626
        %1721 = vmatpush1.bf16.msra.mxu0 %v1625
        %1722 = vmatprep.subr.bf16.mxu0 %v1630
        %1723 = vmatpush1.bf16.msra.mxu0 %v1629
        %1724 = vmatprep.subr.bf16.mxu0 %v1634
        %1725 = vmatpush1.bf16.msra.mxu0 %v1633
        %1726 = vmatprep.subr.bf16.mxu0 0
        %1727 = vmatpush1.bf16.msra.mxu0 0
        %1728 = vmatprep.subr.bf16.mxu0 0
        %1729 = vmatpush1.bf16.msra.mxu0 0
        %1730 = vmatprep.subr.bf16.mxu0 0
        %1731 = vmatpush1.bf16.msra.mxu0 0
        %1732 = vmatprep.subr.bf16.mxu0 0
        %1733 = vmatpush1.bf16.msra.mxu0 0
        %1734 = vmatprep.subr.bf16.mxu0 0
        %1735 = vmatpush1.bf16.msra.mxu0 0
        %1736 = vmatprep.subr.bf16.mxu0 0
        %1737 = vmatpush1.bf16.msra.mxu0 0
        %1738 = vmatprep.subr.bf16.mxu0 0
        %1739 = vmatpush1.bf16.msra.mxu0 0
        %1740 = vmatprep.subr.bf16.mxu0 0
        %1741 = vmatpush1.bf16.msra.mxu0 0
        %1742 = vmatprep.mubr.bf16.mxu0 0
        %1743 = vmatmul.mubr.bf16.gmra.mrb[0].mxu0 %v1448
        %v1744 = vpop.f32.mrb[0].mxu0
        %v1745 = vadd.f32 0.0, %v1744
        %v1746 = vpop.f32.mrb[0].mxu0
        %v1747 = vadd.f32 0.0, %v1746
        %v1748 = vpop.f32.mrb[0].mxu0
        %v1749 = vadd.f32 0.0, %v1748
        %v1750 = vpop.f32.mrb[0].mxu0
        %v1751 = vadd.f32 0.0, %v1750
        %1752 = vdwg.mxu0
        %v1753 = vadd.f32 %v1467, %v1702
        %v1754 = vadd.f32 %v1468, %v1704
        %v1755 = vadd.f32 %v1469, %v1745
        %v1756 = vadd.f32 %v1470, %v1747
        %v1757 = vadd.f32 %v1471, %v1706
        %v1758 = vadd.f32 %v1472, %v1708
        %v1759 = vadd.f32 %v1473, %v1749
        %v1760 = vadd.f32 %v1474, %v1751
        %v1761 = vxor.u32 %v1753, 2147483648
        %v1762 = vxor.u32 %v1757, 2147483648
        %v1763 = vmul.f32 %v1761, 1.442695
        %v1764 = vpow.pop %v1763
        %v1765 = vmul.f32 %v1762, 1.442695
        %v1766 = vpow.pop %v1765
        %v1767 = vadd.f32 %v1764, 1.0
        %v1768 = vadd.f32 %v1766, 1.0
        %v1769 = vrcp.pop %v1767
        %v1770 = vmul.f32 1.0, %v1769
        %v1771 = vrcp.pop %v1768
        %v1772 = vmul.f32 1.0, %v1771
        %v1773 = vxor.u32 %v1754, 2147483648
        %v1774 = vxor.u32 %v1758, 2147483648
        %v1775 = vmul.f32 %v1773, 1.442695
        %v1776 = vpow.pop %v1775
        %v1777 = vmul.f32 %v1774, 1.442695
        %v1778 = vpow.pop %v1777
        %v1779 = vadd.f32 %v1776, 1.0
        %v1780 = vadd.f32 %v1778, 1.0
        %v1781 = vrcp.pop %v1779
        %v1782 = vmul.f32 1.0, %v1781
        %v1783 = vrcp.pop %v1780
        %v1784 = vmul.f32 1.0, %v1783
        %v1785 = vtanh.pop %v1755
        %v1786 = vtanh.pop %v1759
        %v1787 = vxor.u32 %v1756, 2147483648
        %v1788 = vxor.u32 %v1760, 2147483648
        %v1789 = vmul.f32 %v1787, 1.442695
        %v1790 = vpow.pop %v1789
        %v1791 = vmul.f32 %v1788, 1.442695
        %v1792 = vpow.pop %v1791
        %v1793 = vadd.f32 %v1790, 1.0
        %v1794 = vadd.f32 %v1792, 1.0
        %v1795 = vrcp.pop %v1793
        %v1796 = vmul.f32 1.0, %v1795
        %v1797 = vrcp.pop %v1794
        %v1798 = vmul.f32 1.0, %v1797
        %v1799 = vmul.f32 %v1782, %v1442
        %v1800 = vmul.f32 %v1784, %v1443
        %v1801 = vmul.f32 %v1770, %v1785
        %v1802 = vmul.f32 %v1772, %v1786
        %v1803 = vadd.f32 %v1799, %v1801
        %v1804 = vadd.f32 %v1800, %v1802
        %v1805 = vtanh.pop %v1803
        %v1806 = vtanh.pop %v1804
        %v1807 = vmul.f32 %v1796, %v1805
        %v1808 = vmul.f32 %v1798, %v1806
        %v1809 = vpack.c.bf16 %v1808, %v1807
        %v1811 = vunpack.c.l.b16 %v1809
        %v1812 = vunpack.c.h.b16 %v1809
        %v1813 = vpack.c.b16 %v1811, %v1811
        %v1814 = vpack.c.b16 %v1812, %v1812
        %s1817 = smul.addr %s1462, 4
        %s1818 = scalar_lea.vmem %s272, %s1817 [#allocation5]
        %1819 = vst [vmem:[%s1818] sm:$0xf] %v1813
        %1820 = vst [vmem:[%s1818 + $0x4] sm:$0xf] %v1814
        %s1821 = scalar_select %p732, 4, 3
        %s1822 = smul.u32 %s1821, 16
        %s1823 = sshra.s32 %s1822, 3
        %s1824 = sand.u32 %s1822, 7
        %s1825 = smul.u32 %s1823, 4
        %s1826 = smul.addr %s1825, 8
        %s1827 = scalar_lea.vmem [#allocation2], %s1826
        %v1828 = vld [vmem:[%s1827] sm:$0xff]
        %v1829 = vld [vmem:[%s1827 + $0x8] sm:$0xff]
        %v1830 = vld [vmem:[%s1827 + $0x10] sm:$0xff]
        %v1831 = vld [vmem:[%s1827 + $0x18] sm:$0xff]
        %v1832 = vld [vmem:[%s1827 + $0x20] sm:$0xff]
        %v1833 = vld [vmem:[%s1827 + $0x28] sm:$0xff]
        %v1834 = vld [vmem:[%s1827 + $0x30] sm:$0xff]
        %v1835 = vld [vmem:[%s1827 + $0x38] sm:$0xff]
        %v1836 = vld [vmem:[%s296] sm:$0xff]
        %v1837 = vld [vmem:[%s296 + $0x8] sm:$0xff]
        %v1838 = vld [vmem:[%s296 + $0x10] sm:$0xff]
        %v1839 = vld [vmem:[%s296 + $0x18] sm:$0xff]
        %v1840 = vld [vmem:[%s296 + $0x20] sm:$0xff]
        %v1841 = vld [vmem:[%s296 + $0x28] sm:$0xff]
        %v1842 = vld [vmem:[%s296 + $0x30] sm:$0xff]
        %v1843 = vld [vmem:[%s296 + $0x38] sm:$0xff]
        %v1844 = vld [vmem:[%s296 + $0x40] sm:$0xff]
        %v1845 = vld [vmem:[%s296 + $0x48] sm:$0xff]
        %v1846 = vld [vmem:[%s296 + $0x50] sm:$0xff]
        %v1847 = vld [vmem:[%s296 + $0x58] sm:$0xff]
        %v1848 = vld [vmem:[%s296 + $0x60] sm:$0xff]
        %v1849 = vld [vmem:[%s296 + $0x68] sm:$0xff]
        %v1850 = vld [vmem:[%s296 + $0x70] sm:$0xff]
        %v1851 = vld [vmem:[%s296 + $0x78] sm:$0xff]
        %v1852 = vld [vmem:[%s296 + $0x80] sm:$0xff]
        %v1853 = vld [vmem:[%s296 + $0x88] sm:$0xff]
        %v1854 = vld [vmem:[%s296 + $0x90] sm:$0xff]
        %v1855 = vld [vmem:[%s296 + $0x98] sm:$0xff]
        %v1856 = vld [vmem:[%s296 + $0xa0] sm:$0xff]
        %v1857 = vld [vmem:[%s296 + $0xa8] sm:$0xff]
        %v1858 = vld [vmem:[%s296 + $0xb0] sm:$0xff]
        %v1859 = vld [vmem:[%s296 + $0xb8] sm:$0xff]
        %v1860 = vld [vmem:[%s296 + $0xc0] sm:$0xff]
        %v1861 = vld [vmem:[%s296 + $0xc8] sm:$0xff]
        %v1862 = vld [vmem:[%s296 + $0xd0] sm:$0xff]
        %v1863 = vld [vmem:[%s296 + $0xd8] sm:$0xff]
        %v1864 = vld [vmem:[%s296 + $0xe0] sm:$0xff]
        %v1865 = vld [vmem:[%s296 + $0xe8] sm:$0xff]
        %v1866 = vld [vmem:[%s296 + $0xf0] sm:$0xff]
        %v1867 = vld [vmem:[%s296 + $0xf8] sm:$0xff]
        %v1900 = vunpack.c.l.b16 %v1836
        %v1901 = vunpack.c.h.b16 %v1836
        %v1902 = vunpack.c.l.b16 %v1837
        %v1903 = vunpack.c.h.b16 %v1837
        %v1904 = vunpack.c.l.b16 %v1838
        %v1905 = vunpack.c.h.b16 %v1838
        %v1906 = vunpack.c.l.b16 %v1839
        %v1907 = vunpack.c.h.b16 %v1839
        %v1908 = vunpack.c.l.b16 %v1840
        %v1909 = vunpack.c.h.b16 %v1840
        %v1910 = vunpack.c.l.b16 %v1841
        %v1911 = vunpack.c.h.b16 %v1841
        %v1912 = vunpack.c.l.b16 %v1842
        %v1913 = vunpack.c.h.b16 %v1842
        %v1914 = vunpack.c.l.b16 %v1843
        %v1915 = vunpack.c.h.b16 %v1843
        %v1916 = vunpack.c.l.b16 %v1844
        %v1917 = vunpack.c.h.b16 %v1844
        %v1918 = vunpack.c.l.b16 %v1845
        %v1919 = vunpack.c.h.b16 %v1845
        %v1920 = vunpack.c.l.b16 %v1846
        %v1921 = vunpack.c.h.b16 %v1846
        %v1922 = vunpack.c.l.b16 %v1847
        %v1923 = vunpack.c.h.b16 %v1847
        %v1924 = vunpack.c.l.b16 %v1848
        %v1925 = vunpack.c.h.b16 %v1848
        %v1926 = vunpack.c.l.b16 %v1849
        %v1927 = vunpack.c.h.b16 %v1849
        %v1928 = vunpack.c.l.b16 %v1850
        %v1929 = vunpack.c.h.b16 %v1850
        %v1930 = vunpack.c.l.b16 %v1851
        %v1931 = vunpack.c.h.b16 %v1851
        %v1932 = vunpack.c.l.b16 %v1852
        %v1933 = vunpack.c.h.b16 %v1852
        %v1934 = vunpack.c.l.b16 %v1853
        %v1935 = vunpack.c.h.b16 %v1853
        %v1936 = vunpack.c.l.b16 %v1854
        %v1937 = vunpack.c.h.b16 %v1854
        %v1938 = vunpack.c.l.b16 %v1855
        %v1939 = vunpack.c.h.b16 %v1855
        %v1940 = vunpack.c.l.b16 %v1856
        %v1941 = vunpack.c.h.b16 %v1856
        %v1942 = vunpack.c.l.b16 %v1857
        %v1943 = vunpack.c.h.b16 %v1857
        %v1944 = vunpack.c.l.b16 %v1858
        %v1945 = vunpack.c.h.b16 %v1858
        %v1946 = vunpack.c.l.b16 %v1859
        %v1947 = vunpack.c.h.b16 %v1859
        %v1948 = vunpack.c.l.b16 %v1860
        %v1949 = vunpack.c.h.b16 %v1860
        %v1950 = vunpack.c.l.b16 %v1861
        %v1951 = vunpack.c.h.b16 %v1861
        %v1952 = vunpack.c.l.b16 %v1862
        %v1953 = vunpack.c.h.b16 %v1862
        %v1954 = vunpack.c.l.b16 %v1863
        %v1955 = vunpack.c.h.b16 %v1863
        %v1956 = vunpack.c.l.b16 %v1864
        %v1957 = vunpack.c.h.b16 %v1864
        %v1958 = vunpack.c.l.b16 %v1865
        %v1959 = vunpack.c.h.b16 %v1865
        %v1960 = vunpack.c.l.b16 %v1866
        %v1961 = vunpack.c.h.b16 %v1866
        %v1962 = vunpack.c.l.b16 %v1867
        %v1963 = vunpack.c.h.b16 %v1867
        %v1964 = vpack.c.b16 %v1904, %v1900
        %v1965 = vpack.c.b16 %v1905, %v1901
        %v1966 = vpack.c.b16 %v1906, %v1902
        %v1967 = vpack.c.b16 %v1907, %v1903
        %v1968 = vpack.c.b16 %v1912, %v1908
        %v1969 = vpack.c.b16 %v1913, %v1909
        %v1970 = vpack.c.b16 %v1914, %v1910
        %v1971 = vpack.c.b16 %v1915, %v1911
        %v1972 = vpack.c.b16 %v1920, %v1916
        %v1973 = vpack.c.b16 %v1921, %v1917
        %v1974 = vpack.c.b16 %v1922, %v1918
        %v1975 = vpack.c.b16 %v1923, %v1919
        %v1976 = vpack.c.b16 %v1928, %v1924
        %v1977 = vpack.c.b16 %v1929, %v1925
        %v1978 = vpack.c.b16 %v1930, %v1926
        %v1979 = vpack.c.b16 %v1931, %v1927
        %v1980 = vpack.c.b16 %v1936, %v1932
        %v1981 = vpack.c.b16 %v1937, %v1933
        %v1982 = vpack.c.b16 %v1938, %v1934
        %v1983 = vpack.c.b16 %v1939, %v1935
        %v1984 = vpack.c.b16 %v1944, %v1940
        %v1985 = vpack.c.b16 %v1945, %v1941
        %v1986 = vpack.c.b16 %v1946, %v1942
        %v1987 = vpack.c.b16 %v1947, %v1943
        %v1988 = vpack.c.b16 %v1952, %v1948
        %v1989 = vpack.c.b16 %v1953, %v1949
        %v1990 = vpack.c.b16 %v1954, %v1950
        %v1991 = vpack.c.b16 %v1955, %v1951
        %v1992 = vpack.c.b16 %v1960, %v1956
        %v1993 = vpack.c.b16 %v1961, %v1957
        %v1994 = vpack.c.b16 %v1962, %v1958
        %v1995 = vpack.c.b16 %v1963, %v1959
        %2028 = vmatprep.subr.bf16.mxu0 %v1965
        %2029 = vmatpush1.bf16.msra.mxu0 %v1964
        %2030 = vmatprep.subr.bf16.mxu0 %v1969
        %2031 = vmatpush1.bf16.msra.mxu0 %v1968
        %2032 = vmatprep.subr.bf16.mxu0 %v1973
        %2033 = vmatpush1.bf16.msra.mxu0 %v1972
        %2034 = vmatprep.subr.bf16.mxu0 %v1977
        %2035 = vmatpush1.bf16.msra.mxu0 %v1976
        %2036 = vmatprep.subr.bf16.mxu0 %v1981
        %2037 = vmatpush1.bf16.msra.mxu0 %v1980
        %2038 = vmatprep.subr.bf16.mxu0 %v1985
        %2039 = vmatpush1.bf16.msra.mxu0 %v1984
        %2040 = vmatprep.subr.bf16.mxu0 %v1989
        %2041 = vmatpush1.bf16.msra.mxu0 %v1988
        %2042 = vmatprep.subr.bf16.mxu0 %v1993
        %2043 = vmatpush1.bf16.msra.mxu0 %v1992
        %2044 = vmatprep.subr.bf16.mxu0 0
        %2045 = vmatpush1.bf16.msra.mxu0 0
        %2046 = vmatprep.subr.bf16.mxu0 0
        %2047 = vmatpush1.bf16.msra.mxu0 0
        %2048 = vmatprep.subr.bf16.mxu0 0
        %2049 = vmatpush1.bf16.msra.mxu0 0
        %2050 = vmatprep.subr.bf16.mxu0 0
        %2051 = vmatpush1.bf16.msra.mxu0 0
        %2052 = vmatprep.subr.bf16.mxu0 0
        %2053 = vmatpush1.bf16.msra.mxu0 0
        %2054 = vmatprep.subr.bf16.mxu0 0
        %2055 = vmatpush1.bf16.msra.mxu0 0
        %2056 = vmatprep.subr.bf16.mxu0 0
        %2057 = vmatpush1.bf16.msra.mxu0 0
        %2058 = vmatprep.subr.bf16.mxu0 0
        %2059 = vmatpush1.bf16.msra.mxu0 0
        %2060 = vmatprep.mubr.bf16.mxu0 0
        %2061 = vmatmul.mubr.bf16.gmra.mrb[0].mxu0 %v1809
        %v2062 = vpop.f32.mrb[0].mxu0
        %v2063 = vadd.f32 0.0, %v2062
        %v2064 = vpop.f32.mrb[0].mxu0
        %v2065 = vadd.f32 0.0, %v2064
        %v2066 = vpop.f32.mrb[0].mxu0
        %v2067 = vadd.f32 0.0, %v2066
        %v2068 = vpop.f32.mrb[0].mxu0
        %v2069 = vadd.f32 0.0, %v2068
        %2070 = vdwg.mxu0
        %2071 = vmatprep.subr.bf16.mxu0 %v1967
        %2072 = vmatpush1.bf16.msra.mxu0 %v1966
        %2073 = vmatprep.subr.bf16.mxu0 %v1971
        %2074 = vmatpush1.bf16.msra.mxu0 %v1970
        %2075 = vmatprep.subr.bf16.mxu0 %v1975
        %2076 = vmatpush1.bf16.msra.mxu0 %v1974
        %2077 = vmatprep.subr.bf16.mxu0 %v1979
        %2078 = vmatpush1.bf16.msra.mxu0 %v1978
        %2079 = vmatprep.subr.bf16.mxu0 %v1983
        %2080 = vmatpush1.bf16.msra.mxu0 %v1982
        %2081 = vmatprep.subr.bf16.mxu0 %v1987
        %2082 = vmatpush1.bf16.msra.mxu0 %v1986
        %2083 = vmatprep.subr.bf16.mxu0 %v1991
        %2084 = vmatpush1.bf16.msra.mxu0 %v1990
        %2085 = vmatprep.subr.bf16.mxu0 %v1995
        %2086 = vmatpush1.bf16.msra.mxu0 %v1994
        %2087 = vmatprep.subr.bf16.mxu0 0
        %2088 = vmatpush1.bf16.msra.mxu0 0
        %2089 = vmatprep.subr.bf16.mxu0 0
        %2090 = vmatpush1.bf16.msra.mxu0 0
        %2091 = vmatprep.subr.bf16.mxu0 0
        %2092 = vmatpush1.bf16.msra.mxu0 0
        %2093 = vmatprep.subr.bf16.mxu0 0
        %2094 = vmatpush1.bf16.msra.mxu0 0
        %2095 = vmatprep.subr.bf16.mxu0 0
        %2096 = vmatpush1.bf16.msra.mxu0 0
        %2097 = vmatprep.subr.bf16.mxu0 0
        %2098 = vmatpush1.bf16.msra.mxu0 0
        %2099 = vmatprep.subr.bf16.mxu0 0
        %2100 = vmatpush1.bf16.msra.mxu0 0
        %2101 = vmatprep.subr.bf16.mxu0 0
        %2102 = vmatpush1.bf16.msra.mxu0 0
        %2103 = vmatprep.mubr.bf16.mxu0 0
        %2104 = vmatmul.mubr.bf16.gmra.mrb[0].mxu0 %v1809
        %v2105 = vpop.f32.mrb[0].mxu0
        %v2106 = vadd.f32 0.0, %v2105
        %v2107 = vpop.f32.mrb[0].mxu0
        %v2108 = vadd.f32 0.0, %v2107
        %v2109 = vpop.f32.mrb[0].mxu0
        %v2110 = vadd.f32 0.0, %v2109
        %v2111 = vpop.f32.mrb[0].mxu0
        %v2112 = vadd.f32 0.0, %v2111
        %2113 = vdwg.mxu0
        %v2114 = vadd.f32 %v1828, %v2063
        %v2115 = vadd.f32 %v1829, %v2065
        %v2116 = vadd.f32 %v1830, %v2106
        %v2117 = vadd.f32 %v1831, %v2108
        %v2118 = vadd.f32 %v1832, %v2067
        %v2119 = vadd.f32 %v1833, %v2069
        %v2120 = vadd.f32 %v1834, %v2110
        %v2121 = vadd.f32 %v1835, %v2112
        %v2122 = vxor.u32 %v2114, 2147483648
        %v2123 = vxor.u32 %v2118, 2147483648
        %v2124 = vmul.f32 %v2122, 1.442695
        %v2125 = vpow.pop %v2124
        %v2126 = vmul.f32 %v2123, 1.442695
        %v2127 = vpow.pop %v2126
        %v2128 = vadd.f32 %v2125, 1.0
        %v2129 = vadd.f32 %v2127, 1.0
        %v2130 = vrcp.pop %v2128
        %v2131 = vmul.f32 1.0, %v2130
        %v2132 = vrcp.pop %v2129
        %v2133 = vmul.f32 1.0, %v2132
        %v2134 = vxor.u32 %v2115, 2147483648
        %v2135 = vxor.u32 %v2119, 2147483648
        %v2136 = vmul.f32 %v2134, 1.442695
        %v2137 = vpow.pop %v2136
        %v2138 = vmul.f32 %v2135, 1.442695
        %v2139 = vpow.pop %v2138
        %v2140 = vadd.f32 %v2137, 1.0
        %v2141 = vadd.f32 %v2139, 1.0
        %v2142 = vrcp.pop %v2140
        %v2143 = vmul.f32 1.0, %v2142
        %v2144 = vrcp.pop %v2141
        %v2145 = vmul.f32 1.0, %v2144
        %v2146 = vtanh.pop %v2116
        %v2147 = vtanh.pop %v2120
        %v2148 = vxor.u32 %v2117, 2147483648
        %v2149 = vxor.u32 %v2121, 2147483648
        %v2150 = vmul.f32 %v2148, 1.442695
        %v2151 = vpow.pop %v2150
        %v2152 = vmul.f32 %v2149, 1.442695
        %v2153 = vpow.pop %v2152
        %v2154 = vadd.f32 %v2151, 1.0
        %v2155 = vadd.f32 %v2153, 1.0
        %v2156 = vrcp.pop %v2154
        %v2157 = vmul.f32 1.0, %v2156
        %v2158 = vrcp.pop %v2155
        %v2159 = vmul.f32 1.0, %v2158
        %v2160 = vmul.f32 %v2143, %v1803
        %v2161 = vmul.f32 %v2145, %v1804
        %v2162 = vmul.f32 %v2131, %v2146
        %v2163 = vmul.f32 %v2133, %v2147
        %v2164 = vadd.f32 %v2160, %v2162
        %v2165 = vadd.f32 %v2161, %v2163
        %v2166 = vtanh.pop %v2164
        %v2167 = vtanh.pop %v2165
        %v2168 = vmul.f32 %v2157, %v2166
        %v2169 = vmul.f32 %v2159, %v2167
        %v2170 = vpack.c.bf16 %v2169, %v2168
        %v2172 = vunpack.c.l.b16 %v2170
        %v2173 = vunpack.c.h.b16 %v2170
        %v2174 = vpack.c.b16 %v2172, %v2172
        %v2175 = vpack.c.b16 %v2173, %v2173
        %s2178 = smul.addr %s1823, 4
        %s2179 = scalar_lea.vmem %s272, %s2178 [#allocation5]
        %2180 = vst [vmem:[%s2179] sm:$0xf] %v2174
        %2181 = vst [vmem:[%s2179 + $0x4] sm:$0xf] %v2175
        %s2182 = scalar_select %p732, 3, 4
        %s2183 = smul.u32 %s2182, 16
        %s2184 = sshra.s32 %s2183, 3
        %s2185 = sand.u32 %s2183, 7
        %s2186 = smul.u32 %s2184, 4
        %s2187 = smul.addr %s2186, 8
        %s2188 = scalar_lea.vmem [#allocation2], %s2187
        %v2189 = vld [vmem:[%s2188] sm:$0xff]
        %v2190 = vld [vmem:[%s2188 + $0x8] sm:$0xff]
        %v2191 = vld [vmem:[%s2188 + $0x10] sm:$0xff]
        %v2192 = vld [vmem:[%s2188 + $0x18] sm:$0xff]
        %v2193 = vld [vmem:[%s2188 + $0x20] sm:$0xff]
        %v2194 = vld [vmem:[%s2188 + $0x28] sm:$0xff]
        %v2195 = vld [vmem:[%s2188 + $0x30] sm:$0xff]
        %v2196 = vld [vmem:[%s2188 + $0x38] sm:$0xff]
        %v2197 = vld [vmem:[%s296] sm:$0xff]
        %v2198 = vld [vmem:[%s296 + $0x8] sm:$0xff]
        %v2199 = vld [vmem:[%s296 + $0x10] sm:$0xff]
        %v2200 = vld [vmem:[%s296 + $0x18] sm:$0xff]
        %v2201 = vld [vmem:[%s296 + $0x20] sm:$0xff]
        %v2202 = vld [vmem:[%s296 + $0x28] sm:$0xff]
        %v2203 = vld [vmem:[%s296 + $0x30] sm:$0xff]
        %v2204 = vld [vmem:[%s296 + $0x38] sm:$0xff]
        %v2205 = vld [vmem:[%s296 + $0x40] sm:$0xff]
        %v2206 = vld [vmem:[%s296 + $0x48] sm:$0xff]
        %v2207 = vld [vmem:[%s296 + $0x50] sm:$0xff]
        %v2208 = vld [vmem:[%s296 + $0x58] sm:$0xff]
        %v2209 = vld [vmem:[%s296 + $0x60] sm:$0xff]
        %v2210 = vld [vmem:[%s296 + $0x68] sm:$0xff]
        %v2211 = vld [vmem:[%s296 + $0x70] sm:$0xff]
        %v2212 = vld [vmem:[%s296 + $0x78] sm:$0xff]
        %v2213 = vld [vmem:[%s296 + $0x80] sm:$0xff]
        %v2214 = vld [vmem:[%s296 + $0x88] sm:$0xff]
        %v2215 = vld [vmem:[%s296 + $0x90] sm:$0xff]
        %v2216 = vld [vmem:[%s296 + $0x98] sm:$0xff]
        %v2217 = vld [vmem:[%s296 + $0xa0] sm:$0xff]
        %v2218 = vld [vmem:[%s296 + $0xa8] sm:$0xff]
        %v2219 = vld [vmem:[%s296 + $0xb0] sm:$0xff]
        %v2220 = vld [vmem:[%s296 + $0xb8] sm:$0xff]
        %v2221 = vld [vmem:[%s296 + $0xc0] sm:$0xff]
        %v2222 = vld [vmem:[%s296 + $0xc8] sm:$0xff]
        %v2223 = vld [vmem:[%s296 + $0xd0] sm:$0xff]
        %v2224 = vld [vmem:[%s296 + $0xd8] sm:$0xff]
        %v2225 = vld [vmem:[%s296 + $0xe0] sm:$0xff]
        %v2226 = vld [vmem:[%s296 + $0xe8] sm:$0xff]
        %v2227 = vld [vmem:[%s296 + $0xf0] sm:$0xff]
        %v2228 = vld [vmem:[%s296 + $0xf8] sm:$0xff]
        %v2261 = vunpack.c.l.b16 %v2197
        %v2262 = vunpack.c.h.b16 %v2197
        %v2263 = vunpack.c.l.b16 %v2198
        %v2264 = vunpack.c.h.b16 %v2198
        %v2265 = vunpack.c.l.b16 %v2199
        %v2266 = vunpack.c.h.b16 %v2199
        %v2267 = vunpack.c.l.b16 %v2200
        %v2268 = vunpack.c.h.b16 %v2200
        %v2269 = vunpack.c.l.b16 %v2201
        %v2270 = vunpack.c.h.b16 %v2201
        %v2271 = vunpack.c.l.b16 %v2202
        %v2272 = vunpack.c.h.b16 %v2202
        %v2273 = vunpack.c.l.b16 %v2203
        %v2274 = vunpack.c.h.b16 %v2203
        %v2275 = vunpack.c.l.b16 %v2204
        %v2276 = vunpack.c.h.b16 %v2204
        %v2277 = vunpack.c.l.b16 %v2205
        %v2278 = vunpack.c.h.b16 %v2205
        %v2279 = vunpack.c.l.b16 %v2206
        %v2280 = vunpack.c.h.b16 %v2206
        %v2281 = vunpack.c.l.b16 %v2207
        %v2282 = vunpack.c.h.b16 %v2207
        %v2283 = vunpack.c.l.b16 %v2208
        %v2284 = vunpack.c.h.b16 %v2208
        %v2285 = vunpack.c.l.b16 %v2209
        %v2286 = vunpack.c.h.b16 %v2209
        %v2287 = vunpack.c.l.b16 %v2210
        %v2288 = vunpack.c.h.b16 %v2210
        %v2289 = vunpack.c.l.b16 %v2211
        %v2290 = vunpack.c.h.b16 %v2211
        %v2291 = vunpack.c.l.b16 %v2212
        %v2292 = vunpack.c.h.b16 %v2212
        %v2293 = vunpack.c.l.b16 %v2213
        %v2294 = vunpack.c.h.b16 %v2213
        %v2295 = vunpack.c.l.b16 %v2214
        %v2296 = vunpack.c.h.b16 %v2214
        %v2297 = vunpack.c.l.b16 %v2215
        %v2298 = vunpack.c.h.b16 %v2215
        %v2299 = vunpack.c.l.b16 %v2216
        %v2300 = vunpack.c.h.b16 %v2216
        %v2301 = vunpack.c.l.b16 %v2217
        %v2302 = vunpack.c.h.b16 %v2217
        %v2303 = vunpack.c.l.b16 %v2218
        %v2304 = vunpack.c.h.b16 %v2218
        %v2305 = vunpack.c.l.b16 %v2219
        %v2306 = vunpack.c.h.b16 %v2219
        %v2307 = vunpack.c.l.b16 %v2220
        %v2308 = vunpack.c.h.b16 %v2220
        %v2309 = vunpack.c.l.b16 %v2221
        %v2310 = vunpack.c.h.b16 %v2221
        %v2311 = vunpack.c.l.b16 %v2222
        %v2312 = vunpack.c.h.b16 %v2222
        %v2313 = vunpack.c.l.b16 %v2223
        %v2314 = vunpack.c.h.b16 %v2223
        %v2315 = vunpack.c.l.b16 %v2224
        %v2316 = vunpack.c.h.b16 %v2224
        %v2317 = vunpack.c.l.b16 %v2225
        %v2318 = vunpack.c.h.b16 %v2225
        %v2319 = vunpack.c.l.b16 %v2226
        %v2320 = vunpack.c.h.b16 %v2226
        %v2321 = vunpack.c.l.b16 %v2227
        %v2322 = vunpack.c.h.b16 %v2227
        %v2323 = vunpack.c.l.b16 %v2228
        %v2324 = vunpack.c.h.b16 %v2228
        %v2325 = vpack.c.b16 %v2265, %v2261
        %v2326 = vpack.c.b16 %v2266, %v2262
        %v2327 = vpack.c.b16 %v2267, %v2263
        %v2328 = vpack.c.b16 %v2268, %v2264
        %v2329 = vpack.c.b16 %v2273, %v2269
        %v2330 = vpack.c.b16 %v2274, %v2270
        %v2331 = vpack.c.b16 %v2275, %v2271
        %v2332 = vpack.c.b16 %v2276, %v2272
        %v2333 = vpack.c.b16 %v2281, %v2277
        %v2334 = vpack.c.b16 %v2282, %v2278
        %v2335 = vpack.c.b16 %v2283, %v2279
        %v2336 = vpack.c.b16 %v2284, %v2280
        %v2337 = vpack.c.b16 %v2289, %v2285
        %v2338 = vpack.c.b16 %v2290, %v2286
        %v2339 = vpack.c.b16 %v2291, %v2287
        %v2340 = vpack.c.b16 %v2292, %v2288
        %v2341 = vpack.c.b16 %v2297, %v2293
        %v2342 = vpack.c.b16 %v2298, %v2294
        %v2343 = vpack.c.b16 %v2299, %v2295
        %v2344 = vpack.c.b16 %v2300, %v2296
        %v2345 = vpack.c.b16 %v2305, %v2301
        %v2346 = vpack.c.b16 %v2306, %v2302
        %v2347 = vpack.c.b16 %v2307, %v2303
        %v2348 = vpack.c.b16 %v2308, %v2304
        %v2349 = vpack.c.b16 %v2313, %v2309
        %v2350 = vpack.c.b16 %v2314, %v2310
        %v2351 = vpack.c.b16 %v2315, %v2311
        %v2352 = vpack.c.b16 %v2316, %v2312
        %v2353 = vpack.c.b16 %v2321, %v2317
        %v2354 = vpack.c.b16 %v2322, %v2318
        %v2355 = vpack.c.b16 %v2323, %v2319
        %v2356 = vpack.c.b16 %v2324, %v2320
        %2389 = vmatprep.subr.bf16.mxu0 %v2326
        %2390 = vmatpush1.bf16.msra.mxu0 %v2325
        %2391 = vmatprep.subr.bf16.mxu0 %v2330
        %2392 = vmatpush1.bf16.msra.mxu0 %v2329
        %2393 = vmatprep.subr.bf16.mxu0 %v2334
        %2394 = vmatpush1.bf16.msra.mxu0 %v2333
        %2395 = vmatprep.subr.bf16.mxu0 %v2338
        %2396 = vmatpush1.bf16.msra.mxu0 %v2337
        %2397 = vmatprep.subr.bf16.mxu0 %v2342
        %2398 = vmatpush1.bf16.msra.mxu0 %v2341
        %2399 = vmatprep.subr.bf16.mxu0 %v2346
        %2400 = vmatpush1.bf16.msra.mxu0 %v2345
        %2401 = vmatprep.subr.bf16.mxu0 %v2350
        %2402 = vmatpush1.bf16.msra.mxu0 %v2349
        %2403 = vmatprep.subr.bf16.mxu0 %v2354
        %2404 = vmatpush1.bf16.msra.mxu0 %v2353
        %2405 = vmatprep.subr.bf16.mxu0 0
        %2406 = vmatpush1.bf16.msra.mxu0 0
        %2407 = vmatprep.subr.bf16.mxu0 0
        %2408 = vmatpush1.bf16.msra.mxu0 0
        %2409 = vmatprep.subr.bf16.mxu0 0
        %2410 = vmatpush1.bf16.msra.mxu0 0
        %2411 = vmatprep.subr.bf16.mxu0 0
        %2412 = vmatpush1.bf16.msra.mxu0 0
        %2413 = vmatprep.subr.bf16.mxu0 0
        %2414 = vmatpush1.bf16.msra.mxu0 0
        %2415 = vmatprep.subr.bf16.mxu0 0
        %2416 = vmatpush1.bf16.msra.mxu0 0
        %2417 = vmatprep.subr.bf16.mxu0 0
        %2418 = vmatpush1.bf16.msra.mxu0 0
        %2419 = vmatprep.subr.bf16.mxu0 0
        %2420 = vmatpush1.bf16.msra.mxu0 0
        %2421 = vmatprep.mubr.bf16.mxu0 0
        %2422 = vmatmul.mubr.bf16.gmra.mrb[0].mxu0 %v2170
        %v2423 = vpop.f32.mrb[0].mxu0
        %v2424 = vadd.f32 0.0, %v2423
        %v2425 = vpop.f32.mrb[0].mxu0
        %v2426 = vadd.f32 0.0, %v2425
        %v2427 = vpop.f32.mrb[0].mxu0
        %v2428 = vadd.f32 0.0, %v2427
        %v2429 = vpop.f32.mrb[0].mxu0
        %v2430 = vadd.f32 0.0, %v2429
        %2431 = vdwg.mxu0
        %2432 = vmatprep.subr.bf16.mxu0 %v2328
        %2433 = vmatpush1.bf16.msra.mxu0 %v2327
        %2434 = vmatprep.subr.bf16.mxu0 %v2332
        %2435 = vmatpush1.bf16.msra.mxu0 %v2331
        %2436 = vmatprep.subr.bf16.mxu0 %v2336
        %2437 = vmatpush1.bf16.msra.mxu0 %v2335
        %2438 = vmatprep.subr.bf16.mxu0 %v2340
        %2439 = vmatpush1.bf16.msra.mxu0 %v2339
        %2440 = vmatprep.subr.bf16.mxu0 %v2344
        %2441 = vmatpush1.bf16.msra.mxu0 %v2343
        %2442 = vmatprep.subr.bf16.mxu0 %v2348
        %2443 = vmatpush1.bf16.msra.mxu0 %v2347
        %2444 = vmatprep.subr.bf16.mxu0 %v2352
        %2445 = vmatpush1.bf16.msra.mxu0 %v2351
        %2446 = vmatprep.subr.bf16.mxu0 %v2356
        %2447 = vmatpush1.bf16.msra.mxu0 %v2355
        %2448 = vmatprep.subr.bf16.mxu0 0
        %2449 = vmatpush1.bf16.msra.mxu0 0
        %2450 = vmatprep.subr.bf16.mxu0 0
        %2451 = vmatpush1.bf16.msra.mxu0 0
        %2452 = vmatprep.subr.bf16.mxu0 0
        %2453 = vmatpush1.bf16.msra.mxu0 0
        %2454 = vmatprep.subr.bf16.mxu0 0
        %2455 = vmatpush1.bf16.msra.mxu0 0
        %2456 = vmatprep.subr.bf16.mxu0 0
        %2457 = vmatpush1.bf16.msra.mxu0 0
        %2458 = vmatprep.subr.bf16.mxu0 0
        %2459 = vmatpush1.bf16.msra.mxu0 0
        %2460 = vmatprep.subr.bf16.mxu0 0
        %2461 = vmatpush1.bf16.msra.mxu0 0
        %2462 = vmatprep.subr.bf16.mxu0 0
        %2463 = vmatpush1.bf16.msra.mxu0 0
        %2464 = vmatprep.mubr.bf16.mxu0 0
        %2465 = vmatmul.mubr.bf16.gmra.mrb[0].mxu0 %v2170
        %v2466 = vpop.f32.mrb[0].mxu0
        %v2467 = vadd.f32 0.0, %v2466
        %v2468 = vpop.f32.mrb[0].mxu0
        %v2469 = vadd.f32 0.0, %v2468
        %v2470 = vpop.f32.mrb[0].mxu0
        %v2471 = vadd.f32 0.0, %v2470
        %v2472 = vpop.f32.mrb[0].mxu0
        %v2473 = vadd.f32 0.0, %v2472
        %2474 = vdwg.mxu0
        %v2475 = vadd.f32 %v2189, %v2424
        %v2476 = vadd.f32 %v2190, %v2426
        %v2477 = vadd.f32 %v2191, %v2467
        %v2478 = vadd.f32 %v2192, %v2469
        %v2479 = vadd.f32 %v2193, %v2428
        %v2480 = vadd.f32 %v2194, %v2430
        %v2481 = vadd.f32 %v2195, %v2471
        %v2482 = vadd.f32 %v2196, %v2473
        %v2483 = vxor.u32 %v2475, 2147483648
        %v2484 = vxor.u32 %v2479, 2147483648
        %v2485 = vmul.f32 %v2483, 1.442695
        %v2486 = vpow.pop %v2485
        %v2487 = vmul.f32 %v2484, 1.442695
        %v2488 = vpow.pop %v2487
        %v2489 = vadd.f32 %v2486, 1.0
        %v2490 = vadd.f32 %v2488, 1.0
        %v2491 = vrcp.pop %v2489
        %v2492 = vmul.f32 1.0, %v2491
        %v2493 = vrcp.pop %v2490
        %v2494 = vmul.f32 1.0, %v2493
        %v2495 = vxor.u32 %v2476, 2147483648
        %v2496 = vxor.u32 %v2480, 2147483648
        %v2497 = vmul.f32 %v2495, 1.442695
        %v2498 = vpow.pop %v2497
        %v2499 = vmul.f32 %v2496, 1.442695
        %v2500 = vpow.pop %v2499
        %v2501 = vadd.f32 %v2498, 1.0
        %v2502 = vadd.f32 %v2500, 1.0
        %v2503 = vrcp.pop %v2501
        %v2504 = vmul.f32 1.0, %v2503
        %v2505 = vrcp.pop %v2502
        %v2506 = vmul.f32 1.0, %v2505
        %v2507 = vtanh.pop %v2477
        %v2508 = vtanh.pop %v2481
        %v2509 = vxor.u32 %v2478, 2147483648
        %v2510 = vxor.u32 %v2482, 2147483648
        %v2511 = vmul.f32 %v2509, 1.442695
        %v2512 = vpow.pop %v2511
        %v2513 = vmul.f32 %v2510, 1.442695
        %v2514 = vpow.pop %v2513
        %v2515 = vadd.f32 %v2512, 1.0
        %v2516 = vadd.f32 %v2514, 1.0
        %v2517 = vrcp.pop %v2515
        %v2518 = vmul.f32 1.0, %v2517
        %v2519 = vrcp.pop %v2516
        %v2520 = vmul.f32 1.0, %v2519
        %v2521 = vmul.f32 %v2504, %v2164
        %v2522 = vmul.f32 %v2506, %v2165
        %v2523 = vmul.f32 %v2492, %v2507
        %v2524 = vmul.f32 %v2494, %v2508
        %v2525 = vadd.f32 %v2521, %v2523
        %v2526 = vadd.f32 %v2522, %v2524
        %v2527 = vtanh.pop %v2525
        %v2528 = vtanh.pop %v2526
        %v2529 = vmul.f32 %v2518, %v2527
        %v2530 = vmul.f32 %v2520, %v2528
        %v2531 = vpack.c.bf16 %v2530, %v2529
        %v2533 = vunpack.c.l.b16 %v2531
        %v2534 = vunpack.c.h.b16 %v2531
        %v2535 = vpack.c.b16 %v2533, %v2533
        %v2536 = vpack.c.b16 %v2534, %v2534
        %s2539 = smul.addr %s2184, 4
        %s2540 = scalar_lea.vmem %s272, %s2539 [#allocation5]
        %2541 = vst [vmem:[%s2540] sm:$0xf] %v2535
        %2542 = vst [vmem:[%s2540 + $0x4] sm:$0xf] %v2536
        %s2543 = scalar_select %p732, 2, 5
        %s2544 = smul.u32 %s2543, 16
        %s2545 = sshra.s32 %s2544, 3
        %s2546 = sand.u32 %s2544, 7
        %s2547 = smul.u32 %s2545, 4
        %s2548 = smul.addr %s2547, 8
        %s2549 = scalar_lea.vmem [#allocation2], %s2548
        %v2550 = vld [vmem:[%s2549] sm:$0xff]
        %v2551 = vld [vmem:[%s2549 + $0x8] sm:$0xff]
        %v2552 = vld [vmem:[%s2549 + $0x10] sm:$0xff]
        %v2553 = vld [vmem:[%s2549 + $0x18] sm:$0xff]
        %v2554 = vld [vmem:[%s2549 + $0x20] sm:$0xff]
        %v2555 = vld [vmem:[%s2549 + $0x28] sm:$0xff]
        %v2556 = vld [vmem:[%s2549 + $0x30] sm:$0xff]
        %v2557 = vld [vmem:[%s2549 + $0x38] sm:$0xff]
        %v2558 = vld [vmem:[%s296] sm:$0xff]
        %v2559 = vld [vmem:[%s296 + $0x8] sm:$0xff]
        %v2560 = vld [vmem:[%s296 + $0x10] sm:$0xff]
        %v2561 = vld [vmem:[%s296 + $0x18] sm:$0xff]
        %v2562 = vld [vmem:[%s296 + $0x20] sm:$0xff]
        %v2563 = vld [vmem:[%s296 + $0x28] sm:$0xff]
        %v2564 = vld [vmem:[%s296 + $0x30] sm:$0xff]
        %v2565 = vld [vmem:[%s296 + $0x38] sm:$0xff]
        %v2566 = vld [vmem:[%s296 + $0x40] sm:$0xff]
        %v2567 = vld [vmem:[%s296 + $0x48] sm:$0xff]
        %v2568 = vld [vmem:[%s296 + $0x50] sm:$0xff]
        %v2569 = vld [vmem:[%s296 + $0x58] sm:$0xff]
        %v2570 = vld [vmem:[%s296 + $0x60] sm:$0xff]
        %v2571 = vld [vmem:[%s296 + $0x68] sm:$0xff]
        %v2572 = vld [vmem:[%s296 + $0x70] sm:$0xff]
        %v2573 = vld [vmem:[%s296 + $0x78] sm:$0xff]
        %v2574 = vld [vmem:[%s296 + $0x80] sm:$0xff]
        %v2575 = vld [vmem:[%s296 + $0x88] sm:$0xff]
        %v2576 = vld [vmem:[%s296 + $0x90] sm:$0xff]
        %v2577 = vld [vmem:[%s296 + $0x98] sm:$0xff]
        %v2578 = vld [vmem:[%s296 + $0xa0] sm:$0xff]
        %v2579 = vld [vmem:[%s296 + $0xa8] sm:$0xff]
        %v2580 = vld [vmem:[%s296 + $0xb0] sm:$0xff]
        %v2581 = vld [vmem:[%s296 + $0xb8] sm:$0xff]
        %v2582 = vld [vmem:[%s296 + $0xc0] sm:$0xff]
        %v2583 = vld [vmem:[%s296 + $0xc8] sm:$0xff]
        %v2584 = vld [vmem:[%s296 + $0xd0] sm:$0xff]
        %v2585 = vld [vmem:[%s296 + $0xd8] sm:$0xff]
        %v2586 = vld [vmem:[%s296 + $0xe0] sm:$0xff]
        %v2587 = vld [vmem:[%s296 + $0xe8] sm:$0xff]
        %v2588 = vld [vmem:[%s296 + $0xf0] sm:$0xff]
        %v2589 = vld [vmem:[%s296 + $0xf8] sm:$0xff]
        %v2622 = vunpack.c.l.b16 %v2558
        %v2623 = vunpack.c.h.b16 %v2558
        %v2624 = vunpack.c.l.b16 %v2559
        %v2625 = vunpack.c.h.b16 %v2559
        %v2626 = vunpack.c.l.b16 %v2560
        %v2627 = vunpack.c.h.b16 %v2560
        %v2628 = vunpack.c.l.b16 %v2561
        %v2629 = vunpack.c.h.b16 %v2561
        %v2630 = vunpack.c.l.b16 %v2562
        %v2631 = vunpack.c.h.b16 %v2562
        %v2632 = vunpack.c.l.b16 %v2563
        %v2633 = vunpack.c.h.b16 %v2563
        %v2634 = vunpack.c.l.b16 %v2564
        %v2635 = vunpack.c.h.b16 %v2564
        %v2636 = vunpack.c.l.b16 %v2565
        %v2637 = vunpack.c.h.b16 %v2565
        %v2638 = vunpack.c.l.b16 %v2566
        %v2639 = vunpack.c.h.b16 %v2566
        %v2640 = vunpack.c.l.b16 %v2567
        %v2641 = vunpack.c.h.b16 %v2567
        %v2642 = vunpack.c.l.b16 %v2568
        %v2643 = vunpack.c.h.b16 %v2568
        %v2644 = vunpack.c.l.b16 %v2569
        %v2645 = vunpack.c.h.b16 %v2569
        %v2646 = vunpack.c.l.b16 %v2570
        %v2647 = vunpack.c.h.b16 %v2570
        %v2648 = vunpack.c.l.b16 %v2571
        %v2649 = vunpack.c.h.b16 %v2571
        %v2650 = vunpack.c.l.b16 %v2572
        %v2651 = vunpack.c.h.b16 %v2572
        %v2652 = vunpack.c.l.b16 %v2573
        %v2653 = vunpack.c.h.b16 %v2573
        %v2654 = vunpack.c.l.b16 %v2574
        %v2655 = vunpack.c.h.b16 %v2574
        %v2656 = vunpack.c.l.b16 %v2575
        %v2657 = vunpack.c.h.b16 %v2575
        %v2658 = vunpack.c.l.b16 %v2576
        %v2659 = vunpack.c.h.b16 %v2576
        %v2660 = vunpack.c.l.b16 %v2577
        %v2661 = vunpack.c.h.b16 %v2577
        %v2662 = vunpack.c.l.b16 %v2578
        %v2663 = vunpack.c.h.b16 %v2578
        %v2664 = vunpack.c.l.b16 %v2579
        %v2665 = vunpack.c.h.b16 %v2579
        %v2666 = vunpack.c.l.b16 %v2580
        %v2667 = vunpack.c.h.b16 %v2580
        %v2668 = vunpack.c.l.b16 %v2581
        %v2669 = vunpack.c.h.b16 %v2581
        %v2670 = vunpack.c.l.b16 %v2582
        %v2671 = vunpack.c.h.b16 %v2582
        %v2672 = vunpack.c.l.b16 %v2583
        %v2673 = vunpack.c.h.b16 %v2583
        %v2674 = vunpack.c.l.b16 %v2584
        %v2675 = vunpack.c.h.b16 %v2584
        %v2676 = vunpack.c.l.b16 %v2585
        %v2677 = vunpack.c.h.b16 %v2585
        %v2678 = vunpack.c.l.b16 %v2586
        %v2679 = vunpack.c.h.b16 %v2586
        %v2680 = vunpack.c.l.b16 %v2587
        %v2681 = vunpack.c.h.b16 %v2587
        %v2682 = vunpack.c.l.b16 %v2588
        %v2683 = vunpack.c.h.b16 %v2588
        %v2684 = vunpack.c.l.b16 %v2589
        %v2685 = vunpack.c.h.b16 %v2589
        %v2686 = vpack.c.b16 %v2626, %v2622
        %v2687 = vpack.c.b16 %v2627, %v2623
        %v2688 = vpack.c.b16 %v2628, %v2624
        %v2689 = vpack.c.b16 %v2629, %v2625
        %v2690 = vpack.c.b16 %v2634, %v2630
        %v2691 = vpack.c.b16 %v2635, %v2631
        %v2692 = vpack.c.b16 %v2636, %v2632
        %v2693 = vpack.c.b16 %v2637, %v2633
        %v2694 = vpack.c.b16 %v2642, %v2638
        %v2695 = vpack.c.b16 %v2643, %v2639
        %v2696 = vpack.c.b16 %v2644, %v2640
        %v2697 = vpack.c.b16 %v2645, %v2641
        %v2698 = vpack.c.b16 %v2650, %v2646
        %v2699 = vpack.c.b16 %v2651, %v2647
        %v2700 = vpack.c.b16 %v2652, %v2648
        %v2701 = vpack.c.b16 %v2653, %v2649
        %v2702 = vpack.c.b16 %v2658, %v2654
        %v2703 = vpack.c.b16 %v2659, %v2655
        %v2704 = vpack.c.b16 %v2660, %v2656
        %v2705 = vpack.c.b16 %v2661, %v2657
        %v2706 = vpack.c.b16 %v2666, %v2662
        %v2707 = vpack.c.b16 %v2667, %v2663
        %v2708 = vpack.c.b16 %v2668, %v2664
        %v2709 = vpack.c.b16 %v2669, %v2665
        %v2710 = vpack.c.b16 %v2674, %v2670
        %v2711 = vpack.c.b16 %v2675, %v2671
        %v2712 = vpack.c.b16 %v2676, %v2672
        %v2713 = vpack.c.b16 %v2677, %v2673
        %v2714 = vpack.c.b16 %v2682, %v2678
        %v2715 = vpack.c.b16 %v2683, %v2679
        %v2716 = vpack.c.b16 %v2684, %v2680
        %v2717 = vpack.c.b16 %v2685, %v2681
        %2750 = vmatprep.subr.bf16.mxu0 %v2687
        %2751 = vmatpush1.bf16.msra.mxu0 %v2686
        %2752 = vmatprep.subr.bf16.mxu0 %v2691
        %2753 = vmatpush1.bf16.msra.mxu0 %v2690
        %2754 = vmatprep.subr.bf16.mxu0 %v2695
        %2755 = vmatpush1.bf16.msra.mxu0 %v2694
        %2756 = vmatprep.subr.bf16.mxu0 %v2699
        %2757 = vmatpush1.bf16.msra.mxu0 %v2698
        %2758 = vmatprep.subr.bf16.mxu0 %v2703
        %2759 = vmatpush1.bf16.msra.mxu0 %v2702
        %2760 = vmatprep.subr.bf16.mxu0 %v2707
        %2761 = vmatpush1.bf16.msra.mxu0 %v2706
        %2762 = vmatprep.subr.bf16.mxu0 %v2711
        %2763 = vmatpush1.bf16.msra.mxu0 %v2710
        %2764 = vmatprep.subr.bf16.mxu0 %v2715
        %2765 = vmatpush1.bf16.msra.mxu0 %v2714
        %2766 = vmatprep.subr.bf16.mxu0 0
        %2767 = vmatpush1.bf16.msra.mxu0 0
        %2768 = vmatprep.subr.bf16.mxu0 0
        %2769 = vmatpush1.bf16.msra.mxu0 0
        %2770 = vmatprep.subr.bf16.mxu0 0
        %2771 = vmatpush1.bf16.msra.mxu0 0
        %2772 = vmatprep.subr.bf16.mxu0 0
        %2773 = vmatpush1.bf16.msra.mxu0 0
        %2774 = vmatprep.subr.bf16.mxu0 0
        %2775 = vmatpush1.bf16.msra.mxu0 0
        %2776 = vmatprep.subr.bf16.mxu0 0
        %2777 = vmatpush1.bf16.msra.mxu0 0
        %2778 = vmatprep.subr.bf16.mxu0 0
        %2779 = vmatpush1.bf16.msra.mxu0 0
        %2780 = vmatprep.subr.bf16.mxu0 0
        %2781 = vmatpush1.bf16.msra.mxu0 0
        %2782 = vmatprep.mubr.bf16.mxu0 0
        %2783 = vmatmul.mubr.bf16.gmra.mrb[0].mxu0 %v2531
        %v2784 = vpop.f32.mrb[0].mxu0
        %v2785 = vadd.f32 0.0, %v2784
        %v2786 = vpop.f32.mrb[0].mxu0
        %v2787 = vadd.f32 0.0, %v2786
        %v2788 = vpop.f32.mrb[0].mxu0
        %v2789 = vadd.f32 0.0, %v2788
        %v2790 = vpop.f32.mrb[0].mxu0
        %v2791 = vadd.f32 0.0, %v2790
        %2792 = vdwg.mxu0
        %2793 = vmatprep.subr.bf16.mxu0 %v2689
        %2794 = vmatpush1.bf16.msra.mxu0 %v2688
        %2795 = vmatprep.subr.bf16.mxu0 %v2693
        %2796 = vmatpush1.bf16.msra.mxu0 %v2692
        %2797 = vmatprep.subr.bf16.mxu0 %v2697
        %2798 = vmatpush1.bf16.msra.mxu0 %v2696
        %2799 = vmatprep.subr.bf16.mxu0 %v2701
        %2800 = vmatpush1.bf16.msra.mxu0 %v2700
        %2801 = vmatprep.subr.bf16.mxu0 %v2705
        %2802 = vmatpush1.bf16.msra.mxu0 %v2704
        %2803 = vmatprep.subr.bf16.mxu0 %v2709
        %2804 = vmatpush1.bf16.msra.mxu0 %v2708
        %2805 = vmatprep.subr.bf16.mxu0 %v2713
        %2806 = vmatpush1.bf16.msra.mxu0 %v2712
        %2807 = vmatprep.subr.bf16.mxu0 %v2717
        %2808 = vmatpush1.bf16.msra.mxu0 %v2716
        %2809 = vmatprep.subr.bf16.mxu0 0
        %2810 = vmatpush1.bf16.msra.mxu0 0
        %2811 = vmatprep.subr.bf16.mxu0 0
        %2812 = vmatpush1.bf16.msra.mxu0 0
        %2813 = vmatprep.subr.bf16.mxu0 0
        %2814 = vmatpush1.bf16.msra.mxu0 0
        %2815 = vmatprep.subr.bf16.mxu0 0
        %2816 = vmatpush1.bf16.msra.mxu0 0
        %2817 = vmatprep.subr.bf16.mxu0 0
        %2818 = vmatpush1.bf16.msra.mxu0 0
        %2819 = vmatprep.subr.bf16.mxu0 0
        %2820 = vmatpush1.bf16.msra.mxu0 0
        %2821 = vmatprep.subr.bf16.mxu0 0
        %2822 = vmatpush1.bf16.msra.mxu0 0
        %2823 = vmatprep.subr.bf16.mxu0 0
        %2824 = vmatpush1.bf16.msra.mxu0 0
        %2825 = vmatprep.mubr.bf16.mxu0 0
        %2826 = vmatmul.mubr.bf16.gmra.mrb[0].mxu0 %v2531
        %v2827 = vpop.f32.mrb[0].mxu0
        %v2828 = vadd.f32 0.0, %v2827
        %v2829 = vpop.f32.mrb[0].mxu0
        %v2830 = vadd.f32 0.0, %v2829
        %v2831 = vpop.f32.mrb[0].mxu0
        %v2832 = vadd.f32 0.0, %v2831
        %v2833 = vpop.f32.mrb[0].mxu0
        %v2834 = vadd.f32 0.0, %v2833
        %2835 = vdwg.mxu0
        %v2836 = vadd.f32 %v2550, %v2785
        %v2837 = vadd.f32 %v2551, %v2787
        %v2838 = vadd.f32 %v2552, %v2828
        %v2839 = vadd.f32 %v2553, %v2830
        %v2840 = vadd.f32 %v2554, %v2789
        %v2841 = vadd.f32 %v2555, %v2791
        %v2842 = vadd.f32 %v2556, %v2832
        %v2843 = vadd.f32 %v2557, %v2834
        %v2844 = vxor.u32 %v2836, 2147483648
        %v2845 = vxor.u32 %v2840, 2147483648
        %v2846 = vmul.f32 %v2844, 1.442695
        %v2847 = vpow.pop %v2846
        %v2848 = vmul.f32 %v2845, 1.442695
        %v2849 = vpow.pop %v2848
        %v2850 = vadd.f32 %v2847, 1.0
        %v2851 = vadd.f32 %v2849, 1.0
        %v2852 = vrcp.pop %v2850
        %v2853 = vmul.f32 1.0, %v2852
        %v2854 = vrcp.pop %v2851
        %v2855 = vmul.f32 1.0, %v2854
        %v2856 = vxor.u32 %v2837, 2147483648
        %v2857 = vxor.u32 %v2841, 2147483648
        %v2858 = vmul.f32 %v2856, 1.442695
        %v2859 = vpow.pop %v2858
        %v2860 = vmul.f32 %v2857, 1.442695
        %v2861 = vpow.pop %v2860
        %v2862 = vadd.f32 %v2859, 1.0
        %v2863 = vadd.f32 %v2861, 1.0
        %v2864 = vrcp.pop %v2862
        %v2865 = vmul.f32 1.0, %v2864
        %v2866 = vrcp.pop %v2863
        %v2867 = vmul.f32 1.0, %v2866
        %v2868 = vtanh.pop %v2838
        %v2869 = vtanh.pop %v2842
        %v2870 = vxor.u32 %v2839, 2147483648
        %v2871 = vxor.u32 %v2843, 2147483648
        %v2872 = vmul.f32 %v2870, 1.442695
        %v2873 = vpow.pop %v2872
        %v2874 = vmul.f32 %v2871, 1.442695
        %v2875 = vpow.pop %v2874
        %v2876 = vadd.f32 %v2873, 1.0
        %v2877 = vadd.f32 %v2875, 1.0
        %v2878 = vrcp.pop %v2876
        %v2879 = vmul.f32 1.0, %v2878
        %v2880 = vrcp.pop %v2877
        %v2881 = vmul.f32 1.0, %v2880
        %v2882 = vmul.f32 %v2865, %v2525
        %v2883 = vmul.f32 %v2867, %v2526
        %v2884 = vmul.f32 %v2853, %v2868
        %v2885 = vmul.f32 %v2855, %v2869
        %v2886 = vadd.f32 %v2882, %v2884
        %v2887 = vadd.f32 %v2883, %v2885
        %v2888 = vtanh.pop %v2886
        %v2889 = vtanh.pop %v2887
        %v2890 = vmul.f32 %v2879, %v2888
        %v2891 = vmul.f32 %v2881, %v2889
        %v2892 = vpack.c.bf16 %v2891, %v2890
        %v2894 = vunpack.c.l.b16 %v2892
        %v2895 = vunpack.c.h.b16 %v2892
        %v2896 = vpack.c.b16 %v2894, %v2894
        %v2897 = vpack.c.b16 %v2895, %v2895
        %s2900 = smul.addr %s2545, 4
        %s2901 = scalar_lea.vmem %s272, %s2900 [#allocation5]
        %2902 = vst [vmem:[%s2901] sm:$0xf] %v2896
        %2903 = vst [vmem:[%s2901 + $0x4] sm:$0xf] %v2897
        %s2904 = scalar_select %p732, 1, 6
        %s2905 = smul.u32 %s2904, 16
        %s2906 = sshra.s32 %s2905, 3
        %s2907 = sand.u32 %s2905, 7
        %s2908 = smul.u32 %s2906, 4
        %s2909 = smul.addr %s2908, 8
        %s2910 = scalar_lea.vmem [#allocation2], %s2909
        %v2911 = vld [vmem:[%s2910] sm:$0xff]
        %v2912 = vld [vmem:[%s2910 + $0x8] sm:$0xff]
        %v2913 = vld [vmem:[%s2910 + $0x10] sm:$0xff]
        %v2914 = vld [vmem:[%s2910 + $0x18] sm:$0xff]
        %v2915 = vld [vmem:[%s2910 + $0x20] sm:$0xff]
        %v2916 = vld [vmem:[%s2910 + $0x28] sm:$0xff]
        %v2917 = vld [vmem:[%s2910 + $0x30] sm:$0xff]
        %v2918 = vld [vmem:[%s2910 + $0x38] sm:$0xff]
        %v2919 = vld [vmem:[%s296] sm:$0xff]
        %v2920 = vld [vmem:[%s296 + $0x8] sm:$0xff]
        %v2921 = vld [vmem:[%s296 + $0x10] sm:$0xff]
        %v2922 = vld [vmem:[%s296 + $0x18] sm:$0xff]
        %v2923 = vld [vmem:[%s296 + $0x20] sm:$0xff]
        %v2924 = vld [vmem:[%s296 + $0x28] sm:$0xff]
        %v2925 = vld [vmem:[%s296 + $0x30] sm:$0xff]
        %v2926 = vld [vmem:[%s296 + $0x38] sm:$0xff]
        %v2927 = vld [vmem:[%s296 + $0x40] sm:$0xff]
        %v2928 = vld [vmem:[%s296 + $0x48] sm:$0xff]
        %v2929 = vld [vmem:[%s296 + $0x50] sm:$0xff]
        %v2930 = vld [vmem:[%s296 + $0x58] sm:$0xff]
        %v2931 = vld [vmem:[%s296 + $0x60] sm:$0xff]
        %v2932 = vld [vmem:[%s296 + $0x68] sm:$0xff]
        %v2933 = vld [vmem:[%s296 + $0x70] sm:$0xff]
        %v2934 = vld [vmem:[%s296 + $0x78] sm:$0xff]
        %v2935 = vld [vmem:[%s296 + $0x80] sm:$0xff]
        %v2936 = vld [vmem:[%s296 + $0x88] sm:$0xff]
        %v2937 = vld [vmem:[%s296 + $0x90] sm:$0xff]
        %v2938 = vld [vmem:[%s296 + $0x98] sm:$0xff]
        %v2939 = vld [vmem:[%s296 + $0xa0] sm:$0xff]
        %v2940 = vld [vmem:[%s296 + $0xa8] sm:$0xff]
        %v2941 = vld [vmem:[%s296 + $0xb0] sm:$0xff]
        %v2942 = vld [vmem:[%s296 + $0xb8] sm:$0xff]
        %v2943 = vld [vmem:[%s296 + $0xc0] sm:$0xff]
        %v2944 = vld [vmem:[%s296 + $0xc8] sm:$0xff]
        %v2945 = vld [vmem:[%s296 + $0xd0] sm:$0xff]
        %v2946 = vld [vmem:[%s296 + $0xd8] sm:$0xff]
        %v2947 = vld [vmem:[%s296 + $0xe0] sm:$0xff]
        %v2948 = vld [vmem:[%s296 + $0xe8] sm:$0xff]
        %v2949 = vld [vmem:[%s296 + $0xf0] sm:$0xff]
        %v2950 = vld [vmem:[%s296 + $0xf8] sm:$0xff]
        %v2983 = vunpack.c.l.b16 %v2919
        %v2984 = vunpack.c.h.b16 %v2919
        %v2985 = vunpack.c.l.b16 %v2920
        %v2986 = vunpack.c.h.b16 %v2920
        %v2987 = vunpack.c.l.b16 %v2921
        %v2988 = vunpack.c.h.b16 %v2921
        %v2989 = vunpack.c.l.b16 %v2922
        %v2990 = vunpack.c.h.b16 %v2922
        %v2991 = vunpack.c.l.b16 %v2923
        %v2992 = vunpack.c.h.b16 %v2923
        %v2993 = vunpack.c.l.b16 %v2924
        %v2994 = vunpack.c.h.b16 %v2924
        %v2995 = vunpack.c.l.b16 %v2925
        %v2996 = vunpack.c.h.b16 %v2925
        %v2997 = vunpack.c.l.b16 %v2926
        %v2998 = vunpack.c.h.b16 %v2926
        %v2999 = vunpack.c.l.b16 %v2927
        %v3000 = vunpack.c.h.b16 %v2927
        %v3001 = vunpack.c.l.b16 %v2928
        %v3002 = vunpack.c.h.b16 %v2928
        %v3003 = vunpack.c.l.b16 %v2929
        %v3004 = vunpack.c.h.b16 %v2929
        %v3005 = vunpack.c.l.b16 %v2930
        %v3006 = vunpack.c.h.b16 %v2930
        %v3007 = vunpack.c.l.b16 %v2931
        %v3008 = vunpack.c.h.b16 %v2931
        %v3009 = vunpack.c.l.b16 %v2932
        %v3010 = vunpack.c.h.b16 %v2932
        %v3011 = vunpack.c.l.b16 %v2933
        %v3012 = vunpack.c.h.b16 %v2933
        %v3013 = vunpack.c.l.b16 %v2934
        %v3014 = vunpack.c.h.b16 %v2934
        %v3015 = vunpack.c.l.b16 %v2935
        %v3016 = vunpack.c.h.b16 %v2935
        %v3017 = vunpack.c.l.b16 %v2936
        %v3018 = vunpack.c.h.b16 %v2936
        %v3019 = vunpack.c.l.b16 %v2937
        %v3020 = vunpack.c.h.b16 %v2937
        %v3021 = vunpack.c.l.b16 %v2938
        %v3022 = vunpack.c.h.b16 %v2938
        %v3023 = vunpack.c.l.b16 %v2939
        %v3024 = vunpack.c.h.b16 %v2939
        %v3025 = vunpack.c.l.b16 %v2940
        %v3026 = vunpack.c.h.b16 %v2940
        %v3027 = vunpack.c.l.b16 %v2941
        %v3028 = vunpack.c.h.b16 %v2941
        %v3029 = vunpack.c.l.b16 %v2942
        %v3030 = vunpack.c.h.b16 %v2942
        %v3031 = vunpack.c.l.b16 %v2943
        %v3032 = vunpack.c.h.b16 %v2943
        %v3033 = vunpack.c.l.b16 %v2944
        %v3034 = vunpack.c.h.b16 %v2944
        %v3035 = vunpack.c.l.b16 %v2945
        %v3036 = vunpack.c.h.b16 %v2945
        %v3037 = vunpack.c.l.b16 %v2946
        %v3038 = vunpack.c.h.b16 %v2946
        %v3039 = vunpack.c.l.b16 %v2947
        %v3040 = vunpack.c.h.b16 %v2947
        %v3041 = vunpack.c.l.b16 %v2948
        %v3042 = vunpack.c.h.b16 %v2948
        %v3043 = vunpack.c.l.b16 %v2949
        %v3044 = vunpack.c.h.b16 %v2949
        %v3045 = vunpack.c.l.b16 %v2950
        %v3046 = vunpack.c.h.b16 %v2950
        %v3047 = vpack.c.b16 %v2987, %v2983
        %v3048 = vpack.c.b16 %v2988, %v2984
        %v3049 = vpack.c.b16 %v2989, %v2985
        %v3050 = vpack.c.b16 %v2990, %v2986
        %v3051 = vpack.c.b16 %v2995, %v2991
        %v3052 = vpack.c.b16 %v2996, %v2992
        %v3053 = vpack.c.b16 %v2997, %v2993
        %v3054 = vpack.c.b16 %v2998, %v2994
        %v3055 = vpack.c.b16 %v3003, %v2999
        %v3056 = vpack.c.b16 %v3004, %v3000
        %v3057 = vpack.c.b16 %v3005, %v3001
        %v3058 = vpack.c.b16 %v3006, %v3002
        %v3059 = vpack.c.b16 %v3011, %v3007
        %v3060 = vpack.c.b16 %v3012, %v3008
        %v3061 = vpack.c.b16 %v3013, %v3009
        %v3062 = vpack.c.b16 %v3014, %v3010
        %v3063 = vpack.c.b16 %v3019, %v3015
        %v3064 = vpack.c.b16 %v3020, %v3016
        %v3065 = vpack.c.b16 %v3021, %v3017
        %v3066 = vpack.c.b16 %v3022, %v3018
        %v3067 = vpack.c.b16 %v3027, %v3023
        %v3068 = vpack.c.b16 %v3028, %v3024
        %v3069 = vpack.c.b16 %v3029, %v3025
        %v3070 = vpack.c.b16 %v3030, %v3026
        %v3071 = vpack.c.b16 %v3035, %v3031
        %v3072 = vpack.c.b16 %v3036, %v3032
        %v3073 = vpack.c.b16 %v3037, %v3033
        %v3074 = vpack.c.b16 %v3038, %v3034
        %v3075 = vpack.c.b16 %v3043, %v3039
        %v3076 = vpack.c.b16 %v3044, %v3040
        %v3077 = vpack.c.b16 %v3045, %v3041
        %v3078 = vpack.c.b16 %v3046, %v3042
        %3111 = vmatprep.subr.bf16.mxu0 %v3048
        %3112 = vmatpush1.bf16.msra.mxu0 %v3047
        %3113 = vmatprep.subr.bf16.mxu0 %v3052
        %3114 = vmatpush1.bf16.msra.mxu0 %v3051
        %3115 = vmatprep.subr.bf16.mxu0 %v3056
        %3116 = vmatpush1.bf16.msra.mxu0 %v3055
        %3117 = vmatprep.subr.bf16.mxu0 %v3060
        %3118 = vmatpush1.bf16.msra.mxu0 %v3059
        %3119 = vmatprep.subr.bf16.mxu0 %v3064
        %3120 = vmatpush1.bf16.msra.mxu0 %v3063
        %3121 = vmatprep.subr.bf16.mxu0 %v3068
        %3122 = vmatpush1.bf16.msra.mxu0 %v3067
        %3123 = vmatprep.subr.bf16.mxu0 %v3072
        %3124 = vmatpush1.bf16.msra.mxu0 %v3071
        %3125 = vmatprep.subr.bf16.mxu0 %v3076
        %3126 = vmatpush1.bf16.msra.mxu0 %v3075
        %3127 = vmatprep.subr.bf16.mxu0 0
        %3128 = vmatpush1.bf16.msra.mxu0 0
        %3129 = vmatprep.subr.bf16.mxu0 0
        %3130 = vmatpush1.bf16.msra.mxu0 0
        %3131 = vmatprep.subr.bf16.mxu0 0
        %3132 = vmatpush1.bf16.msra.mxu0 0
        %3133 = vmatprep.subr.bf16.mxu0 0
        %3134 = vmatpush1.bf16.msra.mxu0 0
        %3135 = vmatprep.subr.bf16.mxu0 0
        %3136 = vmatpush1.bf16.msra.mxu0 0
        %3137 = vmatprep.subr.bf16.mxu0 0
        %3138 = vmatpush1.bf16.msra.mxu0 0
        %3139 = vmatprep.subr.bf16.mxu0 0
        %3140 = vmatpush1.bf16.msra.mxu0 0
        %3141 = vmatprep.subr.bf16.mxu0 0
        %3142 = vmatpush1.bf16.msra.mxu0 0
        %3143 = vmatprep.mubr.bf16.mxu0 0
        %3144 = vmatmul.mubr.bf16.gmra.mrb[0].mxu0 %v2892
        %v3145 = vpop.f32.mrb[0].mxu0
        %v3146 = vadd.f32 0.0, %v3145
        %v3147 = vpop.f32.mrb[0].mxu0
        %v3148 = vadd.f32 0.0, %v3147
        %v3149 = vpop.f32.mrb[0].mxu0
        %v3150 = vadd.f32 0.0, %v3149
        %v3151 = vpop.f32.mrb[0].mxu0
        %v3152 = vadd.f32 0.0, %v3151
        %3153 = vdwg.mxu0
        %3154 = vmatprep.subr.bf16.mxu0 %v3050
        %3155 = vmatpush1.bf16.msra.mxu0 %v3049
        %3156 = vmatprep.subr.bf16.mxu0 %v3054
        %3157 = vmatpush1.bf16.msra.mxu0 %v3053
        %3158 = vmatprep.subr.bf16.mxu0 %v3058
        %3159 = vmatpush1.bf16.msra.mxu0 %v3057
        %3160 = vmatprep.subr.bf16.mxu0 %v3062
        %3161 = vmatpush1.bf16.msra.mxu0 %v3061
        %3162 = vmatprep.subr.bf16.mxu0 %v3066
        %3163 = vmatpush1.bf16.msra.mxu0 %v3065
        %3164 = vmatprep.subr.bf16.mxu0 %v3070
        %3165 = vmatpush1.bf16.msra.mxu0 %v3069
        %3166 = vmatprep.subr.bf16.mxu0 %v3074
        %3167 = vmatpush1.bf16.msra.mxu0 %v3073
        %3168 = vmatprep.subr.bf16.mxu0 %v3078
        %3169 = vmatpush1.bf16.msra.mxu0 %v3077
        %3170 = vmatprep.subr.bf16.mxu0 0
        %3171 = vmatpush1.bf16.msra.mxu0 0
        %3172 = vmatprep.subr.bf16.mxu0 0
        %3173 = vmatpush1.bf16.msra.mxu0 0
        %3174 = vmatprep.subr.bf16.mxu0 0
        %3175 = vmatpush1.bf16.msra.mxu0 0
        %3176 = vmatprep.subr.bf16.mxu0 0
        %3177 = vmatpush1.bf16.msra.mxu0 0
        %3178 = vmatprep.subr.bf16.mxu0 0
        %3179 = vmatpush1.bf16.msra.mxu0 0
        %3180 = vmatprep.subr.bf16.mxu0 0
        %3181 = vmatpush1.bf16.msra.mxu0 0
        %3182 = vmatprep.subr.bf16.mxu0 0
        %3183 = vmatpush1.bf16.msra.mxu0 0
        %3184 = vmatprep.subr.bf16.mxu0 0
        %3185 = vmatpush1.bf16.msra.mxu0 0
        %3186 = vmatprep.mubr.bf16.mxu0 0
        %3187 = vmatmul.mubr.bf16.gmra.mrb[0].mxu0 %v2892
        %v3188 = vpop.f32.mrb[0].mxu0
        %v3189 = vadd.f32 0.0, %v3188
        %v3190 = vpop.f32.mrb[0].mxu0
        %v3191 = vadd.f32 0.0, %v3190
        %v3192 = vpop.f32.mrb[0].mxu0
        %v3193 = vadd.f32 0.0, %v3192
        %v3194 = vpop.f32.mrb[0].mxu0
        %v3195 = vadd.f32 0.0, %v3194
        %3196 = vdwg.mxu0
        %v3197 = vadd.f32 %v2911, %v3146
        %v3198 = vadd.f32 %v2912, %v3148
        %v3199 = vadd.f32 %v2913, %v3189
        %v3200 = vadd.f32 %v2914, %v3191
        %v3201 = vadd.f32 %v2915, %v3150
        %v3202 = vadd.f32 %v2916, %v3152
        %v3203 = vadd.f32 %v2917, %v3193
        %v3204 = vadd.f32 %v2918, %v3195
        %v3205 = vxor.u32 %v3197, 2147483648
        %v3206 = vxor.u32 %v3201, 2147483648
        %v3207 = vmul.f32 %v3205, 1.442695
        %v3208 = vpow.pop %v3207
        %v3209 = vmul.f32 %v3206, 1.442695
        %v3210 = vpow.pop %v3209
        %v3211 = vadd.f32 %v3208, 1.0
        %v3212 = vadd.f32 %v3210, 1.0
        %v3213 = vrcp.pop %v3211
        %v3214 = vmul.f32 1.0, %v3213
        %v3215 = vrcp.pop %v3212
        %v3216 = vmul.f32 1.0, %v3215
        %v3217 = vxor.u32 %v3198, 2147483648
        %v3218 = vxor.u32 %v3202, 2147483648
        %v3219 = vmul.f32 %v3217, 1.442695
        %v3220 = vpow.pop %v3219
        %v3221 = vmul.f32 %v3218, 1.442695
        %v3222 = vpow.pop %v3221
        %v3223 = vadd.f32 %v3220, 1.0
        %v3224 = vadd.f32 %v3222, 1.0
        %v3225 = vrcp.pop %v3223
        %v3226 = vmul.f32 1.0, %v3225
        %v3227 = vrcp.pop %v3224
        %v3228 = vmul.f32 1.0, %v3227
        %v3229 = vtanh.pop %v3199
        %v3230 = vtanh.pop %v3203
        %v3231 = vxor.u32 %v3200, 2147483648
        %v3232 = vxor.u32 %v3204, 2147483648
        %v3233 = vmul.f32 %v3231, 1.442695
        %v3234 = vpow.pop %v3233
        %v3235 = vmul.f32 %v3232, 1.442695
        %v3236 = vpow.pop %v3235
        %v3237 = vadd.f32 %v3234, 1.0
        %v3238 = vadd.f32 %v3236, 1.0
        %v3239 = vrcp.pop %v3237
        %v3240 = vmul.f32 1.0, %v3239
        %v3241 = vrcp.pop %v3238
        %v3242 = vmul.f32 1.0, %v3241
        %v3243 = vmul.f32 %v3226, %v2886
        %v3244 = vmul.f32 %v3228, %v2887
        %v3245 = vmul.f32 %v3214, %v3229
        %v3246 = vmul.f32 %v3216, %v3230
        %v3247 = vadd.f32 %v3243, %v3245
        %v3248 = vadd.f32 %v3244, %v3246
        %v3249 = vtanh.pop %v3247
        %v3250 = vtanh.pop %v3248
        %v3251 = vmul.f32 %v3240, %v3249
        %v3252 = vmul.f32 %v3242, %v3250
        %v3253 = vpack.c.bf16 %v3252, %v3251
        %v3255 = vunpack.c.l.b16 %v3253
        %v3256 = vunpack.c.h.b16 %v3253
        %v3257 = vpack.c.b16 %v3255, %v3255
        %v3258 = vpack.c.b16 %v3256, %v3256
        %s3261 = smul.addr %s2906, 4
        %s3262 = scalar_lea.vmem %s272, %s3261 [#allocation5]
        %3263 = vst [vmem:[%s3262] sm:$0xf] %v3257
        %3264 = vst [vmem:[%s3262 + $0x4] sm:$0xf] %v3258
        %s3265 = scalar_select %p732, 0, 7
        %s3266 = smul.u32 %s3265, 16
        %s3267 = sshra.s32 %s3266, 3
        %s3268 = sand.u32 %s3266, 7
        %s3269 = smul.u32 %s3267, 4
        %s3270 = smul.addr %s3269, 8
        %s3271 = scalar_lea.vmem [#allocation2], %s3270
        %v3272 = vld [vmem:[%s3271] sm:$0xff]
        %v3273 = vld [vmem:[%s3271 + $0x8] sm:$0xff]
        %v3274 = vld [vmem:[%s3271 + $0x10] sm:$0xff]
        %v3275 = vld [vmem:[%s3271 + $0x18] sm:$0xff]
        %v3276 = vld [vmem:[%s3271 + $0x20] sm:$0xff]
        %v3277 = vld [vmem:[%s3271 + $0x28] sm:$0xff]
        %v3278 = vld [vmem:[%s3271 + $0x30] sm:$0xff]
        %v3279 = vld [vmem:[%s3271 + $0x38] sm:$0xff]
        %v3280 = vld [vmem:[%s296] sm:$0xff]
        %v3281 = vld [vmem:[%s296 + $0x8] sm:$0xff]
        %v3282 = vld [vmem:[%s296 + $0x10] sm:$0xff]
        %v3283 = vld [vmem:[%s296 + $0x18] sm:$0xff]
        %v3284 = vld [vmem:[%s296 + $0x20] sm:$0xff]
        %v3285 = vld [vmem:[%s296 + $0x28] sm:$0xff]
        %v3286 = vld [vmem:[%s296 + $0x30] sm:$0xff]
        %v3287 = vld [vmem:[%s296 + $0x38] sm:$0xff]
        %v3288 = vld [vmem:[%s296 + $0x40] sm:$0xff]
        %v3289 = vld [vmem:[%s296 + $0x48] sm:$0xff]
        %v3290 = vld [vmem:[%s296 + $0x50] sm:$0xff]
        %v3291 = vld [vmem:[%s296 + $0x58] sm:$0xff]
        %v3292 = vld [vmem:[%s296 + $0x60] sm:$0xff]
        %v3293 = vld [vmem:[%s296 + $0x68] sm:$0xff]
        %v3294 = vld [vmem:[%s296 + $0x70] sm:$0xff]
        %v3295 = vld [vmem:[%s296 + $0x78] sm:$0xff]
        %v3296 = vld [vmem:[%s296 + $0x80] sm:$0xff]
        %v3297 = vld [vmem:[%s296 + $0x88] sm:$0xff]
        %v3298 = vld [vmem:[%s296 + $0x90] sm:$0xff]
        %v3299 = vld [vmem:[%s296 + $0x98] sm:$0xff]
        %v3300 = vld [vmem:[%s296 + $0xa0] sm:$0xff]
        %v3301 = vld [vmem:[%s296 + $0xa8] sm:$0xff]
        %v3302 = vld [vmem:[%s296 + $0xb0] sm:$0xff]
        %v3303 = vld [vmem:[%s296 + $0xb8] sm:$0xff]
        %v3304 = vld [vmem:[%s296 + $0xc0] sm:$0xff]
        %v3305 = vld [vmem:[%s296 + $0xc8] sm:$0xff]
        %v3306 = vld [vmem:[%s296 + $0xd0] sm:$0xff]
        %v3307 = vld [vmem:[%s296 + $0xd8] sm:$0xff]
        %v3308 = vld [vmem:[%s296 + $0xe0] sm:$0xff]
        %v3309 = vld [vmem:[%s296 + $0xe8] sm:$0xff]
        %v3310 = vld [vmem:[%s296 + $0xf0] sm:$0xff]
        %v3311 = vld [vmem:[%s296 + $0xf8] sm:$0xff]
        %v3344 = vunpack.c.l.b16 %v3280
        %v3345 = vunpack.c.h.b16 %v3280
        %v3346 = vunpack.c.l.b16 %v3281
        %v3347 = vunpack.c.h.b16 %v3281
        %v3348 = vunpack.c.l.b16 %v3282
        %v3349 = vunpack.c.h.b16 %v3282
        %v3350 = vunpack.c.l.b16 %v3283
        %v3351 = vunpack.c.h.b16 %v3283
        %v3352 = vunpack.c.l.b16 %v3284
        %v3353 = vunpack.c.h.b16 %v3284
        %v3354 = vunpack.c.l.b16 %v3285
        %v3355 = vunpack.c.h.b16 %v3285
        %v3356 = vunpack.c.l.b16 %v3286
        %v3357 = vunpack.c.h.b16 %v3286
        %v3358 = vunpack.c.l.b16 %v3287
        %v3359 = vunpack.c.h.b16 %v3287
        %v3360 = vunpack.c.l.b16 %v3288
        %v3361 = vunpack.c.h.b16 %v3288
        %v3362 = vunpack.c.l.b16 %v3289
        %v3363 = vunpack.c.h.b16 %v3289
        %v3364 = vunpack.c.l.b16 %v3290
        %v3365 = vunpack.c.h.b16 %v3290
        %v3366 = vunpack.c.l.b16 %v3291
        %v3367 = vunpack.c.h.b16 %v3291
        %v3368 = vunpack.c.l.b16 %v3292
        %v3369 = vunpack.c.h.b16 %v3292
        %v3370 = vunpack.c.l.b16 %v3293
        %v3371 = vunpack.c.h.b16 %v3293
        %v3372 = vunpack.c.l.b16 %v3294
        %v3373 = vunpack.c.h.b16 %v3294
        %v3374 = vunpack.c.l.b16 %v3295
        %v3375 = vunpack.c.h.b16 %v3295
        %v3376 = vunpack.c.l.b16 %v3296
        %v3377 = vunpack.c.h.b16 %v3296
        %v3378 = vunpack.c.l.b16 %v3297
        %v3379 = vunpack.c.h.b16 %v3297
        %v3380 = vunpack.c.l.b16 %v3298
        %v3381 = vunpack.c.h.b16 %v3298
        %v3382 = vunpack.c.l.b16 %v3299
        %v3383 = vunpack.c.h.b16 %v3299
        %v3384 = vunpack.c.l.b16 %v3300
        %v3385 = vunpack.c.h.b16 %v3300
        %v3386 = vunpack.c.l.b16 %v3301
        %v3387 = vunpack.c.h.b16 %v3301
        %v3388 = vunpack.c.l.b16 %v3302
        %v3389 = vunpack.c.h.b16 %v3302
        %v3390 = vunpack.c.l.b16 %v3303
        %v3391 = vunpack.c.h.b16 %v3303
        %v3392 = vunpack.c.l.b16 %v3304
        %v3393 = vunpack.c.h.b16 %v3304
        %v3394 = vunpack.c.l.b16 %v3305
        %v3395 = vunpack.c.h.b16 %v3305
        %v3396 = vunpack.c.l.b16 %v3306
        %v3397 = vunpack.c.h.b16 %v3306
        %v3398 = vunpack.c.l.b16 %v3307
        %v3399 = vunpack.c.h.b16 %v3307
        %v3400 = vunpack.c.l.b16 %v3308
        %v3401 = vunpack.c.h.b16 %v3308
        %v3402 = vunpack.c.l.b16 %v3309
        %v3403 = vunpack.c.h.b16 %v3309
        %v3404 = vunpack.c.l.b16 %v3310
        %v3405 = vunpack.c.h.b16 %v3310
        %v3406 = vunpack.c.l.b16 %v3311
        %v3407 = vunpack.c.h.b16 %v3311
        %v3408 = vpack.c.b16 %v3348, %v3344
        %v3409 = vpack.c.b16 %v3349, %v3345
        %v3410 = vpack.c.b16 %v3350, %v3346
        %v3411 = vpack.c.b16 %v3351, %v3347
        %v3412 = vpack.c.b16 %v3356, %v3352
        %v3413 = vpack.c.b16 %v3357, %v3353
        %v3414 = vpack.c.b16 %v3358, %v3354
        %v3415 = vpack.c.b16 %v3359, %v3355
        %v3416 = vpack.c.b16 %v3364, %v3360
        %v3417 = vpack.c.b16 %v3365, %v3361
        %v3418 = vpack.c.b16 %v3366, %v3362
        %v3419 = vpack.c.b16 %v3367, %v3363
        %v3420 = vpack.c.b16 %v3372, %v3368
        %v3421 = vpack.c.b16 %v3373, %v3369
        %v3422 = vpack.c.b16 %v3374, %v3370
        %v3423 = vpack.c.b16 %v3375, %v3371
        %v3424 = vpack.c.b16 %v3380, %v3376
        %v3425 = vpack.c.b16 %v3381, %v3377
        %v3426 = vpack.c.b16 %v3382, %v3378
        %v3427 = vpack.c.b16 %v3383, %v3379
        %v3428 = vpack.c.b16 %v3388, %v3384
        %v3429 = vpack.c.b16 %v3389, %v3385
        %v3430 = vpack.c.b16 %v3390, %v3386
        %v3431 = vpack.c.b16 %v3391, %v3387
        %v3432 = vpack.c.b16 %v3396, %v3392
        %v3433 = vpack.c.b16 %v3397, %v3393
        %v3434 = vpack.c.b16 %v3398, %v3394
        %v3435 = vpack.c.b16 %v3399, %v3395
        %v3436 = vpack.c.b16 %v3404, %v3400
        %v3437 = vpack.c.b16 %v3405, %v3401
        %v3438 = vpack.c.b16 %v3406, %v3402
        %v3439 = vpack.c.b16 %v3407, %v3403
        %3472 = vmatprep.subr.bf16.mxu0 %v3409
        %3473 = vmatpush1.bf16.msra.mxu0 %v3408
        %3474 = vmatprep.subr.bf16.mxu0 %v3413
        %3475 = vmatpush1.bf16.msra.mxu0 %v3412
        %3476 = vmatprep.subr.bf16.mxu0 %v3417
        %3477 = vmatpush1.bf16.msra.mxu0 %v3416
        %3478 = vmatprep.subr.bf16.mxu0 %v3421
        %3479 = vmatpush1.bf16.msra.mxu0 %v3420
        %3480 = vmatprep.subr.bf16.mxu0 %v3425
        %3481 = vmatpush1.bf16.msra.mxu0 %v3424
        %3482 = vmatprep.subr.bf16.mxu0 %v3429
        %3483 = vmatpush1.bf16.msra.mxu0 %v3428
        %3484 = vmatprep.subr.bf16.mxu0 %v3433
        %3485 = vmatpush1.bf16.msra.mxu0 %v3432
        %3486 = vmatprep.subr.bf16.mxu0 %v3437
        %3487 = vmatpush1.bf16.msra.mxu0 %v3436
        %3488 = vmatprep.subr.bf16.mxu0 0
        %3489 = vmatpush1.bf16.msra.mxu0 0
        %3490 = vmatprep.subr.bf16.mxu0 0
        %3491 = vmatpush1.bf16.msra.mxu0 0
        %3492 = vmatprep.subr.bf16.mxu0 0
        %3493 = vmatpush1.bf16.msra.mxu0 0
        %3494 = vmatprep.subr.bf16.mxu0 0
        %3495 = vmatpush1.bf16.msra.mxu0 0
        %3496 = vmatprep.subr.bf16.mxu0 0
        %3497 = vmatpush1.bf16.msra.mxu0 0
        %3498 = vmatprep.subr.bf16.mxu0 0
        %3499 = vmatpush1.bf16.msra.mxu0 0
        %3500 = vmatprep.subr.bf16.mxu0 0
        %3501 = vmatpush1.bf16.msra.mxu0 0
        %3502 = vmatprep.subr.bf16.mxu0 0
        %3503 = vmatpush1.bf16.msra.mxu0 0
        %3504 = vmatprep.mubr.bf16.mxu0 0
        %3505 = vmatmul.mubr.bf16.gmra.mrb[0].mxu0 %v3253
        %v3506 = vpop.f32.mrb[0].mxu0
        %v3507 = vadd.f32 0.0, %v3506
        %v3508 = vpop.f32.mrb[0].mxu0
        %v3509 = vadd.f32 0.0, %v3508
        %v3510 = vpop.f32.mrb[0].mxu0
        %v3511 = vadd.f32 0.0, %v3510
        %v3512 = vpop.f32.mrb[0].mxu0
        %v3513 = vadd.f32 0.0, %v3512
        %3514 = vdwg.mxu0
        %3515 = vmatprep.subr.bf16.mxu0 %v3411
        %3516 = vmatpush1.bf16.msra.mxu0 %v3410
        %3517 = vmatprep.subr.bf16.mxu0 %v3415
        %3518 = vmatpush1.bf16.msra.mxu0 %v3414
        %3519 = vmatprep.subr.bf16.mxu0 %v3419
        %3520 = vmatpush1.bf16.msra.mxu0 %v3418
        %3521 = vmatprep.subr.bf16.mxu0 %v3423
        %3522 = vmatpush1.bf16.msra.mxu0 %v3422
        %3523 = vmatprep.subr.bf16.mxu0 %v3427
        %3524 = vmatpush1.bf16.msra.mxu0 %v3426
        %3525 = vmatprep.subr.bf16.mxu0 %v3431
        %3526 = vmatpush1.bf16.msra.mxu0 %v3430
        %3527 = vmatprep.subr.bf16.mxu0 %v3435
        %3528 = vmatpush1.bf16.msra.mxu0 %v3434
        %3529 = vmatprep.subr.bf16.mxu0 %v3439
        %3530 = vmatpush1.bf16.msra.mxu0 %v3438
        %3531 = vmatprep.subr.bf16.mxu0 0
        %3532 = vmatpush1.bf16.msra.mxu0 0
        %3533 = vmatprep.subr.bf16.mxu0 0
        %3534 = vmatpush1.bf16.msra.mxu0 0
        %3535 = vmatprep.subr.bf16.mxu0 0
        %3536 = vmatpush1.bf16.msra.mxu0 0
        %3537 = vmatprep.subr.bf16.mxu0 0
        %3538 = vmatpush1.bf16.msra.mxu0 0
        %3539 = vmatprep.subr.bf16.mxu0 0
        %3540 = vmatpush1.bf16.msra.mxu0 0
        %3541 = vmatprep.subr.bf16.mxu0 0
        %3542 = vmatpush1.bf16.msra.mxu0 0
        %3543 = vmatprep.subr.bf16.mxu0 0
        %3544 = vmatpush1.bf16.msra.mxu0 0
        %3545 = vmatprep.subr.bf16.mxu0 0
        %3546 = vmatpush1.bf16.msra.mxu0 0
        %3547 = vmatprep.mubr.bf16.mxu0 0
        %3548 = vmatmul.mubr.bf16.gmra.mrb[0].mxu0 %v3253
        %v3549 = vpop.f32.mrb[0].mxu0
        %v3550 = vadd.f32 0.0, %v3549
        %v3551 = vpop.f32.mrb[0].mxu0
        %v3552 = vadd.f32 0.0, %v3551
        %v3553 = vpop.f32.mrb[0].mxu0
        %v3554 = vadd.f32 0.0, %v3553
        %v3555 = vpop.f32.mrb[0].mxu0
        %v3556 = vadd.f32 0.0, %v3555
        %3557 = vdwg.mxu0
        %v3558 = vadd.f32 %v3272, %v3507
        %v3559 = vadd.f32 %v3273, %v3509
        %v3560 = vadd.f32 %v3274, %v3550
        %v3561 = vadd.f32 %v3275, %v3552
        %v3562 = vadd.f32 %v3276, %v3511
        %v3563 = vadd.f32 %v3277, %v3513
        %v3564 = vadd.f32 %v3278, %v3554
        %v3565 = vadd.f32 %v3279, %v3556
        %v3566 = vxor.u32 %v3558, 2147483648
        %v3567 = vxor.u32 %v3562, 2147483648
        %v3568 = vmul.f32 %v3566, 1.442695
        %v3569 = vpow.pop %v3568
        %v3570 = vmul.f32 %v3567, 1.442695
        %v3571 = vpow.pop %v3570
        %v3572 = vadd.f32 %v3569, 1.0
        %v3573 = vadd.f32 %v3571, 1.0
        %v3574 = vrcp.pop %v3572
        %v3575 = vmul.f32 1.0, %v3574
        %v3576 = vrcp.pop %v3573
        %v3577 = vmul.f32 1.0, %v3576
        %v3578 = vxor.u32 %v3559, 2147483648
        %v3579 = vxor.u32 %v3563, 2147483648
        %v3580 = vmul.f32 %v3578, 1.442695
        %v3581 = vpow.pop %v3580
        %v3582 = vmul.f32 %v3579, 1.442695
        %v3583 = vpow.pop %v3582
        %v3584 = vadd.f32 %v3581, 1.0
        %v3585 = vadd.f32 %v3583, 1.0
        %v3586 = vrcp.pop %v3584
        %v3587 = vmul.f32 1.0, %v3586
        %v3588 = vrcp.pop %v3585
        %v3589 = vmul.f32 1.0, %v3588
        %v3590 = vtanh.pop %v3560
        %v3591 = vtanh.pop %v3564
        %v3592 = vxor.u32 %v3561, 2147483648
        %v3593 = vxor.u32 %v3565, 2147483648
        %v3594 = vmul.f32 %v3592, 1.442695
        %v3595 = vpow.pop %v3594
        %v3596 = vmul.f32 %v3593, 1.442695
        %v3597 = vpow.pop %v3596
        %v3598 = vadd.f32 %v3595, 1.0
        %v3599 = vadd.f32 %v3597, 1.0
        %v3600 = vrcp.pop %v3598
        %v3601 = vmul.f32 1.0, %v3600
        %v3602 = vrcp.pop %v3599
        %v3603 = vmul.f32 1.0, %v3602
        %v3604 = vmul.f32 %v3587, %v3247
        %v3605 = vmul.f32 %v3589, %v3248
        %v3606 = vmul.f32 %v3575, %v3590
        %v3607 = vmul.f32 %v3577, %v3591
        %v3608 = vadd.f32 %v3604, %v3606
        %v3609 = vadd.f32 %v3605, %v3607
        %v3610 = vtanh.pop %v3608
        %v3611 = vtanh.pop %v3609
        %v3612 = vmul.f32 %v3601, %v3610
        %v3613 = vmul.f32 %v3603, %v3611
        %v3614 = vpack.c.bf16 %v3613, %v3612
        %v3616 = vunpack.c.l.b16 %v3614
        %v3617 = vunpack.c.h.b16 %v3614
        %v3618 = vpack.c.b16 %v3616, %v3616
        %v3619 = vpack.c.b16 %v3617, %v3617
        %s3622 = smul.addr %s3267, 4
        %s3623 = scalar_lea.vmem %s272, %s3622 [#allocation5]
        %3624 = vst [vmem:[%s3623] sm:$0xf] %v3618
        %3625 = vst [vmem:[%s3623 + $0x4] sm:$0xf] %v3619
        %3626 = vst [vmem:[#allocation3] sm:$0xff] %v3612
        %3627 = vst [vmem:[#allocation3 + $0x8] sm:$0xff] %v3613
        %3628 = vst [vmem:[#allocation4] sm:$0xff] %v3608
        %3629 = vst [vmem:[#allocation4 + $0x8] sm:$0xff] %v3609
        %s3630 = sand.u32 %s157, 1
        %s3631 = sand.u32 %s157, 1
        %s3632 = smul.addr %s3631, 64
        %s3633 = scalar_lea.vmem [#allocation5], %s3632
        // Predicated region
        $region41: #{net_forward.3} parent=35 // pred_check
          %p3634 = pneg %p167
        $region42: #{net_forward.3} parent=35 // pred_check_branch
          %3636 = sbr.rel (%p3634) target = $region44
        $region43: #{net_forward.3} parent=35 // pred_region
          %s3637 = smul.u32 %s20, 2
          %s3638 = ssub.s32 0, %s3637
          %s3639 = smul.u32 %s19, %s3638
          %s3640 = sadd.s32 %s20, %s3639
          %s3641 = smul.u32 16, %s3640
          %s3642 = smul.addr %s3641, 2
          %s3643 = sadd.s32 %s19, %s3642
          %s3644 = smul.addr %s3643, 4
          %s3645 = scalar_lea.vmem %s4, %s3644
          // Predicated region
          $region45: #{net_forward.3} parent=43 // pred_check
            _
          $region46: #{net_forward.3} parent=43 // pred_check_branch
            %3647 = sbr.rel (0) target = $region48
          $region47: #{net_forward.3} parent=43 // pred_region
            // Predicated region
            $region49: #{net_forward.3} parent=47 // pred_check
              _
            $region50: #{net_forward.3} parent=47 // pred_check_branch
              %3649 = sbr.rel target = $region52
            $region51: #{net_forward.3} parent=47 // pred_region
              // Predicated region
              $region64: #{net_forward.3} parent=51 // pred_check
                _
              $region65: #{net_forward.3} parent=51 // pred_check_branch
                %3694 = sbr.rel (0) target = $region67
              $region66: #{net_forward.3} parent=51 // pred_region
                loop: start=0, step=1, limit=1
                $region68: #{net_forward.3} parent=66 // loop_pre_header
                  _
                $region69: #{net_forward.3} parent=66 // loop_header
                  %s3696 = sphi 0, %s3700
                  %p3697 = scmp.ge.s32.totalorder %s3696, 1
                  %s3701 = sphi %s3633, %s3633
                  %s3702 = sphi %s3645, %s3645
                $region70: #{net_forward.3} parent=66 // loop_header_branch
                  %3699 = sbr.rel (%p3697) target = $region74
                $region71: #{net_forward.3} parent=66 // loop_body
                  _
                $region72: #{net_forward.3} parent=66 // loop_footer
                  %s3700 = sadd.s32 1, %s3696
                $region73: #{net_forward.3} parent=66 // loop_footer_branch
                  %3695 = sbr.rel target = $region69
                $region74: #{net_forward.3} parent=66 // loop_exit
                  _
                loop: start=0, step=1, limit=1
                $region75: #{net_forward.3} parent=66 // loop_pre_header
                  _
                $region76: #{net_forward.3} parent=66 // loop_header
                  %s3705 = sphi 0, %s3709
                  %p3706 = scmp.ge.s32.totalorder %s3705, 1
                  %s3710 = sphi %s3633, %s3633
                  %s3711 = sphi %s3645, %s3645
                $region77: #{net_forward.3} parent=66 // loop_header_branch
                  %3708 = sbr.rel (%p3706) target = $region81
                $region78: #{net_forward.3} parent=66 // loop_body
                  %v3712 = vld [vmem:[%s3710] sm:$0xf]
                  %3713 = vst [vmem:[%s3711] sm:$0xf] %v3712
                  %v3714 = vld [vmem:[%s3710 + $0x4] sm:$0xf]
                  %3715 = vst [vmem:[%s3711 + $0x8] sm:$0xf] %v3714
                  %v3716 = vld [vmem:[%s3710 + $0x8] sm:$0xf]
                  %3717 = vst [vmem:[%s3711 + $0x10] sm:$0xf] %v3716
                  %v3718 = vld [vmem:[%s3710 + $0xc] sm:$0xf]
                  %3719 = vst [vmem:[%s3711 + $0x18] sm:$0xf] %v3718
                  %v3720 = vld [vmem:[%s3710 + $0x10] sm:$0xf]
                  %3721 = vst [vmem:[%s3711 + $0x20] sm:$0xf] %v3720
                  %v3722 = vld [vmem:[%s3710 + $0x14] sm:$0xf]
                  %3723 = vst [vmem:[%s3711 + $0x28] sm:$0xf] %v3722
                  %v3724 = vld [vmem:[%s3710 + $0x18] sm:$0xf]
                  %3725 = vst [vmem:[%s3711 + $0x30] sm:$0xf] %v3724
                  %v3726 = vld [vmem:[%s3710 + $0x1c] sm:$0xf]
                  %3727 = vst [vmem:[%s3711 + $0x38] sm:$0xf] %v3726
                  %v3728 = vld [vmem:[%s3710 + $0x20] sm:$0xf]
                  %3729 = vst [vmem:[%s3711 + $0x40] sm:$0xf] %v3728
                  %v3730 = vld [vmem:[%s3710 + $0x24] sm:$0xf]
                  %3731 = vst [vmem:[%s3711 + $0x48] sm:$0xf] %v3730
                  %v3732 = vld [vmem:[%s3710 + $0x28] sm:$0xf]
                  %3733 = vst [vmem:[%s3711 + $0x50] sm:$0xf] %v3732
                  %v3734 = vld [vmem:[%s3710 + $0x2c] sm:$0xf]
                  %3735 = vst [vmem:[%s3711 + $0x58] sm:$0xf] %v3734
                  %v3736 = vld [vmem:[%s3710 + $0x30] sm:$0xf]
                  %3737 = vst [vmem:[%s3711 + $0x60] sm:$0xf] %v3736
                  %v3738 = vld [vmem:[%s3710 + $0x34] sm:$0xf]
                  %3739 = vst [vmem:[%s3711 + $0x68] sm:$0xf] %v3738
                  %v3740 = vld [vmem:[%s3710 + $0x38] sm:$0xf]
                  %3741 = vst [vmem:[%s3711 + $0x70] sm:$0xf] %v3740
                  %v3742 = vld [vmem:[%s3710 + $0x3c] sm:$0xf]
                  %3743 = vst [vmem:[%s3711 + $0x78] sm:$0xf] %v3742
                $region79: #{net_forward.3} parent=66 // loop_footer
                  %s3709 = sadd.s32 1, %s3705
                $region80: #{net_forward.3} parent=66 // loop_footer_branch
                  %3704 = sbr.rel target = $region76
                $region81: #{net_forward.3} parent=66 // loop_exit
                  _
              $region67: #{net_forward.3} parent=51 // pred_fallthru
                _
            $region52: #{net_forward.3} parent=47 // pred_fallthru
              _
            // Predicated region
            $region53: #{net_forward.3} parent=47 // pred_check
              _
            $region54: #{net_forward.3} parent=47 // pred_check_branch
              %3651 = sbr.rel (0) target = $region56
            $region55: #{net_forward.3} parent=47 // pred_region
              loop: start=0, step=1, limit=1
              $region57: #{net_forward.3} parent=55 // loop_pre_header
                _
              $region58: #{net_forward.3} parent=55 // loop_header
                %s3654 = sphi 0, %s3658
                %p3655 = scmp.ge.s32.totalorder %s3654, 1
                %s3659 = sphi %s3633, %s3633
                %s3660 = sphi %s3645, %s3645
              $region59: #{net_forward.3} parent=55 // loop_header_branch
                %3657 = sbr.rel (%p3655) target = $region63
              $region60: #{net_forward.3} parent=55 // loop_body
                %v3661 = vld [vmem:[%s3659] sm:$0xf]
                %3662 = vst [vmem:[%s3660] sm:$0xf] %v3661
                %v3663 = vld [vmem:[%s3659 + $0x4] sm:$0xf]
                %3664 = vst [vmem:[%s3660 + $0x8] sm:$0xf] %v3663
                %v3665 = vld [vmem:[%s3659 + $0x8] sm:$0xf]
                %3666 = vst [vmem:[%s3660 + $0x10] sm:$0xf] %v3665
                %v3667 = vld [vmem:[%s3659 + $0xc] sm:$0xf]
                %3668 = vst [vmem:[%s3660 + $0x18] sm:$0xf] %v3667
                %v3669 = vld [vmem:[%s3659 + $0x10] sm:$0xf]
                %3670 = vst [vmem:[%s3660 + $0x20] sm:$0xf] %v3669
                %v3671 = vld [vmem:[%s3659 + $0x14] sm:$0xf]
                %3672 = vst [vmem:[%s3660 + $0x28] sm:$0xf] %v3671
                %v3673 = vld [vmem:[%s3659 + $0x18] sm:$0xf]
                %3674 = vst [vmem:[%s3660 + $0x30] sm:$0xf] %v3673
                %v3675 = vld [vmem:[%s3659 + $0x1c] sm:$0xf]
                %3676 = vst [vmem:[%s3660 + $0x38] sm:$0xf] %v3675
                %v3677 = vld [vmem:[%s3659 + $0x20] sm:$0xf]
                %3678 = vst [vmem:[%s3660 + $0x40] sm:$0xf] %v3677
                %v3679 = vld [vmem:[%s3659 + $0x24] sm:$0xf]
                %3680 = vst [vmem:[%s3660 + $0x48] sm:$0xf] %v3679
                %v3681 = vld [vmem:[%s3659 + $0x28] sm:$0xf]
                %3682 = vst [vmem:[%s3660 + $0x50] sm:$0xf] %v3681
                %v3683 = vld [vmem:[%s3659 + $0x2c] sm:$0xf]
                %3684 = vst [vmem:[%s3660 + $0x58] sm:$0xf] %v3683
                %v3685 = vld [vmem:[%s3659 + $0x30] sm:$0xf]
                %3686 = vst [vmem:[%s3660 + $0x60] sm:$0xf] %v3685
                %v3687 = vld [vmem:[%s3659 + $0x34] sm:$0xf]
                %3688 = vst [vmem:[%s3660 + $0x68] sm:$0xf] %v3687
                %v3689 = vld [vmem:[%s3659 + $0x38] sm:$0xf]
                %3690 = vst [vmem:[%s3660 + $0x70] sm:$0xf] %v3689
                %v3691 = vld [vmem:[%s3659 + $0x3c] sm:$0xf]
                %3692 = vst [vmem:[%s3660 + $0x78] sm:$0xf] %v3691
              $region61: #{net_forward.3} parent=55 // loop_footer
                %s3658 = sadd.s32 1, %s3654
              $region62: #{net_forward.3} parent=55 // loop_footer_branch
                %3653 = sbr.rel target = $region58
              $region63: #{net_forward.3} parent=55 // loop_exit
                _
            $region56: #{net_forward.3} parent=47 // pred_fallthru
              _
          $region48: #{net_forward.3} parent=43 // pred_fallthru
            _
          %3744 = vnop
        $region44: #{net_forward.3} parent=35 // pred_fallthru
          _
      $region36: #{net_forward.3} parent=5 // pred_fallthru
        _
      %p3745 = scmp.le.s32.totalorder 2, %s10
      // Predicated region
      $region82: #{net_forward.3} parent=5 // pred_check
        %p3746 = pneg %p3745
      $region83: #{net_forward.3} parent=5 // pred_check_branch
        %3748 = sbr.rel (%p3746) target = $region85
      $region84: #{net_forward.3} parent=5 // pred_region
        %s3749 = ssub.s32 %s10, 2
        // Predicated region
        $region86: #{net_forward.3} parent=84 // pred_check
          %p3750 = pneg %p173
        $region87: #{net_forward.3} parent=84 // pred_check_branch
          %3752 = sbr.rel (%p3750) target = $region89
        $region88: #{net_forward.3} parent=84 // pred_region
          %s3753 = sand.u32 %s158, 1
          %s3754 = sand.u32 %s158, 1
          %s3755 = smul.addr %s3754, 64
          %s3756 = scalar_lea.vmem [#allocation5], %s3755
        $region89: #{net_forward.3} parent=84 // pred_fallthru
          _
      $region85: #{net_forward.3} parent=5 // pred_fallthru
        _
    $region6: #{net_forward.3} parent=1 // loop_footer
      %s14 = sadd.s32 1, %s10
    $region7: #{net_forward.3} parent=1 // loop_footer_branch
      %9 = sbr.rel target = $region3
    $region8: #{net_forward.3} parent=1 // loop_exit
      _

// kernel: net_forward.4
$region0: #{net_forward.4}
  #allocation0 [shape = 'u32[]', space=smem, size = 0x4, offset = 0x4, fixed_abs, tag = 'smem constant byte address 0x4 - core index']
  #allocation1 [shape = 'u32[144,128]{1,0:T(1,128)}', space=vmem, size = 0x12000, scoped, tag = 'internal scratch']
  #allocation2 [shape = 'f32[128,512]{1,0:T(8,128)}', space=vmem, size = 0x40000, scoped, tag = 'scratch operand']
  #allocation3 [shape = 'f32[16,128]{1,0:T(8,128)}', space=vmem, size = 0x2000, scoped, tag = 'scratch operand']
  #allocation4 [shape = 'f32[16,128]{1,0:T(8,128)}', space=vmem, size = 0x2000, scoped, tag = 'scratch operand']
  %s0 = inlined_call_operand.vmem [shape: bf16[128,256], index: 0, kind: input, shape index: {}]
  %s1 = inlined_call_operand.vmem [shape: bf16[2,256,512], index: 1, kind: input, shape index: {}]
  %s2 = inlined_call_operand.vmem [shape: bf16[2,128,512], index: 2, kind: input, shape index: {}]
  %s3 = inlined_call_operand.vmem [shape: f32[2,1,512], index: 3, kind: input, shape index: {}]
  %s4 = inlined_call_operand.vmem [shape: bf16[128,256], index: 4, kind: output, shape index: {}]
  %s5 = sld [smem:[#allocation0]]
  $region90: #{net_forward.4} parent=0
    _
  %s7 = ssub.s32 1, %s5
  %s8 = scalar_select 0, %s7, %s5
  $region1: #{net_forward.4} parent=0
    #allocation5 [shape = 'u8[65536]{0}', space=vmem, size = 0x10000, scoped, tag = 'output window, operand 0']
    loop: start=0, step=1, limit=4
    $region2: #{net_forward.4} parent=1 // loop_pre_header
      _
    $region3: #{net_forward.4} parent=1 // loop_header
      %s10 = sphi 0, %s14
      %p11 = scmp.ge.s32.totalorder %s10, 4
      %s17 = sphi 0, %s29
      %s18 = sphi 0, %s25
      %s19 = sphi 0, %s17
      %s20 = sphi 0, %s18
      %s21 = sphi 0, %s19
      %s22 = sphi 0, %s20
      %s40 = sphi 0, %s42
      %s43 = sphi 0, %s40
      %s44 = sphi 0, %s43
      %s60 = sphi 0, %s44
      %s66 = sphi 0, %s68
      %s69 = sphi 0, %s66
      %s70 = sphi 0, %s69
      %s86 = sphi 0, %s70
      %s92 = sphi 0, %s94
      %s95 = sphi 0, %s92
      %s96 = sphi 0, %s95
      %s112 = sphi 0, %s96
      %s118 = sphi 0, %s120
      %s121 = sphi 0, %s118
      %s122 = sphi 0, %s121
      %s138 = sphi 0, %s122
      %s154 = sphi 0, %s156
      %s157 = sphi 0, %s154
      %s158 = sphi 0, %s157
      %s174 = sphi 0, %s158
    $region4: #{net_forward.4} parent=1 // loop_header_branch
      %13 = sbr.rel (%p11) target = $region8
    $region5: #{net_forward.4} parent=1 // loop_body
      %s15 = ssub.s32 %s10, 1
      %s16 = ssub.s32 %s10, 2
      %s23 = sadd.s32 1, %s18
      %p24 = scmp.ge.s32.totalorder %s23, 1
      %s25 = scalar_select %p24, 0, %s23
      %s26 = sadd.s32 1, %s17
      %s27 = scalar_select %p24, %s26, %s17
      %p28 = scmp.ge.s32.totalorder %s27, 2
      %s29 = scalar_select %p28, 0, %s27
      %s30 = smul.u32 %s18, 2
      %s31 = ssub.s32 0, %s30
      %s32 = smul.u32 %s17, %s31
      %s33 = sadd.s32 %s18, %s32
      %s34 = smul.u32 %s25, 2
      %s35 = ssub.s32 0, %s34
      %s36 = smul.u32 %s29, %s35
      %s37 = sadd.s32 %s25, %s36
      %s38 = ssub.s32 %s33, %s37
      %p39 = scmp.eq.s32.totalorder %s38, 0
      %s41 = sadd.s32 %s40, 1
      %s42 = scalar_select %p39, %s40, %s41
      %p45 = pneg %p39
      %p46 = scmp.eq.s32.totalorder %s10, 1
      %p47 = por %p45, %p46
      %p48 = scmp.ne.s32.totalorder %s40, %s43
      %p49 = scmp.eq.s32.totalorder %s10, 0
      %p50 = por %p48, %p49
      %p51 = scmp.ne.s32.totalorder %s40, %s43
      %p52 = scmp.eq.s32.totalorder %s15, 1
      %p53 = por %p51, %p52
      %p54 = scmp.ne.s32.totalorder %s43, %s44
      %p55 = scmp.eq.s32.totalorder %s15, 0
      %p56 = por %p54, %p55
      %p57 = scmp.ne.s32.totalorder %s43, %s44
      %p58 = scmp.eq.s32.totalorder %s16, 1
      %p59 = por %p57, %p58
      %p61 = scmp.ne.s32.totalorder %s44, %s60
      %p62 = scmp.eq.s32.totalorder %s16, 0
      %p63 = por %p61, %p62
      %s64 = ssub.s32 %s17, %s29
      %p65 = scmp.eq.s32.totalorder %s64, 0
      %s67 = sadd.s32 %s66, 1
      %s68 = scalar_select %p65, %s66, %s67
      %p71 = pneg %p65
      %p72 = scmp.eq.s32.totalorder %s10, 1
      %p73 = por %p71, %p72
      %p74 = scmp.ne.s32.totalorder %s66, %s69
      %p75 = scmp.eq.s32.totalorder %s10, 0
      %p76 = por %p74, %p75
      %p77 = scmp.ne.s32.totalorder %s66, %s69
      %p78 = scmp.eq.s32.totalorder %s15, 1
      %p79 = por %p77, %p78
      %p80 = scmp.ne.s32.totalorder %s69, %s70
      %p81 = scmp.eq.s32.totalorder %s15, 0
      %p82 = por %p80, %p81
      %p83 = scmp.ne.s32.totalorder %s69, %s70
      %p84 = scmp.eq.s32.totalorder %s16, 1
      %p85 = por %p83, %p84
      %p87 = scmp.ne.s32.totalorder %s70, %s86
      %p88 = scmp.eq.s32.totalorder %s16, 0
      %p89 = por %p87, %p88
      %s90 = ssub.s32 %s17, %s29
      %p91 = scmp.eq.s32.totalorder %s90, 0
      %s93 = sadd.s32 %s92, 1
      %s94 = scalar_select %p91, %s92, %s93
      %p97 = pneg %p91
      %p98 = scmp.eq.s32.totalorder %s10, 1
      %p99 = por %p97, %p98
      %p100 = scmp.ne.s32.totalorder %s92, %s95
      %p101 = scmp.eq.s32.totalorder %s10, 0
      %p102 = por %p100, %p101
      %p103 = scmp.ne.s32.totalorder %s92, %s95
      %p104 = scmp.eq.s32.totalorder %s15, 1
      %p105 = por %p103, %p104
      %p106 = scmp.ne.s32.totalorder %s95, %s96
      %p107 = scmp.eq.s32.totalorder %s15, 0
      %p108 = por %p106, %p107
      %p109 = scmp.ne.s32.totalorder %s95, %s96
      %p110 = scmp.eq.s32.totalorder %s16, 1
      %p111 = por %p109, %p110
      %p113 = scmp.ne.s32.totalorder %s96, %s112
      %p114 = scmp.eq.s32.totalorder %s16, 0
      %p115 = por %p113, %p114
      %s116 = ssub.s32 %s17, %s29
      %p117 = scmp.eq.s32.totalorder %s116, 0
      %s119 = sadd.s32 %s118, 1
      %s120 = scalar_select %p117, %s118, %s119
      %p123 = pneg %p117
      %p124 = scmp.eq.s32.totalorder %s10, 1
      %p125 = por %p123, %p124
      %p126 = scmp.ne.s32.totalorder %s118, %s121
      %p127 = scmp.eq.s32.totalorder %s10, 0
      %p128 = por %p126, %p127
      %p129 = scmp.ne.s32.totalorder %s118, %s121
      %p130 = scmp.eq.s32.totalorder %s15, 1
      %p131 = por %p129, %p130
      %p132 = scmp.ne.s32.totalorder %s121, %s122
      %p133 = scmp.eq.s32.totalorder %s15, 0
      %p134 = por %p132, %p133
      %p135 = scmp.ne.s32.totalorder %s121, %s122
      %p136 = scmp.eq.s32.totalorder %s16, 1
      %p137 = por %p135, %p136
      %p139 = scmp.ne.s32.totalorder %s122, %s138
      %p140 = scmp.eq.s32.totalorder %s16, 0
      %p141 = por %p139, %p140
      %s142 = smul.u32 %s18, 2
      %s143 = ssub.s32 0, %s142
      %s144 = smul.u32 %s17, %s143
      %s145 = sadd.s32 %s18, %s144
      %s146 = smul.u32 %s25, 2
      %s147 = ssub.s32 0, %s146
      %s148 = smul.u32 %s29, %s147
      %s149 = sadd.s32 %s25, %s148
      %s150 = ssub.s32 %s145, %s149
      %s151 = ssub.s32 %s17, %s29
      %s152 = sor.u32 %s150, %s151
      %p153 = scmp.eq.s32.totalorder %s152, 0
      %s155 = sadd.s32 %s154, 1
      %s156 = scalar_select %p153, %s154, %s155
      %p159 = pneg %p153
      %p160 = scmp.eq.s32.totalorder %s10, 1
      %p161 = por %p159, %p160
      %p162 = scmp.ne.s32.totalorder %s154, %s157
      %p163 = scmp.eq.s32.totalorder %s10, 0
      %p164 = por %p162, %p163
      %p165 = scmp.ne.s32.totalorder %s154, %s157
      %p166 = scmp.eq.s32.totalorder %s15, 1
      %p167 = por %p165, %p166
      %p168 = scmp.ne.s32.totalorder %s157, %s158
      %p169 = scmp.eq.s32.totalorder %s15, 0
      %p170 = por %p168, %p169
      %p171 = scmp.ne.s32.totalorder %s157, %s158
      %p172 = scmp.eq.s32.totalorder %s16, 1
      %p173 = por %p171, %p172
      %p175 = scmp.ne.s32.totalorder %s158, %s174
      %p176 = scmp.eq.s32.totalorder %s16, 0
      %p177 = por %p175, %p176
      %p178 = scmp.le.s32.totalorder 1, %s10
      %p179 = scmp.lt.s32.totalorder %s10, 3
      %p180 = pnand %p178, %p179
      %p181 = pneg %p180
      // Predicated region
      $region9: #{net_forward.4} parent=5 // pred_check
        _
      $region10: #{net_forward.4} parent=5 // pred_check_branch
        %183 = sbr.rel (%p180) target = $region12
      $region11: #{net_forward.4} parent=5 // pred_region
        %s184 = ssub.s32 %s10, 1
      $region12: #{net_forward.4} parent=5 // pred_fallthru
        _
      %p185 = scmp.lt.s32.totalorder %s10, 2
      // Predicated region
      $region13: #{net_forward.4} parent=5 // pred_check
        %p186 = pneg %p185
      $region14: #{net_forward.4} parent=5 // pred_check_branch
        %188 = sbr.rel (%p186) target = $region16
      $region15: #{net_forward.4} parent=5 // pred_region
        // Predicated region
        $region17: #{net_forward.4} parent=15 // pred_check
          %p189 = pneg %p50
        $region18: #{net_forward.4} parent=15 // pred_check_branch
          %191 = sbr.rel (%p189) target = $region20
        $region19: #{net_forward.4} parent=15 // pred_region
          %s192 = smul.u32 %s18, 2
          %s193 = ssub.s32 0, %s192
          %s194 = smul.u32 %s17, %s193
          %s195 = sadd.s32 %s18, %s194
          %s196 = smul.u32 16, %s195
          %p197 = scmp.lt.s32.totalorder %s196, 15
          %s198 = scalar_select %p197, %s196, 15
          %s199 = smul.addr %s198, 2
          %s200 = smul.addr %s199, 4
          %s201 = scalar_lea.vmem %s0, %s200
          %s202 = smul.u32 %s18, 2
          %s203 = ssub.s32 0, %s202
          %s204 = smul.u32 %s17, %s203
          %s205 = sadd.s32 %s18, %s204
          %s206 = smul.u32 16, %s205
        $region20: #{net_forward.4} parent=15 // pred_fallthru
          _
        // Predicated region
        $region21: #{net_forward.4} parent=15 // pred_check
          %p207 = pneg %p76
        $region22: #{net_forward.4} parent=15 // pred_check_branch
          %209 = sbr.rel (%p207) target = $region24
        $region23: #{net_forward.4} parent=15 // pred_region
          %p210 = scmp.lt.s32.totalorder %s17, 1
          %s211 = scalar_select %p210, %s17, 1
          %s212 = smul.addr %s211, 128
          %s213 = smul.addr %s212, 4
          %s214 = scalar_lea.vmem %s1, %s213
        $region24: #{net_forward.4} parent=15 // pred_fallthru
          _
        // Predicated region
        $region25: #{net_forward.4} parent=15 // pred_check
          %p215 = pneg %p102
        $region26: #{net_forward.4} parent=15 // pred_check_branch
          %217 = sbr.rel (%p215) target = $region28
        $region27: #{net_forward.4} parent=15 // pred_region
          %p218 = scmp.lt.s32.totalorder %s17, 1
          %s219 = scalar_select %p218, %s17, 1
          %s220 = smul.addr %s219, 64
          %s221 = smul.addr %s220, 4
          %s222 = scalar_lea.vmem %s2, %s221
        $region28: #{net_forward.4} parent=15 // pred_fallthru
          _
        // Predicated region
        $region29: #{net_forward.4} parent=15 // pred_check
          %p223 = pneg %p128
        $region30: #{net_forward.4} parent=15 // pred_check_branch
          %225 = sbr.rel (%p223) target = $region32
        $region31: #{net_forward.4} parent=15 // pred_region
          %p226 = scmp.lt.s32.totalorder %s17, 1
          %s227 = scalar_select %p226, %s17, 1
          %s228 = smul.addr %s227, 4
          %s229 = scalar_lea.vmem %s3, %s228
        $region32: #{net_forward.4} parent=15 // pred_fallthru
          _
      $region16: #{net_forward.4} parent=5 // pred_fallthru
        _
      %p230 = scmp.le.s32.totalorder 1, %s10
      %p231 = scmp.lt.s32.totalorder %s10, 3
      %p232 = pnand %p230, %p231
      %p233 = pneg %p232
      // Predicated region
      $region33: #{net_forward.4} parent=5 // pred_check
        _
      $region34: #{net_forward.4} parent=5 // pred_check_branch
        %235 = sbr.rel (%p232) target = $region36
      $region35: #{net_forward.4} parent=5 // pred_region
        %s236 = ssub.s32 %s10, 1
        %s237 = smul.u32 %s20, 2
        %s238 = ssub.s32 0, %s237
        %s239 = smul.u32 %s19, %s238
        %s240 = sadd.s32 %s20, %s239
        %s241 = smul.u32 16, %s240
        %p242 = scmp.lt.s32.totalorder %s241, 15
        %s243 = scalar_select %p242, %s241, 15
        %s244 = smul.addr %s243, 2
        %s245 = smul.addr %s244, 4
        %s246 = scalar_lea.vmem %s0, %s245
        %p247 = pneg %p56
        %p248 = pneg %p53
        %p249 = scmp.lt.s32.totalorder %s19, 1
        %s250 = scalar_select %p249, %s19, 1
        %s251 = smul.addr %s250, 128
        %s252 = smul.addr %s251, 4
        %s253 = scalar_lea.vmem %s1, %s252
        %p254 = pneg %p82
        %p255 = pneg %p79
        %p256 = scmp.lt.s32.totalorder %s19, 1
        %s257 = scalar_select %p256, %s19, 1
        %s258 = smul.addr %s257, 64
        %s259 = smul.addr %s258, 4
        %s260 = scalar_lea.vmem %s2, %s259
        %p261 = pneg %p108
        %p262 = pneg %p105
        %p263 = scmp.lt.s32.totalorder %s19, 1
        %s264 = scalar_select %p263, %s19, 1
        %s265 = smul.addr %s264, 4
        %s266 = scalar_lea.vmem %s3, %s265
        %p267 = pneg %p134
        %p268 = pneg %p131
        %p269 = pneg %p170
        %p270 = pneg %p167
        %s271 = sand.u32 %s157, 1
        %s272 = sand.u32 %s157, 1
        %s273 = smul.addr %s272, 64
        %s274 = scalar_lea.vmem [#allocation5], %s273
        %s275 = smul.u32 %s20, 2
        %s276 = ssub.s32 0, %s275
        %s277 = smul.u32 %s19, %s276
        %s278 = sadd.s32 %s20, %s277
        %s279 = smul.u32 16, %s278
        %p280 = scmp.lt.s32.totalorder %s279, 15
        %s281 = scalar_select %p280, %s279, 15
        %s282 = smul.addr %s281, 2
        %s283 = smul.addr %s282, 4
        %s284 = scalar_lea.vmem %s0, %s283
        %s285 = smul.u32 %s20, 2
        %s286 = ssub.s32 0, %s285
        %s287 = smul.u32 %s19, %s286
        %s288 = sadd.s32 %s20, %s287
        %s289 = smul.u32 16, %s288
        %p290 = scmp.lt.s32.totalorder %s19, 1
        %s291 = scalar_select %p290, %s19, 1
        %s292 = smul.addr %s291, 128
        %s293 = smul.addr %s292, 4
        %s294 = scalar_lea.vmem %s1, %s293
        %p295 = scmp.lt.s32.totalorder %s19, 1
        %s296 = scalar_select %p295, %s19, 1
        %s297 = smul.addr %s296, 64
        %s298 = smul.addr %s297, 4
        %s299 = scalar_lea.vmem %s2, %s298
        %p300 = scmp.lt.s32.totalorder %s19, 1
        %s301 = scalar_select %p300, %s19, 1
        %s302 = smul.addr %s301, 4
        %s303 = scalar_lea.vmem %s3, %s302
        %s304 = smul.u32 %s20, 2
        %s305 = ssub.s32 0, %s304
        %s306 = smul.u32 %s19, %s305
        %s307 = sadd.s32 %s20, %s306
        %s308 = smul.u32 16, %s307
        %p310 = scmp.eq.s32.totalorder %s20, 0
        // Predicated region
        $region37: #{net_forward.4} parent=35 // pred_check
          %p311 = pneg %p310
        $region38: #{net_forward.4} parent=35 // pred_check_branch
          %313 = sbr.rel (%p311) target = $region40
        $region39: #{net_forward.4} parent=35 // pred_region
          %314 = vst [vmem:[#allocation3] sm:$0xff] 0.0
          %315 = vst [vmem:[#allocation3 + $0x8] sm:$0xff] 0.0
          %316 = vst [vmem:[#allocation4] sm:$0xff] 0.0
          %317 = vst [vmem:[#allocation4 + $0x8] sm:$0xff] 0.0
        $region40: #{net_forward.4} parent=35 // pred_fallthru
          _
        %v318 = vld [vmem:[%s284] sm:$0xff]
        %v319 = vld [vmem:[%s284 + $0x8] sm:$0xff]
        %v320 = vld [vmem:[%s284 + $0x10] sm:$0xff]
        %v321 = vld [vmem:[%s284 + $0x18] sm:$0xff]
        %v322 = vld [vmem:[%s284 + $0x20] sm:$0xff]
        %v323 = vld [vmem:[%s284 + $0x28] sm:$0xff]
        %v324 = vld [vmem:[%s284 + $0x30] sm:$0xff]
        %v325 = vld [vmem:[%s284 + $0x38] sm:$0xff]
        %v326 = vld [vmem:[%s284 + $0x40] sm:$0xff]
        %v327 = vld [vmem:[%s284 + $0x48] sm:$0xff]
        %v328 = vld [vmem:[%s284 + $0x50] sm:$0xff]
        %v329 = vld [vmem:[%s284 + $0x58] sm:$0xff]
        %v330 = vld [vmem:[%s284 + $0x60] sm:$0xff]
        %v331 = vld [vmem:[%s284 + $0x68] sm:$0xff]
        %v332 = vld [vmem:[%s284 + $0x70] sm:$0xff]
        %v333 = vld [vmem:[%s284 + $0x78] sm:$0xff]
        %v334 = vld [vmem:[%s294] sm:$0xff]
        %v335 = vld [vmem:[%s294 + $0x8] sm:$0xff]
        %v336 = vld [vmem:[%s294 + $0x10] sm:$0xff]
        %v337 = vld [vmem:[%s294 + $0x18] sm:$0xff]
        %v338 = vld [vmem:[%s294 + $0x20] sm:$0xff]
        %v339 = vld [vmem:[%s294 + $0x28] sm:$0xff]
        %v340 = vld [vmem:[%s294 + $0x30] sm:$0xff]
        %v341 = vld [vmem:[%s294 + $0x38] sm:$0xff]
        %v342 = vld [vmem:[%s294 + $0x40] sm:$0xff]
        %v343 = vld [vmem:[%s294 + $0x48] sm:$0xff]
        %v344 = vld [vmem:[%s294 + $0x50] sm:$0xff]
        %v345 = vld [vmem:[%s294 + $0x58] sm:$0xff]
        %v346 = vld [vmem:[%s294 + $0x60] sm:$0xff]
        %v347 = vld [vmem:[%s294 + $0x68] sm:$0xff]
        %v348 = vld [vmem:[%s294 + $0x70] sm:$0xff]
        %v349 = vld [vmem:[%s294 + $0x78] sm:$0xff]
        %v350 = vld [vmem:[%s294 + $0x80] sm:$0xff]
        %v351 = vld [vmem:[%s294 + $0x88] sm:$0xff]
        %v352 = vld [vmem:[%s294 + $0x90] sm:$0xff]
        %v353 = vld [vmem:[%s294 + $0x98] sm:$0xff]
        %v354 = vld [vmem:[%s294 + $0xa0] sm:$0xff]
        %v355 = vld [vmem:[%s294 + $0xa8] sm:$0xff]
        %v356 = vld [vmem:[%s294 + $0xb0] sm:$0xff]
        %v357 = vld [vmem:[%s294 + $0xb8] sm:$0xff]
        %v358 = vld [vmem:[%s294 + $0xc0] sm:$0xff]
        %v359 = vld [vmem:[%s294 + $0xc8] sm:$0xff]
        %v360 = vld [vmem:[%s294 + $0xd0] sm:$0xff]
        %v361 = vld [vmem:[%s294 + $0xd8] sm:$0xff]
        %v362 = vld [vmem:[%s294 + $0xe0] sm:$0xff]
        %v363 = vld [vmem:[%s294 + $0xe8] sm:$0xff]
        %v364 = vld [vmem:[%s294 + $0xf0] sm:$0xff]
        %v365 = vld [vmem:[%s294 + $0xf8] sm:$0xff]
        %v366 = vld [vmem:[%s294 + $0x100] sm:$0xff]
        %v367 = vld [vmem:[%s294 + $0x108] sm:$0xff]
        %v368 = vld [vmem:[%s294 + $0x110] sm:$0xff]
        %v369 = vld [vmem:[%s294 + $0x118] sm:$0xff]
        %v370 = vld [vmem:[%s294 + $0x120] sm:$0xff]
        %v371 = vld [vmem:[%s294 + $0x128] sm:$0xff]
        %v372 = vld [vmem:[%s294 + $0x130] sm:$0xff]
        %v373 = vld [vmem:[%s294 + $0x138] sm:$0xff]
        %v374 = vld [vmem:[%s294 + $0x140] sm:$0xff]
        %v375 = vld [vmem:[%s294 + $0x148] sm:$0xff]
        %v376 = vld [vmem:[%s294 + $0x150] sm:$0xff]
        %v377 = vld [vmem:[%s294 + $0x158] sm:$0xff]
        %v378 = vld [vmem:[%s294 + $0x160] sm:$0xff]
        %v379 = vld [vmem:[%s294 + $0x168] sm:$0xff]
        %v380 = vld [vmem:[%s294 + $0x170] sm:$0xff]
        %v381 = vld [vmem:[%s294 + $0x178] sm:$0xff]
        %v382 = vld [vmem:[%s294 + $0x180] sm:$0xff]
        %v383 = vld [vmem:[%s294 + $0x188] sm:$0xff]
        %v384 = vld [vmem:[%s294 + $0x190] sm:$0xff]
        %v385 = vld [vmem:[%s294 + $0x198] sm:$0xff]
        %v386 = vld [vmem:[%s294 + $0x1a0] sm:$0xff]
        %v387 = vld [vmem:[%s294 + $0x1a8] sm:$0xff]
        %v388 = vld [vmem:[%s294 + $0x1b0] sm:$0xff]
        %v389 = vld [vmem:[%s294 + $0x1b8] sm:$0xff]
        %v390 = vld [vmem:[%s294 + $0x1c0] sm:$0xff]
        %v391 = vld [vmem:[%s294 + $0x1c8] sm:$0xff]
        %v392 = vld [vmem:[%s294 + $0x1d0] sm:$0xff]
        %v393 = vld [vmem:[%s294 + $0x1d8] sm:$0xff]
        %v394 = vld [vmem:[%s294 + $0x1e0] sm:$0xff]
        %v395 = vld [vmem:[%s294 + $0x1e8] sm:$0xff]
        %v396 = vld [vmem:[%s294 + $0x1f0] sm:$0xff]
        %v397 = vld [vmem:[%s294 + $0x1f8] sm:$0xff]
        %v398 = vld [vmem:[%s303] sm:$0xf]
        %v400 = vlaneseq
        %v401 = vshrl.u32 %v400, 7
        %v402 = vsub.s32 0, %v401
        %v403 = vrot.slane %v398, %v402
        %v404 = vlaneseq
        %v405 = vshrl.u32 %v404, 7
        %v406 = vsub.s32 1, %v405
        %v407 = vrot.slane %v398, %v406
        %v408 = vlaneseq
        %v409 = vshrl.u32 %v408, 7
        %v410 = vsub.s32 2, %v409
        %v411 = vrot.slane %v398, %v410
        %v412 = vlaneseq
        %v413 = vshrl.u32 %v412, 7
        %v414 = vsub.s32 3, %v413
        %v415 = vrot.slane %v398, %v414
        %v436 = vunpack.c.l.b16 %v318
        %v437 = vunpack.c.h.b16 %v318
        %v438 = vunpack.c.l.b16 %v319
        %v439 = vunpack.c.h.b16 %v319
        %v440 = vunpack.c.l.b16 %v320
        %v441 = vunpack.c.h.b16 %v320
        %v442 = vunpack.c.l.b16 %v321
        %v443 = vunpack.c.h.b16 %v321
        %v444 = vunpack.c.l.b16 %v322
        %v445 = vunpack.c.h.b16 %v322
        %v446 = vunpack.c.l.b16 %v323
        %v447 = vunpack.c.h.b16 %v323
        %v448 = vunpack.c.l.b16 %v324
        %v449 = vunpack.c.h.b16 %v324
        %v450 = vunpack.c.l.b16 %v325
        %v451 = vunpack.c.h.b16 %v325
        %v452 = vunpack.c.l.b16 %v326
        %v453 = vunpack.c.h.b16 %v326
        %v454 = vunpack.c.l.b16 %v327
        %v455 = vunpack.c.h.b16 %v327
        %v456 = vunpack.c.l.b16 %v328
        %v457 = vunpack.c.h.b16 %v328
        %v458 = vunpack.c.l.b16 %v329
        %v459 = vunpack.c.h.b16 %v329
        %v460 = vunpack.c.l.b16 %v330
        %v461 = vunpack.c.h.b16 %v330
        %v462 = vunpack.c.l.b16 %v331
        %v463 = vunpack.c.h.b16 %v331
        %v464 = vunpack.c.l.b16 %v332
        %v465 = vunpack.c.h.b16 %v332
        %v466 = vunpack.c.l.b16 %v333
        %v467 = vunpack.c.h.b16 %v333
        %v468 = vpack.c.b16 %v438, %v436
        %v469 = vpack.c.b16 %v439, %v437
        %v470 = vpack.c.b16 %v442, %v440
        %v471 = vpack.c.b16 %v443, %v441
        %v472 = vpack.c.b16 %v446, %v444
        %v473 = vpack.c.b16 %v447, %v445
        %v474 = vpack.c.b16 %v450, %v448
        %v475 = vpack.c.b16 %v451, %v449
        %v476 = vpack.c.b16 %v454, %v452
        %v477 = vpack.c.b16 %v455, %v453
        %v478 = vpack.c.b16 %v458, %v456
        %v479 = vpack.c.b16 %v459, %v457
        %v480 = vpack.c.b16 %v462, %v460
        %v481 = vpack.c.b16 %v463, %v461
        %v482 = vpack.c.b16 %v466, %v464
        %v483 = vpack.c.b16 %v467, %v465
        %v564 = vunpack.c.l.b16 %v334
        %v565 = vunpack.c.h.b16 %v334
        %v566 = vunpack.c.l.b16 %v335
        %v567 = vunpack.c.h.b16 %v335
        %v568 = vunpack.c.l.b16 %v336
        %v569 = vunpack.c.h.b16 %v336
        %v570 = vunpack.c.l.b16 %v337
        %v571 = vunpack.c.h.b16 %v337
        %v572 = vunpack.c.l.b16 %v338
        %v573 = vunpack.c.h.b16 %v338
        %v574 = vunpack.c.l.b16 %v339
        %v575 = vunpack.c.h.b16 %v339
        %v576 = vunpack.c.l.b16 %v340
        %v577 = vunpack.c.h.b16 %v340
        %v578 = vunpack.c.l.b16 %v341
        %v579 = vunpack.c.h.b16 %v341
        %v580 = vunpack.c.l.b16 %v342
        %v581 = vunpack.c.h.b16 %v342
        %v582 = vunpack.c.l.b16 %v343
        %v583 = vunpack.c.h.b16 %v343
        %v584 = vunpack.c.l.b16 %v344
        %v585 = vunpack.c.h.b16 %v344
        %v586 = vunpack.c.l.b16 %v345
        %v587 = vunpack.c.h.b16 %v345
        %v588 = vunpack.c.l.b16 %v346
        %v589 = vunpack.c.h.b16 %v346
        %v590 = vunpack.c.l.b16 %v347
        %v591 = vunpack.c.h.b16 %v347
        %v592 = vunpack.c.l.b16 %v348
        %v593 = vunpack.c.h.b16 %v348
        %v594 = vunpack.c.l.b16 %v349
        %v595 = vunpack.c.h.b16 %v349
        %v596 = vunpack.c.l.b16 %v350
        %v597 = vunpack.c.h.b16 %v350
        %v598 = vunpack.c.l.b16 %v351
        %v599 = vunpack.c.h.b16 %v351
        %v600 = vunpack.c.l.b16 %v352
        %v601 = vunpack.c.h.b16 %v352
        %v602 = vunpack.c.l.b16 %v353
        %v603 = vunpack.c.h.b16 %v353
        %v604 = vunpack.c.l.b16 %v354
        %v605 = vunpack.c.h.b16 %v354
        %v606 = vunpack.c.l.b16 %v355
        %v607 = vunpack.c.h.b16 %v355
        %v608 = vunpack.c.l.b16 %v356
        %v609 = vunpack.c.h.b16 %v356
        %v610 = vunpack.c.l.b16 %v357
        %v611 = vunpack.c.h.b16 %v357
        %v612 = vunpack.c.l.b16 %v358
        %v613 = vunpack.c.h.b16 %v358
        %v614 = vunpack.c.l.b16 %v359
        %v615 = vunpack.c.h.b16 %v359
        %v616 = vunpack.c.l.b16 %v360
        %v617 = vunpack.c.h.b16 %v360
        %v618 = vunpack.c.l.b16 %v361
        %v619 = vunpack.c.h.b16 %v361
        %v620 = vunpack.c.l.b16 %v362
        %v621 = vunpack.c.h.b16 %v362
        %v622 = vunpack.c.l.b16 %v363
        %v623 = vunpack.c.h.b16 %v363
        %v624 = vunpack.c.l.b16 %v364
        %v625 = vunpack.c.h.b16 %v364
        %v626 = vunpack.c.l.b16 %v365
        %v627 = vunpack.c.h.b16 %v365
        %v628 = vunpack.c.l.b16 %v366
        %v629 = vunpack.c.h.b16 %v366
        %v630 = vunpack.c.l.b16 %v367
        %v631 = vunpack.c.h.b16 %v367
        %v632 = vunpack.c.l.b16 %v368
        %v633 = vunpack.c.h.b16 %v368
        %v634 = vunpack.c.l.b16 %v369
        %v635 = vunpack.c.h.b16 %v369
        %v636 = vunpack.c.l.b16 %v370
        %v637 = vunpack.c.h.b16 %v370
        %v638 = vunpack.c.l.b16 %v371
        %v639 = vunpack.c.h.b16 %v371
        %v640 = vunpack.c.l.b16 %v372
        %v641 = vunpack.c.h.b16 %v372
        %v642 = vunpack.c.l.b16 %v373
        %v643 = vunpack.c.h.b16 %v373
        %v644 = vunpack.c.l.b16 %v374
        %v645 = vunpack.c.h.b16 %v374
        %v646 = vunpack.c.l.b16 %v375
        %v647 = vunpack.c.h.b16 %v375
        %v648 = vunpack.c.l.b16 %v376
        %v649 = vunpack.c.h.b16 %v376
        %v650 = vunpack.c.l.b16 %v377
        %v651 = vunpack.c.h.b16 %v377
        %v652 = vunpack.c.l.b16 %v378
        %v653 = vunpack.c.h.b16 %v378
        %v654 = vunpack.c.l.b16 %v379
        %v655 = vunpack.c.h.b16 %v379
        %v656 = vunpack.c.l.b16 %v380
        %v657 = vunpack.c.h.b16 %v380
        %v658 = vunpack.c.l.b16 %v381
        %v659 = vunpack.c.h.b16 %v381
        %v660 = vunpack.c.l.b16 %v382
        %v661 = vunpack.c.h.b16 %v382
        %v662 = vunpack.c.l.b16 %v383
        %v663 = vunpack.c.h.b16 %v383
        %v664 = vunpack.c.l.b16 %v384
        %v665 = vunpack.c.h.b16 %v384
        %v666 = vunpack.c.l.b16 %v385
        %v667 = vunpack.c.h.b16 %v385
        %v668 = vunpack.c.l.b16 %v386
        %v669 = vunpack.c.h.b16 %v386
        %v670 = vunpack.c.l.b16 %v387
        %v671 = vunpack.c.h.b16 %v387
        %v672 = vunpack.c.l.b16 %v388
        %v673 = vunpack.c.h.b16 %v388
        %v674 = vunpack.c.l.b16 %v389
        %v675 = vunpack.c.h.b16 %v389
        %v676 = vunpack.c.l.b16 %v390
        %v677 = vunpack.c.h.b16 %v390
        %v678 = vunpack.c.l.b16 %v391
        %v679 = vunpack.c.h.b16 %v391
        %v680 = vunpack.c.l.b16 %v392
        %v681 = vunpack.c.h.b16 %v392
        %v682 = vunpack.c.l.b16 %v393
        %v683 = vunpack.c.h.b16 %v393
        %v684 = vunpack.c.l.b16 %v394
        %v685 = vunpack.c.h.b16 %v394
        %v686 = vunpack.c.l.b16 %v395
        %v687 = vunpack.c.h.b16 %v395
        %v688 = vunpack.c.l.b16 %v396
        %v689 = vunpack.c.h.b16 %v396
        %v690 = vunpack.c.l.b16 %v397
        %v691 = vunpack.c.h.b16 %v397
        %v692 = vpack.c.b16 %v568, %v564
        %v693 = vpack.c.b16 %v569, %v565
        %v694 = vpack.c.b16 %v570, %v566
        %v695 = vpack.c.b16 %v571, %v567
        %v696 = vpack.c.b16 %v576, %v572
        %v697 = vpack.c.b16 %v577, %v573
        %v698 = vpack.c.b16 %v578, %v574
        %v699 = vpack.c.b16 %v579, %v575
        %v700 = vpack.c.b16 %v584, %v580
        %v701 = vpack.c.b16 %v585, %v581
        %v702 = vpack.c.b16 %v586, %v582
        %v703 = vpack.c.b16 %v587, %v583
        %v704 = vpack.c.b16 %v592, %v588
        %v705 = vpack.c.b16 %v593, %v589
        %v706 = vpack.c.b16 %v594, %v590
        %v707 = vpack.c.b16 %v595, %v591
        %v708 = vpack.c.b16 %v600, %v596
        %v709 = vpack.c.b16 %v601, %v597
        %v710 = vpack.c.b16 %v602, %v598
        %v711 = vpack.c.b16 %v603, %v599
        %v712 = vpack.c.b16 %v608, %v604
        %v713 = vpack.c.b16 %v609, %v605
        %v714 = vpack.c.b16 %v610, %v606
        %v715 = vpack.c.b16 %v611, %v607
        %v716 = vpack.c.b16 %v616, %v612
        %v717 = vpack.c.b16 %v617, %v613
        %v718 = vpack.c.b16 %v618, %v614
        %v719 = vpack.c.b16 %v619, %v615
        %v720 = vpack.c.b16 %v624, %v620
        %v721 = vpack.c.b16 %v625, %v621
        %v722 = vpack.c.b16 %v626, %v622
        %v723 = vpack.c.b16 %v627, %v623
        %v724 = vpack.c.b16 %v632, %v628
        %v725 = vpack.c.b16 %v633, %v629
        %v726 = vpack.c.b16 %v634, %v630
        %v727 = vpack.c.b16 %v635, %v631
        %v728 = vpack.c.b16 %v640, %v636
        %v729 = vpack.c.b16 %v641, %v637
        %v730 = vpack.c.b16 %v642, %v638
        %v731 = vpack.c.b16 %v643, %v639
        %v732 = vpack.c.b16 %v648, %v644
        %v733 = vpack.c.b16 %v649, %v645
        %v734 = vpack.c.b16 %v650, %v646
        %v735 = vpack.c.b16 %v651, %v647
        %v736 = vpack.c.b16 %v656, %v652
        %v737 = vpack.c.b16 %v657, %v653
        %v738 = vpack.c.b16 %v658, %v654
        %v739 = vpack.c.b16 %v659, %v655
        %v740 = vpack.c.b16 %v664, %v660
        %v741 = vpack.c.b16 %v665, %v661
        %v742 = vpack.c.b16 %v666, %v662
        %v743 = vpack.c.b16 %v667, %v663
        %v744 = vpack.c.b16 %v672, %v668
        %v745 = vpack.c.b16 %v673, %v669
        %v746 = vpack.c.b16 %v674, %v670
        %v747 = vpack.c.b16 %v675, %v671
        %v748 = vpack.c.b16 %v680, %v676
        %v749 = vpack.c.b16 %v681, %v677
        %v750 = vpack.c.b16 %v682, %v678
        %v751 = vpack.c.b16 %v683, %v679
        %v752 = vpack.c.b16 %v688, %v684
        %v753 = vpack.c.b16 %v689, %v685
        %v754 = vpack.c.b16 %v690, %v686
        %v755 = vpack.c.b16 %v691, %v687
        %820 = vmatprep.subr.bf16.mxu0 %v693
        %821 = vmatpush1.bf16.msra.mxu0 %v692
        %822 = vmatprep.subr.bf16.mxu0 %v697
        %823 = vmatpush1.bf16.msra.mxu0 %v696
        %824 = vmatprep.subr.bf16.mxu0 %v701
        %825 = vmatpush1.bf16.msra.mxu0 %v700
        %826 = vmatprep.subr.bf16.mxu0 %v705
        %827 = vmatpush1.bf16.msra.mxu0 %v704
        %828 = vmatprep.subr.bf16.mxu0 %v709
        %829 = vmatpush1.bf16.msra.mxu0 %v708
        %830 = vmatprep.subr.bf16.mxu0 %v713
        %831 = vmatpush1.bf16.msra.mxu0 %v712
        %832 = vmatprep.subr.bf16.mxu0 %v717
        %833 = vmatpush1.bf16.msra.mxu0 %v716
        %834 = vmatprep.subr.bf16.mxu0 %v721
        %835 = vmatpush1.bf16.msra.mxu0 %v720
        %836 = vmatprep.subr.bf16.mxu0 %v725
        %837 = vmatpush1.bf16.msra.mxu0 %v724
        %838 = vmatprep.subr.bf16.mxu0 %v729
        %839 = vmatpush1.bf16.msra.mxu0 %v728
        %840 = vmatprep.subr.bf16.mxu0 %v733
        %841 = vmatpush1.bf16.msra.mxu0 %v732
        %842 = vmatprep.subr.bf16.mxu0 %v737
        %843 = vmatpush1.bf16.msra.mxu0 %v736
        %844 = vmatprep.subr.bf16.mxu0 %v741
        %845 = vmatpush1.bf16.msra.mxu0 %v740
        %846 = vmatprep.subr.bf16.mxu0 %v745
        %847 = vmatpush1.bf16.msra.mxu0 %v744
        %848 = vmatprep.subr.bf16.mxu0 %v749
        %849 = vmatpush1.bf16.msra.mxu0 %v748
        %850 = vmatprep.subr.bf16.mxu0 %v753
        %851 = vmatpush1.bf16.msra.mxu0 %v752
        %852 = vmatprep.mubr.bf16.mxu0 %v469
        %853 = vmatmul.mubr.bf16.gmra.mrb[0].mxu0 %v468
        %v854 = vpop.f32.mrb[0].mxu0
        %v855 = vadd.f32 %v403, %v854
        %v856 = vpop.f32.mrb[0].mxu0
        %v857 = vadd.f32 %v407, %v856
        %v858 = vpop.f32.mrb[0].mxu0
        %v859 = vadd.f32 %v403, %v858
        %v860 = vpop.f32.mrb[0].mxu0
        %v861 = vadd.f32 %v407, %v860
        %862 = vmatprep.mubr.bf16.mxu0 %v471
        %863 = vmatmul.mubr.bf16.gmra.mrb[0].mxu0 %v470
        %v864 = vpop.f32.mrb[0].mxu0
        %v865 = vadd.f32 %v403, %v864
        %v866 = vpop.f32.mrb[0].mxu0
        %v867 = vadd.f32 %v407, %v866
        %v868 = vpop.f32.mrb[0].mxu0
        %v869 = vadd.f32 %v403, %v868
        %v870 = vpop.f32.mrb[0].mxu0
        %v871 = vadd.f32 %v407, %v870
        %872 = vmatprep.mubr.bf16.mxu0 %v473
        %873 = vmatmul.mubr.bf16.gmra.mrb[0].mxu0 %v472
        %v874 = vpop.f32.mrb[0].mxu0
        %v875 = vadd.f32 %v403, %v874
        %v876 = vpop.f32.mrb[0].mxu0
        %v877 = vadd.f32 %v407, %v876
        %v878 = vpop.f32.mrb[0].mxu0
        %v879 = vadd.f32 %v403, %v878
        %v880 = vpop.f32.mrb[0].mxu0
        %v881 = vadd.f32 %v407, %v880
        %882 = vmatprep.mubr.bf16.mxu0 %v475
        %883 = vmatmul.mubr.bf16.gmra.mrb[0].mxu0 %v474
        %v884 = vpop.f32.mrb[0].mxu0
        %v885 = vadd.f32 %v403, %v884
        %v886 = vpop.f32.mrb[0].mxu0
        %v887 = vadd.f32 %v407, %v886
        %v888 = vpop.f32.mrb[0].mxu0
        %v889 = vadd.f32 %v403, %v888
        %v890 = vpop.f32.mrb[0].mxu0
        %v891 = vadd.f32 %v407, %v890
        %892 = vmatprep.mubr.bf16.mxu0 %v477
        %893 = vmatmul.mubr.bf16.gmra.mrb[0].mxu0 %v476
        %v894 = vpop.f32.mrb[0].mxu0
        %v895 = vadd.f32 %v403, %v894
        %v896 = vpop.f32.mrb[0].mxu0
        %v897 = vadd.f32 %v407, %v896
        %v898 = vpop.f32.mrb[0].mxu0
        %v899 = vadd.f32 %v403, %v898
        %v900 = vpop.f32.mrb[0].mxu0
        %v901 = vadd.f32 %v407, %v900
        %902 = vmatprep.mubr.bf16.mxu0 %v479
        %903 = vmatmul.mubr.bf16.gmra.mrb[0].mxu0 %v478
        %v904 = vpop.f32.mrb[0].mxu0
        %v905 = vadd.f32 %v403, %v904
        %v906 = vpop.f32.mrb[0].mxu0
        %v907 = vadd.f32 %v407, %v906
        %v908 = vpop.f32.mrb[0].mxu0
        %v909 = vadd.f32 %v403, %v908
        %v910 = vpop.f32.mrb[0].mxu0
        %v911 = vadd.f32 %v407, %v910
        %912 = vmatprep.mubr.bf16.mxu0 %v481
        %913 = vmatmul.mubr.bf16.gmra.mrb[0].mxu0 %v480
        %v914 = vpop.f32.mrb[0].mxu0
        %v915 = vadd.f32 %v403, %v914
        %v916 = vpop.f32.mrb[0].mxu0
        %v917 = vadd.f32 %v407, %v916
        %v918 = vpop.f32.mrb[0].mxu0
        %v919 = vadd.f32 %v403, %v918
        %v920 = vpop.f32.mrb[0].mxu0
        %v921 = vadd.f32 %v407, %v920
        %922 = vmatprep.mubr.bf16.mxu0 %v483
        %923 = vmatmul.mubr.bf16.gmra.mrb[0].mxu0 %v482
        %v924 = vpop.f32.mrb[0].mxu0
        %v925 = vadd.f32 %v403, %v924
        %v926 = vpop.f32.mrb[0].mxu0
        %v927 = vadd.f32 %v407, %v926
        %v928 = vpop.f32.mrb[0].mxu0
        %v929 = vadd.f32 %v403, %v928
        %v930 = vpop.f32.mrb[0].mxu0
        %v931 = vadd.f32 %v407, %v930
        %932 = vdwg.mxu0
        %933 = vmatprep.subr.bf16.mxu0 %v695
        %934 = vmatpush1.bf16.msra.mxu0 %v694
        %935 = vmatprep.subr.bf16.mxu0 %v699
        %936 = vmatpush1.bf16.msra.mxu0 %v698
        %937 = vmatprep.subr.bf16.mxu0 %v703
        %938 = vmatpush1.bf16.msra.mxu0 %v702
        %939 = vmatprep.subr.bf16.mxu0 %v707
        %940 = vmatpush1.bf16.msra.mxu0 %v706
        %941 = vmatprep.subr.bf16.mxu0 %v711
        %942 = vmatpush1.bf16.msra.mxu0 %v710
        %943 = vmatprep.subr.bf16.mxu0 %v715
        %944 = vmatpush1.bf16.msra.mxu0 %v714
        %945 = vmatprep.subr.bf16.mxu0 %v719
        %946 = vmatpush1.bf16.msra.mxu0 %v718
        %947 = vmatprep.subr.bf16.mxu0 %v723
        %948 = vmatpush1.bf16.msra.mxu0 %v722
        %949 = vmatprep.subr.bf16.mxu0 %v727
        %950 = vmatpush1.bf16.msra.mxu0 %v726
        %951 = vmatprep.subr.bf16.mxu0 %v731
        %952 = vmatpush1.bf16.msra.mxu0 %v730
        %953 = vmatprep.subr.bf16.mxu0 %v735
        %954 = vmatpush1.bf16.msra.mxu0 %v734
        %955 = vmatprep.subr.bf16.mxu0 %v739
        %956 = vmatpush1.bf16.msra.mxu0 %v738
        %957 = vmatprep.subr.bf16.mxu0 %v743
        %958 = vmatpush1.bf16.msra.mxu0 %v742
        %959 = vmatprep.subr.bf16.mxu0 %v747
        %960 = vmatpush1.bf16.msra.mxu0 %v746
        %961 = vmatprep.subr.bf16.mxu0 %v751
        %962 = vmatpush1.bf16.msra.mxu0 %v750
        %963 = vmatprep.subr.bf16.mxu0 %v755
        %964 = vmatpush1.bf16.msra.mxu0 %v754
        %965 = vmatprep.mubr.bf16.mxu0 %v469
        %966 = vmatmul.mubr.bf16.gmra.mrb[0].mxu0 %v468
        %v967 = vpop.f32.mrb[0].mxu0
        %v968 = vadd.f32 %v411, %v967
        %v969 = vpop.f32.mrb[0].mxu0
        %v970 = vadd.f32 %v415, %v969
        %v971 = vpop.f32.mrb[0].mxu0
        %v972 = vadd.f32 %v411, %v971
        %v973 = vpop.f32.mrb[0].mxu0
        %v974 = vadd.f32 %v415, %v973
        %975 = vmatprep.mubr.bf16.mxu0 %v471
        %976 = vmatmul.mubr.bf16.gmra.mrb[0].mxu0 %v470
        %v977 = vpop.f32.mrb[0].mxu0
        %v978 = vadd.f32 %v411, %v977
        %v979 = vpop.f32.mrb[0].mxu0
        %v980 = vadd.f32 %v415, %v979
        %v981 = vpop.f32.mrb[0].mxu0
        %v982 = vadd.f32 %v411, %v981
        %v983 = vpop.f32.mrb[0].mxu0
        %v984 = vadd.f32 %v415, %v983
        %985 = vmatprep.mubr.bf16.mxu0 %v473
        %986 = vmatmul.mubr.bf16.gmra.mrb[0].mxu0 %v472
        %v987 = vpop.f32.mrb[0].mxu0
        %v988 = vadd.f32 %v411, %v987
        %v989 = vpop.f32.mrb[0].mxu0
        %v990 = vadd.f32 %v415, %v989
        %v991 = vpop.f32.mrb[0].mxu0
        %v992 = vadd.f32 %v411, %v991
        %v993 = vpop.f32.mrb[0].mxu0
        %v994 = vadd.f32 %v415, %v993
        %995 = vmatprep.mubr.bf16.mxu0 %v475
        %996 = vmatmul.mubr.bf16.gmra.mrb[0].mxu0 %v474
        %v997 = vpop.f32.mrb[0].mxu0
        %v998 = vadd.f32 %v411, %v997
        %v999 = vpop.f32.mrb[0].mxu0
        %v1000 = vadd.f32 %v415, %v999
        %v1001 = vpop.f32.mrb[0].mxu0
        %v1002 = vadd.f32 %v411, %v1001
        %v1003 = vpop.f32.mrb[0].mxu0
        %v1004 = vadd.f32 %v415, %v1003
        %1005 = vmatprep.mubr.bf16.mxu0 %v477
        %1006 = vmatmul.mubr.bf16.gmra.mrb[0].mxu0 %v476
        %v1007 = vpop.f32.mrb[0].mxu0
        %v1008 = vadd.f32 %v411, %v1007
        %v1009 = vpop.f32.mrb[0].mxu0
        %v1010 = vadd.f32 %v415, %v1009
        %v1011 = vpop.f32.mrb[0].mxu0
        %v1012 = vadd.f32 %v411, %v1011
        %v1013 = vpop.f32.mrb[0].mxu0
        %v1014 = vadd.f32 %v415, %v1013
        %1015 = vmatprep.mubr.bf16.mxu0 %v479
        %1016 = vmatmul.mubr.bf16.gmra.mrb[0].mxu0 %v478
        %v1017 = vpop.f32.mrb[0].mxu0
        %v1018 = vadd.f32 %v411, %v1017
        %v1019 = vpop.f32.mrb[0].mxu0
        %v1020 = vadd.f32 %v415, %v1019
        %v1021 = vpop.f32.mrb[0].mxu0
        %v1022 = vadd.f32 %v411, %v1021
        %v1023 = vpop.f32.mrb[0].mxu0
        %v1024 = vadd.f32 %v415, %v1023
        %1025 = vmatprep.mubr.bf16.mxu0 %v481
        %1026 = vmatmul.mubr.bf16.gmra.mrb[0].mxu0 %v480
        %v1027 = vpop.f32.mrb[0].mxu0
        %v1028 = vadd.f32 %v411, %v1027
        %v1029 = vpop.f32.mrb[0].mxu0
        %v1030 = vadd.f32 %v415, %v1029
        %v1031 = vpop.f32.mrb[0].mxu0
        %v1032 = vadd.f32 %v411, %v1031
        %v1033 = vpop.f32.mrb[0].mxu0
        %v1034 = vadd.f32 %v415, %v1033
        %1035 = vmatprep.mubr.bf16.mxu0 %v483
        %1036 = vmatmul.mubr.bf16.gmra.mrb[0].mxu0 %v482
        %v1037 = vpop.f32.mrb[0].mxu0
        %v1038 = vadd.f32 %v411, %v1037
        %v1039 = vpop.f32.mrb[0].mxu0
        %v1040 = vadd.f32 %v415, %v1039
        %v1041 = vpop.f32.mrb[0].mxu0
        %v1042 = vadd.f32 %v411, %v1041
        %v1043 = vpop.f32.mrb[0].mxu0
        %v1044 = vadd.f32 %v415, %v1043
        %1045 = vdwg.mxu0
        %1046 = vst [vmem:[#allocation2] sm:$0xff] %v855
        %1047 = vst [vmem:[#allocation2 + $0x8] sm:$0xff] %v857
        %1048 = vst [vmem:[#allocation2 + $0x10] sm:$0xff] %v968
        %1049 = vst [vmem:[#allocation2 + $0x18] sm:$0xff] %v970
        %1050 = vst [vmem:[#allocation2 + $0x20] sm:$0xff] %v859
        %1051 = vst [vmem:[#allocation2 + $0x28] sm:$0xff] %v861
        %1052 = vst [vmem:[#allocation2 + $0x30] sm:$0xff] %v972
        %1053 = vst [vmem:[#allocation2 + $0x38] sm:$0xff] %v974
        %1054 = vst [vmem:[#allocation2 + $0x40] sm:$0xff] %v865
        %1055 = vst [vmem:[#allocation2 + $0x48] sm:$0xff] %v867
        %1056 = vst [vmem:[#allocation2 + $0x50] sm:$0xff] %v978
        %1057 = vst [vmem:[#allocation2 + $0x58] sm:$0xff] %v980
        %1058 = vst [vmem:[#allocation2 + $0x60] sm:$0xff] %v869
        %1059 = vst [vmem:[#allocation2 + $0x68] sm:$0xff] %v871
        %1060 = vst [vmem:[#allocation2 + $0x70] sm:$0xff] %v982
        %1061 = vst [vmem:[#allocation2 + $0x78] sm:$0xff] %v984
        %1062 = vst [vmem:[#allocation2 + $0x80] sm:$0xff] %v875
        %1063 = vst [vmem:[#allocation2 + $0x88] sm:$0xff] %v877
        %1064 = vst [vmem:[#allocation2 + $0x90] sm:$0xff] %v988
        %1065 = vst [vmem:[#allocation2 + $0x98] sm:$0xff] %v990
        %1066 = vst [vmem:[#allocation2 + $0xa0] sm:$0xff] %v879
        %1067 = vst [vmem:[#allocation2 + $0xa8] sm:$0xff] %v881
        %1068 = vst [vmem:[#allocation2 + $0xb0] sm:$0xff] %v992
        %1069 = vst [vmem:[#allocation2 + $0xb8] sm:$0xff] %v994
        %1070 = vst [vmem:[#allocation2 + $0xc0] sm:$0xff] %v885
        %1071 = vst [vmem:[#allocation2 + $0xc8] sm:$0xff] %v887
        %1072 = vst [vmem:[#allocation2 + $0xd0] sm:$0xff] %v998
        %1073 = vst [vmem:[#allocation2 + $0xd8] sm:$0xff] %v1000
        %1074 = vst [vmem:[#allocation2 + $0xe0] sm:$0xff] %v889
        %1075 = vst [vmem:[#allocation2 + $0xe8] sm:$0xff] %v891
        %1076 = vst [vmem:[#allocation2 + $0xf0] sm:$0xff] %v1002
        %1077 = vst [vmem:[#allocation2 + $0xf8] sm:$0xff] %v1004
        %1078 = vst [vmem:[#allocation2 + $0x100] sm:$0xff] %v895
        %1079 = vst [vmem:[#allocation2 + $0x108] sm:$0xff] %v897
        %1080 = vst [vmem:[#allocation2 + $0x110] sm:$0xff] %v1008
        %1081 = vst [vmem:[#allocation2 + $0x118] sm:$0xff] %v1010
        %1082 = vst [vmem:[#allocation2 + $0x120] sm:$0xff] %v899
        %1083 = vst [vmem:[#allocation2 + $0x128] sm:$0xff] %v901
        %1084 = vst [vmem:[#allocation2 + $0x130] sm:$0xff] %v1012
        %1085 = vst [vmem:[#allocation2 + $0x138] sm:$0xff] %v1014
        %1086 = vst [vmem:[#allocation2 + $0x140] sm:$0xff] %v905
        %1087 = vst [vmem:[#allocation2 + $0x148] sm:$0xff] %v907
        %1088 = vst [vmem:[#allocation2 + $0x150] sm:$0xff] %v1018
        %1089 = vst [vmem:[#allocation2 + $0x158] sm:$0xff] %v1020
        %1090 = vst [vmem:[#allocation2 + $0x160] sm:$0xff] %v909
        %1091 = vst [vmem:[#allocation2 + $0x168] sm:$0xff] %v911
        %1092 = vst [vmem:[#allocation2 + $0x170] sm:$0xff] %v1022
        %1093 = vst [vmem:[#allocation2 + $0x178] sm:$0xff] %v1024
        %1094 = vst [vmem:[#allocation2 + $0x180] sm:$0xff] %v915
        %1095 = vst [vmem:[#allocation2 + $0x188] sm:$0xff] %v917
        %1096 = vst [vmem:[#allocation2 + $0x190] sm:$0xff] %v1028
        %1097 = vst [vmem:[#allocation2 + $0x198] sm:$0xff] %v1030
        %1098 = vst [vmem:[#allocation2 + $0x1a0] sm:$0xff] %v919
        %1099 = vst [vmem:[#allocation2 + $0x1a8] sm:$0xff] %v921
        %1100 = vst [vmem:[#allocation2 + $0x1b0] sm:$0xff] %v1032
        %1101 = vst [vmem:[#allocation2 + $0x1b8] sm:$0xff] %v1034
        %1102 = vst [vmem:[#allocation2 + $0x1c0] sm:$0xff] %v925
        %1103 = vst [vmem:[#allocation2 + $0x1c8] sm:$0xff] %v927
        %1104 = vst [vmem:[#allocation2 + $0x1d0] sm:$0xff] %v1038
        %1105 = vst [vmem:[#allocation2 + $0x1d8] sm:$0xff] %v1040
        %1106 = vst [vmem:[#allocation2 + $0x1e0] sm:$0xff] %v929
        %1107 = vst [vmem:[#allocation2 + $0x1e8] sm:$0xff] %v931
        %1108 = vst [vmem:[#allocation2 + $0x1f0] sm:$0xff] %v1042
        %1109 = vst [vmem:[#allocation2 + $0x1f8] sm:$0xff] %v1044
        %p1110 = scmp.ne.s32.totalorder %s19, 0
        %v1111 = vld [vmem:[#allocation3] sm:$0xff]
        %v1112 = vld [vmem:[#allocation3 + $0x8] sm:$0xff]
        %v1113 = vld [vmem:[#allocation4] sm:$0xff]
        %v1114 = vld [vmem:[#allocation4 + $0x8] sm:$0xff]
        %s1115 = scalar_select %p1110, 7, 0
        %s1116 = smul.u32 %s1115, 16
        %s1117 = sshra.s32 %s1116, 3
        %s1118 = sand.u32 %s1116, 7
        %s1119 = smul.u32 %s1117, 4
        %s1120 = smul.addr %s1119, 8
        %s1121 = scalar_lea.vmem [#allocation2], %s1120
        %v1122 = vld [vmem:[%s1121] sm:$0xff]
        %v1123 = vld [vmem:[%s1121 + $0x8] sm:$0xff]
        %v1124 = vld [vmem:[%s1121 + $0x10] sm:$0xff]
        %v1125 = vld [vmem:[%s1121 + $0x18] sm:$0xff]
        %v1126 = vld [vmem:[%s1121 + $0x20] sm:$0xff]
        %v1127 = vld [vmem:[%s1121 + $0x28] sm:$0xff]
        %v1128 = vld [vmem:[%s1121 + $0x30] sm:$0xff]
        %v1129 = vld [vmem:[%s1121 + $0x38] sm:$0xff]
        %v1130 = vpack.c.bf16 %v1112, %v1111
        %v1131 = vld [vmem:[%s299] sm:$0xff]
        %v1132 = vld [vmem:[%s299 + $0x8] sm:$0xff]
        %v1133 = vld [vmem:[%s299 + $0x10] sm:$0xff]
        %v1134 = vld [vmem:[%s299 + $0x18] sm:$0xff]
        %v1135 = vld [vmem:[%s299 + $0x20] sm:$0xff]
        %v1136 = vld [vmem:[%s299 + $0x28] sm:$0xff]
        %v1137 = vld [vmem:[%s299 + $0x30] sm:$0xff]
        %v1138 = vld [vmem:[%s299 + $0x38] sm:$0xff]
        %v1139 = vld [vmem:[%s299 + $0x40] sm:$0xff]
        %v1140 = vld [vmem:[%s299 + $0x48] sm:$0xff]
        %v1141 = vld [vmem:[%s299 + $0x50] sm:$0xff]
        %v1142 = vld [vmem:[%s299 + $0x58] sm:$0xff]
        %v1143 = vld [vmem:[%s299 + $0x60] sm:$0xff]
        %v1144 = vld [vmem:[%s299 + $0x68] sm:$0xff]
        %v1145 = vld [vmem:[%s299 + $0x70] sm:$0xff]
        %v1146 = vld [vmem:[%s299 + $0x78] sm:$0xff]
        %v1147 = vld [vmem:[%s299 + $0x80] sm:$0xff]
        %v1148 = vld [vmem:[%s299 + $0x88] sm:$0xff]
        %v1149 = vld [vmem:[%s299 + $0x90] sm:$0xff]
        %v1150 = vld [vmem:[%s299 + $0x98] sm:$0xff]
        %v1151 = vld [vmem:[%s299 + $0xa0] sm:$0xff]
        %v1152 = vld [vmem:[%s299 + $0xa8] sm:$0xff]
        %v1153 = vld [vmem:[%s299 + $0xb0] sm:$0xff]
        %v1154 = vld [vmem:[%s299 + $0xb8] sm:$0xff]
        %v1155 = vld [vmem:[%s299 + $0xc0] sm:$0xff]
        %v1156 = vld [vmem:[%s299 + $0xc8] sm:$0xff]
        %v1157 = vld [vmem:[%s299 + $0xd0] sm:$0xff]
        %v1158 = vld [vmem:[%s299 + $0xd8] sm:$0xff]
        %v1159 = vld [vmem:[%s299 + $0xe0] sm:$0xff]
        %v1160 = vld [vmem:[%s299 + $0xe8] sm:$0xff]
        %v1161 = vld [vmem:[%s299 + $0xf0] sm:$0xff]
        %v1162 = vld [vmem:[%s299 + $0xf8] sm:$0xff]
        %v1195 = vunpack.c.l.b16 %v1131
        %v1196 = vunpack.c.h.b16 %v1131
        %v1197 = vunpack.c.l.b16 %v1132
        %v1198 = vunpack.c.h.b16 %v1132
        %v1199 = vunpack.c.l.b16 %v1133
        %v1200 = vunpack.c.h.b16 %v1133
        %v1201 = vunpack.c.l.b16 %v1134
        %v1202 = vunpack.c.h.b16 %v1134
        %v1203 = vunpack.c.l.b16 %v1135
        %v1204 = vunpack.c.h.b16 %v1135
        %v1205 = vunpack.c.l.b16 %v1136
        %v1206 = vunpack.c.h.b16 %v1136
        %v1207 = vunpack.c.l.b16 %v1137
        %v1208 = vunpack.c.h.b16 %v1137
        %v1209 = vunpack.c.l.b16 %v1138
        %v1210 = vunpack.c.h.b16 %v1138
        %v1211 = vunpack.c.l.b16 %v1139
        %v1212 = vunpack.c.h.b16 %v1139
        %v1213 = vunpack.c.l.b16 %v1140
        %v1214 = vunpack.c.h.b16 %v1140
        %v1215 = vunpack.c.l.b16 %v1141
        %v1216 = vunpack.c.h.b16 %v1141
        %v1217 = vunpack.c.l.b16 %v1142
        %v1218 = vunpack.c.h.b16 %v1142
        %v1219 = vunpack.c.l.b16 %v1143
        %v1220 = vunpack.c.h.b16 %v1143
        %v1221 = vunpack.c.l.b16 %v1144
        %v1222 = vunpack.c.h.b16 %v1144
        %v1223 = vunpack.c.l.b16 %v1145
        %v1224 = vunpack.c.h.b16 %v1145
        %v1225 = vunpack.c.l.b16 %v1146
        %v1226 = vunpack.c.h.b16 %v1146
        %v1227 = vunpack.c.l.b16 %v1147
        %v1228 = vunpack.c.h.b16 %v1147
        %v1229 = vunpack.c.l.b16 %v1148
        %v1230 = vunpack.c.h.b16 %v1148
        %v1231 = vunpack.c.l.b16 %v1149
        %v1232 = vunpack.c.h.b16 %v1149
        %v1233 = vunpack.c.l.b16 %v1150
        %v1234 = vunpack.c.h.b16 %v1150
        %v1235 = vunpack.c.l.b16 %v1151
        %v1236 = vunpack.c.h.b16 %v1151
        %v1237 = vunpack.c.l.b16 %v1152
        %v1238 = vunpack.c.h.b16 %v1152
        %v1239 = vunpack.c.l.b16 %v1153
        %v1240 = vunpack.c.h.b16 %v1153
        %v1241 = vunpack.c.l.b16 %v1154
        %v1242 = vunpack.c.h.b16 %v1154
        %v1243 = vunpack.c.l.b16 %v1155
        %v1244 = vunpack.c.h.b16 %v1155
        %v1245 = vunpack.c.l.b16 %v1156
        %v1246 = vunpack.c.h.b16 %v1156
        %v1247 = vunpack.c.l.b16 %v1157
        %v1248 = vunpack.c.h.b16 %v1157
        %v1249 = vunpack.c.l.b16 %v1158
        %v1250 = vunpack.c.h.b16 %v1158
        %v1251 = vunpack.c.l.b16 %v1159
        %v1252 = vunpack.c.h.b16 %v1159
        %v1253 = vunpack.c.l.b16 %v1160
        %v1254 = vunpack.c.h.b16 %v1160
        %v1255 = vunpack.c.l.b16 %v1161
        %v1256 = vunpack.c.h.b16 %v1161
        %v1257 = vunpack.c.l.b16 %v1162
        %v1258 = vunpack.c.h.b16 %v1162
        %v1259 = vpack.c.b16 %v1199, %v1195
        %v1260 = vpack.c.b16 %v1200, %v1196
        %v1261 = vpack.c.b16 %v1201, %v1197
        %v1262 = vpack.c.b16 %v1202, %v1198
        %v1263 = vpack.c.b16 %v1207, %v1203
        %v1264 = vpack.c.b16 %v1208, %v1204
        %v1265 = vpack.c.b16 %v1209, %v1205
        %v1266 = vpack.c.b16 %v1210, %v1206
        %v1267 = vpack.c.b16 %v1215, %v1211
        %v1268 = vpack.c.b16 %v1216, %v1212
        %v1269 = vpack.c.b16 %v1217, %v1213
        %v1270 = vpack.c.b16 %v1218, %v1214
        %v1271 = vpack.c.b16 %v1223, %v1219
        %v1272 = vpack.c.b16 %v1224, %v1220
        %v1273 = vpack.c.b16 %v1225, %v1221
        %v1274 = vpack.c.b16 %v1226, %v1222
        %v1275 = vpack.c.b16 %v1231, %v1227
        %v1276 = vpack.c.b16 %v1232, %v1228
        %v1277 = vpack.c.b16 %v1233, %v1229
        %v1278 = vpack.c.b16 %v1234, %v1230
        %v1279 = vpack.c.b16 %v1239, %v1235
        %v1280 = vpack.c.b16 %v1240, %v1236
        %v1281 = vpack.c.b16 %v1241, %v1237
        %v1282 = vpack.c.b16 %v1242, %v1238
        %v1283 = vpack.c.b16 %v1247, %v1243
        %v1284 = vpack.c.b16 %v1248, %v1244
        %v1285 = vpack.c.b16 %v1249, %v1245
        %v1286 = vpack.c.b16 %v1250, %v1246
        %v1287 = vpack.c.b16 %v1255, %v1251
        %v1288 = vpack.c.b16 %v1256, %v1252
        %v1289 = vpack.c.b16 %v1257, %v1253
        %v1290 = vpack.c.b16 %v1258, %v1254
        %1323 = vmatprep.subr.bf16.mxu0 %v1260
        %1324 = vmatpush1.bf16.msra.mxu0 %v1259
        %1325 = vmatprep.subr.bf16.mxu0 %v1264
        %1326 = vmatpush1.bf16.msra.mxu0 %v1263
        %1327 = vmatprep.subr.bf16.mxu0 %v1268
        %1328 = vmatpush1.bf16.msra.mxu0 %v1267
        %1329 = vmatprep.subr.bf16.mxu0 %v1272
        %1330 = vmatpush1.bf16.msra.mxu0 %v1271
        %1331 = vmatprep.subr.bf16.mxu0 %v1276
        %1332 = vmatpush1.bf16.msra.mxu0 %v1275
        %1333 = vmatprep.subr.bf16.mxu0 %v1280
        %1334 = vmatpush1.bf16.msra.mxu0 %v1279
        %1335 = vmatprep.subr.bf16.mxu0 %v1284
        %1336 = vmatpush1.bf16.msra.mxu0 %v1283
        %1337 = vmatprep.subr.bf16.mxu0 %v1288
        %1338 = vmatpush1.bf16.msra.mxu0 %v1287
        %1339 = vmatprep.subr.bf16.mxu0 0
        %1340 = vmatpush1.bf16.msra.mxu0 0
        %1341 = vmatprep.subr.bf16.mxu0 0
        %1342 = vmatpush1.bf16.msra.mxu0 0
        %1343 = vmatprep.subr.bf16.mxu0 0
        %1344 = vmatpush1.bf16.msra.mxu0 0
        %1345 = vmatprep.subr.bf16.mxu0 0
        %1346 = vmatpush1.bf16.msra.mxu0 0
        %1347 = vmatprep.subr.bf16.mxu0 0
        %1348 = vmatpush1.bf16.msra.mxu0 0
        %1349 = vmatprep.subr.bf16.mxu0 0
        %1350 = vmatpush1.bf16.msra.mxu0 0
        %1351 = vmatprep.subr.bf16.mxu0 0
        %1352 = vmatpush1.bf16.msra.mxu0 0
        %1353 = vmatprep.subr.bf16.mxu0 0
        %1354 = vmatpush1.bf16.msra.mxu0 0
        %1355 = vmatprep.mubr.bf16.mxu0 0
        %1356 = vmatmul.mubr.bf16.gmra.mrb[0].mxu0 %v1130
        %v1357 = vpop.f32.mrb[0].mxu0
        %v1358 = vadd.f32 0.0, %v1357
        %v1359 = vpop.f32.mrb[0].mxu0
        %v1360 = vadd.f32 0.0, %v1359
        %v1361 = vpop.f32.mrb[0].mxu0
        %v1362 = vadd.f32 0.0, %v1361
        %v1363 = vpop.f32.mrb[0].mxu0
        %v1364 = vadd.f32 0.0, %v1363
        %1365 = vdwg.mxu0
        %1366 = vmatprep.subr.bf16.mxu0 %v1262
        %1367 = vmatpush1.bf16.msra.mxu0 %v1261
        %1368 = vmatprep.subr.bf16.mxu0 %v1266
        %1369 = vmatpush1.bf16.msra.mxu0 %v1265
        %1370 = vmatprep.subr.bf16.mxu0 %v1270
        %1371 = vmatpush1.bf16.msra.mxu0 %v1269
        %1372 = vmatprep.subr.bf16.mxu0 %v1274
        %1373 = vmatpush1.bf16.msra.mxu0 %v1273
        %1374 = vmatprep.subr.bf16.mxu0 %v1278
        %1375 = vmatpush1.bf16.msra.mxu0 %v1277
        %1376 = vmatprep.subr.bf16.mxu0 %v1282
        %1377 = vmatpush1.bf16.msra.mxu0 %v1281
        %1378 = vmatprep.subr.bf16.mxu0 %v1286
        %1379 = vmatpush1.bf16.msra.mxu0 %v1285
        %1380 = vmatprep.subr.bf16.mxu0 %v1290
        %1381 = vmatpush1.bf16.msra.mxu0 %v1289
        %1382 = vmatprep.subr.bf16.mxu0 0
        %1383 = vmatpush1.bf16.msra.mxu0 0
        %1384 = vmatprep.subr.bf16.mxu0 0
        %1385 = vmatpush1.bf16.msra.mxu0 0
        %1386 = vmatprep.subr.bf16.mxu0 0
        %1387 = vmatpush1.bf16.msra.mxu0 0
        %1388 = vmatprep.subr.bf16.mxu0 0
        %1389 = vmatpush1.bf16.msra.mxu0 0
        %1390 = vmatprep.subr.bf16.mxu0 0
        %1391 = vmatpush1.bf16.msra.mxu0 0
        %1392 = vmatprep.subr.bf16.mxu0 0
        %1393 = vmatpush1.bf16.msra.mxu0 0
        %1394 = vmatprep.subr.bf16.mxu0 0
        %1395 = vmatpush1.bf16.msra.mxu0 0
        %1396 = vmatprep.subr.bf16.mxu0 0
        %1397 = vmatpush1.bf16.msra.mxu0 0
        %1398 = vmatprep.mubr.bf16.mxu0 0
        %1399 = vmatmul.mubr.bf16.gmra.mrb[0].mxu0 %v1130
        %v1400 = vpop.f32.mrb[0].mxu0
        %v1401 = vadd.f32 0.0, %v1400
        %v1402 = vpop.f32.mrb[0].mxu0
        %v1403 = vadd.f32 0.0, %v1402
        %v1404 = vpop.f32.mrb[0].mxu0
        %v1405 = vadd.f32 0.0, %v1404
        %v1406 = vpop.f32.mrb[0].mxu0
        %v1407 = vadd.f32 0.0, %v1406
        %1408 = vdwg.mxu0
        %v1409 = vadd.f32 %v1122, %v1358
        %v1410 = vadd.f32 %v1123, %v1360
        %v1411 = vadd.f32 %v1124, %v1401
        %v1412 = vadd.f32 %v1125, %v1403
        %v1413 = vadd.f32 %v1126, %v1362
        %v1414 = vadd.f32 %v1127, %v1364
        %v1415 = vadd.f32 %v1128, %v1405
        %v1416 = vadd.f32 %v1129, %v1407
        %v1417 = vxor.u32 %v1409, 2147483648
        %v1418 = vxor.u32 %v1413, 2147483648
        %v1419 = vmul.f32 %v1417, 1.442695
        %v1420 = vpow.pop %v1419
        %v1421 = vmul.f32 %v1418, 1.442695
        %v1422 = vpow.pop %v1421
        %v1423 = vadd.f32 %v1420, 1.0
        %v1424 = vadd.f32 %v1422, 1.0
        %v1425 = vrcp.pop %v1423
        %v1426 = vmul.f32 1.0, %v1425
        %v1427 = vrcp.pop %v1424
        %v1428 = vmul.f32 1.0, %v1427
        %v1429 = vxor.u32 %v1410, 2147483648
        %v1430 = vxor.u32 %v1414, 2147483648
        %v1431 = vmul.f32 %v1429, 1.442695
        %v1432 = vpow.pop %v1431
        %v1433 = vmul.f32 %v1430, 1.442695
        %v1434 = vpow.pop %v1433
        %v1435 = vadd.f32 %v1432, 1.0
        %v1436 = vadd.f32 %v1434, 1.0
        %v1437 = vrcp.pop %v1435
        %v1438 = vmul.f32 1.0, %v1437
        %v1439 = vrcp.pop %v1436
        %v1440 = vmul.f32 1.0, %v1439
        %v1441 = vtanh.pop %v1411
        %v1442 = vtanh.pop %v1415
        %v1443 = vxor.u32 %v1412, 2147483648
        %v1444 = vxor.u32 %v1416, 2147483648
        %v1445 = vmul.f32 %v1443, 1.442695
        %v1446 = vpow.pop %v1445
        %v1447 = vmul.f32 %v1444, 1.442695
        %v1448 = vpow.pop %v1447
        %v1449 = vadd.f32 %v1446, 1.0
        %v1450 = vadd.f32 %v1448, 1.0
        %v1451 = vrcp.pop %v1449
        %v1452 = vmul.f32 1.0, %v1451
        %v1453 = vrcp.pop %v1450
        %v1454 = vmul.f32 1.0, %v1453
        %v1455 = vmul.f32 %v1438, %v1113
        %v1456 = vmul.f32 %v1440, %v1114
        %v1457 = vmul.f32 %v1426, %v1441
        %v1458 = vmul.f32 %v1428, %v1442
        %v1459 = vadd.f32 %v1455, %v1457
        %v1460 = vadd.f32 %v1456, %v1458
        %v1461 = vtanh.pop %v1459
        %v1462 = vtanh.pop %v1460
        %v1463 = vmul.f32 %v1452, %v1461
        %v1464 = vmul.f32 %v1454, %v1462
        %v1465 = vpack.c.bf16 %v1464, %v1463
        %v1467 = vunpack.c.l.b16 %v1465
        %v1468 = vunpack.c.h.b16 %v1465
        %v1469 = vpack.c.b16 %v1467, %v1467
        %v1470 = vpack.c.b16 %v1468, %v1468
        %s1473 = smul.addr %s1117, 4
        %s1474 = scalar_lea.vmem %s274, %s1473 [#allocation5]
        %1475 = vst [vmem:[%s1474] sm:$0xf] %v1469
        %1476 = vst [vmem:[%s1474 + $0x4] sm:$0xf] %v1470
        %s1477 = scalar_select %p1110, 6, 1
        %s1478 = smul.u32 %s1477, 16
        %s1479 = sshra.s32 %s1478, 3
        %s1480 = sand.u32 %s1478, 7
        %s1481 = smul.u32 %s1479, 4
        %s1482 = smul.addr %s1481, 8
        %s1483 = scalar_lea.vmem [#allocation2], %s1482
        %v1484 = vld [vmem:[%s1483] sm:$0xff]
        %v1485 = vld [vmem:[%s1483 + $0x8] sm:$0xff]
        %v1486 = vld [vmem:[%s1483 + $0x10] sm:$0xff]
        %v1487 = vld [vmem:[%s1483 + $0x18] sm:$0xff]
        %v1488 = vld [vmem:[%s1483 + $0x20] sm:$0xff]
        %v1489 = vld [vmem:[%s1483 + $0x28] sm:$0xff]
        %v1490 = vld [vmem:[%s1483 + $0x30] sm:$0xff]
        %v1491 = vld [vmem:[%s1483 + $0x38] sm:$0xff]
        %v1492 = vld [vmem:[%s299] sm:$0xff]
        %v1493 = vld [vmem:[%s299 + $0x8] sm:$0xff]
        %v1494 = vld [vmem:[%s299 + $0x10] sm:$0xff]
        %v1495 = vld [vmem:[%s299 + $0x18] sm:$0xff]
        %v1496 = vld [vmem:[%s299 + $0x20] sm:$0xff]
        %v1497 = vld [vmem:[%s299 + $0x28] sm:$0xff]
        %v1498 = vld [vmem:[%s299 + $0x30] sm:$0xff]
        %v1499 = vld [vmem:[%s299 + $0x38] sm:$0xff]
        %v1500 = vld [vmem:[%s299 + $0x40] sm:$0xff]
        %v1501 = vld [vmem:[%s299 + $0x48] sm:$0xff]
        %v1502 = vld [vmem:[%s299 + $0x50] sm:$0xff]
        %v1503 = vld [vmem:[%s299 + $0x58] sm:$0xff]
        %v1504 = vld [vmem:[%s299 + $0x60] sm:$0xff]
        %v1505 = vld [vmem:[%s299 + $0x68] sm:$0xff]
        %v1506 = vld [vmem:[%s299 + $0x70] sm:$0xff]
        %v1507 = vld [vmem:[%s299 + $0x78] sm:$0xff]
        %v1508 = vld [vmem:[%s299 + $0x80] sm:$0xff]
        %v1509 = vld [vmem:[%s299 + $0x88] sm:$0xff]
        %v1510 = vld [vmem:[%s299 + $0x90] sm:$0xff]
        %v1511 = vld [vmem:[%s299 + $0x98] sm:$0xff]
        %v1512 = vld [vmem:[%s299 + $0xa0] sm:$0xff]
        %v1513 = vld [vmem:[%s299 + $0xa8] sm:$0xff]
        %v1514 = vld [vmem:[%s299 + $0xb0] sm:$0xff]
        %v1515 = vld [vmem:[%s299 + $0xb8] sm:$0xff]
        %v1516 = vld [vmem:[%s299 + $0xc0] sm:$0xff]
        %v1517 = vld [vmem:[%s299 + $0xc8] sm:$0xff]
        %v1518 = vld [vmem:[%s299 + $0xd0] sm:$0xff]
        %v1519 = vld [vmem:[%s299 + $0xd8] sm:$0xff]
        %v1520 = vld [vmem:[%s299 + $0xe0] sm:$0xff]
        %v1521 = vld [vmem:[%s299 + $0xe8] sm:$0xff]
        %v1522 = vld [vmem:[%s299 + $0xf0] sm:$0xff]
        %v1523 = vld [vmem:[%s299 + $0xf8] sm:$0xff]
        %v1556 = vunpack.c.l.b16 %v1492
        %v1557 = vunpack.c.h.b16 %v1492
        %v1558 = vunpack.c.l.b16 %v1493
        %v1559 = vunpack.c.h.b16 %v1493
        %v1560 = vunpack.c.l.b16 %v1494
        %v1561 = vunpack.c.h.b16 %v1494
        %v1562 = vunpack.c.l.b16 %v1495
        %v1563 = vunpack.c.h.b16 %v1495
        %v1564 = vunpack.c.l.b16 %v1496
        %v1565 = vunpack.c.h.b16 %v1496
        %v1566 = vunpack.c.l.b16 %v1497
        %v1567 = vunpack.c.h.b16 %v1497
        %v1568 = vunpack.c.l.b16 %v1498
        %v1569 = vunpack.c.h.b16 %v1498
        %v1570 = vunpack.c.l.b16 %v1499
        %v1571 = vunpack.c.h.b16 %v1499
        %v1572 = vunpack.c.l.b16 %v1500
        %v1573 = vunpack.c.h.b16 %v1500
        %v1574 = vunpack.c.l.b16 %v1501
        %v1575 = vunpack.c.h.b16 %v1501
        %v1576 = vunpack.c.l.b16 %v1502
        %v1577 = vunpack.c.h.b16 %v1502
        %v1578 = vunpack.c.l.b16 %v1503
        %v1579 = vunpack.c.h.b16 %v1503
        %v1580 = vunpack.c.l.b16 %v1504
        %v1581 = vunpack.c.h.b16 %v1504
        %v1582 = vunpack.c.l.b16 %v1505
        %v1583 = vunpack.c.h.b16 %v1505
        %v1584 = vunpack.c.l.b16 %v1506
        %v1585 = vunpack.c.h.b16 %v1506
        %v1586 = vunpack.c.l.b16 %v1507
        %v1587 = vunpack.c.h.b16 %v1507
        %v1588 = vunpack.c.l.b16 %v1508
        %v1589 = vunpack.c.h.b16 %v1508
        %v1590 = vunpack.c.l.b16 %v1509
        %v1591 = vunpack.c.h.b16 %v1509
        %v1592 = vunpack.c.l.b16 %v1510
        %v1593 = vunpack.c.h.b16 %v1510
        %v1594 = vunpack.c.l.b16 %v1511
        %v1595 = vunpack.c.h.b16 %v1511
        %v1596 = vunpack.c.l.b16 %v1512
        %v1597 = vunpack.c.h.b16 %v1512
        %v1598 = vunpack.c.l.b16 %v1513
        %v1599 = vunpack.c.h.b16 %v1513
        %v1600 = vunpack.c.l.b16 %v1514
        %v1601 = vunpack.c.h.b16 %v1514
        %v1602 = vunpack.c.l.b16 %v1515
        %v1603 = vunpack.c.h.b16 %v1515
        %v1604 = vunpack.c.l.b16 %v1516
        %v1605 = vunpack.c.h.b16 %v1516
        %v1606 = vunpack.c.l.b16 %v1517
        %v1607 = vunpack.c.h.b16 %v1517
        %v1608 = vunpack.c.l.b16 %v1518
        %v1609 = vunpack.c.h.b16 %v1518
        %v1610 = vunpack.c.l.b16 %v1519
        %v1611 = vunpack.c.h.b16 %v1519
        %v1612 = vunpack.c.l.b16 %v1520
        %v1613 = vunpack.c.h.b16 %v1520
        %v1614 = vunpack.c.l.b16 %v1521
        %v1615 = vunpack.c.h.b16 %v1521
        %v1616 = vunpack.c.l.b16 %v1522
        %v1617 = vunpack.c.h.b16 %v1522
        %v1618 = vunpack.c.l.b16 %v1523
        %v1619 = vunpack.c.h.b16 %v1523
        %v1620 = vpack.c.b16 %v1560, %v1556
        %v1621 = vpack.c.b16 %v1561, %v1557
        %v1622 = vpack.c.b16 %v1562, %v1558
        %v1623 = vpack.c.b16 %v1563, %v1559
        %v1624 = vpack.c.b16 %v1568, %v1564
        %v1625 = vpack.c.b16 %v1569, %v1565
        %v1626 = vpack.c.b16 %v1570, %v1566
        %v1627 = vpack.c.b16 %v1571, %v1567
        %v1628 = vpack.c.b16 %v1576, %v1572
        %v1629 = vpack.c.b16 %v1577, %v1573
        %v1630 = vpack.c.b16 %v1578, %v1574
        %v1631 = vpack.c.b16 %v1579, %v1575
        %v1632 = vpack.c.b16 %v1584, %v1580
        %v1633 = vpack.c.b16 %v1585, %v1581
        %v1634 = vpack.c.b16 %v1586, %v1582
        %v1635 = vpack.c.b16 %v1587, %v1583
        %v1636 = vpack.c.b16 %v1592, %v1588
        %v1637 = vpack.c.b16 %v1593, %v1589
        %v1638 = vpack.c.b16 %v1594, %v1590
        %v1639 = vpack.c.b16 %v1595, %v1591
        %v1640 = vpack.c.b16 %v1600, %v1596
        %v1641 = vpack.c.b16 %v1601, %v1597
        %v1642 = vpack.c.b16 %v1602, %v1598
        %v1643 = vpack.c.b16 %v1603, %v1599
        %v1644 = vpack.c.b16 %v1608, %v1604
        %v1645 = vpack.c.b16 %v1609, %v1605
        %v1646 = vpack.c.b16 %v1610, %v1606
        %v1647 = vpack.c.b16 %v1611, %v1607
        %v1648 = vpack.c.b16 %v1616, %v1612
        %v1649 = vpack.c.b16 %v1617, %v1613
        %v1650 = vpack.c.b16 %v1618, %v1614
        %v1651 = vpack.c.b16 %v1619, %v1615
        %1684 = vmatprep.subr.bf16.mxu0 %v1621
        %1685 = vmatpush1.bf16.msra.mxu0 %v1620
        %1686 = vmatprep.subr.bf16.mxu0 %v1625
        %1687 = vmatpush1.bf16.msra.mxu0 %v1624
        %1688 = vmatprep.subr.bf16.mxu0 %v1629
        %1689 = vmatpush1.bf16.msra.mxu0 %v1628
        %1690 = vmatprep.subr.bf16.mxu0 %v1633
        %1691 = vmatpush1.bf16.msra.mxu0 %v1632
        %1692 = vmatprep.subr.bf16.mxu0 %v1637
        %1693 = vmatpush1.bf16.msra.mxu0 %v1636
        %1694 = vmatprep.subr.bf16.mxu0 %v1641
        %1695 = vmatpush1.bf16.msra.mxu0 %v1640
        %1696 = vmatprep.subr.bf16.mxu0 %v1645
        %1697 = vmatpush1.bf16.msra.mxu0 %v1644
        %1698 = vmatprep.subr.bf16.mxu0 %v1649
        %1699 = vmatpush1.bf16.msra.mxu0 %v1648
        %1700 = vmatprep.subr.bf16.mxu0 0
        %1701 = vmatpush1.bf16.msra.mxu0 0
        %1702 = vmatprep.subr.bf16.mxu0 0
        %1703 = vmatpush1.bf16.msra.mxu0 0
        %1704 = vmatprep.subr.bf16.mxu0 0
        %1705 = vmatpush1.bf16.msra.mxu0 0
        %1706 = vmatprep.subr.bf16.mxu0 0
        %1707 = vmatpush1.bf16.msra.mxu0 0
        %1708 = vmatprep.subr.bf16.mxu0 0
        %1709 = vmatpush1.bf16.msra.mxu0 0
        %1710 = vmatprep.subr.bf16.mxu0 0
        %1711 = vmatpush1.bf16.msra.mxu0 0
        %1712 = vmatprep.subr.bf16.mxu0 0
        %1713 = vmatpush1.bf16.msra.mxu0 0
        %1714 = vmatprep.subr.bf16.mxu0 0
        %1715 = vmatpush1.bf16.msra.mxu0 0
        %1716 = vmatprep.mubr.bf16.mxu0 0
        %1717 = vmatmul.mubr.bf16.gmra.mrb[0].mxu0 %v1465
        %v1718 = vpop.f32.mrb[0].mxu0
        %v1719 = vadd.f32 0.0, %v1718
        %v1720 = vpop.f32.mrb[0].mxu0
        %v1721 = vadd.f32 0.0, %v1720
        %v1722 = vpop.f32.mrb[0].mxu0
        %v1723 = vadd.f32 0.0, %v1722
        %v1724 = vpop.f32.mrb[0].mxu0
        %v1725 = vadd.f32 0.0, %v1724
        %1726 = vdwg.mxu0
        %1727 = vmatprep.subr.bf16.mxu0 %v1623
        %1728 = vmatpush1.bf16.msra.mxu0 %v1622
        %1729 = vmatprep.subr.bf16.mxu0 %v1627
        %1730 = vmatpush1.bf16.msra.mxu0 %v1626
        %1731 = vmatprep.subr.bf16.mxu0 %v1631
        %1732 = vmatpush1.bf16.msra.mxu0 %v1630
        %1733 = vmatprep.subr.bf16.mxu0 %v1635
        %1734 = vmatpush1.bf16.msra.mxu0 %v1634
        %1735 = vmatprep.subr.bf16.mxu0 %v1639
        %1736 = vmatpush1.bf16.msra.mxu0 %v1638
        %1737 = vmatprep.subr.bf16.mxu0 %v1643
        %1738 = vmatpush1.bf16.msra.mxu0 %v1642
        %1739 = vmatprep.subr.bf16.mxu0 %v1647
        %1740 = vmatpush1.bf16.msra.mxu0 %v1646
        %1741 = vmatprep.subr.bf16.mxu0 %v1651
        %1742 = vmatpush1.bf16.msra.mxu0 %v1650
        %1743 = vmatprep.subr.bf16.mxu0 0
        %1744 = vmatpush1.bf16.msra.mxu0 0
        %1745 = vmatprep.subr.bf16.mxu0 0
        %1746 = vmatpush1.bf16.msra.mxu0 0
        %1747 = vmatprep.subr.bf16.mxu0 0
        %1748 = vmatpush1.bf16.msra.mxu0 0
        %1749 = vmatprep.subr.bf16.mxu0 0
        %1750 = vmatpush1.bf16.msra.mxu0 0
        %1751 = vmatprep.subr.bf16.mxu0 0
        %1752 = vmatpush1.bf16.msra.mxu0 0
        %1753 = vmatprep.subr.bf16.mxu0 0
        %1754 = vmatpush1.bf16.msra.mxu0 0
        %1755 = vmatprep.subr.bf16.mxu0 0
        %1756 = vmatpush1.bf16.msra.mxu0 0
        %1757 = vmatprep.subr.bf16.mxu0 0
        %1758 = vmatpush1.bf16.msra.mxu0 0
        %1759 = vmatprep.mubr.bf16.mxu0 0
        %1760 = vmatmul.mubr.bf16.gmra.mrb[0].mxu0 %v1465
        %v1761 = vpop.f32.mrb[0].mxu0
        %v1762 = vadd.f32 0.0, %v1761
        %v1763 = vpop.f32.mrb[0].mxu0
        %v1764 = vadd.f32 0.0, %v1763
        %v1765 = vpop.f32.mrb[0].mxu0
        %v1766 = vadd.f32 0.0, %v1765
        %v1767 = vpop.f32.mrb[0].mxu0
        %v1768 = vadd.f32 0.0, %v1767
        %1769 = vdwg.mxu0
        %v1770 = vadd.f32 %v1484, %v1719
        %v1771 = vadd.f32 %v1485, %v1721
        %v1772 = vadd.f32 %v1486, %v1762
        %v1773 = vadd.f32 %v1487, %v1764
        %v1774 = vadd.f32 %v1488, %v1723
        %v1775 = vadd.f32 %v1489, %v1725
        %v1776 = vadd.f32 %v1490, %v1766
        %v1777 = vadd.f32 %v1491, %v1768
        %v1778 = vxor.u32 %v1770, 2147483648
        %v1779 = vxor.u32 %v1774, 2147483648
        %v1780 = vmul.f32 %v1778, 1.442695
        %v1781 = vpow.pop %v1780
        %v1782 = vmul.f32 %v1779, 1.442695
        %v1783 = vpow.pop %v1782
        %v1784 = vadd.f32 %v1781, 1.0
        %v1785 = vadd.f32 %v1783, 1.0
        %v1786 = vrcp.pop %v1784
        %v1787 = vmul.f32 1.0, %v1786
        %v1788 = vrcp.pop %v1785
        %v1789 = vmul.f32 1.0, %v1788
        %v1790 = vxor.u32 %v1771, 2147483648
        %v1791 = vxor.u32 %v1775, 2147483648
        %v1792 = vmul.f32 %v1790, 1.442695
        %v1793 = vpow.pop %v1792
        %v1794 = vmul.f32 %v1791, 1.442695
        %v1795 = vpow.pop %v1794
        %v1796 = vadd.f32 %v1793, 1.0
        %v1797 = vadd.f32 %v1795, 1.0
        %v1798 = vrcp.pop %v1796
        %v1799 = vmul.f32 1.0, %v1798
        %v1800 = vrcp.pop %v1797
        %v1801 = vmul.f32 1.0, %v1800
        %v1802 = vtanh.pop %v1772
        %v1803 = vtanh.pop %v1776
        %v1804 = vxor.u32 %v1773, 2147483648
        %v1805 = vxor.u32 %v1777, 2147483648
        %v1806 = vmul.f32 %v1804, 1.442695
        %v1807 = vpow.pop %v1806
        %v1808 = vmul.f32 %v1805, 1.442695
        %v1809 = vpow.pop %v1808
        %v1810 = vadd.f32 %v1807, 1.0
        %v1811 = vadd.f32 %v1809, 1.0
        %v1812 = vrcp.pop %v1810
        %v1813 = vmul.f32 1.0, %v1812
        %v1814 = vrcp.pop %v1811
        %v1815 = vmul.f32 1.0, %v1814
        %v1816 = vmul.f32 %v1799, %v1459
        %v1817 = vmul.f32 %v1801, %v1460
        %v1818 = vmul.f32 %v1787, %v1802
        %v1819 = vmul.f32 %v1789, %v1803
        %v1820 = vadd.f32 %v1816, %v1818
        %v1821 = vadd.f32 %v1817, %v1819
        %v1822 = vtanh.pop %v1820
        %v1823 = vtanh.pop %v1821
        %v1824 = vmul.f32 %v1813, %v1822
        %v1825 = vmul.f32 %v1815, %v1823
        %v1826 = vpack.c.bf16 %v1825, %v1824
        %v1828 = vunpack.c.l.b16 %v1826
        %v1829 = vunpack.c.h.b16 %v1826
        %v1830 = vpack.c.b16 %v1828, %v1828
        %v1831 = vpack.c.b16 %v1829, %v1829
        %s1834 = smul.addr %s1479, 4
        %s1835 = scalar_lea.vmem %s274, %s1834 [#allocation5]
        %1836 = vst [vmem:[%s1835] sm:$0xf] %v1830
        %1837 = vst [vmem:[%s1835 + $0x4] sm:$0xf] %v1831
        %s1838 = scalar_select %p1110, 5, 2
        %s1839 = smul.u32 %s1838, 16
        %s1840 = sshra.s32 %s1839, 3
        %s1841 = sand.u32 %s1839, 7
        %s1842 = smul.u32 %s1840, 4
        %s1843 = smul.addr %s1842, 8
        %s1844 = scalar_lea.vmem [#allocation2], %s1843
        %v1845 = vld [vmem:[%s1844] sm:$0xff]
        %v1846 = vld [vmem:[%s1844 + $0x8] sm:$0xff]
        %v1847 = vld [vmem:[%s1844 + $0x10] sm:$0xff]
        %v1848 = vld [vmem:[%s1844 + $0x18] sm:$0xff]
        %v1849 = vld [vmem:[%s1844 + $0x20] sm:$0xff]
        %v1850 = vld [vmem:[%s1844 + $0x28] sm:$0xff]
        %v1851 = vld [vmem:[%s1844 + $0x30] sm:$0xff]
        %v1852 = vld [vmem:[%s1844 + $0x38] sm:$0xff]
        %v1853 = vld [vmem:[%s299] sm:$0xff]
        %v1854 = vld [vmem:[%s299 + $0x8] sm:$0xff]
        %v1855 = vld [vmem:[%s299 + $0x10] sm:$0xff]
        %v1856 = vld [vmem:[%s299 + $0x18] sm:$0xff]
        %v1857 = vld [vmem:[%s299 + $0x20] sm:$0xff]
        %v1858 = vld [vmem:[%s299 + $0x28] sm:$0xff]
        %v1859 = vld [vmem:[%s299 + $0x30] sm:$0xff]
        %v1860 = vld [vmem:[%s299 + $0x38] sm:$0xff]
        %v1861 = vld [vmem:[%s299 + $0x40] sm:$0xff]
        %v1862 = vld [vmem:[%s299 + $0x48] sm:$0xff]
        %v1863 = vld [vmem:[%s299 + $0x50] sm:$0xff]
        %v1864 = vld [vmem:[%s299 + $0x58] sm:$0xff]
        %v1865 = vld [vmem:[%s299 + $0x60] sm:$0xff]
        %v1866 = vld [vmem:[%s299 + $0x68] sm:$0xff]
        %v1867 = vld [vmem:[%s299 + $0x70] sm:$0xff]
        %v1868 = vld [vmem:[%s299 + $0x78] sm:$0xff]
        %v1869 = vld [vmem:[%s299 + $0x80] sm:$0xff]
        %v1870 = vld [vmem:[%s299 + $0x88] sm:$0xff]
        %v1871 = vld [vmem:[%s299 + $0x90] sm:$0xff]
        %v1872 = vld [vmem:[%s299 + $0x98] sm:$0xff]
        %v1873 = vld [vmem:[%s299 + $0xa0] sm:$0xff]
        %v1874 = vld [vmem:[%s299 + $0xa8] sm:$0xff]
        %v1875 = vld [vmem:[%s299 + $0xb0] sm:$0xff]
        %v1876 = vld [vmem:[%s299 + $0xb8] sm:$0xff]
        %v1877 = vld [vmem:[%s299 + $0xc0] sm:$0xff]
        %v1878 = vld [vmem:[%s299 + $0xc8] sm:$0xff]
        %v1879 = vld [vmem:[%s299 + $0xd0] sm:$0xff]
        %v1880 = vld [vmem:[%s299 + $0xd8] sm:$0xff]
        %v1881 = vld [vmem:[%s299 + $0xe0] sm:$0xff]
        %v1882 = vld [vmem:[%s299 + $0xe8] sm:$0xff]
        %v1883 = vld [vmem:[%s299 + $0xf0] sm:$0xff]
        %v1884 = vld [vmem:[%s299 + $0xf8] sm:$0xff]
        %v1917 = vunpack.c.l.b16 %v1853
        %v1918 = vunpack.c.h.b16 %v1853
        %v1919 = vunpack.c.l.b16 %v1854
        %v1920 = vunpack.c.h.b16 %v1854
        %v1921 = vunpack.c.l.b16 %v1855
        %v1922 = vunpack.c.h.b16 %v1855
        %v1923 = vunpack.c.l.b16 %v1856
        %v1924 = vunpack.c.h.b16 %v1856
        %v1925 = vunpack.c.l.b16 %v1857
        %v1926 = vunpack.c.h.b16 %v1857
        %v1927 = vunpack.c.l.b16 %v1858
        %v1928 = vunpack.c.h.b16 %v1858
        %v1929 = vunpack.c.l.b16 %v1859
        %v1930 = vunpack.c.h.b16 %v1859
        %v1931 = vunpack.c.l.b16 %v1860
        %v1932 = vunpack.c.h.b16 %v1860
        %v1933 = vunpack.c.l.b16 %v1861
        %v1934 = vunpack.c.h.b16 %v1861
        %v1935 = vunpack.c.l.b16 %v1862
        %v1936 = vunpack.c.h.b16 %v1862
        %v1937 = vunpack.c.l.b16 %v1863
        %v1938 = vunpack.c.h.b16 %v1863
        %v1939 = vunpack.c.l.b16 %v1864
        %v1940 = vunpack.c.h.b16 %v1864
        %v1941 = vunpack.c.l.b16 %v1865
        %v1942 = vunpack.c.h.b16 %v1865
        %v1943 = vunpack.c.l.b16 %v1866
        %v1944 = vunpack.c.h.b16 %v1866
        %v1945 = vunpack.c.l.b16 %v1867
        %v1946 = vunpack.c.h.b16 %v1867
        %v1947 = vunpack.c.l.b16 %v1868
        %v1948 = vunpack.c.h.b16 %v1868
        %v1949 = vunpack.c.l.b16 %v1869
        %v1950 = vunpack.c.h.b16 %v1869
        %v1951 = vunpack.c.l.b16 %v1870
        %v1952 = vunpack.c.h.b16 %v1870
        %v1953 = vunpack.c.l.b16 %v1871
        %v1954 = vunpack.c.h.b16 %v1871
        %v1955 = vunpack.c.l.b16 %v1872
        %v1956 = vunpack.c.h.b16 %v1872
        %v1957 = vunpack.c.l.b16 %v1873
        %v1958 = vunpack.c.h.b16 %v1873
        %v1959 = vunpack.c.l.b16 %v1874
        %v1960 = vunpack.c.h.b16 %v1874
        %v1961 = vunpack.c.l.b16 %v1875
        %v1962 = vunpack.c.h.b16 %v1875
        %v1963 = vunpack.c.l.b16 %v1876
        %v1964 = vunpack.c.h.b16 %v1876
        %v1965 = vunpack.c.l.b16 %v1877
        %v1966 = vunpack.c.h.b16 %v1877
        %v1967 = vunpack.c.l.b16 %v1878
        %v1968 = vunpack.c.h.b16 %v1878
        %v1969 = vunpack.c.l.b16 %v1879
        %v1970 = vunpack.c.h.b16 %v1879
        %v1971 = vunpack.c.l.b16 %v1880
        %v1972 = vunpack.c.h.b16 %v1880
        %v1973 = vunpack.c.l.b16 %v1881
        %v1974 = vunpack.c.h.b16 %v1881
        %v1975 = vunpack.c.l.b16 %v1882
        %v1976 = vunpack.c.h.b16 %v1882
        %v1977 = vunpack.c.l.b16 %v1883
        %v1978 = vunpack.c.h.b16 %v1883
        %v1979 = vunpack.c.l.b16 %v1884
        %v1980 = vunpack.c.h.b16 %v1884
        %v1981 = vpack.c.b16 %v1921, %v1917
        %v1982 = vpack.c.b16 %v1922, %v1918
        %v1983 = vpack.c.b16 %v1923, %v1919
        %v1984 = vpack.c.b16 %v1924, %v1920
        %v1985 = vpack.c.b16 %v1929, %v1925
        %v1986 = vpack.c.b16 %v1930, %v1926
        %v1987 = vpack.c.b16 %v1931, %v1927
        %v1988 = vpack.c.b16 %v1932, %v1928
        %v1989 = vpack.c.b16 %v1937, %v1933
        %v1990 = vpack.c.b16 %v1938, %v1934
        %v1991 = vpack.c.b16 %v1939, %v1935
        %v1992 = vpack.c.b16 %v1940, %v1936
        %v1993 = vpack.c.b16 %v1945, %v1941
        %v1994 = vpack.c.b16 %v1946, %v1942
        %v1995 = vpack.c.b16 %v1947, %v1943
        %v1996 = vpack.c.b16 %v1948, %v1944
        %v1997 = vpack.c.b16 %v1953, %v1949
        %v1998 = vpack.c.b16 %v1954, %v1950
        %v1999 = vpack.c.b16 %v1955, %v1951
        %v2000 = vpack.c.b16 %v1956, %v1952
        %v2001 = vpack.c.b16 %v1961, %v1957
        %v2002 = vpack.c.b16 %v1962, %v1958
        %v2003 = vpack.c.b16 %v1963, %v1959
        %v2004 = vpack.c.b16 %v1964, %v1960
        %v2005 = vpack.c.b16 %v1969, %v1965
        %v2006 = vpack.c.b16 %v1970, %v1966
        %v2007 = vpack.c.b16 %v1971, %v1967
        %v2008 = vpack.c.b16 %v1972, %v1968
        %v2009 = vpack.c.b16 %v1977, %v1973
        %v2010 = vpack.c.b16 %v1978, %v1974
        %v2011 = vpack.c.b16 %v1979, %v1975
        %v2012 = vpack.c.b16 %v1980, %v1976
        %2045 = vmatprep.subr.bf16.mxu0 %v1982
        %2046 = vmatpush1.bf16.msra.mxu0 %v1981
        %2047 = vmatprep.subr.bf16.mxu0 %v1986
        %2048 = vmatpush1.bf16.msra.mxu0 %v1985
        %2049 = vmatprep.subr.bf16.mxu0 %v1990
        %2050 = vmatpush1.bf16.msra.mxu0 %v1989
        %2051 = vmatprep.subr.bf16.mxu0 %v1994
        %2052 = vmatpush1.bf16.msra.mxu0 %v1993
        %2053 = vmatprep.subr.bf16.mxu0 %v1998
        %2054 = vmatpush1.bf16.msra.mxu0 %v1997
        %2055 = vmatprep.subr.bf16.mxu0 %v2002
        %2056 = vmatpush1.bf16.msra.mxu0 %v2001
        %2057 = vmatprep.subr.bf16.mxu0 %v2006
        %2058 = vmatpush1.bf16.msra.mxu0 %v2005
        %2059 = vmatprep.subr.bf16.mxu0 %v2010
        %2060 = vmatpush1.bf16.msra.mxu0 %v2009
        %2061 = vmatprep.subr.bf16.mxu0 0
        %2062 = vmatpush1.bf16.msra.mxu0 0
        %2063 = vmatprep.subr.bf16.mxu0 0
        %2064 = vmatpush1.bf16.msra.mxu0 0
        %2065 = vmatprep.subr.bf16.mxu0 0
        %2066 = vmatpush1.bf16.msra.mxu0 0
        %2067 = vmatprep.subr.bf16.mxu0 0
        %2068 = vmatpush1.bf16.msra.mxu0 0
        %2069 = vmatprep.subr.bf16.mxu0 0
        %2070 = vmatpush1.bf16.msra.mxu0 0
        %2071 = vmatprep.subr.bf16.mxu0 0
        %2072 = vmatpush1.bf16.msra.mxu0 0
        %2073 = vmatprep.subr.bf16.mxu0 0
        %2074 = vmatpush1.bf16.msra.mxu0 0
        %2075 = vmatprep.subr.bf16.mxu0 0
        %2076 = vmatpush1.bf16.msra.mxu0 0
        %2077 = vmatprep.mubr.bf16.mxu0 0
        %2078 = vmatmul.mubr.bf16.gmra.mrb[0].mxu0 %v1826
        %v2079 = vpop.f32.mrb[0].mxu0
        %v2080 = vadd.f32 0.0, %v2079
        %v2081 = vpop.f32.mrb[0].mxu0
        %v2082 = vadd.f32 0.0, %v2081
        %v2083 = vpop.f32.mrb[0].mxu0
        %v2084 = vadd.f32 0.0, %v2083
        %v2085 = vpop.f32.mrb[0].mxu0
        %v2086 = vadd.f32 0.0, %v2085
        %2087 = vdwg.mxu0
        %2088 = vmatprep.subr.bf16.mxu0 %v1984
        %2089 = vmatpush1.bf16.msra.mxu0 %v1983
        %2090 = vmatprep.subr.bf16.mxu0 %v1988
        %2091 = vmatpush1.bf16.msra.mxu0 %v1987
        %2092 = vmatprep.subr.bf16.mxu0 %v1992
        %2093 = vmatpush1.bf16.msra.mxu0 %v1991
        %2094 = vmatprep.subr.bf16.mxu0 %v1996
        %2095 = vmatpush1.bf16.msra.mxu0 %v1995
        %2096 = vmatprep.subr.bf16.mxu0 %v2000
        %2097 = vmatpush1.bf16.msra.mxu0 %v1999
        %2098 = vmatprep.subr.bf16.mxu0 %v2004
        %2099 = vmatpush1.bf16.msra.mxu0 %v2003
        %2100 = vmatprep.subr.bf16.mxu0 %v2008
        %2101 = vmatpush1.bf16.msra.mxu0 %v2007
        %2102 = vmatprep.subr.bf16.mxu0 %v2012
        %2103 = vmatpush1.bf16.msra.mxu0 %v2011
        %2104 = vmatprep.subr.bf16.mxu0 0
        %2105 = vmatpush1.bf16.msra.mxu0 0
        %2106 = vmatprep.subr.bf16.mxu0 0
        %2107 = vmatpush1.bf16.msra.mxu0 0
        %2108 = vmatprep.subr.bf16.mxu0 0
        %2109 = vmatpush1.bf16.msra.mxu0 0
        %2110 = vmatprep.subr.bf16.mxu0 0
        %2111 = vmatpush1.bf16.msra.mxu0 0
        %2112 = vmatprep.subr.bf16.mxu0 0
        %2113 = vmatpush1.bf16.msra.mxu0 0
        %2114 = vmatprep.subr.bf16.mxu0 0
        %2115 = vmatpush1.bf16.msra.mxu0 0
        %2116 = vmatprep.subr.bf16.mxu0 0
        %2117 = vmatpush1.bf16.msra.mxu0 0
        %2118 = vmatprep.subr.bf16.mxu0 0
        %2119 = vmatpush1.bf16.msra.mxu0 0
        %2120 = vmatprep.mubr.bf16.mxu0 0
        %2121 = vmatmul.mubr.bf16.gmra.mrb[0].mxu0 %v1826
        %v2122 = vpop.f32.mrb[0].mxu0
        %v2123 = vadd.f32 0.0, %v2122
        %v2124 = vpop.f32.mrb[0].mxu0
        %v2125 = vadd.f32 0.0, %v2124
        %v2126 = vpop.f32.mrb[0].mxu0
        %v2127 = vadd.f32 0.0, %v2126
        %v2128 = vpop.f32.mrb[0].mxu0
        %v2129 = vadd.f32 0.0, %v2128
        %2130 = vdwg.mxu0
        %v2131 = vadd.f32 %v1845, %v2080
        %v2132 = vadd.f32 %v1846, %v2082
        %v2133 = vadd.f32 %v1847, %v2123
        %v2134 = vadd.f32 %v1848, %v2125
        %v2135 = vadd.f32 %v1849, %v2084
        %v2136 = vadd.f32 %v1850, %v2086
        %v2137 = vadd.f32 %v1851, %v2127
        %v2138 = vadd.f32 %v1852, %v2129
        %v2139 = vxor.u32 %v2131, 2147483648
        %v2140 = vxor.u32 %v2135, 2147483648
        %v2141 = vmul.f32 %v2139, 1.442695
        %v2142 = vpow.pop %v2141
        %v2143 = vmul.f32 %v2140, 1.442695
        %v2144 = vpow.pop %v2143
        %v2145 = vadd.f32 %v2142, 1.0
        %v2146 = vadd.f32 %v2144, 1.0
        %v2147 = vrcp.pop %v2145
        %v2148 = vmul.f32 1.0, %v2147
        %v2149 = vrcp.pop %v2146
        %v2150 = vmul.f32 1.0, %v2149
        %v2151 = vxor.u32 %v2132, 2147483648
        %v2152 = vxor.u32 %v2136, 2147483648
        %v2153 = vmul.f32 %v2151, 1.442695
        %v2154 = vpow.pop %v2153
        %v2155 = vmul.f32 %v2152, 1.442695
        %v2156 = vpow.pop %v2155
        %v2157 = vadd.f32 %v2154, 1.0
        %v2158 = vadd.f32 %v2156, 1.0
        %v2159 = vrcp.pop %v2157
        %v2160 = vmul.f32 1.0, %v2159
        %v2161 = vrcp.pop %v2158
        %v2162 = vmul.f32 1.0, %v2161
        %v2163 = vtanh.pop %v2133
        %v2164 = vtanh.pop %v2137
        %v2165 = vxor.u32 %v2134, 2147483648
        %v2166 = vxor.u32 %v2138, 2147483648
        %v2167 = vmul.f32 %v2165, 1.442695
        %v2168 = vpow.pop %v2167
        %v2169 = vmul.f32 %v2166, 1.442695
        %v2170 = vpow.pop %v2169
        %v2171 = vadd.f32 %v2168, 1.0
        %v2172 = vadd.f32 %v2170, 1.0
        %v2173 = vrcp.pop %v2171
        %v2174 = vmul.f32 1.0, %v2173
        %v2175 = vrcp.pop %v2172
        %v2176 = vmul.f32 1.0, %v2175
        %v2177 = vmul.f32 %v2160, %v1820
        %v2178 = vmul.f32 %v2162, %v1821
        %v2179 = vmul.f32 %v2148, %v2163
        %v2180 = vmul.f32 %v2150, %v2164
        %v2181 = vadd.f32 %v2177, %v2179
        %v2182 = vadd.f32 %v2178, %v2180
        %v2183 = vtanh.pop %v2181
        %v2184 = vtanh.pop %v2182
        %v2185 = vmul.f32 %v2174, %v2183
        %v2186 = vmul.f32 %v2176, %v2184
        %v2187 = vpack.c.bf16 %v2186, %v2185
        %v2189 = vunpack.c.l.b16 %v2187
        %v2190 = vunpack.c.h.b16 %v2187
        %v2191 = vpack.c.b16 %v2189, %v2189
        %v2192 = vpack.c.b16 %v2190, %v2190
        %s2195 = smul.addr %s1840, 4
        %s2196 = scalar_lea.vmem %s274, %s2195 [#allocation5]
        %2197 = vst [vmem:[%s2196] sm:$0xf] %v2191
        %2198 = vst [vmem:[%s2196 + $0x4] sm:$0xf] %v2192
        %s2199 = scalar_select %p1110, 4, 3
        %s2200 = smul.u32 %s2199, 16
        %s2201 = sshra.s32 %s2200, 3
        %s2202 = sand.u32 %s2200, 7
        %s2203 = smul.u32 %s2201, 4
        %s2204 = smul.addr %s2203, 8
        %s2205 = scalar_lea.vmem [#allocation2], %s2204
        %v2206 = vld [vmem:[%s2205] sm:$0xff]
        %v2207 = vld [vmem:[%s2205 + $0x8] sm:$0xff]
        %v2208 = vld [vmem:[%s2205 + $0x10] sm:$0xff]
        %v2209 = vld [vmem:[%s2205 + $0x18] sm:$0xff]
        %v2210 = vld [vmem:[%s2205 + $0x20] sm:$0xff]
        %v2211 = vld [vmem:[%s2205 + $0x28] sm:$0xff]
        %v2212 = vld [vmem:[%s2205 + $0x30] sm:$0xff]
        %v2213 = vld [vmem:[%s2205 + $0x38] sm:$0xff]
        %v2214 = vld [vmem:[%s299] sm:$0xff]
        %v2215 = vld [vmem:[%s299 + $0x8] sm:$0xff]
        %v2216 = vld [vmem:[%s299 + $0x10] sm:$0xff]
        %v2217 = vld [vmem:[%s299 + $0x18] sm:$0xff]
        %v2218 = vld [vmem:[%s299 + $0x20] sm:$0xff]
        %v2219 = vld [vmem:[%s299 + $0x28] sm:$0xff]
        %v2220 = vld [vmem:[%s299 + $0x30] sm:$0xff]
        %v2221 = vld [vmem:[%s299 + $0x38] sm:$0xff]
        %v2222 = vld [vmem:[%s299 + $0x40] sm:$0xff]
        %v2223 = vld [vmem:[%s299 + $0x48] sm:$0xff]
        %v2224 = vld [vmem:[%s299 + $0x50] sm:$0xff]
        %v2225 = vld [vmem:[%s299 + $0x58] sm:$0xff]
        %v2226 = vld [vmem:[%s299 + $0x60] sm:$0xff]
        %v2227 = vld [vmem:[%s299 + $0x68] sm:$0xff]
        %v2228 = vld [vmem:[%s299 + $0x70] sm:$0xff]
        %v2229 = vld [vmem:[%s299 + $0x78] sm:$0xff]
        %v2230 = vld [vmem:[%s299 + $0x80] sm:$0xff]
        %v2231 = vld [vmem:[%s299 + $0x88] sm:$0xff]
        %v2232 = vld [vmem:[%s299 + $0x90] sm:$0xff]
        %v2233 = vld [vmem:[%s299 + $0x98] sm:$0xff]
        %v2234 = vld [vmem:[%s299 + $0xa0] sm:$0xff]
        %v2235 = vld [vmem:[%s299 + $0xa8] sm:$0xff]
        %v2236 = vld [vmem:[%s299 + $0xb0] sm:$0xff]
        %v2237 = vld [vmem:[%s299 + $0xb8] sm:$0xff]
        %v2238 = vld [vmem:[%s299 + $0xc0] sm:$0xff]
        %v2239 = vld [vmem:[%s299 + $0xc8] sm:$0xff]
        %v2240 = vld [vmem:[%s299 + $0xd0] sm:$0xff]
        %v2241 = vld [vmem:[%s299 + $0xd8] sm:$0xff]
        %v2242 = vld [vmem:[%s299 + $0xe0] sm:$0xff]
        %v2243 = vld [vmem:[%s299 + $0xe8] sm:$0xff]
        %v2244 = vld [vmem:[%s299 + $0xf0] sm:$0xff]
        %v2245 = vld [vmem:[%s299 + $0xf8] sm:$0xff]
        %v2278 = vunpack.c.l.b16 %v2214
        %v2279 = vunpack.c.h.b16 %v2214
        %v2280 = vunpack.c.l.b16 %v2215
        %v2281 = vunpack.c.h.b16 %v2215
        %v2282 = vunpack.c.l.b16 %v2216
        %v2283 = vunpack.c.h.b16 %v2216
        %v2284 = vunpack.c.l.b16 %v2217
        %v2285 = vunpack.c.h.b16 %v2217
        %v2286 = vunpack.c.l.b16 %v2218
        %v2287 = vunpack.c.h.b16 %v2218
        %v2288 = vunpack.c.l.b16 %v2219
        %v2289 = vunpack.c.h.b16 %v2219
        %v2290 = vunpack.c.l.b16 %v2220
        %v2291 = vunpack.c.h.b16 %v2220
        %v2292 = vunpack.c.l.b16 %v2221
        %v2293 = vunpack.c.h.b16 %v2221
        %v2294 = vunpack.c.l.b16 %v2222
        %v2295 = vunpack.c.h.b16 %v2222
        %v2296 = vunpack.c.l.b16 %v2223
        %v2297 = vunpack.c.h.b16 %v2223
        %v2298 = vunpack.c.l.b16 %v2224
        %v2299 = vunpack.c.h.b16 %v2224
        %v2300 = vunpack.c.l.b16 %v2225
        %v2301 = vunpack.c.h.b16 %v2225
        %v2302 = vunpack.c.l.b16 %v2226
        %v2303 = vunpack.c.h.b16 %v2226
        %v2304 = vunpack.c.l.b16 %v2227
        %v2305 = vunpack.c.h.b16 %v2227
        %v2306 = vunpack.c.l.b16 %v2228
        %v2307 = vunpack.c.h.b16 %v2228
        %v2308 = vunpack.c.l.b16 %v2229
        %v2309 = vunpack.c.h.b16 %v2229
        %v2310 = vunpack.c.l.b16 %v2230
        %v2311 = vunpack.c.h.b16 %v2230
        %v2312 = vunpack.c.l.b16 %v2231
        %v2313 = vunpack.c.h.b16 %v2231
        %v2314 = vunpack.c.l.b16 %v2232
        %v2315 = vunpack.c.h.b16 %v2232
        %v2316 = vunpack.c.l.b16 %v2233
        %v2317 = vunpack.c.h.b16 %v2233
        %v2318 = vunpack.c.l.b16 %v2234
        %v2319 = vunpack.c.h.b16 %v2234
        %v2320 = vunpack.c.l.b16 %v2235
        %v2321 = vunpack.c.h.b16 %v2235
        %v2322 = vunpack.c.l.b16 %v2236
        %v2323 = vunpack.c.h.b16 %v2236
        %v2324 = vunpack.c.l.b16 %v2237
        %v2325 = vunpack.c.h.b16 %v2237
        %v2326 = vunpack.c.l.b16 %v2238
        %v2327 = vunpack.c.h.b16 %v2238
        %v2328 = vunpack.c.l.b16 %v2239
        %v2329 = vunpack.c.h.b16 %v2239
        %v2330 = vunpack.c.l.b16 %v2240
        %v2331 = vunpack.c.h.b16 %v2240
        %v2332 = vunpack.c.l.b16 %v2241
        %v2333 = vunpack.c.h.b16 %v2241
        %v2334 = vunpack.c.l.b16 %v2242
        %v2335 = vunpack.c.h.b16 %v2242
        %v2336 = vunpack.c.l.b16 %v2243
        %v2337 = vunpack.c.h.b16 %v2243
        %v2338 = vunpack.c.l.b16 %v2244
        %v2339 = vunpack.c.h.b16 %v2244
        %v2340 = vunpack.c.l.b16 %v2245
        %v2341 = vunpack.c.h.b16 %v2245
        %v2342 = vpack.c.b16 %v2282, %v2278
        %v2343 = vpack.c.b16 %v2283, %v2279
        %v2344 = vpack.c.b16 %v2284, %v2280
        %v2345 = vpack.c.b16 %v2285, %v2281
        %v2346 = vpack.c.b16 %v2290, %v2286
        %v2347 = vpack.c.b16 %v2291, %v2287
        %v2348 = vpack.c.b16 %v2292, %v2288
        %v2349 = vpack.c.b16 %v2293, %v2289
        %v2350 = vpack.c.b16 %v2298, %v2294
        %v2351 = vpack.c.b16 %v2299, %v2295
        %v2352 = vpack.c.b16 %v2300, %v2296
        %v2353 = vpack.c.b16 %v2301, %v2297
        %v2354 = vpack.c.b16 %v2306, %v2302
        %v2355 = vpack.c.b16 %v2307, %v2303
        %v2356 = vpack.c.b16 %v2308, %v2304
        %v2357 = vpack.c.b16 %v2309, %v2305
        %v2358 = vpack.c.b16 %v2314, %v2310
        %v2359 = vpack.c.b16 %v2315, %v2311
        %v2360 = vpack.c.b16 %v2316, %v2312
        %v2361 = vpack.c.b16 %v2317, %v2313
        %v2362 = vpack.c.b16 %v2322, %v2318
        %v2363 = vpack.c.b16 %v2323, %v2319
        %v2364 = vpack.c.b16 %v2324, %v2320
        %v2365 = vpack.c.b16 %v2325, %v2321
        %v2366 = vpack.c.b16 %v2330, %v2326
        %v2367 = vpack.c.b16 %v2331, %v2327
        %v2368 = vpack.c.b16 %v2332, %v2328
        %v2369 = vpack.c.b16 %v2333, %v2329
        %v2370 = vpack.c.b16 %v2338, %v2334
        %v2371 = vpack.c.b16 %v2339, %v2335
        %v2372 = vpack.c.b16 %v2340, %v2336
        %v2373 = vpack.c.b16 %v2341, %v2337
        %2406 = vmatprep.subr.bf16.mxu0 %v2343
        %2407 = vmatpush1.bf16.msra.mxu0 %v2342
        %2408 = vmatprep.subr.bf16.mxu0 %v2347
        %2409 = vmatpush1.bf16.msra.mxu0 %v2346
        %2410 = vmatprep.subr.bf16.mxu0 %v2351
        %2411 = vmatpush1.bf16.msra.mxu0 %v2350
        %2412 = vmatprep.subr.bf16.mxu0 %v2355
        %2413 = vmatpush1.bf16.msra.mxu0 %v2354
        %2414 = vmatprep.subr.bf16.mxu0 %v2359
        %2415 = vmatpush1.bf16.msra.mxu0 %v2358
        %2416 = vmatprep.subr.bf16.mxu0 %v2363
        %2417 = vmatpush1.bf16.msra.mxu0 %v2362
        %2418 = vmatprep.subr.bf16.mxu0 %v2367
        %2419 = vmatpush1.bf16.msra.mxu0 %v2366
        %2420 = vmatprep.subr.bf16.mxu0 %v2371
        %2421 = vmatpush1.bf16.msra.mxu0 %v2370
        %2422 = vmatprep.subr.bf16.mxu0 0
        %2423 = vmatpush1.bf16.msra.mxu0 0
        %2424 = vmatprep.subr.bf16.mxu0 0
        %2425 = vmatpush1.bf16.msra.mxu0 0
        %2426 = vmatprep.subr.bf16.mxu0 0
        %2427 = vmatpush1.bf16.msra.mxu0 0
        %2428 = vmatprep.subr.bf16.mxu0 0
        %2429 = vmatpush1.bf16.msra.mxu0 0
        %2430 = vmatprep.subr.bf16.mxu0 0
        %2431 = vmatpush1.bf16.msra.mxu0 0
        %2432 = vmatprep.subr.bf16.mxu0 0
        %2433 = vmatpush1.bf16.msra.mxu0 0
        %2434 = vmatprep.subr.bf16.mxu0 0
        %2435 = vmatpush1.bf16.msra.mxu0 0
        %2436 = vmatprep.subr.bf16.mxu0 0
        %2437 = vmatpush1.bf16.msra.mxu0 0
        %2438 = vmatprep.mubr.bf16.mxu0 0
        %2439 = vmatmul.mubr.bf16.gmra.mrb[0].mxu0 %v2187
        %v2440 = vpop.f32.mrb[0].mxu0
        %v2441 = vadd.f32 0.0, %v2440
        %v2442 = vpop.f32.mrb[0].mxu0
        %v2443 = vadd.f32 0.0, %v2442
        %v2444 = vpop.f32.mrb[0].mxu0
        %v2445 = vadd.f32 0.0, %v2444
        %v2446 = vpop.f32.mrb[0].mxu0
        %v2447 = vadd.f32 0.0, %v2446
        %2448 = vdwg.mxu0
        %2449 = vmatprep.subr.bf16.mxu0 %v2345
        %2450 = vmatpush1.bf16.msra.mxu0 %v2344
        %2451 = vmatprep.subr.bf16.mxu0 %v2349
        %2452 = vmatpush1.bf16.msra.mxu0 %v2348
        %2453 = vmatprep.subr.bf16.mxu0 %v2353
        %2454 = vmatpush1.bf16.msra.mxu0 %v2352
        %2455 = vmatprep.subr.bf16.mxu0 %v2357
        %2456 = vmatpush1.bf16.msra.mxu0 %v2356
        %2457 = vmatprep.subr.bf16.mxu0 %v2361
        %2458 = vmatpush1.bf16.msra.mxu0 %v2360
        %2459 = vmatprep.subr.bf16.mxu0 %v2365
        %2460 = vmatpush1.bf16.msra.mxu0 %v2364
        %2461 = vmatprep.subr.bf16.mxu0 %v2369
        %2462 = vmatpush1.bf16.msra.mxu0 %v2368
        %2463 = vmatprep.subr.bf16.mxu0 %v2373
        %2464 = vmatpush1.bf16.msra.mxu0 %v2372
        %2465 = vmatprep.subr.bf16.mxu0 0
        %2466 = vmatpush1.bf16.msra.mxu0 0
        %2467 = vmatprep.subr.bf16.mxu0 0
        %2468 = vmatpush1.bf16.msra.mxu0 0
        %2469 = vmatprep.subr.bf16.mxu0 0
        %2470 = vmatpush1.bf16.msra.mxu0 0
        %2471 = vmatprep.subr.bf16.mxu0 0
        %2472 = vmatpush1.bf16.msra.mxu0 0
        %2473 = vmatprep.subr.bf16.mxu0 0
        %2474 = vmatpush1.bf16.msra.mxu0 0
        %2475 = vmatprep.subr.bf16.mxu0 0
        %2476 = vmatpush1.bf16.msra.mxu0 0
        %2477 = vmatprep.subr.bf16.mxu0 0
        %2478 = vmatpush1.bf16.msra.mxu0 0
        %2479 = vmatprep.subr.bf16.mxu0 0
        %2480 = vmatpush1.bf16.msra.mxu0 0
        %2481 = vmatprep.mubr.bf16.mxu0 0
        %2482 = vmatmul.mubr.bf16.gmra.mrb[0].mxu0 %v2187
        %v2483 = vpop.f32.mrb[0].mxu0
        %v2484 = vadd.f32 0.0, %v2483
        %v2485 = vpop.f32.mrb[0].mxu0
        %v2486 = vadd.f32 0.0, %v2485
        %v2487 = vpop.f32.mrb[0].mxu0
        %v2488 = vadd.f32 0.0, %v2487
        %v2489 = vpop.f32.mrb[0].mxu0
        %v2490 = vadd.f32 0.0, %v2489
        %2491 = vdwg.mxu0
        %v2492 = vadd.f32 %v2206, %v2441
        %v2493 = vadd.f32 %v2207, %v2443
        %v2494 = vadd.f32 %v2208, %v2484
        %v2495 = vadd.f32 %v2209, %v2486
        %v2496 = vadd.f32 %v2210, %v2445
        %v2497 = vadd.f32 %v2211, %v2447
        %v2498 = vadd.f32 %v2212, %v2488
        %v2499 = vadd.f32 %v2213, %v2490
        %v2500 = vxor.u32 %v2492, 2147483648
        %v2501 = vxor.u32 %v2496, 2147483648
        %v2502 = vmul.f32 %v2500, 1.442695
        %v2503 = vpow.pop %v2502
        %v2504 = vmul.f32 %v2501, 1.442695
        %v2505 = vpow.pop %v2504
        %v2506 = vadd.f32 %v2503, 1.0
        %v2507 = vadd.f32 %v2505, 1.0
        %v2508 = vrcp.pop %v2506
        %v2509 = vmul.f32 1.0, %v2508
        %v2510 = vrcp.pop %v2507
        %v2511 = vmul.f32 1.0, %v2510
        %v2512 = vxor.u32 %v2493, 2147483648
        %v2513 = vxor.u32 %v2497, 2147483648
        %v2514 = vmul.f32 %v2512, 1.442695
        %v2515 = vpow.pop %v2514
        %v2516 = vmul.f32 %v2513, 1.442695
        %v2517 = vpow.pop %v2516
        %v2518 = vadd.f32 %v2515, 1.0
        %v2519 = vadd.f32 %v2517, 1.0
        %v2520 = vrcp.pop %v2518
        %v2521 = vmul.f32 1.0, %v2520
        %v2522 = vrcp.pop %v2519
        %v2523 = vmul.f32 1.0, %v2522
        %v2524 = vtanh.pop %v2494
        %v2525 = vtanh.pop %v2498
        %v2526 = vxor.u32 %v2495, 2147483648
        %v2527 = vxor.u32 %v2499, 2147483648
        %v2528 = vmul.f32 %v2526, 1.442695
        %v2529 = vpow.pop %v2528
        %v2530 = vmul.f32 %v2527, 1.442695
        %v2531 = vpow.pop %v2530
        %v2532 = vadd.f32 %v2529, 1.0
        %v2533 = vadd.f32 %v2531, 1.0
        %v2534 = vrcp.pop %v2532
        %v2535 = vmul.f32 1.0, %v2534
        %v2536 = vrcp.pop %v2533
        %v2537 = vmul.f32 1.0, %v2536
        %v2538 = vmul.f32 %v2521, %v2181
        %v2539 = vmul.f32 %v2523, %v2182
        %v2540 = vmul.f32 %v2509, %v2524
        %v2541 = vmul.f32 %v2511, %v2525
        %v2542 = vadd.f32 %v2538, %v2540
        %v2543 = vadd.f32 %v2539, %v2541
        %v2544 = vtanh.pop %v2542
        %v2545 = vtanh.pop %v2543
        %v2546 = vmul.f32 %v2535, %v2544
        %v2547 = vmul.f32 %v2537, %v2545
        %v2548 = vpack.c.bf16 %v2547, %v2546
        %v2550 = vunpack.c.l.b16 %v2548
        %v2551 = vunpack.c.h.b16 %v2548
        %v2552 = vpack.c.b16 %v2550, %v2550
        %v2553 = vpack.c.b16 %v2551, %v2551
        %s2556 = smul.addr %s2201, 4
        %s2557 = scalar_lea.vmem %s274, %s2556 [#allocation5]
        %2558 = vst [vmem:[%s2557] sm:$0xf] %v2552
        %2559 = vst [vmem:[%s2557 + $0x4] sm:$0xf] %v2553
        %s2560 = scalar_select %p1110, 3, 4
        %s2561 = smul.u32 %s2560, 16
        %s2562 = sshra.s32 %s2561, 3
        %s2563 = sand.u32 %s2561, 7
        %s2564 = smul.u32 %s2562, 4
        %s2565 = smul.addr %s2564, 8
        %s2566 = scalar_lea.vmem [#allocation2], %s2565
        %v2567 = vld [vmem:[%s2566] sm:$0xff]
        %v2568 = vld [vmem:[%s2566 + $0x8] sm:$0xff]
        %v2569 = vld [vmem:[%s2566 + $0x10] sm:$0xff]
        %v2570 = vld [vmem:[%s2566 + $0x18] sm:$0xff]
        %v2571 = vld [vmem:[%s2566 + $0x20] sm:$0xff]
        %v2572 = vld [vmem:[%s2566 + $0x28] sm:$0xff]
        %v2573 = vld [vmem:[%s2566 + $0x30] sm:$0xff]
        %v2574 = vld [vmem:[%s2566 + $0x38] sm:$0xff]
        %v2575 = vld [vmem:[%s299] sm:$0xff]
        %v2576 = vld [vmem:[%s299 + $0x8] sm:$0xff]
        %v2577 = vld [vmem:[%s299 + $0x10] sm:$0xff]
        %v2578 = vld [vmem:[%s299 + $0x18] sm:$0xff]
        %v2579 = vld [vmem:[%s299 + $0x20] sm:$0xff]
        %v2580 = vld [vmem:[%s299 + $0x28] sm:$0xff]
        %v2581 = vld [vmem:[%s299 + $0x30] sm:$0xff]
        %v2582 = vld [vmem:[%s299 + $0x38] sm:$0xff]
        %v2583 = vld [vmem:[%s299 + $0x40] sm:$0xff]
        %v2584 = vld [vmem:[%s299 + $0x48] sm:$0xff]
        %v2585 = vld [vmem:[%s299 + $0x50] sm:$0xff]
        %v2586 = vld [vmem:[%s299 + $0x58] sm:$0xff]
        %v2587 = vld [vmem:[%s299 + $0x60] sm:$0xff]
        %v2588 = vld [vmem:[%s299 + $0x68] sm:$0xff]
        %v2589 = vld [vmem:[%s299 + $0x70] sm:$0xff]
        %v2590 = vld [vmem:[%s299 + $0x78] sm:$0xff]
        %v2591 = vld [vmem:[%s299 + $0x80] sm:$0xff]
        %v2592 = vld [vmem:[%s299 + $0x88] sm:$0xff]
        %v2593 = vld [vmem:[%s299 + $0x90] sm:$0xff]
        %v2594 = vld [vmem:[%s299 + $0x98] sm:$0xff]
        %v2595 = vld [vmem:[%s299 + $0xa0] sm:$0xff]
        %v2596 = vld [vmem:[%s299 + $0xa8] sm:$0xff]
        %v2597 = vld [vmem:[%s299 + $0xb0] sm:$0xff]
        %v2598 = vld [vmem:[%s299 + $0xb8] sm:$0xff]
        %v2599 = vld [vmem:[%s299 + $0xc0] sm:$0xff]
        %v2600 = vld [vmem:[%s299 + $0xc8] sm:$0xff]
        %v2601 = vld [vmem:[%s299 + $0xd0] sm:$0xff]
        %v2602 = vld [vmem:[%s299 + $0xd8] sm:$0xff]
        %v2603 = vld [vmem:[%s299 + $0xe0] sm:$0xff]
        %v2604 = vld [vmem:[%s299 + $0xe8] sm:$0xff]
        %v2605 = vld [vmem:[%s299 + $0xf0] sm:$0xff]
        %v2606 = vld [vmem:[%s299 + $0xf8] sm:$0xff]
        %v2639 = vunpack.c.l.b16 %v2575
        %v2640 = vunpack.c.h.b16 %v2575
        %v2641 = vunpack.c.l.b16 %v2576
        %v2642 = vunpack.c.h.b16 %v2576
        %v2643 = vunpack.c.l.b16 %v2577
        %v2644 = vunpack.c.h.b16 %v2577
        %v2645 = vunpack.c.l.b16 %v2578
        %v2646 = vunpack.c.h.b16 %v2578
        %v2647 = vunpack.c.l.b16 %v2579
        %v2648 = vunpack.c.h.b16 %v2579
        %v2649 = vunpack.c.l.b16 %v2580
        %v2650 = vunpack.c.h.b16 %v2580
        %v2651 = vunpack.c.l.b16 %v2581
        %v2652 = vunpack.c.h.b16 %v2581
        %v2653 = vunpack.c.l.b16 %v2582
        %v2654 = vunpack.c.h.b16 %v2582
        %v2655 = vunpack.c.l.b16 %v2583
        %v2656 = vunpack.c.h.b16 %v2583
        %v2657 = vunpack.c.l.b16 %v2584
        %v2658 = vunpack.c.h.b16 %v2584
        %v2659 = vunpack.c.l.b16 %v2585
        %v2660 = vunpack.c.h.b16 %v2585
        %v2661 = vunpack.c.l.b16 %v2586
        %v2662 = vunpack.c.h.b16 %v2586
        %v2663 = vunpack.c.l.b16 %v2587
        %v2664 = vunpack.c.h.b16 %v2587
        %v2665 = vunpack.c.l.b16 %v2588
        %v2666 = vunpack.c.h.b16 %v2588
        %v2667 = vunpack.c.l.b16 %v2589
        %v2668 = vunpack.c.h.b16 %v2589
        %v2669 = vunpack.c.l.b16 %v2590
        %v2670 = vunpack.c.h.b16 %v2590
        %v2671 = vunpack.c.l.b16 %v2591
        %v2672 = vunpack.c.h.b16 %v2591
        %v2673 = vunpack.c.l.b16 %v2592
        %v2674 = vunpack.c.h.b16 %v2592
        %v2675 = vunpack.c.l.b16 %v2593
        %v2676 = vunpack.c.h.b16 %v2593
        %v2677 = vunpack.c.l.b16 %v2594
        %v2678 = vunpack.c.h.b16 %v2594
        %v2679 = vunpack.c.l.b16 %v2595
        %v2680 = vunpack.c.h.b16 %v2595
        %v2681 = vunpack.c.l.b16 %v2596
        %v2682 = vunpack.c.h.b16 %v2596
        %v2683 = vunpack.c.l.b16 %v2597
        %v2684 = vunpack.c.h.b16 %v2597
        %v2685 = vunpack.c.l.b16 %v2598
        %v2686 = vunpack.c.h.b16 %v2598
        %v2687 = vunpack.c.l.b16 %v2599
        %v2688 = vunpack.c.h.b16 %v2599
        %v2689 = vunpack.c.l.b16 %v2600
        %v2690 = vunpack.c.h.b16 %v2600
        %v2691 = vunpack.c.l.b16 %v2601
        %v2692 = vunpack.c.h.b16 %v2601
        %v2693 = vunpack.c.l.b16 %v2602
        %v2694 = vunpack.c.h.b16 %v2602
        %v2695 = vunpack.c.l.b16 %v2603
        %v2696 = vunpack.c.h.b16 %v2603
        %v2697 = vunpack.c.l.b16 %v2604
        %v2698 = vunpack.c.h.b16 %v2604
        %v2699 = vunpack.c.l.b16 %v2605
        %v2700 = vunpack.c.h.b16 %v2605
        %v2701 = vunpack.c.l.b16 %v2606
        %v2702 = vunpack.c.h.b16 %v2606
        %v2703 = vpack.c.b16 %v2643, %v2639
        %v2704 = vpack.c.b16 %v2644, %v2640
        %v2705 = vpack.c.b16 %v2645, %v2641
        %v2706 = vpack.c.b16 %v2646, %v2642
        %v2707 = vpack.c.b16 %v2651, %v2647
        %v2708 = vpack.c.b16 %v2652, %v2648
        %v2709 = vpack.c.b16 %v2653, %v2649
        %v2710 = vpack.c.b16 %v2654, %v2650
        %v2711 = vpack.c.b16 %v2659, %v2655
        %v2712 = vpack.c.b16 %v2660, %v2656
        %v2713 = vpack.c.b16 %v2661, %v2657
        %v2714 = vpack.c.b16 %v2662, %v2658
        %v2715 = vpack.c.b16 %v2667, %v2663
        %v2716 = vpack.c.b16 %v2668, %v2664
        %v2717 = vpack.c.b16 %v2669, %v2665
        %v2718 = vpack.c.b16 %v2670, %v2666
        %v2719 = vpack.c.b16 %v2675, %v2671
        %v2720 = vpack.c.b16 %v2676, %v2672
        %v2721 = vpack.c.b16 %v2677, %v2673
        %v2722 = vpack.c.b16 %v2678, %v2674
        %v2723 = vpack.c.b16 %v2683, %v2679
        %v2724 = vpack.c.b16 %v2684, %v2680
        %v2725 = vpack.c.b16 %v2685, %v2681
        %v2726 = vpack.c.b16 %v2686, %v2682
        %v2727 = vpack.c.b16 %v2691, %v2687
        %v2728 = vpack.c.b16 %v2692, %v2688
        %v2729 = vpack.c.b16 %v2693, %v2689
        %v2730 = vpack.c.b16 %v2694, %v2690
        %v2731 = vpack.c.b16 %v2699, %v2695
        %v2732 = vpack.c.b16 %v2700, %v2696
        %v2733 = vpack.c.b16 %v2701, %v2697
        %v2734 = vpack.c.b16 %v2702, %v2698
        %2767 = vmatprep.subr.bf16.mxu0 %v2704
        %2768 = vmatpush1.bf16.msra.mxu0 %v2703
        %2769 = vmatprep.subr.bf16.mxu0 %v2708
        %2770 = vmatpush1.bf16.msra.mxu0 %v2707
        %2771 = vmatprep.subr.bf16.mxu0 %v2712
        %2772 = vmatpush1.bf16.msra.mxu0 %v2711
        %2773 = vmatprep.subr.bf16.mxu0 %v2716
        %2774 = vmatpush1.bf16.msra.mxu0 %v2715
        %2775 = vmatprep.subr.bf16.mxu0 %v2720
        %2776 = vmatpush1.bf16.msra.mxu0 %v2719
        %2777 = vmatprep.subr.bf16.mxu0 %v2724
        %2778 = vmatpush1.bf16.msra.mxu0 %v2723
        %2779 = vmatprep.subr.bf16.mxu0 %v2728
        %2780 = vmatpush1.bf16.msra.mxu0 %v2727
        %2781 = vmatprep.subr.bf16.mxu0 %v2732
        %2782 = vmatpush1.bf16.msra.mxu0 %v2731
        %2783 = vmatprep.subr.bf16.mxu0 0
        %2784 = vmatpush1.bf16.msra.mxu0 0
        %2785 = vmatprep.subr.bf16.mxu0 0
        %2786 = vmatpush1.bf16.msra.mxu0 0
        %2787 = vmatprep.subr.bf16.mxu0 0
        %2788 = vmatpush1.bf16.msra.mxu0 0
        %2789 = vmatprep.subr.bf16.mxu0 0
        %2790 = vmatpush1.bf16.msra.mxu0 0
        %2791 = vmatprep.subr.bf16.mxu0 0
        %2792 = vmatpush1.bf16.msra.mxu0 0
        %2793 = vmatprep.subr.bf16.mxu0 0
        %2794 = vmatpush1.bf16.msra.mxu0 0
        %2795 = vmatprep.subr.bf16.mxu0 0
        %2796 = vmatpush1.bf16.msra.mxu0 0
        %2797 = vmatprep.subr.bf16.mxu0 0
        %2798 = vmatpush1.bf16.msra.mxu0 0
        %2799 = vmatprep.mubr.bf16.mxu0 0
        %2800 = vmatmul.mubr.bf16.gmra.mrb[0].mxu0 %v2548
        %v2801 = vpop.f32.mrb[0].mxu0
        %v2802 = vadd.f32 0.0, %v2801
        %v2803 = vpop.f32.mrb[0].mxu0
        %v2804 = vadd.f32 0.0, %v2803
        %v2805 = vpop.f32.mrb[0].mxu0
        %v2806 = vadd.f32 0.0, %v2805
        %v2807 = vpop.f32.mrb[0].mxu0
        %v2808 = vadd.f32 0.0, %v2807
        %2809 = vdwg.mxu0
        %2810 = vmatprep.subr.bf16.mxu0 %v2706
        %2811 = vmatpush1.bf16.msra.mxu0 %v2705
        %2812 = vmatprep.subr.bf16.mxu0 %v2710
        %2813 = vmatpush1.bf16.msra.mxu0 %v2709
        %2814 = vmatprep.subr.bf16.mxu0 %v2714
        %2815 = vmatpush1.bf16.msra.mxu0 %v2713
        %2816 = vmatprep.subr.bf16.mxu0 %v2718
        %2817 = vmatpush1.bf16.msra.mxu0 %v2717
        %2818 = vmatprep.subr.bf16.mxu0 %v2722
        %2819 = vmatpush1.bf16.msra.mxu0 %v2721
        %2820 = vmatprep.subr.bf16.mxu0 %v2726
        %2821 = vmatpush1.bf16.msra.mxu0 %v2725
        %2822 = vmatprep.subr.bf16.mxu0 %v2730
        %2823 = vmatpush1.bf16.msra.mxu0 %v2729
        %2824 = vmatprep.subr.bf16.mxu0 %v2734
        %2825 = vmatpush1.bf16.msra.mxu0 %v2733
        %2826 = vmatprep.subr.bf16.mxu0 0
        %2827 = vmatpush1.bf16.msra.mxu0 0
        %2828 = vmatprep.subr.bf16.mxu0 0
        %2829 = vmatpush1.bf16.msra.mxu0 0
        %2830 = vmatprep.subr.bf16.mxu0 0
        %2831 = vmatpush1.bf16.msra.mxu0 0
        %2832 = vmatprep.subr.bf16.mxu0 0
        %2833 = vmatpush1.bf16.msra.mxu0 0
        %2834 = vmatprep.subr.bf16.mxu0 0
        %2835 = vmatpush1.bf16.msra.mxu0 0
        %2836 = vmatprep.subr.bf16.mxu0 0
        %2837 = vmatpush1.bf16.msra.mxu0 0
        %2838 = vmatprep.subr.bf16.mxu0 0
        %2839 = vmatpush1.bf16.msra.mxu0 0
        %2840 = vmatprep.subr.bf16.mxu0 0
        %2841 = vmatpush1.bf16.msra.mxu0 0
        %2842 = vmatprep.mubr.bf16.mxu0 0
        %2843 = vmatmul.mubr.bf16.gmra.mrb[0].mxu0 %v2548
        %v2844 = vpop.f32.mrb[0].mxu0
        %v2845 = vadd.f32 0.0, %v2844
        %v2846 = vpop.f32.mrb[0].mxu0
        %v2847 = vadd.f32 0.0, %v2846
        %v2848 = vpop.f32.mrb[0].mxu0
        %v2849 = vadd.f32 0.0, %v2848
        %v2850 = vpop.f32.mrb[0].mxu0
        %v2851 = vadd.f32 0.0, %v2850
        %2852 = vdwg.mxu0
        %v2853 = vadd.f32 %v2567, %v2802
        %v2854 = vadd.f32 %v2568, %v2804
        %v2855 = vadd.f32 %v2569, %v2845
        %v2856 = vadd.f32 %v2570, %v2847
        %v2857 = vadd.f32 %v2571, %v2806
        %v2858 = vadd.f32 %v2572, %v2808
        %v2859 = vadd.f32 %v2573, %v2849
        %v2860 = vadd.f32 %v2574, %v2851
        %v2861 = vxor.u32 %v2853, 2147483648
        %v2862 = vxor.u32 %v2857, 2147483648
        %v2863 = vmul.f32 %v2861, 1.442695
        %v2864 = vpow.pop %v2863
        %v2865 = vmul.f32 %v2862, 1.442695
        %v2866 = vpow.pop %v2865
        %v2867 = vadd.f32 %v2864, 1.0
        %v2868 = vadd.f32 %v2866, 1.0
        %v2869 = vrcp.pop %v2867
        %v2870 = vmul.f32 1.0, %v2869
        %v2871 = vrcp.pop %v2868
        %v2872 = vmul.f32 1.0, %v2871
        %v2873 = vxor.u32 %v2854, 2147483648
        %v2874 = vxor.u32 %v2858, 2147483648
        %v2875 = vmul.f32 %v2873, 1.442695
        %v2876 = vpow.pop %v2875
        %v2877 = vmul.f32 %v2874, 1.442695
        %v2878 = vpow.pop %v2877
        %v2879 = vadd.f32 %v2876, 1.0
        %v2880 = vadd.f32 %v2878, 1.0
        %v2881 = vrcp.pop %v2879
        %v2882 = vmul.f32 1.0, %v2881
        %v2883 = vrcp.pop %v2880
        %v2884 = vmul.f32 1.0, %v2883
        %v2885 = vtanh.pop %v2855
        %v2886 = vtanh.pop %v2859
        %v2887 = vxor.u32 %v2856, 2147483648
        %v2888 = vxor.u32 %v2860, 2147483648
        %v2889 = vmul.f32 %v2887, 1.442695
        %v2890 = vpow.pop %v2889
        %v2891 = vmul.f32 %v2888, 1.442695
        %v2892 = vpow.pop %v2891
        %v2893 = vadd.f32 %v2890, 1.0
        %v2894 = vadd.f32 %v2892, 1.0
        %v2895 = vrcp.pop %v2893
        %v2896 = vmul.f32 1.0, %v2895
        %v2897 = vrcp.pop %v2894
        %v2898 = vmul.f32 1.0, %v2897
        %v2899 = vmul.f32 %v2882, %v2542
        %v2900 = vmul.f32 %v2884, %v2543
        %v2901 = vmul.f32 %v2870, %v2885
        %v2902 = vmul.f32 %v2872, %v2886
        %v2903 = vadd.f32 %v2899, %v2901
        %v2904 = vadd.f32 %v2900, %v2902
        %v2905 = vtanh.pop %v2903
        %v2906 = vtanh.pop %v2904
        %v2907 = vmul.f32 %v2896, %v2905
        %v2908 = vmul.f32 %v2898, %v2906
        %v2909 = vpack.c.bf16 %v2908, %v2907
        %v2911 = vunpack.c.l.b16 %v2909
        %v2912 = vunpack.c.h.b16 %v2909
        %v2913 = vpack.c.b16 %v2911, %v2911
        %v2914 = vpack.c.b16 %v2912, %v2912
        %s2917 = smul.addr %s2562, 4
        %s2918 = scalar_lea.vmem %s274, %s2917 [#allocation5]
        %2919 = vst [vmem:[%s2918] sm:$0xf] %v2913
        %2920 = vst [vmem:[%s2918 + $0x4] sm:$0xf] %v2914
        %s2921 = scalar_select %p1110, 2, 5
        %s2922 = smul.u32 %s2921, 16
        %s2923 = sshra.s32 %s2922, 3
        %s2924 = sand.u32 %s2922, 7
        %s2925 = smul.u32 %s2923, 4
        %s2926 = smul.addr %s2925, 8
        %s2927 = scalar_lea.vmem [#allocation2], %s2926
        %v2928 = vld [vmem:[%s2927] sm:$0xff]
        %v2929 = vld [vmem:[%s2927 + $0x8] sm:$0xff]
        %v2930 = vld [vmem:[%s2927 + $0x10] sm:$0xff]
        %v2931 = vld [vmem:[%s2927 + $0x18] sm:$0xff]
        %v2932 = vld [vmem:[%s2927 + $0x20] sm:$0xff]
        %v2933 = vld [vmem:[%s2927 + $0x28] sm:$0xff]
        %v2934 = vld [vmem:[%s2927 + $0x30] sm:$0xff]
        %v2935 = vld [vmem:[%s2927 + $0x38] sm:$0xff]
        %v2936 = vld [vmem:[%s299] sm:$0xff]
        %v2937 = vld [vmem:[%s299 + $0x8] sm:$0xff]
        %v2938 = vld [vmem:[%s299 + $0x10] sm:$0xff]
        %v2939 = vld [vmem:[%s299 + $0x18] sm:$0xff]
        %v2940 = vld [vmem:[%s299 + $0x20] sm:$0xff]
        %v2941 = vld [vmem:[%s299 + $0x28] sm:$0xff]
        %v2942 = vld [vmem:[%s299 + $0x30] sm:$0xff]
        %v2943 = vld [vmem:[%s299 + $0x38] sm:$0xff]
        %v2944 = vld [vmem:[%s299 + $0x40] sm:$0xff]
        %v2945 = vld [vmem:[%s299 + $0x48] sm:$0xff]
        %v2946 = vld [vmem:[%s299 + $0x50] sm:$0xff]
        %v2947 = vld [vmem:[%s299 + $0x58] sm:$0xff]
        %v2948 = vld [vmem:[%s299 + $0x60] sm:$0xff]
        %v2949 = vld [vmem:[%s299 + $0x68] sm:$0xff]
        %v2950 = vld [vmem:[%s299 + $0x70] sm:$0xff]
        %v2951 = vld [vmem:[%s299 + $0x78] sm:$0xff]
        %v2952 = vld [vmem:[%s299 + $0x80] sm:$0xff]
        %v2953 = vld [vmem:[%s299 + $0x88] sm:$0xff]
        %v2954 = vld [vmem:[%s299 + $0x90] sm:$0xff]
        %v2955 = vld [vmem:[%s299 + $0x98] sm:$0xff]
        %v2956 = vld [vmem:[%s299 + $0xa0] sm:$0xff]
        %v2957 = vld [vmem:[%s299 + $0xa8] sm:$0xff]
        %v2958 = vld [vmem:[%s299 + $0xb0] sm:$0xff]
        %v2959 = vld [vmem:[%s299 + $0xb8] sm:$0xff]
        %v2960 = vld [vmem:[%s299 + $0xc0] sm:$0xff]
        %v2961 = vld [vmem:[%s299 + $0xc8] sm:$0xff]
        %v2962 = vld [vmem:[%s299 + $0xd0] sm:$0xff]
        %v2963 = vld [vmem:[%s299 + $0xd8] sm:$0xff]
        %v2964 = vld [vmem:[%s299 + $0xe0] sm:$0xff]
        %v2965 = vld [vmem:[%s299 + $0xe8] sm:$0xff]
        %v2966 = vld [vmem:[%s299 + $0xf0] sm:$0xff]
        %v2967 = vld [vmem:[%s299 + $0xf8] sm:$0xff]
        %v3000 = vunpack.c.l.b16 %v2936
        %v3001 = vunpack.c.h.b16 %v2936
        %v3002 = vunpack.c.l.b16 %v2937
        %v3003 = vunpack.c.h.b16 %v2937
        %v3004 = vunpack.c.l.b16 %v2938
        %v3005 = vunpack.c.h.b16 %v2938
        %v3006 = vunpack.c.l.b16 %v2939
        %v3007 = vunpack.c.h.b16 %v2939
        %v3008 = vunpack.c.l.b16 %v2940
        %v3009 = vunpack.c.h.b16 %v2940
        %v3010 = vunpack.c.l.b16 %v2941
        %v3011 = vunpack.c.h.b16 %v2941
        %v3012 = vunpack.c.l.b16 %v2942
        %v3013 = vunpack.c.h.b16 %v2942
        %v3014 = vunpack.c.l.b16 %v2943
        %v3015 = vunpack.c.h.b16 %v2943
        %v3016 = vunpack.c.l.b16 %v2944
        %v3017 = vunpack.c.h.b16 %v2944
        %v3018 = vunpack.c.l.b16 %v2945
        %v3019 = vunpack.c.h.b16 %v2945
        %v3020 = vunpack.c.l.b16 %v2946
        %v3021 = vunpack.c.h.b16 %v2946
        %v3022 = vunpack.c.l.b16 %v2947
        %v3023 = vunpack.c.h.b16 %v2947
        %v3024 = vunpack.c.l.b16 %v2948
        %v3025 = vunpack.c.h.b16 %v2948
        %v3026 = vunpack.c.l.b16 %v2949
        %v3027 = vunpack.c.h.b16 %v2949
        %v3028 = vunpack.c.l.b16 %v2950
        %v3029 = vunpack.c.h.b16 %v2950
        %v3030 = vunpack.c.l.b16 %v2951
        %v3031 = vunpack.c.h.b16 %v2951
        %v3032 = vunpack.c.l.b16 %v2952
        %v3033 = vunpack.c.h.b16 %v2952
        %v3034 = vunpack.c.l.b16 %v2953
        %v3035 = vunpack.c.h.b16 %v2953
        %v3036 = vunpack.c.l.b16 %v2954
        %v3037 = vunpack.c.h.b16 %v2954
        %v3038 = vunpack.c.l.b16 %v2955
        %v3039 = vunpack.c.h.b16 %v2955
        %v3040 = vunpack.c.l.b16 %v2956
        %v3041 = vunpack.c.h.b16 %v2956
        %v3042 = vunpack.c.l.b16 %v2957
        %v3043 = vunpack.c.h.b16 %v2957
        %v3044 = vunpack.c.l.b16 %v2958
        %v3045 = vunpack.c.h.b16 %v2958
        %v3046 = vunpack.c.l.b16 %v2959
        %v3047 = vunpack.c.h.b16 %v2959
        %v3048 = vunpack.c.l.b16 %v2960
        %v3049 = vunpack.c.h.b16 %v2960
        %v3050 = vunpack.c.l.b16 %v2961
        %v3051 = vunpack.c.h.b16 %v2961
        %v3052 = vunpack.c.l.b16 %v2962
        %v3053 = vunpack.c.h.b16 %v2962
        %v3054 = vunpack.c.l.b16 %v2963
        %v3055 = vunpack.c.h.b16 %v2963
        %v3056 = vunpack.c.l.b16 %v2964
        %v3057 = vunpack.c.h.b16 %v2964
        %v3058 = vunpack.c.l.b16 %v2965
        %v3059 = vunpack.c.h.b16 %v2965
        %v3060 = vunpack.c.l.b16 %v2966
        %v3061 = vunpack.c.h.b16 %v2966
        %v3062 = vunpack.c.l.b16 %v2967
        %v3063 = vunpack.c.h.b16 %v2967
        %v3064 = vpack.c.b16 %v3004, %v3000
        %v3065 = vpack.c.b16 %v3005, %v3001
        %v3066 = vpack.c.b16 %v3006, %v3002
        %v3067 = vpack.c.b16 %v3007, %v3003
        %v3068 = vpack.c.b16 %v3012, %v3008
        %v3069 = vpack.c.b16 %v3013, %v3009
        %v3070 = vpack.c.b16 %v3014, %v3010
        %v3071 = vpack.c.b16 %v3015, %v3011
        %v3072 = vpack.c.b16 %v3020, %v3016
        %v3073 = vpack.c.b16 %v3021, %v3017
        %v3074 = vpack.c.b16 %v3022, %v3018
        %v3075 = vpack.c.b16 %v3023, %v3019
        %v3076 = vpack.c.b16 %v3028, %v3024
        %v3077 = vpack.c.b16 %v3029, %v3025
        %v3078 = vpack.c.b16 %v3030, %v3026
        %v3079 = vpack.c.b16 %v3031, %v3027
        %v3080 = vpack.c.b16 %v3036, %v3032
        %v3081 = vpack.c.b16 %v3037, %v3033
        %v3082 = vpack.c.b16 %v3038, %v3034
        %v3083 = vpack.c.b16 %v3039, %v3035
        %v3084 = vpack.c.b16 %v3044, %v3040
        %v3085 = vpack.c.b16 %v3045, %v3041
        %v3086 = vpack.c.b16 %v3046, %v3042
        %v3087 = vpack.c.b16 %v3047, %v3043
        %v3088 = vpack.c.b16 %v3052, %v3048
        %v3089 = vpack.c.b16 %v3053, %v3049
        %v3090 = vpack.c.b16 %v3054, %v3050
        %v3091 = vpack.c.b16 %v3055, %v3051
        %v3092 = vpack.c.b16 %v3060, %v3056
        %v3093 = vpack.c.b16 %v3061, %v3057
        %v3094 = vpack.c.b16 %v3062, %v3058
        %v3095 = vpack.c.b16 %v3063, %v3059
        %3128 = vmatprep.subr.bf16.mxu0 %v3065
        %3129 = vmatpush1.bf16.msra.mxu0 %v3064
        %3130 = vmatprep.subr.bf16.mxu0 %v3069
        %3131 = vmatpush1.bf16.msra.mxu0 %v3068
        %3132 = vmatprep.subr.bf16.mxu0 %v3073
        %3133 = vmatpush1.bf16.msra.mxu0 %v3072
        %3134 = vmatprep.subr.bf16.mxu0 %v3077
        %3135 = vmatpush1.bf16.msra.mxu0 %v3076
        %3136 = vmatprep.subr.bf16.mxu0 %v3081
        %3137 = vmatpush1.bf16.msra.mxu0 %v3080
        %3138 = vmatprep.subr.bf16.mxu0 %v3085
        %3139 = vmatpush1.bf16.msra.mxu0 %v3084
        %3140 = vmatprep.subr.bf16.mxu0 %v3089
        %3141 = vmatpush1.bf16.msra.mxu0 %v3088
        %3142 = vmatprep.subr.bf16.mxu0 %v3093
        %3143 = vmatpush1.bf16.msra.mxu0 %v3092
        %3144 = vmatprep.subr.bf16.mxu0 0
        %3145 = vmatpush1.bf16.msra.mxu0 0
        %3146 = vmatprep.subr.bf16.mxu0 0
        %3147 = vmatpush1.bf16.msra.mxu0 0
        %3148 = vmatprep.subr.bf16.mxu0 0
        %3149 = vmatpush1.bf16.msra.mxu0 0
        %3150 = vmatprep.subr.bf16.mxu0 0
        %3151 = vmatpush1.bf16.msra.mxu0 0
        %3152 = vmatprep.subr.bf16.mxu0 0
        %3153 = vmatpush1.bf16.msra.mxu0 0
        %3154 = vmatprep.subr.bf16.mxu0 0
        %3155 = vmatpush1.bf16.msra.mxu0 0
        %3156 = vmatprep.subr.bf16.mxu0 0
        %3157 = vmatpush1.bf16.msra.mxu0 0
        %3158 = vmatprep.subr.bf16.mxu0 0
        %3159 = vmatpush1.bf16.msra.mxu0 0
        %3160 = vmatprep.mubr.bf16.mxu0 0
        %3161 = vmatmul.mubr.bf16.gmra.mrb[0].mxu0 %v2909
        %v3162 = vpop.f32.mrb[0].mxu0
        %v3163 = vadd.f32 0.0, %v3162
        %v3164 = vpop.f32.mrb[0].mxu0
        %v3165 = vadd.f32 0.0, %v3164
        %v3166 = vpop.f32.mrb[0].mxu0
        %v3167 = vadd.f32 0.0, %v3166
        %v3168 = vpop.f32.mrb[0].mxu0
        %v3169 = vadd.f32 0.0, %v3168
        %3170 = vdwg.mxu0
        %3171 = vmatprep.subr.bf16.mxu0 %v3067
        %3172 = vmatpush1.bf16.msra.mxu0 %v3066
        %3173 = vmatprep.subr.bf16.mxu0 %v3071
        %3174 = vmatpush1.bf16.msra.mxu0 %v3070
        %3175 = vmatprep.subr.bf16.mxu0 %v3075
        %3176 = vmatpush1.bf16.msra.mxu0 %v3074
        %3177 = vmatprep.subr.bf16.mxu0 %v3079
        %3178 = vmatpush1.bf16.msra.mxu0 %v3078
        %3179 = vmatprep.subr.bf16.mxu0 %v3083
        %3180 = vmatpush1.bf16.msra.mxu0 %v3082
        %3181 = vmatprep.subr.bf16.mxu0 %v3087
        %3182 = vmatpush1.bf16.msra.mxu0 %v3086
        %3183 = vmatprep.subr.bf16.mxu0 %v3091
        %3184 = vmatpush1.bf16.msra.mxu0 %v3090
        %3185 = vmatprep.subr.bf16.mxu0 %v3095
        %3186 = vmatpush1.bf16.msra.mxu0 %v3094
        %3187 = vmatprep.subr.bf16.mxu0 0
        %3188 = vmatpush1.bf16.msra.mxu0 0
        %3189 = vmatprep.subr.bf16.mxu0 0
        %3190 = vmatpush1.bf16.msra.mxu0 0
        %3191 = vmatprep.subr.bf16.mxu0 0
        %3192 = vmatpush1.bf16.msra.mxu0 0
        %3193 = vmatprep.subr.bf16.mxu0 0
        %3194 = vmatpush1.bf16.msra.mxu0 0
        %3195 = vmatprep.subr.bf16.mxu0 0
        %3196 = vmatpush1.bf16.msra.mxu0 0
        %3197 = vmatprep.subr.bf16.mxu0 0
        %3198 = vmatpush1.bf16.msra.mxu0 0
        %3199 = vmatprep.subr.bf16.mxu0 0
        %3200 = vmatpush1.bf16.msra.mxu0 0
        %3201 = vmatprep.subr.bf16.mxu0 0
        %3202 = vmatpush1.bf16.msra.mxu0 0
        %3203 = vmatprep.mubr.bf16.mxu0 0
        %3204 = vmatmul.mubr.bf16.gmra.mrb[0].mxu0 %v2909
        %v3205 = vpop.f32.mrb[0].mxu0
        %v3206 = vadd.f32 0.0, %v3205
        %v3207 = vpop.f32.mrb[0].mxu0
        %v3208 = vadd.f32 0.0, %v3207
        %v3209 = vpop.f32.mrb[0].mxu0
        %v3210 = vadd.f32 0.0, %v3209
        %v3211 = vpop.f32.mrb[0].mxu0
        %v3212 = vadd.f32 0.0, %v3211
        %3213 = vdwg.mxu0
        %v3214 = vadd.f32 %v2928, %v3163
        %v3215 = vadd.f32 %v2929, %v3165
        %v3216 = vadd.f32 %v2930, %v3206
        %v3217 = vadd.f32 %v2931, %v3208
        %v3218 = vadd.f32 %v2932, %v3167
        %v3219 = vadd.f32 %v2933, %v3169
        %v3220 = vadd.f32 %v2934, %v3210
        %v3221 = vadd.f32 %v2935, %v3212
        %v3222 = vxor.u32 %v3214, 2147483648
        %v3223 = vxor.u32 %v3218, 2147483648
        %v3224 = vmul.f32 %v3222, 1.442695
        %v3225 = vpow.pop %v3224
        %v3226 = vmul.f32 %v3223, 1.442695
        %v3227 = vpow.pop %v3226
        %v3228 = vadd.f32 %v3225, 1.0
        %v3229 = vadd.f32 %v3227, 1.0
        %v3230 = vrcp.pop %v3228
        %v3231 = vmul.f32 1.0, %v3230
        %v3232 = vrcp.pop %v3229
        %v3233 = vmul.f32 1.0, %v3232
        %v3234 = vxor.u32 %v3215, 2147483648
        %v3235 = vxor.u32 %v3219, 2147483648
        %v3236 = vmul.f32 %v3234, 1.442695
        %v3237 = vpow.pop %v3236
        %v3238 = vmul.f32 %v3235, 1.442695
        %v3239 = vpow.pop %v3238
        %v3240 = vadd.f32 %v3237, 1.0
        %v3241 = vadd.f32 %v3239, 1.0
        %v3242 = vrcp.pop %v3240
        %v3243 = vmul.f32 1.0, %v3242
        %v3244 = vrcp.pop %v3241
        %v3245 = vmul.f32 1.0, %v3244
        %v3246 = vtanh.pop %v3216
        %v3247 = vtanh.pop %v3220
        %v3248 = vxor.u32 %v3217, 2147483648
        %v3249 = vxor.u32 %v3221, 2147483648
        %v3250 = vmul.f32 %v3248, 1.442695
        %v3251 = vpow.pop %v3250
        %v3252 = vmul.f32 %v3249, 1.442695
        %v3253 = vpow.pop %v3252
        %v3254 = vadd.f32 %v3251, 1.0
        %v3255 = vadd.f32 %v3253, 1.0
        %v3256 = vrcp.pop %v3254
        %v3257 = vmul.f32 1.0, %v3256
        %v3258 = vrcp.pop %v3255
        %v3259 = vmul.f32 1.0, %v3258
        %v3260 = vmul.f32 %v3243, %v2903
        %v3261 = vmul.f32 %v3245, %v2904
        %v3262 = vmul.f32 %v3231, %v3246
        %v3263 = vmul.f32 %v3233, %v3247
        %v3264 = vadd.f32 %v3260, %v3262
        %v3265 = vadd.f32 %v3261, %v3263
        %v3266 = vtanh.pop %v3264
        %v3267 = vtanh.pop %v3265
        %v3268 = vmul.f32 %v3257, %v3266
        %v3269 = vmul.f32 %v3259, %v3267
        %v3270 = vpack.c.bf16 %v3269, %v3268
        %v3272 = vunpack.c.l.b16 %v3270
        %v3273 = vunpack.c.h.b16 %v3270
        %v3274 = vpack.c.b16 %v3272, %v3272
        %v3275 = vpack.c.b16 %v3273, %v3273
        %s3278 = smul.addr %s2923, 4
        %s3279 = scalar_lea.vmem %s274, %s3278 [#allocation5]
        %3280 = vst [vmem:[%s3279] sm:$0xf] %v3274
        %3281 = vst [vmem:[%s3279 + $0x4] sm:$0xf] %v3275
        %s3282 = scalar_select %p1110, 1, 6
        %s3283 = smul.u32 %s3282, 16
        %s3284 = sshra.s32 %s3283, 3
        %s3285 = sand.u32 %s3283, 7
        %s3286 = smul.u32 %s3284, 4
        %s3287 = smul.addr %s3286, 8
        %s3288 = scalar_lea.vmem [#allocation2], %s3287
        %v3289 = vld [vmem:[%s3288] sm:$0xff]
        %v3290 = vld [vmem:[%s3288 + $0x8] sm:$0xff]
        %v3291 = vld [vmem:[%s3288 + $0x10] sm:$0xff]
        %v3292 = vld [vmem:[%s3288 + $0x18] sm:$0xff]
        %v3293 = vld [vmem:[%s3288 + $0x20] sm:$0xff]
        %v3294 = vld [vmem:[%s3288 + $0x28] sm:$0xff]
        %v3295 = vld [vmem:[%s3288 + $0x30] sm:$0xff]
        %v3296 = vld [vmem:[%s3288 + $0x38] sm:$0xff]
        %v3297 = vld [vmem:[%s299] sm:$0xff]
        %v3298 = vld [vmem:[%s299 + $0x8] sm:$0xff]
        %v3299 = vld [vmem:[%s299 + $0x10] sm:$0xff]
        %v3300 = vld [vmem:[%s299 + $0x18] sm:$0xff]
        %v3301 = vld [vmem:[%s299 + $0x20] sm:$0xff]
        %v3302 = vld [vmem:[%s299 + $0x28] sm:$0xff]
        %v3303 = vld [vmem:[%s299 + $0x30] sm:$0xff]
        %v3304 = vld [vmem:[%s299 + $0x38] sm:$0xff]
        %v3305 = vld [vmem:[%s299 + $0x40] sm:$0xff]
        %v3306 = vld [vmem:[%s299 + $0x48] sm:$0xff]
        %v3307 = vld [vmem:[%s299 + $0x50] sm:$0xff]
        %v3308 = vld [vmem:[%s299 + $0x58] sm:$0xff]
        %v3309 = vld [vmem:[%s299 + $0x60] sm:$0xff]
        %v3310 = vld [vmem:[%s299 + $0x68] sm:$0xff]
        %v3311 = vld [vmem:[%s299 + $0x70] sm:$0xff]
        %v3312 = vld [vmem:[%s299 + $0x78] sm:$0xff]
        %v3313 = vld [vmem:[%s299 + $0x80] sm:$0xff]
        %v3314 = vld [vmem:[%s299 + $0x88] sm:$0xff]
        %v3315 = vld [vmem:[%s299 + $0x90] sm:$0xff]
        %v3316 = vld [vmem:[%s299 + $0x98] sm:$0xff]
        %v3317 = vld [vmem:[%s299 + $0xa0] sm:$0xff]
        %v3318 = vld [vmem:[%s299 + $0xa8] sm:$0xff]
        %v3319 = vld [vmem:[%s299 + $0xb0] sm:$0xff]
        %v3320 = vld [vmem:[%s299 + $0xb8] sm:$0xff]
        %v3321 = vld [vmem:[%s299 + $0xc0] sm:$0xff]
        %v3322 = vld [vmem:[%s299 + $0xc8] sm:$0xff]
        %v3323 = vld [vmem:[%s299 + $0xd0] sm:$0xff]
        %v3324 = vld [vmem:[%s299 + $0xd8] sm:$0xff]
        %v3325 = vld [vmem:[%s299 + $0xe0] sm:$0xff]
        %v3326 = vld [vmem:[%s299 + $0xe8] sm:$0xff]
        %v3327 = vld [vmem:[%s299 + $0xf0] sm:$0xff]
        %v3328 = vld [vmem:[%s299 + $0xf8] sm:$0xff]
        %v3361 = vunpack.c.l.b16 %v3297
        %v3362 = vunpack.c.h.b16 %v3297
        %v3363 = vunpack.c.l.b16 %v3298
        %v3364 = vunpack.c.h.b16 %v3298
        %v3365 = vunpack.c.l.b16 %v3299
        %v3366 = vunpack.c.h.b16 %v3299
        %v3367 = vunpack.c.l.b16 %v3300
        %v3368 = vunpack.c.h.b16 %v3300
        %v3369 = vunpack.c.l.b16 %v3301
        %v3370 = vunpack.c.h.b16 %v3301
        %v3371 = vunpack.c.l.b16 %v3302
        %v3372 = vunpack.c.h.b16 %v3302
        %v3373 = vunpack.c.l.b16 %v3303
        %v3374 = vunpack.c.h.b16 %v3303
        %v3375 = vunpack.c.l.b16 %v3304
        %v3376 = vunpack.c.h.b16 %v3304
        %v3377 = vunpack.c.l.b16 %v3305
        %v3378 = vunpack.c.h.b16 %v3305
        %v3379 = vunpack.c.l.b16 %v3306
        %v3380 = vunpack.c.h.b16 %v3306
        %v3381 = vunpack.c.l.b16 %v3307
        %v3382 = vunpack.c.h.b16 %v3307
        %v3383 = vunpack.c.l.b16 %v3308
        %v3384 = vunpack.c.h.b16 %v3308
        %v3385 = vunpack.c.l.b16 %v3309
        %v3386 = vunpack.c.h.b16 %v3309
        %v3387 = vunpack.c.l.b16 %v3310
        %v3388 = vunpack.c.h.b16 %v3310
        %v3389 = vunpack.c.l.b16 %v3311
        %v3390 = vunpack.c.h.b16 %v3311
        %v3391 = vunpack.c.l.b16 %v3312
        %v3392 = vunpack.c.h.b16 %v3312
        %v3393 = vunpack.c.l.b16 %v3313
        %v3394 = vunpack.c.h.b16 %v3313
        %v3395 = vunpack.c.l.b16 %v3314
        %v3396 = vunpack.c.h.b16 %v3314
        %v3397 = vunpack.c.l.b16 %v3315
        %v3398 = vunpack.c.h.b16 %v3315
        %v3399 = vunpack.c.l.b16 %v3316
        %v3400 = vunpack.c.h.b16 %v3316
        %v3401 = vunpack.c.l.b16 %v3317
        %v3402 = vunpack.c.h.b16 %v3317
        %v3403 = vunpack.c.l.b16 %v3318
        %v3404 = vunpack.c.h.b16 %v3318
        %v3405 = vunpack.c.l.b16 %v3319
        %v3406 = vunpack.c.h.b16 %v3319
        %v3407 = vunpack.c.l.b16 %v3320
        %v3408 = vunpack.c.h.b16 %v3320
        %v3409 = vunpack.c.l.b16 %v3321
        %v3410 = vunpack.c.h.b16 %v3321
        %v3411 = vunpack.c.l.b16 %v3322
        %v3412 = vunpack.c.h.b16 %v3322
        %v3413 = vunpack.c.l.b16 %v3323
        %v3414 = vunpack.c.h.b16 %v3323
        %v3415 = vunpack.c.l.b16 %v3324
        %v3416 = vunpack.c.h.b16 %v3324
        %v3417 = vunpack.c.l.b16 %v3325
        %v3418 = vunpack.c.h.b16 %v3325
        %v3419 = vunpack.c.l.b16 %v3326
        %v3420 = vunpack.c.h.b16 %v3326
        %v3421 = vunpack.c.l.b16 %v3327
        %v3422 = vunpack.c.h.b16 %v3327
        %v3423 = vunpack.c.l.b16 %v3328
        %v3424 = vunpack.c.h.b16 %v3328
        %v3425 = vpack.c.b16 %v3365, %v3361
        %v3426 = vpack.c.b16 %v3366, %v3362
        %v3427 = vpack.c.b16 %v3367, %v3363
        %v3428 = vpack.c.b16 %v3368, %v3364
        %v3429 = vpack.c.b16 %v3373, %v3369
        %v3430 = vpack.c.b16 %v3374, %v3370
        %v3431 = vpack.c.b16 %v3375, %v3371
        %v3432 = vpack.c.b16 %v3376, %v3372
        %v3433 = vpack.c.b16 %v3381, %v3377
        %v3434 = vpack.c.b16 %v3382, %v3378
        %v3435 = vpack.c.b16 %v3383, %v3379
        %v3436 = vpack.c.b16 %v3384, %v3380
        %v3437 = vpack.c.b16 %v3389, %v3385
        %v3438 = vpack.c.b16 %v3390, %v3386
        %v3439 = vpack.c.b16 %v3391, %v3387
        %v3440 = vpack.c.b16 %v3392, %v3388
        %v3441 = vpack.c.b16 %v3397, %v3393
        %v3442 = vpack.c.b16 %v3398, %v3394
        %v3443 = vpack.c.b16 %v3399, %v3395
        %v3444 = vpack.c.b16 %v3400, %v3396
        %v3445 = vpack.c.b16 %v3405, %v3401
        %v3446 = vpack.c.b16 %v3406, %v3402
        %v3447 = vpack.c.b16 %v3407, %v3403
        %v3448 = vpack.c.b16 %v3408, %v3404
        %v3449 = vpack.c.b16 %v3413, %v3409
        %v3450 = vpack.c.b16 %v3414, %v3410
        %v3451 = vpack.c.b16 %v3415, %v3411
        %v3452 = vpack.c.b16 %v3416, %v3412
        %v3453 = vpack.c.b16 %v3421, %v3417
        %v3454 = vpack.c.b16 %v3422, %v3418
        %v3455 = vpack.c.b16 %v3423, %v3419
        %v3456 = vpack.c.b16 %v3424, %v3420
        %3489 = vmatprep.subr.bf16.mxu0 %v3426
        %3490 = vmatpush1.bf16.msra.mxu0 %v3425
        %3491 = vmatprep.subr.bf16.mxu0 %v3430
        %3492 = vmatpush1.bf16.msra.mxu0 %v3429
        %3493 = vmatprep.subr.bf16.mxu0 %v3434
        %3494 = vmatpush1.bf16.msra.mxu0 %v3433
        %3495 = vmatprep.subr.bf16.mxu0 %v3438
        %3496 = vmatpush1.bf16.msra.mxu0 %v3437
        %3497 = vmatprep.subr.bf16.mxu0 %v3442
        %3498 = vmatpush1.bf16.msra.mxu0 %v3441
        %3499 = vmatprep.subr.bf16.mxu0 %v3446
        %3500 = vmatpush1.bf16.msra.mxu0 %v3445
        %3501 = vmatprep.subr.bf16.mxu0 %v3450
        %3502 = vmatpush1.bf16.msra.mxu0 %v3449
        %3503 = vmatprep.subr.bf16.mxu0 %v3454
        %3504 = vmatpush1.bf16.msra.mxu0 %v3453
        %3505 = vmatprep.subr.bf16.mxu0 0
        %3506 = vmatpush1.bf16.msra.mxu0 0
        %3507 = vmatprep.subr.bf16.mxu0 0
        %3508 = vmatpush1.bf16.msra.mxu0 0
        %3509 = vmatprep.subr.bf16.mxu0 0
        %3510 = vmatpush1.bf16.msra.mxu0 0
        %3511 = vmatprep.subr.bf16.mxu0 0
        %3512 = vmatpush1.bf16.msra.mxu0 0
        %3513 = vmatprep.subr.bf16.mxu0 0
        %3514 = vmatpush1.bf16.msra.mxu0 0
        %3515 = vmatprep.subr.bf16.mxu0 0
        %3516 = vmatpush1.bf16.msra.mxu0 0
        %3517 = vmatprep.subr.bf16.mxu0 0
        %3518 = vmatpush1.bf16.msra.mxu0 0
        %3519 = vmatprep.subr.bf16.mxu0 0
        %3520 = vmatpush1.bf16.msra.mxu0 0
        %3521 = vmatprep.mubr.bf16.mxu0 0
        %3522 = vmatmul.mubr.bf16.gmra.mrb[0].mxu0 %v3270
        %v3523 = vpop.f32.mrb[0].mxu0
        %v3524 = vadd.f32 0.0, %v3523
        %v3525 = vpop.f32.mrb[0].mxu0
        %v3526 = vadd.f32 0.0, %v3525
        %v3527 = vpop.f32.mrb[0].mxu0
        %v3528 = vadd.f32 0.0, %v3527
        %v3529 = vpop.f32.mrb[0].mxu0
        %v3530 = vadd.f32 0.0, %v3529
        %3531 = vdwg.mxu0
        %3532 = vmatprep.subr.bf16.mxu0 %v3428
        %3533 = vmatpush1.bf16.msra.mxu0 %v3427
        %3534 = vmatprep.subr.bf16.mxu0 %v3432
        %3535 = vmatpush1.bf16.msra.mxu0 %v3431
        %3536 = vmatprep.subr.bf16.mxu0 %v3436
        %3537 = vmatpush1.bf16.msra.mxu0 %v3435
        %3538 = vmatprep.subr.bf16.mxu0 %v3440
        %3539 = vmatpush1.bf16.msra.mxu0 %v3439
        %3540 = vmatprep.subr.bf16.mxu0 %v3444
        %3541 = vmatpush1.bf16.msra.mxu0 %v3443
        %3542 = vmatprep.subr.bf16.mxu0 %v3448
        %3543 = vmatpush1.bf16.msra.mxu0 %v3447
        %3544 = vmatprep.subr.bf16.mxu0 %v3452
        %3545 = vmatpush1.bf16.msra.mxu0 %v3451
        %3546 = vmatprep.subr.bf16.mxu0 %v3456
        %3547 = vmatpush1.bf16.msra.mxu0 %v3455
        %3548 = vmatprep.subr.bf16.mxu0 0
        %3549 = vmatpush1.bf16.msra.mxu0 0
        %3550 = vmatprep.subr.bf16.mxu0 0
        %3551 = vmatpush1.bf16.msra.mxu0 0
        %3552 = vmatprep.subr.bf16.mxu0 0
        %3553 = vmatpush1.bf16.msra.mxu0 0
        %3554 = vmatprep.subr.bf16.mxu0 0
        %3555 = vmatpush1.bf16.msra.mxu0 0
        %3556 = vmatprep.subr.bf16.mxu0 0
        %3557 = vmatpush1.bf16.msra.mxu0 0
        %3558 = vmatprep.subr.bf16.mxu0 0
        %3559 = vmatpush1.bf16.msra.mxu0 0
        %3560 = vmatprep.subr.bf16.mxu0 0
        %3561 = vmatpush1.bf16.msra.mxu0 0
        %3562 = vmatprep.subr.bf16.mxu0 0
        %3563 = vmatpush1.bf16.msra.mxu0 0
        %3564 = vmatprep.mubr.bf16.mxu0 0
        %3565 = vmatmul.mubr.bf16.gmra.mrb[0].mxu0 %v3270
        %v3566 = vpop.f32.mrb[0].mxu0
        %v3567 = vadd.f32 0.0, %v3566
        %v3568 = vpop.f32.mrb[0].mxu0
        %v3569 = vadd.f32 0.0, %v3568
        %v3570 = vpop.f32.mrb[0].mxu0
        %v3571 = vadd.f32 0.0, %v3570
        %v3572 = vpop.f32.mrb[0].mxu0
        %v3573 = vadd.f32 0.0, %v3572
        %3574 = vdwg.mxu0
        %v3575 = vadd.f32 %v3289, %v3524
        %v3576 = vadd.f32 %v3290, %v3526
        %v3577 = vadd.f32 %v3291, %v3567
        %v3578 = vadd.f32 %v3292, %v3569
        %v3579 = vadd.f32 %v3293, %v3528
        %v3580 = vadd.f32 %v3294, %v3530
        %v3581 = vadd.f32 %v3295, %v3571
        %v3582 = vadd.f32 %v3296, %v3573
        %v3583 = vxor.u32 %v3575, 2147483648
        %v3584 = vxor.u32 %v3579, 2147483648
        %v3585 = vmul.f32 %v3583, 1.442695
        %v3586 = vpow.pop %v3585
        %v3587 = vmul.f32 %v3584, 1.442695
        %v3588 = vpow.pop %v3587
        %v3589 = vadd.f32 %v3586, 1.0
        %v3590 = vadd.f32 %v3588, 1.0
        %v3591 = vrcp.pop %v3589
        %v3592 = vmul.f32 1.0, %v3591
        %v3593 = vrcp.pop %v3590
        %v3594 = vmul.f32 1.0, %v3593
        %v3595 = vxor.u32 %v3576, 2147483648
        %v3596 = vxor.u32 %v3580, 2147483648
        %v3597 = vmul.f32 %v3595, 1.442695
        %v3598 = vpow.pop %v3597
        %v3599 = vmul.f32 %v3596, 1.442695
        %v3600 = vpow.pop %v3599
        %v3601 = vadd.f32 %v3598, 1.0
        %v3602 = vadd.f32 %v3600, 1.0
        %v3603 = vrcp.pop %v3601
        %v3604 = vmul.f32 1.0, %v3603
        %v3605 = vrcp.pop %v3602
        %v3606 = vmul.f32 1.0, %v3605
        %v3607 = vtanh.pop %v3577
        %v3608 = vtanh.pop %v3581
        %v3609 = vxor.u32 %v3578, 2147483648
        %v3610 = vxor.u32 %v3582, 2147483648
        %v3611 = vmul.f32 %v3609, 1.442695
        %v3612 = vpow.pop %v3611
        %v3613 = vmul.f32 %v3610, 1.442695
        %v3614 = vpow.pop %v3613
        %v3615 = vadd.f32 %v3612, 1.0
        %v3616 = vadd.f32 %v3614, 1.0
        %v3617 = vrcp.pop %v3615
        %v3618 = vmul.f32 1.0, %v3617
        %v3619 = vrcp.pop %v3616
        %v3620 = vmul.f32 1.0, %v3619
        %v3621 = vmul.f32 %v3604, %v3264
        %v3622 = vmul.f32 %v3606, %v3265
        %v3623 = vmul.f32 %v3592, %v3607
        %v3624 = vmul.f32 %v3594, %v3608
        %v3625 = vadd.f32 %v3621, %v3623
        %v3626 = vadd.f32 %v3622, %v3624
        %v3627 = vtanh.pop %v3625
        %v3628 = vtanh.pop %v3626
        %v3629 = vmul.f32 %v3618, %v3627
        %v3630 = vmul.f32 %v3620, %v3628
        %v3631 = vpack.c.bf16 %v3630, %v3629
        %v3633 = vunpack.c.l.b16 %v3631
        %v3634 = vunpack.c.h.b16 %v3631
        %v3635 = vpack.c.b16 %v3633, %v3633
        %v3636 = vpack.c.b16 %v3634, %v3634
        %s3639 = smul.addr %s3284, 4
        %s3640 = scalar_lea.vmem %s274, %s3639 [#allocation5]
        %3641 = vst [vmem:[%s3640] sm:$0xf] %v3635
        %3642 = vst [vmem:[%s3640 + $0x4] sm:$0xf] %v3636
        %s3643 = scalar_select %p1110, 0, 7
        %s3644 = smul.u32 %s3643, 16
        %s3645 = sshra.s32 %s3644, 3
        %s3646 = sand.u32 %s3644, 7
        %s3647 = smul.u32 %s3645, 4
        %s3648 = smul.addr %s3647, 8
        %s3649 = scalar_lea.vmem [#allocation2], %s3648
        %v3650 = vld [vmem:[%s3649] sm:$0xff]
        %v3651 = vld [vmem:[%s3649 + $0x8] sm:$0xff]
        %v3652 = vld [vmem:[%s3649 + $0x10] sm:$0xff]
        %v3653 = vld [vmem:[%s3649 + $0x18] sm:$0xff]
        %v3654 = vld [vmem:[%s3649 + $0x20] sm:$0xff]
        %v3655 = vld [vmem:[%s3649 + $0x28] sm:$0xff]
        %v3656 = vld [vmem:[%s3649 + $0x30] sm:$0xff]
        %v3657 = vld [vmem:[%s3649 + $0x38] sm:$0xff]
        %v3658 = vld [vmem:[%s299] sm:$0xff]
        %v3659 = vld [vmem:[%s299 + $0x8] sm:$0xff]
        %v3660 = vld [vmem:[%s299 + $0x10] sm:$0xff]
        %v3661 = vld [vmem:[%s299 + $0x18] sm:$0xff]
        %v3662 = vld [vmem:[%s299 + $0x20] sm:$0xff]
        %v3663 = vld [vmem:[%s299 + $0x28] sm:$0xff]
        %v3664 = vld [vmem:[%s299 + $0x30] sm:$0xff]
        %v3665 = vld [vmem:[%s299 + $0x38] sm:$0xff]
        %v3666 = vld [vmem:[%s299 + $0x40] sm:$0xff]
        %v3667 = vld [vmem:[%s299 + $0x48] sm:$0xff]
        %v3668 = vld [vmem:[%s299 + $0x50] sm:$0xff]
        %v3669 = vld [vmem:[%s299 + $0x58] sm:$0xff]
        %v3670 = vld [vmem:[%s299 + $0x60] sm:$0xff]
        %v3671 = vld [vmem:[%s299 + $0x68] sm:$0xff]
        %v3672 = vld [vmem:[%s299 + $0x70] sm:$0xff]
        %v3673 = vld [vmem:[%s299 + $0x78] sm:$0xff]
        %v3674 = vld [vmem:[%s299 + $0x80] sm:$0xff]
        %v3675 = vld [vmem:[%s299 + $0x88] sm:$0xff]
        %v3676 = vld [vmem:[%s299 + $0x90] sm:$0xff]
        %v3677 = vld [vmem:[%s299 + $0x98] sm:$0xff]
        %v3678 = vld [vmem:[%s299 + $0xa0] sm:$0xff]
        %v3679 = vld [vmem:[%s299 + $0xa8] sm:$0xff]
        %v3680 = vld [vmem:[%s299 + $0xb0] sm:$0xff]
        %v3681 = vld [vmem:[%s299 + $0xb8] sm:$0xff]
        %v3682 = vld [vmem:[%s299 + $0xc0] sm:$0xff]
        %v3683 = vld [vmem:[%s299 + $0xc8] sm:$0xff]
        %v3684 = vld [vmem:[%s299 + $0xd0] sm:$0xff]
        %v3685 = vld [vmem:[%s299 + $0xd8] sm:$0xff]
        %v3686 = vld [vmem:[%s299 + $0xe0] sm:$0xff]
        %v3687 = vld [vmem:[%s299 + $0xe8] sm:$0xff]
        %v3688 = vld [vmem:[%s299 + $0xf0] sm:$0xff]
        %v3689 = vld [vmem:[%s299 + $0xf8] sm:$0xff]
        %v3722 = vunpack.c.l.b16 %v3658
        %v3723 = vunpack.c.h.b16 %v3658
        %v3724 = vunpack.c.l.b16 %v3659
        %v3725 = vunpack.c.h.b16 %v3659
        %v3726 = vunpack.c.l.b16 %v3660
        %v3727 = vunpack.c.h.b16 %v3660
        %v3728 = vunpack.c.l.b16 %v3661
        %v3729 = vunpack.c.h.b16 %v3661
        %v3730 = vunpack.c.l.b16 %v3662
        %v3731 = vunpack.c.h.b16 %v3662
        %v3732 = vunpack.c.l.b16 %v3663
        %v3733 = vunpack.c.h.b16 %v3663
        %v3734 = vunpack.c.l.b16 %v3664
        %v3735 = vunpack.c.h.b16 %v3664
        %v3736 = vunpack.c.l.b16 %v3665
        %v3737 = vunpack.c.h.b16 %v3665
        %v3738 = vunpack.c.l.b16 %v3666
        %v3739 = vunpack.c.h.b16 %v3666
        %v3740 = vunpack.c.l.b16 %v3667
        %v3741 = vunpack.c.h.b16 %v3667
        %v3742 = vunpack.c.l.b16 %v3668
        %v3743 = vunpack.c.h.b16 %v3668
        %v3744 = vunpack.c.l.b16 %v3669
        %v3745 = vunpack.c.h.b16 %v3669
        %v3746 = vunpack.c.l.b16 %v3670
        %v3747 = vunpack.c.h.b16 %v3670
        %v3748 = vunpack.c.l.b16 %v3671
        %v3749 = vunpack.c.h.b16 %v3671
        %v3750 = vunpack.c.l.b16 %v3672
        %v3751 = vunpack.c.h.b16 %v3672
        %v3752 = vunpack.c.l.b16 %v3673
        %v3753 = vunpack.c.h.b16 %v3673
        %v3754 = vunpack.c.l.b16 %v3674
        %v3755 = vunpack.c.h.b16 %v3674
        %v3756 = vunpack.c.l.b16 %v3675
        %v3757 = vunpack.c.h.b16 %v3675
        %v3758 = vunpack.c.l.b16 %v3676
        %v3759 = vunpack.c.h.b16 %v3676
        %v3760 = vunpack.c.l.b16 %v3677
        %v3761 = vunpack.c.h.b16 %v3677
        %v3762 = vunpack.c.l.b16 %v3678
        %v3763 = vunpack.c.h.b16 %v3678
        %v3764 = vunpack.c.l.b16 %v3679
        %v3765 = vunpack.c.h.b16 %v3679
        %v3766 = vunpack.c.l.b16 %v3680
        %v3767 = vunpack.c.h.b16 %v3680
        %v3768 = vunpack.c.l.b16 %v3681
        %v3769 = vunpack.c.h.b16 %v3681
        %v3770 = vunpack.c.l.b16 %v3682
        %v3771 = vunpack.c.h.b16 %v3682
        %v3772 = vunpack.c.l.b16 %v3683
        %v3773 = vunpack.c.h.b16 %v3683
        %v3774 = vunpack.c.l.b16 %v3684
        %v3775 = vunpack.c.h.b16 %v3684
        %v3776 = vunpack.c.l.b16 %v3685
        %v3777 = vunpack.c.h.b16 %v3685
        %v3778 = vunpack.c.l.b16 %v3686
        %v3779 = vunpack.c.h.b16 %v3686
        %v3780 = vunpack.c.l.b16 %v3687
        %v3781 = vunpack.c.h.b16 %v3687
        %v3782 = vunpack.c.l.b16 %v3688
        %v3783 = vunpack.c.h.b16 %v3688
        %v3784 = vunpack.c.l.b16 %v3689
        %v3785 = vunpack.c.h.b16 %v3689
        %v3786 = vpack.c.b16 %v3726, %v3722
        %v3787 = vpack.c.b16 %v3727, %v3723
        %v3788 = vpack.c.b16 %v3728, %v3724
        %v3789 = vpack.c.b16 %v3729, %v3725
        %v3790 = vpack.c.b16 %v3734, %v3730
        %v3791 = vpack.c.b16 %v3735, %v3731
        %v3792 = vpack.c.b16 %v3736, %v3732
        %v3793 = vpack.c.b16 %v3737, %v3733
        %v3794 = vpack.c.b16 %v3742, %v3738
        %v3795 = vpack.c.b16 %v3743, %v3739
        %v3796 = vpack.c.b16 %v3744, %v3740
        %v3797 = vpack.c.b16 %v3745, %v3741
        %v3798 = vpack.c.b16 %v3750, %v3746
        %v3799 = vpack.c.b16 %v3751, %v3747
        %v3800 = vpack.c.b16 %v3752, %v3748
        %v3801 = vpack.c.b16 %v3753, %v3749
        %v3802 = vpack.c.b16 %v3758, %v3754
        %v3803 = vpack.c.b16 %v3759, %v3755
        %v3804 = vpack.c.b16 %v3760, %v3756
        %v3805 = vpack.c.b16 %v3761, %v3757
        %v3806 = vpack.c.b16 %v3766, %v3762
        %v3807 = vpack.c.b16 %v3767, %v3763
        %v3808 = vpack.c.b16 %v3768, %v3764
        %v3809 = vpack.c.b16 %v3769, %v3765
        %v3810 = vpack.c.b16 %v3774, %v3770
        %v3811 = vpack.c.b16 %v3775, %v3771
        %v3812 = vpack.c.b16 %v3776, %v3772
        %v3813 = vpack.c.b16 %v3777, %v3773
        %v3814 = vpack.c.b16 %v3782, %v3778
        %v3815 = vpack.c.b16 %v3783, %v3779
        %v3816 = vpack.c.b16 %v3784, %v3780
        %v3817 = vpack.c.b16 %v3785, %v3781
        %3850 = vmatprep.subr.bf16.mxu0 %v3787
        %3851 = vmatpush1.bf16.msra.mxu0 %v3786
        %3852 = vmatprep.subr.bf16.mxu0 %v3791
        %3853 = vmatpush1.bf16.msra.mxu0 %v3790
        %3854 = vmatprep.subr.bf16.mxu0 %v3795
        %3855 = vmatpush1.bf16.msra.mxu0 %v3794
        %3856 = vmatprep.subr.bf16.mxu0 %v3799
        %3857 = vmatpush1.bf16.msra.mxu0 %v3798
        %3858 = vmatprep.subr.bf16.mxu0 %v3803
        %3859 = vmatpush1.bf16.msra.mxu0 %v3802
        %3860 = vmatprep.subr.bf16.mxu0 %v3807
        %3861 = vmatpush1.bf16.msra.mxu0 %v3806
        %3862 = vmatprep.subr.bf16.mxu0 %v3811
        %3863 = vmatpush1.bf16.msra.mxu0 %v3810
        %3864 = vmatprep.subr.bf16.mxu0 %v3815
        %3865 = vmatpush1.bf16.msra.mxu0 %v3814
        %3866 = vmatprep.subr.bf16.mxu0 0
        %3867 = vmatpush1.bf16.msra.mxu0 0
        %3868 = vmatprep.subr.bf16.mxu0 0
        %3869 = vmatpush1.bf16.msra.mxu0 0
        %3870 = vmatprep.subr.bf16.mxu0 0
        %3871 = vmatpush1.bf16.msra.mxu0 0
        %3872 = vmatprep.subr.bf16.mxu0 0
        %3873 = vmatpush1.bf16.msra.mxu0 0
        %3874 = vmatprep.subr.bf16.mxu0 0
        %3875 = vmatpush1.bf16.msra.mxu0 0
        %3876 = vmatprep.subr.bf16.mxu0 0
        %3877 = vmatpush1.bf16.msra.mxu0 0
        %3878 = vmatprep.subr.bf16.mxu0 0
        %3879 = vmatpush1.bf16.msra.mxu0 0
        %3880 = vmatprep.subr.bf16.mxu0 0
        %3881 = vmatpush1.bf16.msra.mxu0 0
        %3882 = vmatprep.mubr.bf16.mxu0 0
        %3883 = vmatmul.mubr.bf16.gmra.mrb[0].mxu0 %v3631
        %v3884 = vpop.f32.mrb[0].mxu0
        %v3885 = vadd.f32 0.0, %v3884
        %v3886 = vpop.f32.mrb[0].mxu0
        %v3887 = vadd.f32 0.0, %v3886
        %v3888 = vpop.f32.mrb[0].mxu0
        %v3889 = vadd.f32 0.0, %v3888
        %v3890 = vpop.f32.mrb[0].mxu0
        %v3891 = vadd.f32 0.0, %v3890
        %3892 = vdwg.mxu0
        %3893 = vmatprep.subr.bf16.mxu0 %v3789
        %3894 = vmatpush1.bf16.msra.mxu0 %v3788
        %3895 = vmatprep.subr.bf16.mxu0 %v3793
        %3896 = vmatpush1.bf16.msra.mxu0 %v3792
        %3897 = vmatprep.subr.bf16.mxu0 %v3797
        %3898 = vmatpush1.bf16.msra.mxu0 %v3796
        %3899 = vmatprep.subr.bf16.mxu0 %v3801
        %3900 = vmatpush1.bf16.msra.mxu0 %v3800
        %3901 = vmatprep.subr.bf16.mxu0 %v3805
        %3902 = vmatpush1.bf16.msra.mxu0 %v3804
        %3903 = vmatprep.subr.bf16.mxu0 %v3809
        %3904 = vmatpush1.bf16.msra.mxu0 %v3808
        %3905 = vmatprep.subr.bf16.mxu0 %v3813
        %3906 = vmatpush1.bf16.msra.mxu0 %v3812
        %3907 = vmatprep.subr.bf16.mxu0 %v3817
        %3908 = vmatpush1.bf16.msra.mxu0 %v3816
        %3909 = vmatprep.subr.bf16.mxu0 0
        %3910 = vmatpush1.bf16.msra.mxu0 0
        %3911 = vmatprep.subr.bf16.mxu0 0
        %3912 = vmatpush1.bf16.msra.mxu0 0
        %3913 = vmatprep.subr.bf16.mxu0 0
        %3914 = vmatpush1.bf16.msra.mxu0 0
        %3915 = vmatprep.subr.bf16.mxu0 0
        %3916 = vmatpush1.bf16.msra.mxu0 0
        %3917 = vmatprep.subr.bf16.mxu0 0
        %3918 = vmatpush1.bf16.msra.mxu0 0
        %3919 = vmatprep.subr.bf16.mxu0 0
        %3920 = vmatpush1.bf16.msra.mxu0 0
        %3921 = vmatprep.subr.bf16.mxu0 0
        %3922 = vmatpush1.bf16.msra.mxu0 0
        %3923 = vmatprep.subr.bf16.mxu0 0
        %3924 = vmatpush1.bf16.msra.mxu0 0
        %3925 = vmatprep.mubr.bf16.mxu0 0
        %3926 = vmatmul.mubr.bf16.gmra.mrb[0].mxu0 %v3631
        %v3927 = vpop.f32.mrb[0].mxu0
        %v3928 = vadd.f32 0.0, %v3927
        %v3929 = vpop.f32.mrb[0].mxu0
        %v3930 = vadd.f32 0.0, %v3929
        %v3931 = vpop.f32.mrb[0].mxu0
        %v3932 = vadd.f32 0.0, %v3931
        %v3933 = vpop.f32.mrb[0].mxu0
        %v3934 = vadd.f32 0.0, %v3933
        %3935 = vdwg.mxu0
        %v3936 = vadd.f32 %v3650, %v3885
        %v3937 = vadd.f32 %v3651, %v3887
        %v3938 = vadd.f32 %v3652, %v3928
        %v3939 = vadd.f32 %v3653, %v3930
        %v3940 = vadd.f32 %v3654, %v3889
        %v3941 = vadd.f32 %v3655, %v3891
        %v3942 = vadd.f32 %v3656, %v3932
        %v3943 = vadd.f32 %v3657, %v3934
        %v3944 = vxor.u32 %v3936, 2147483648
        %v3945 = vxor.u32 %v3940, 2147483648
        %v3946 = vmul.f32 %v3944, 1.442695
        %v3947 = vpow.pop %v3946
        %v3948 = vmul.f32 %v3945, 1.442695
        %v3949 = vpow.pop %v3948
        %v3950 = vadd.f32 %v3947, 1.0
        %v3951 = vadd.f32 %v3949, 1.0
        %v3952 = vrcp.pop %v3950
        %v3953 = vmul.f32 1.0, %v3952
        %v3954 = vrcp.pop %v3951
        %v3955 = vmul.f32 1.0, %v3954
        %v3956 = vxor.u32 %v3937, 2147483648
        %v3957 = vxor.u32 %v3941, 2147483648
        %v3958 = vmul.f32 %v3956, 1.442695
        %v3959 = vpow.pop %v3958
        %v3960 = vmul.f32 %v3957, 1.442695
        %v3961 = vpow.pop %v3960
        %v3962 = vadd.f32 %v3959, 1.0
        %v3963 = vadd.f32 %v3961, 1.0
        %v3964 = vrcp.pop %v3962
        %v3965 = vmul.f32 1.0, %v3964
        %v3966 = vrcp.pop %v3963
        %v3967 = vmul.f32 1.0, %v3966
        %v3968 = vtanh.pop %v3938
        %v3969 = vtanh.pop %v3942
        %v3970 = vxor.u32 %v3939, 2147483648
        %v3971 = vxor.u32 %v3943, 2147483648
        %v3972 = vmul.f32 %v3970, 1.442695
        %v3973 = vpow.pop %v3972
        %v3974 = vmul.f32 %v3971, 1.442695
        %v3975 = vpow.pop %v3974
        %v3976 = vadd.f32 %v3973, 1.0
        %v3977 = vadd.f32 %v3975, 1.0
        %v3978 = vrcp.pop %v3976
        %v3979 = vmul.f32 1.0, %v3978
        %v3980 = vrcp.pop %v3977
        %v3981 = vmul.f32 1.0, %v3980
        %v3982 = vmul.f32 %v3965, %v3625
        %v3983 = vmul.f32 %v3967, %v3626
        %v3984 = vmul.f32 %v3953, %v3968
        %v3985 = vmul.f32 %v3955, %v3969
        %v3986 = vadd.f32 %v3982, %v3984
        %v3987 = vadd.f32 %v3983, %v3985
        %v3988 = vtanh.pop %v3986
        %v3989 = vtanh.pop %v3987
        %v3990 = vmul.f32 %v3979, %v3988
        %v3991 = vmul.f32 %v3981, %v3989
        %v3992 = vpack.c.bf16 %v3991, %v3990
        %v3994 = vunpack.c.l.b16 %v3992
        %v3995 = vunpack.c.h.b16 %v3992
        %v3996 = vpack.c.b16 %v3994, %v3994
        %v3997 = vpack.c.b16 %v3995, %v3995
        %s4000 = smul.addr %s3645, 4
        %s4001 = scalar_lea.vmem %s274, %s4000 [#allocation5]
        %4002 = vst [vmem:[%s4001] sm:$0xf] %v3996
        %4003 = vst [vmem:[%s4001 + $0x4] sm:$0xf] %v3997
        %4004 = vst [vmem:[#allocation3] sm:$0xff] %v3990
        %4005 = vst [vmem:[#allocation3 + $0x8] sm:$0xff] %v3991
        %4006 = vst [vmem:[#allocation4] sm:$0xff] %v3986
        %4007 = vst [vmem:[#allocation4 + $0x8] sm:$0xff] %v3987
        %s4008 = sand.u32 %s157, 1
        %s4009 = sand.u32 %s157, 1
        %s4010 = smul.addr %s4009, 64
        %s4011 = scalar_lea.vmem [#allocation5], %s4010
        // Predicated region
        $region41: #{net_forward.4} parent=35 // pred_check
          %p4012 = pneg %p167
        $region42: #{net_forward.4} parent=35 // pred_check_branch
          %4014 = sbr.rel (%p4012) target = $region44
        $region43: #{net_forward.4} parent=35 // pred_region
          %s4015 = smul.u32 %s20, 2
          %s4016 = ssub.s32 0, %s4015
          %s4017 = smul.u32 %s19, %s4016
          %s4018 = sadd.s32 %s20, %s4017
          %s4019 = smul.u32 16, %s4018
          %s4020 = smul.addr %s4019, 2
          %s4021 = sadd.s32 %s19, %s4020
          %s4022 = smul.addr %s4021, 4
          %s4023 = scalar_lea.vmem %s4, %s4022
          // Predicated region
          $region45: #{net_forward.4} parent=43 // pred_check
            _
          $region46: #{net_forward.4} parent=43 // pred_check_branch
            %4025 = sbr.rel (0) target = $region48
          $region47: #{net_forward.4} parent=43 // pred_region
            // Predicated region
            $region49: #{net_forward.4} parent=47 // pred_check
              _
            $region50: #{net_forward.4} parent=47 // pred_check_branch
              %4027 = sbr.rel target = $region52
            $region51: #{net_forward.4} parent=47 // pred_region
              // Predicated region
              $region64: #{net_forward.4} parent=51 // pred_check
                _
              $region65: #{net_forward.4} parent=51 // pred_check_branch
                %4072 = sbr.rel (0) target = $region67
              $region66: #{net_forward.4} parent=51 // pred_region
                loop: start=0, step=1, limit=1
                $region68: #{net_forward.4} parent=66 // loop_pre_header
                  _
                $region69: #{net_forward.4} parent=66 // loop_header
                  %s4074 = sphi 0, %s4078
                  %p4075 = scmp.ge.s32.totalorder %s4074, 1
                  %s4079 = sphi %s4011, %s4011
                  %s4080 = sphi %s4023, %s4023
                $region70: #{net_forward.4} parent=66 // loop_header_branch
                  %4077 = sbr.rel (%p4075) target = $region74
                $region71: #{net_forward.4} parent=66 // loop_body
                  _
                $region72: #{net_forward.4} parent=66 // loop_footer
                  %s4078 = sadd.s32 1, %s4074
                $region73: #{net_forward.4} parent=66 // loop_footer_branch
                  %4073 = sbr.rel target = $region69
                $region74: #{net_forward.4} parent=66 // loop_exit
                  _
                loop: start=0, step=1, limit=1
                $region75: #{net_forward.4} parent=66 // loop_pre_header
                  _
                $region76: #{net_forward.4} parent=66 // loop_header
                  %s4083 = sphi 0, %s4087
                  %p4084 = scmp.ge.s32.totalorder %s4083, 1
                  %s4088 = sphi %s4011, %s4011
                  %s4089 = sphi %s4023, %s4023
                $region77: #{net_forward.4} parent=66 // loop_header_branch
                  %4086 = sbr.rel (%p4084) target = $region81
                $region78: #{net_forward.4} parent=66 // loop_body
                  %v4090 = vld [vmem:[%s4088] sm:$0xf]
                  %4091 = vst [vmem:[%s4089] sm:$0xf] %v4090
                  %v4092 = vld [vmem:[%s4088 + $0x4] sm:$0xf]
                  %4093 = vst [vmem:[%s4089 + $0x8] sm:$0xf] %v4092
                  %v4094 = vld [vmem:[%s4088 + $0x8] sm:$0xf]
                  %4095 = vst [vmem:[%s4089 + $0x10] sm:$0xf] %v4094
                  %v4096 = vld [vmem:[%s4088 + $0xc] sm:$0xf]
                  %4097 = vst [vmem:[%s4089 + $0x18] sm:$0xf] %v4096
                  %v4098 = vld [vmem:[%s4088 + $0x10] sm:$0xf]
                  %4099 = vst [vmem:[%s4089 + $0x20] sm:$0xf] %v4098
                  %v4100 = vld [vmem:[%s4088 + $0x14] sm:$0xf]
                  %4101 = vst [vmem:[%s4089 + $0x28] sm:$0xf] %v4100
                  %v4102 = vld [vmem:[%s4088 + $0x18] sm:$0xf]
                  %4103 = vst [vmem:[%s4089 + $0x30] sm:$0xf] %v4102
                  %v4104 = vld [vmem:[%s4088 + $0x1c] sm:$0xf]
                  %4105 = vst [vmem:[%s4089 + $0x38] sm:$0xf] %v4104
                  %v4106 = vld [vmem:[%s4088 + $0x20] sm:$0xf]
                  %4107 = vst [vmem:[%s4089 + $0x40] sm:$0xf] %v4106
                  %v4108 = vld [vmem:[%s4088 + $0x24] sm:$0xf]
                  %4109 = vst [vmem:[%s4089 + $0x48] sm:$0xf] %v4108
                  %v4110 = vld [vmem:[%s4088 + $0x28] sm:$0xf]
                  %4111 = vst [vmem:[%s4089 + $0x50] sm:$0xf] %v4110
                  %v4112 = vld [vmem:[%s4088 + $0x2c] sm:$0xf]
                  %4113 = vst [vmem:[%s4089 + $0x58] sm:$0xf] %v4112
                  %v4114 = vld [vmem:[%s4088 + $0x30] sm:$0xf]
                  %4115 = vst [vmem:[%s4089 + $0x60] sm:$0xf] %v4114
                  %v4116 = vld [vmem:[%s4088 + $0x34] sm:$0xf]
                  %4117 = vst [vmem:[%s4089 + $0x68] sm:$0xf] %v4116
                  %v4118 = vld [vmem:[%s4088 + $0x38] sm:$0xf]
                  %4119 = vst [vmem:[%s4089 + $0x70] sm:$0xf] %v4118
                  %v4120 = vld [vmem:[%s4088 + $0x3c] sm:$0xf]
                  %4121 = vst [vmem:[%s4089 + $0x78] sm:$0xf] %v4120
                $region79: #{net_forward.4} parent=66 // loop_footer
                  %s4087 = sadd.s32 1, %s4083
                $region80: #{net_forward.4} parent=66 // loop_footer_branch
                  %4082 = sbr.rel target = $region76
                $region81: #{net_forward.4} parent=66 // loop_exit
                  _
              $region67: #{net_forward.4} parent=51 // pred_fallthru
                _
            $region52: #{net_forward.4} parent=47 // pred_fallthru
              _
            // Predicated region
            $region53: #{net_forward.4} parent=47 // pred_check
              _
            $region54: #{net_forward.4} parent=47 // pred_check_branch
              %4029 = sbr.rel (0) target = $region56
            $region55: #{net_forward.4} parent=47 // pred_region
              loop: start=0, step=1, limit=1
              $region57: #{net_forward.4} parent=55 // loop_pre_header
                _
              $region58: #{net_forward.4} parent=55 // loop_header
                %s4032 = sphi 0, %s4036
                %p4033 = scmp.ge.s32.totalorder %s4032, 1
                %s4037 = sphi %s4011, %s4011
                %s4038 = sphi %s4023, %s4023
              $region59: #{net_forward.4} parent=55 // loop_header_branch
                %4035 = sbr.rel (%p4033) target = $region63
              $region60: #{net_forward.4} parent=55 // loop_body
                %v4039 = vld [vmem:[%s4037] sm:$0xf]
                %4040 = vst [vmem:[%s4038] sm:$0xf] %v4039
                %v4041 = vld [vmem:[%s4037 + $0x4] sm:$0xf]
                %4042 = vst [vmem:[%s4038 + $0x8] sm:$0xf] %v4041
                %v4043 = vld [vmem:[%s4037 + $0x8] sm:$0xf]
                %4044 = vst [vmem:[%s4038 + $0x10] sm:$0xf] %v4043
                %v4045 = vld [vmem:[%s4037 + $0xc] sm:$0xf]
                %4046 = vst [vmem:[%s4038 + $0x18] sm:$0xf] %v4045
                %v4047 = vld [vmem:[%s4037 + $0x10] sm:$0xf]
                %4048 = vst [vmem:[%s4038 + $0x20] sm:$0xf] %v4047
                %v4049 = vld [vmem:[%s4037 + $0x14] sm:$0xf]
                %4050 = vst [vmem:[%s4038 + $0x28] sm:$0xf] %v4049
                %v4051 = vld [vmem:[%s4037 + $0x18] sm:$0xf]
                %4052 = vst [vmem:[%s4038 + $0x30] sm:$0xf] %v4051
                %v4053 = vld [vmem:[%s4037 + $0x1c] sm:$0xf]
                %4054 = vst [vmem:[%s4038 + $0x38] sm:$0xf] %v4053
                %v4055 = vld [vmem:[%s4037 + $0x20] sm:$0xf]
                %4056 = vst [vmem:[%s4038 + $0x40] sm:$0xf] %v4055
                %v4057 = vld [vmem:[%s4037 + $0x24] sm:$0xf]
                %4058 = vst [vmem:[%s4038 + $0x48] sm:$0xf] %v4057
                %v4059 = vld [vmem:[%s4037 + $0x28] sm:$0xf]
                %4060 = vst [vmem:[%s4038 + $0x50] sm:$0xf] %v4059
                %v4061 = vld [vmem:[%s4037 + $0x2c] sm:$0xf]
                %4062 = vst [vmem:[%s4038 + $0x58] sm:$0xf] %v4061
                %v4063 = vld [vmem:[%s4037 + $0x30] sm:$0xf]
                %4064 = vst [vmem:[%s4038 + $0x60] sm:$0xf] %v4063
                %v4065 = vld [vmem:[%s4037 + $0x34] sm:$0xf]
                %4066 = vst [vmem:[%s4038 + $0x68] sm:$0xf] %v4065
                %v4067 = vld [vmem:[%s4037 + $0x38] sm:$0xf]
                %4068 = vst [vmem:[%s4038 + $0x70] sm:$0xf] %v4067
                %v4069 = vld [vmem:[%s4037 + $0x3c] sm:$0xf]
                %4070 = vst [vmem:[%s4038 + $0x78] sm:$0xf] %v4069
              $region61: #{net_forward.4} parent=55 // loop_footer
                %s4036 = sadd.s32 1, %s4032
              $region62: #{net_forward.4} parent=55 // loop_footer_branch
                %4031 = sbr.rel target = $region58
              $region63: #{net_forward.4} parent=55 // loop_exit
                _
            $region56: #{net_forward.4} parent=47 // pred_fallthru
              _
          $region48: #{net_forward.4} parent=43 // pred_fallthru
            _
          %4122 = vnop
        $region44: #{net_forward.4} parent=35 // pred_fallthru
          _
      $region36: #{net_forward.4} parent=5 // pred_fallthru
        _
      %p4123 = scmp.le.s32.totalorder 2, %s10
      // Predicated region
      $region82: #{net_forward.4} parent=5 // pred_check
        %p4124 = pneg %p4123
      $region83: #{net_forward.4} parent=5 // pred_check_branch
        %4126 = sbr.rel (%p4124) target = $region85
      $region84: #{net_forward.4} parent=5 // pred_region
        %s4127 = ssub.s32 %s10, 2
        // Predicated region
        $region86: #{net_forward.4} parent=84 // pred_check
          %p4128 = pneg %p173
        $region87: #{net_forward.4} parent=84 // pred_check_branch
          %4130 = sbr.rel (%p4128) target = $region89
        $region88: #{net_forward.4} parent=84 // pred_region
          %s4131 = sand.u32 %s158, 1
          %s4132 = sand.u32 %s158, 1
          %s4133 = smul.addr %s4132, 64
          %s4134 = scalar_lea.vmem [#allocation5], %s4133
        $region89: #{net_forward.4} parent=84 // pred_fallthru
          _
      $region85: #{net_forward.4} parent=5 // pred_fallthru
        _
    $region6: #{net_forward.4} parent=1 // loop_footer
      %s14 = sadd.s32 1, %s10
    $region7: #{net_forward.4} parent=1 // loop_footer_branch
      %9 = sbr.rel target = $region3
    $region8: #{net_forward.4} parent=1 // loop_exit
      _

</llo_original>
